<compile_context>
chip_gen: v6e
topology: v6e:2x2x1
jax: 0.10.0
libtpu: 0.0.40
codegen_flags: <defaults>
</compile_context>

<pallas_src>
import functools

import jax
import jax.numpy as jnp
from jax.experimental import pallas as pl
from jax.experimental.pallas import tpu as pltpu


def _round_up(x, m):
    return ((x + m - 1) // m) * m


# Column offset at which y1 is staged inside the scratch: a sublane multiple so
# the (big) y1 store is aligned; the left zero band [0:8) doubles as the dx=0
# halo column, and an 8-wide right band gives an aligned zero store for dx=2.
_COL0 = 8


# -----------------------------------------------------------------------------
# Fused Pallas kernel: one batch image per grid step, everything stays in VMEM.
# -----------------------------------------------------------------------------
def _fused_resblock_kernel(x_ref, w1_ref, b1_ref, w2_ref, ws_ref, bo_ref,
                           o_ref, y1p_ref, acc_ref, *, w_valid):
    _, H, Wp, Cout = o_ref.shape
    Cin = x_ref.shape[-1]
    HW = H * Wp

    # ---- conv1 (+ folded BN1): 3 K-fused MXU dots (K = 3*Cin), f32 accum ----
    x_mid = None
    for dy in range(3):
        row = x_ref[0, dy:dy + H, :, :]                       # (H, Wp+2, Cin) bf16
        taps = [row[:, dx:dx + Wp, :] for dx in range(3)]
        if dy == 1:
            x_mid = taps[1]                                    # reused by shortcut
        patch = jnp.concatenate(taps, axis=-1).reshape(HW, 3 * Cin)
        d = jnp.dot(patch, w1_ref[dy], preferred_element_type=jnp.float32)
        if dy == 0:
            acc_ref[...] = d
        else:
            acc_ref[...] += d

    y1 = jnp.maximum(acc_ref[...] + b1_ref[...], 0.0)          # f32 bias + relu
    y1 = y1.astype(jnp.bfloat16).reshape(H, Wp, Cout)
    if w_valid < Wp:
        # Width-padding columns must stay zero so conv2's halo reads are clean.
        col = jax.lax.broadcasted_iota(jnp.int32, (1, Wp, 1), 1)
        y1 = jnp.where(col < w_valid, y1, jnp.zeros_like(y1))

    # ---- stage y1 (bf16) in scratch; zero ONLY the 1-px halo bands ----------
    w_scr = y1p_ref.shape[1]
    y1p_ref[0, :, :] = jnp.zeros((w_scr, Cout), jnp.bfloat16)
    y1p_ref[H + 1, :, :] = jnp.zeros((w_scr, Cout), jnp.bfloat16)
    y1p_ref[1:H + 1, 0:_COL0, :] = jnp.zeros((H, _COL0, Cout), jnp.bfloat16)
    y1p_ref[1:H + 1, _COL0 + Wp:w_scr, :] = jnp.zeros(
        (H, w_scr - _COL0 - Wp, Cout), jnp.bfloat16)
    y1p_ref[1:H + 1, _COL0:_COL0 + Wp, :] = y1

    # ---- conv2 (+ folded BN2): 3 K-fused MXU dots on the bf16 scratch -------
    for dy in range(3):
        taps = [y1p_ref[dy:dy + H, _COL0 - 1 + dx:_COL0 - 1 + dx + Wp, :]
                for dx in range(3)]
        patch = jnp.concatenate(taps, axis=-1).reshape(HW, 3 * Cout)
        d = jnp.dot(patch, w2_ref[dy], preferred_element_type=jnp.float32)
        if dy == 0:
            acc_ref[...] = d
        else:
            acc_ref[...] += d

    # ---- 1x1 shortcut (+ folded BN) reuses centre tap; residual add + ReLU --
    sc = jnp.dot(x_mid.reshape(HW, Cin), ws_ref[...],
                 preferred_element_type=jnp.float32)
    out = jnp.maximum(acc_ref[...] + sc + bo_ref[...], 0.0)
    o_ref[0] = out.reshape(H, Wp, Cout)


def _const_spec(shape):
    """BlockSpec for grid-invariant operands; single-buffered where supported."""
    nd = len(shape)
    idx = lambda *_: (0,) * nd
    if hasattr(pl, "Buffered"):
        try:
            return pl.BlockSpec(shape, idx, pipeline_mode=pl.Buffered(1))
        except TypeError:
            pass
    return pl.BlockSpec(shape, idx)


def _fused_residual_block(x_pad, w1, b1, w2, ws, bo, *, w_valid):
    N, Hp2, Wp2, Cin_p = x_pad.shape
    H, Wp = Hp2 - 2, Wp2 - 2
    Cout_p = w1.shape[-1]
    w_scr = _COL0 + Wp + 8

    # Per-step VMEM footprint -> explicit limit (cap at 56 MiB: v7x-safe).
    budget = (
        (Hp2 * Wp2 * Cin_p) * 2 * 2                      # x block, double-buffered
        + (H * Wp * Cout_p) * 4 * 2                      # out block, double-buffered
        + (w1.size + w2.size + ws.size) * 2 * 2          # weights (worst case 2 bufs)
        + (b1.size + bo.size) * 4 * 2
        + (Hp2 * w_scr * Cout_p) * 2                     # y1 scratch (bf16)
        + (H * Wp * Cout_p) * 4                          # acc scratch (f32)
        + (H * Wp * 3 * max(Cin_p, Cout_p)) * 2 * 2      # K-fused patch temporaries
    )
    vmem_limit = int(min(56 * 1024 * 1024, max(32 * 1024 * 1024, 2 * budget)))

    kernel = functools.partial(_fused_resblock_kernel, w_valid=w_valid)
    return pl.pallas_call(
        kernel,
        out_shape=jax.ShapeDtypeStruct((N, H, Wp, Cout_p), jnp.float32),
        grid=(N,),
        in_specs=[
            pl.BlockSpec((1, Hp2, Wp2, Cin_p), lambda n: (n, 0, 0, 0)),  # x (bf16)
            _const_spec(w1.shape),   # w1 fused (3, 3*Cin_p, Cout_p) bf16
            _const_spec(b1.shape),   # b1 (1, Cout_p) f32
            _const_spec(w2.shape),   # w2 fused (3, 3*Cout_p, Cout_p) bf16
            _const_spec(ws.shape),   # ws (Cin_p, Cout_p) bf16
            _const_spec(bo.shape),   # b2 + bs (1, Cout_p) f32
        ],
        out_specs=pl.BlockSpec((1, H, Wp, Cout_p), lambda n: (n, 0, 0, 0)),
        scratch_shapes=[
            pltpu.VMEM((H + 2, w_scr, Cout_p), jnp.bfloat16),   # y1 + zero halo
            pltpu.VMEM((H * Wp, Cout_p), jnp.float32),          # MXU accumulator
        ],
        compiler_params=pltpu.CompilerParams(
            dimension_semantics=("parallel",),
            vmem_limit_bytes=vmem_limit,
        ),
    )(x_pad, w1, b1, w2, ws, bo)


# -----------------------------------------------------------------------------
# Host-side glue: NHWC transpose, channel/width padding, BN folding, bf16 cast.
# -----------------------------------------------------------------------------
def _fold_bn(gamma, beta, mean, var, eps=1e-5):
    scale = gamma / jnp.sqrt(var + eps)
    return scale, beta - mean * scale


@jax.jit
def residual_block_forward(x_nchw, params):
    """Equivalent of ResidualBlock.forward (in_channels != out_channels path)."""
    N, C_in, H, W = x_nchw.shape
    C_out = params["w1"].shape[-1]
    Cp_in, Cp_out = _round_up(C_in, 128), _round_up(C_out, 128)
    Wp = _round_up(W, 8)   # keeps (H,W,C)<->(H*W,C) reshapes layout-free

    # NHWC, channels padded to 128 lanes, 1-px conv halo + width padding, bf16.
    x = jnp.transpose(x_nchw, (0, 2, 3, 1))
    x = jnp.pad(x, ((0, 0), (1, 1), (1, 1 + Wp - W), (0, Cp_in - C_in)))
    x = x.astype(jnp.bfloat16)

    s1, b1 = _fold_bn(*params["bn1"])
    s2, b2 = _fold_bn(*params["bn2"])
    ss, bs = _fold_bn(*params["bns"])

    def pad_w(w, ci, co):
        pads = [(0, 0)] * (w.ndim - 2) + [(0, ci - w.shape[-2]), (0, co - w.shape[-1])]
        return jnp.pad(w, pads)

    # Fold BN scale into the conv weights, pad channels, fuse the three dx taps
    # along the contraction axis (K = 3*C), cast to bf16 for the MXU.
    w1 = pad_w(params["w1"] * s1, Cp_in, Cp_out).reshape(
        3, 3 * Cp_in, Cp_out).astype(jnp.bfloat16)
    w2 = pad_w(params["w2"] * s2, Cp_out, Cp_out).reshape(
        3, 3 * Cp_out, Cp_out).astype(jnp.bfloat16)
    ws = pad_w(params["ws"] * ss, Cp_in, Cp_out).astype(jnp.bfloat16)
    b1p = jnp.pad(b1, (0, Cp_out - C_out)).reshape(1, Cp_out).astype(jnp.float32)
    bop = jnp.pad(b2 + bs, (0, Cp_out - C_out)).reshape(1, Cp_out).astype(jnp.float32)

    out = _fused_residual_block(x, w1, b1p, w2, ws, bop, w_valid=W)
    return jnp.transpose(out[:, :, :W, :C_out], (0, 3, 1, 2))   # back to NCHW


# -----------------------------------------------------------------------------
# Pure-JAX reference (f32) for validation
# -----------------------------------------------------------------------------
def _reference(x_nchw, params):
    x = jnp.transpose(x_nchw, (0, 2, 3, 1)).astype(jnp.float32)

    def conv(inp, w_hwio, pad):
        return jax.lax.conv_general_dilated(
            inp, w_hwio, window_strides=(1, 1), padding=pad,
            dimension_numbers=("NHWC", "HWIO", "NHWC"))

    def bn(inp, prm):
        g, b, m, v = prm
        return (inp - m) / jnp.sqrt(v + 1e-5) * g + b

    out = jax.nn.relu(bn(conv(x, params["w1"], ((1, 1), (1, 1))), params["bn1"]))
    out = bn(conv(out, params["w2"], ((1, 1), (1, 1))), params["bn2"])
    sc = bn(conv(x, params["ws"][None, None], ((0, 0), (0, 0))), params["bns"])
    out = jax.nn.relu(out + sc)
    return jnp.transpose(out, (0, 3, 1, 2))


# -----------------------------------------------------------------------------
def make_params(key, c_in, c_out):
    ks = jax.random.split(key, 9)
    return {
        # conv weights stored HWIO (PyTorch OIHW transposed)
        "w1": jax.random.normal(ks[0], (3, 3, c_in, c_out), jnp.float32) * 0.1,
        "w2": jax.random.normal(ks[1], (3, 3, c_out, c_out), jnp.float32) * 0.1,
        "ws": jax.random.normal(ks[2], (c_in, c_out), jnp.float32) * 0.1,
        # BN params: (gamma, beta, running_mean, running_var)
        "bn1": (1.0 + 0.1 * jax.random.normal(ks[3], (c_out,), jnp.float32),
                0.1 * jax.random.normal(ks[4], (c_out,), jnp.float32),
                0.05 * jax.random.normal(ks[5], (c_out,), jnp.float32),
                1.0 + 0.1 * jax.random.uniform(ks[6], (c_out,), jnp.float32)),
        "bn2": (jnp.ones((c_out,), jnp.float32) * 0.9,
                jnp.full((c_out,), 0.02, jnp.float32),
                jnp.full((c_out,), 0.01, jnp.float32),
                jnp.ones((c_out,), jnp.float32) * 1.1),
        "bns": (1.0 + 0.1 * jax.random.normal(ks[7], (c_out,), jnp.float32),
                0.1 * jax.random.normal(ks[8], (c_out,), jnp.float32),
                jnp.zeros((c_out,), jnp.float32),
                jnp.ones((c_out,), jnp.float32)),
    }


if __name__ == "__main__":
    N, C_IN, C_OUT, H, W = 2, 4, 8, 16, 16   # in != out -> conv shortcut path
    key = jax.random.PRNGKey(0)
    kx, kp = jax.random.split(key)
    x = jax.random.normal(kx, (N, C_IN, H, W), jnp.float32)   # NCHW, like PyTorch
    params = make_params(kp, C_IN, C_OUT)

    out = jax.block_until_ready(residual_block_forward(x, params))
    ref = _reference(x, params)

    assert out.shape == (N, C_OUT, H, W)
    # bf16 MXU operands -> compare against the f32 reference with bf16-level tolerance.
    assert float(jnp.max(jnp.abs(out - ref))) < 5e-2, "mismatch vs JAX reference"

    print("KERNEL_OK")
</pallas_src>

<mosaic_0001>
module attributes {stable_mosaic.version = 11 : i64} {
  func.func @_fused_resblock_kernel(%arg0: i32, %arg1: memref<1x18x18x128xbf16, #tpu.memory_space<vmem>>, %arg2: memref<3x384x128xbf16, #tpu.memory_space<vmem>>, %arg3: memref<1x128xf32, #tpu.memory_space<vmem>>, %arg4: memref<3x384x128xbf16, #tpu.memory_space<vmem>>, %arg5: memref<128x128xbf16, #tpu.memory_space<vmem>>, %arg6: memref<1x128xf32, #tpu.memory_space<vmem>>, %arg7: memref<1x16x16x128xf32, #tpu.memory_space<vmem>>, %arg8: memref<18x32x128xbf16, #tpu.memory_space<vmem>>, %arg9: memref<256x128xf32, #tpu.memory_space<vmem>>) attributes {dimension_semantics = [#tpu.dimension_semantics<parallel>], iteration_bounds = array<i64: 2>, scalar_prefetch = 0 : i64, scratch_operands = 2 : i64, tpu.core_type = #tpu.core_type<tc>, window_params = [{transform_indices = @transform_0, window_bounds = array<i64: 1, 18, 18, 128>}, {pipeline_mode = #tpu.pipeline_mode<synchronous>, transform_indices = @transform_1, window_bounds = array<i64: 3, 384, 128>}, {pipeline_mode = #tpu.pipeline_mode<synchronous>, transform_indices = @transform_2, window_bounds = array<i64: 1, 128>}, {pipeline_mode = #tpu.pipeline_mode<synchronous>, transform_indices = @transform_3, window_bounds = array<i64: 3, 384, 128>}, {pipeline_mode = #tpu.pipeline_mode<synchronous>, transform_indices = @transform_4, window_bounds = array<i64: 128, 128>}, {pipeline_mode = #tpu.pipeline_mode<synchronous>, transform_indices = @transform_5, window_bounds = array<i64: 1, 128>}, {transform_indices = @transform_6, window_bounds = array<i64: 1, 16, 16, 128>}]} {
    %c0 = arith.constant 0 : index
    %c0_0 = arith.constant 0 : index
    %c0_1 = arith.constant 0 : index
    %c0_2 = arith.constant 0 : index
    %0 = vector.load %arg1[%c0, %c0_0, %c0_1, %c0_2] : memref<1x18x18x128xbf16, #tpu.memory_space<vmem>>, vector<1x16x18x128xbf16>
    %1 = vector.shape_cast %0 : vector<1x16x18x128xbf16> to vector<16x18x128xbf16>
    %2 = vector.extract_strided_slice %1 {offsets = [0, 0, 0], sizes = [16, 16, 128], strides = [1, 1, 1]} : vector<16x18x128xbf16> to vector<16x16x128xbf16>
    %3 = vector.extract_strided_slice %1 {offsets = [0, 1, 0], sizes = [16, 16, 128], strides = [1, 1, 1]} : vector<16x18x128xbf16> to vector<16x16x128xbf16>
    %4 = vector.extract_strided_slice %1 {offsets = [0, 2, 0], sizes = [16, 16, 128], strides = [1, 1, 1]} : vector<16x18x128xbf16> to vector<16x16x128xbf16>
    %5 = tpu.concatenate %2, %3, %4 in 2 : vector<16x16x128xbf16>, vector<16x16x128xbf16>, vector<16x16x128xbf16> -> vector<16x16x384xbf16>
    %6 = vector.shape_cast %5 : vector<16x16x384xbf16> to vector<256x384xbf16>
    %c0_3 = arith.constant 0 : index
    %c0_4 = arith.constant 0 : index
    %c0_5 = arith.constant 0 : index
    %7 = vector.load %arg2[%c0_3, %c0_4, %c0_5] : memref<3x384x128xbf16, #tpu.memory_space<vmem>>, vector<1x384x128xbf16>
    %8 = vector.shape_cast %7 : vector<1x384x128xbf16> to vector<384x128xbf16>
    %cst = arith.constant dense<0.000000e+00> : vector<256x128xf32>
    %9 = tpu.matmul %6, %8, %cst {dimension_numbers = #tpu.dot_dimension_numbers<[1], [0], [0], [1], [0, 0, 1, 1], [], []>} : vector<256x384xbf16>, vector<384x128xbf16>, vector<256x128xf32> -> vector<256x128xf32>
    %c0_6 = arith.constant 0 : index
    %c0_7 = arith.constant 0 : index
    %10 = vector.load %arg9[%c0_6, %c0_7] : memref<256x128xf32, #tpu.memory_space<vmem>>, vector<256x128xf32>
    tpu.vector_store %arg9[%c0_6, %c0_7], %9 {strides = array<i32>} : memref<256x128xf32, #tpu.memory_space<vmem>>, vector<256x128xf32>,
    %c0_8 = arith.constant 0 : index
    %c1 = arith.constant 1 : index
    %c0_9 = arith.constant 0 : index
    %c0_10 = arith.constant 0 : index
    %11 = vector.load %arg1[%c0_8, %c1, %c0_9, %c0_10] : memref<1x18x18x128xbf16, #tpu.memory_space<vmem>>, vector<1x16x18x128xbf16>
    %12 = vector.shape_cast %11 : vector<1x16x18x128xbf16> to vector<16x18x128xbf16>
    %13 = vector.extract_strided_slice %12 {offsets = [0, 0, 0], sizes = [16, 16, 128], strides = [1, 1, 1]} : vector<16x18x128xbf16> to vector<16x16x128xbf16>
    %14 = vector.extract_strided_slice %12 {offsets = [0, 1, 0], sizes = [16, 16, 128], strides = [1, 1, 1]} : vector<16x18x128xbf16> to vector<16x16x128xbf16>
    %15 = vector.extract_strided_slice %12 {offsets = [0, 2, 0], sizes = [16, 16, 128], strides = [1, 1, 1]} : vector<16x18x128xbf16> to vector<16x16x128xbf16>
    %16 = tpu.concatenate %13, %14, %15 in 2 : vector<16x16x128xbf16>, vector<16x16x128xbf16>, vector<16x16x128xbf16> -> vector<16x16x384xbf16>
    %17 = vector.shape_cast %16 : vector<16x16x384xbf16> to vector<256x384xbf16>
    %c1_11 = arith.constant 1 : index
    %c0_12 = arith.constant 0 : index
    %c0_13 = arith.constant 0 : index
    %18 = vector.load %arg2[%c1_11, %c0_12, %c0_13] : memref<3x384x128xbf16, #tpu.memory_space<vmem>>, vector<1x384x128xbf16>
    %19 = vector.shape_cast %18 : vector<1x384x128xbf16> to vector<384x128xbf16>
    %cst_14 = arith.constant dense<0.000000e+00> : vector<256x128xf32>
    %20 = tpu.matmul %17, %19, %cst_14 {dimension_numbers = #tpu.dot_dimension_numbers<[1], [0], [0], [1], [0, 0, 1, 1], [], []>} : vector<256x384xbf16>, vector<384x128xbf16>, vector<256x128xf32> -> vector<256x128xf32>
    %c0_15 = arith.constant 0 : index
    %c0_16 = arith.constant 0 : index
    %21 = vector.load %arg9[%c0_15, %c0_16] : memref<256x128xf32, #tpu.memory_space<vmem>>, vector<256x128xf32>
    %22 = arith.addf %21, %20 : vector<256x128xf32>
    %c0_17 = arith.constant 0 : index
    %c0_18 = arith.constant 0 : index
    %23 = vector.load %arg9[%c0_17, %c0_18] : memref<256x128xf32, #tpu.memory_space<vmem>>, vector<256x128xf32>
    tpu.vector_store %arg9[%c0_17, %c0_18], %22 {strides = array<i32>} : memref<256x128xf32, #tpu.memory_space<vmem>>, vector<256x128xf32>,
    %c0_19 = arith.constant 0 : index
    %c2 = arith.constant 2 : index
    %c0_20 = arith.constant 0 : index
    %c0_21 = arith.constant 0 : index
    %24 = vector.load %arg1[%c0_19, %c2, %c0_20, %c0_21] : memref<1x18x18x128xbf16, #tpu.memory_space<vmem>>, vector<1x16x18x128xbf16>
    %25 = vector.shape_cast %24 : vector<1x16x18x128xbf16> to vector<16x18x128xbf16>
    %26 = vector.extract_strided_slice %25 {offsets = [0, 0, 0], sizes = [16, 16, 128], strides = [1, 1, 1]} : vector<16x18x128xbf16> to vector<16x16x128xbf16>
    %27 = vector.extract_strided_slice %25 {offsets = [0, 1, 0], sizes = [16, 16, 128], strides = [1, 1, 1]} : vector<16x18x128xbf16> to vector<16x16x128xbf16>
    %28 = vector.extract_strided_slice %25 {offsets = [0, 2, 0], sizes = [16, 16, 128], strides = [1, 1, 1]} : vector<16x18x128xbf16> to vector<16x16x128xbf16>
    %29 = tpu.concatenate %26, %27, %28 in 2 : vector<16x16x128xbf16>, vector<16x16x128xbf16>, vector<16x16x128xbf16> -> vector<16x16x384xbf16>
    %30 = vector.shape_cast %29 : vector<16x16x384xbf16> to vector<256x384xbf16>
    %c2_22 = arith.constant 2 : index
    %c0_23 = arith.constant 0 : index
    %c0_24 = arith.constant 0 : index
    %31 = vector.load %arg2[%c2_22, %c0_23, %c0_24] : memref<3x384x128xbf16, #tpu.memory_space<vmem>>, vector<1x384x128xbf16>
    %32 = vector.shape_cast %31 : vector<1x384x128xbf16> to vector<384x128xbf16>
    %cst_25 = arith.constant dense<0.000000e+00> : vector<256x128xf32>
    %33 = tpu.matmul %30, %32, %cst_25 {dimension_numbers = #tpu.dot_dimension_numbers<[1], [0], [0], [1], [0, 0, 1, 1], [], []>} : vector<256x384xbf16>, vector<384x128xbf16>, vector<256x128xf32> -> vector<256x128xf32>
    %c0_26 = arith.constant 0 : index
    %c0_27 = arith.constant 0 : index
    %34 = vector.load %arg9[%c0_26, %c0_27] : memref<256x128xf32, #tpu.memory_space<vmem>>, vector<256x128xf32>
    %35 = arith.addf %34, %33 : vector<256x128xf32>
    %c0_28 = arith.constant 0 : index
    %c0_29 = arith.constant 0 : index
    %36 = vector.load %arg9[%c0_28, %c0_29] : memref<256x128xf32, #tpu.memory_space<vmem>>, vector<256x128xf32>
    tpu.vector_store %arg9[%c0_28, %c0_29], %35 {strides = array<i32>} : memref<256x128xf32, #tpu.memory_space<vmem>>, vector<256x128xf32>,
    %c0_30 = arith.constant 0 : index
    %c0_31 = arith.constant 0 : index
    %37 = vector.load %arg9[%c0_30, %c0_31] : memref<256x128xf32, #tpu.memory_space<vmem>>, vector<256x128xf32>
    %c0_32 = arith.constant 0 : index
    %c0_33 = arith.constant 0 : index
    %38 = vector.load %arg3[%c0_32, %c0_33] : memref<1x128xf32, #tpu.memory_space<vmem>>, vector<1x128xf32>
    %39 = vector.broadcast %38 : vector<1x128xf32> to vector<256x128xf32>
    %40 = arith.addf %37, %39 : vector<256x128xf32>
    %cst_34 = arith.constant 0.000000e+00 : f32
    %41 = vector.broadcast %cst_34 : f32 to vector<256x128xf32>
    %42 = arith.maximumf %40, %41 : vector<256x128xf32>
    %43 = arith.truncf %42 : vector<256x128xf32> to vector<256x128xbf16>
    %44 = vector.shape_cast %43 : vector<256x128xbf16> to vector<16x16x128xbf16>
    %cst_35 = arith.constant 0.000000e+00 : bf16
    %45 = vector.broadcast %cst_35 : bf16 to vector<32x128xbf16>
    %c0_36 = arith.constant 0 : index
    %c0_37 = arith.constant 0 : index
    %c0_38 = arith.constant 0 : index
    %46 = vector.load %arg8[%c0_36, %c0_37, %c0_38] : memref<18x32x128xbf16, #tpu.memory_space<vmem>>, vector<1x32x128xbf16>
    %47 = vector.shape_cast %46 : vector<1x32x128xbf16> to vector<32x128xbf16>
    %48 = vector.shape_cast %45 : vector<32x128xbf16> to vector<1x32x128xbf16>
    tpu.vector_store %arg8[%c0_36, %c0_37, %c0_38], %48 {strides = array<i32>} : memref<18x32x128xbf16, #tpu.memory_space<vmem>>, vector<1x32x128xbf16>,
    %cst_39 = arith.constant 0.000000e+00 : bf16
    %49 = vector.broadcast %cst_39 : bf16 to vector<32x128xbf16>
    %c17 = arith.constant 17 : index
    %c0_40 = arith.constant 0 : index
    %c0_41 = arith.constant 0 : index
    %50 = vector.load %arg8[%c17, %c0_40, %c0_41] : memref<18x32x128xbf16, #tpu.memory_space<vmem>>, vector<1x32x128xbf16>
    %51 = vector.shape_cast %50 : vector<1x32x128xbf16> to vector<32x128xbf16>
    %52 = vector.shape_cast %49 : vector<32x128xbf16> to vector<1x32x128xbf16>
    tpu.vector_store %arg8[%c17, %c0_40, %c0_41], %52 {strides = array<i32>} : memref<18x32x128xbf16, #tpu.memory_space<vmem>>, vector<1x32x128xbf16>,
    %cst_42 = arith.constant 0.000000e+00 : bf16
    %53 = vector.broadcast %cst_42 : bf16 to vector<16x8x128xbf16>
    %c1_43 = arith.constant 1 : index
    %c0_44 = arith.constant 0 : index
    %c0_45 = arith.constant 0 : index
    %54 = vector.load %arg8[%c1_43, %c0_44, %c0_45] : memref<18x32x128xbf16, #tpu.memory_space<vmem>>, vector<16x8x128xbf16>
    tpu.vector_store %arg8[%c1_43, %c0_44, %c0_45], %53 {strides = array<i32>} : memref<18x32x128xbf16, #tpu.memory_space<vmem>>, vector<16x8x128xbf16>,
    %cst_46 = arith.constant 0.000000e+00 : bf16
    %55 = vector.broadcast %cst_46 : bf16 to vector<16x8x128xbf16>
    %c1_47 = arith.constant 1 : index
    %c24 = arith.constant 24 : index
    %c0_48 = arith.constant 0 : index
    %56 = vector.load %arg8[%c1_47, %c24, %c0_48] : memref<18x32x128xbf16, #tpu.memory_space<vmem>>, vector<16x8x128xbf16>
    tpu.vector_store %arg8[%c1_47, %c24, %c0_48], %55 {strides = array<i32>} : memref<18x32x128xbf16, #tpu.memory_space<vmem>>, vector<16x8x128xbf16>,
    %c1_49 = arith.constant 1 : index
    %c8 = arith.constant 8 : index
    %c0_50 = arith.constant 0 : index
    %57 = vector.load %arg8[%c1_49, %c8, %c0_50] : memref<18x32x128xbf16, #tpu.memory_space<vmem>>, vector<16x16x128xbf16>
    tpu.vector_store %arg8[%c1_49, %c8, %c0_50], %44 {strides = array<i32>} : memref<18x32x128xbf16, #tpu.memory_space<vmem>>, vector<16x16x128xbf16>,
    %c0_51 = arith.constant 0 : index
    %c7 = arith.constant 7 : index
    %c0_52 = arith.constant 0 : index
    %58 = vector.load %arg8[%c0_51, %c7, %c0_52] : memref<18x32x128xbf16, #tpu.memory_space<vmem>>, vector<16x16x128xbf16>
    %c0_53 = arith.constant 0 : index
    %c8_54 = arith.constant 8 : index
    %c0_55 = arith.constant 0 : index
    %59 = vector.load %arg8[%c0_53, %c8_54, %c0_55] : memref<18x32x128xbf16, #tpu.memory_space<vmem>>, vector<16x16x128xbf16>
    %c0_56 = arith.constant 0 : index
    %c9 = arith.constant 9 : index
    %c0_57 = arith.constant 0 : index
    %60 = vector.load %arg8[%c0_56, %c9, %c0_57] : memref<18x32x128xbf16, #tpu.memory_space<vmem>>, vector<16x16x128xbf16>
    %61 = tpu.concatenate %58, %59, %60 in 2 : vector<16x16x128xbf16>, vector<16x16x128xbf16>, vector<16x16x128xbf16> -> vector<16x16x384xbf16>
    %62 = vector.shape_cast %61 : vector<16x16x384xbf16> to vector<256x384xbf16>
    %c0_58 = arith.constant 0 : index
    %c0_59 = arith.constant 0 : index
    %c0_60 = arith.constant 0 : index
    %63 = vector.load %arg4[%c0_58, %c0_59, %c0_60] : memref<3x384x128xbf16, #tpu.memory_space<vmem>>, vector<1x384x128xbf16>
    %64 = vector.shape_cast %63 : vector<1x384x128xbf16> to vector<384x128xbf16>
    %cst_61 = arith.constant dense<0.000000e+00> : vector<256x128xf32>
    %65 = tpu.matmul %62, %64, %cst_61 {dimension_numbers = #tpu.dot_dimension_numbers<[1], [0], [0], [1], [0, 0, 1, 1], [], []>} : vector<256x384xbf16>, vector<384x128xbf16>, vector<256x128xf32> -> vector<256x128xf32>
    %c0_62 = arith.constant 0 : index
    %c0_63 = arith.constant 0 : index
    %66 = vector.load %arg9[%c0_62, %c0_63] : memref<256x128xf32, #tpu.memory_space<vmem>>, vector<256x128xf32>
    tpu.vector_store %arg9[%c0_62, %c0_63], %65 {strides = array<i32>} : memref<256x128xf32, #tpu.memory_space<vmem>>, vector<256x128xf32>,
    %c1_64 = arith.constant 1 : index
    %c7_65 = arith.constant 7 : index
    %c0_66 = arith.constant 0 : index
    %67 = vector.load %arg8[%c1_64, %c7_65, %c0_66] : memref<18x32x128xbf16, #tpu.memory_space<vmem>>, vector<16x16x128xbf16>
    %c1_67 = arith.constant 1 : index
    %c8_68 = arith.constant 8 : index
    %c0_69 = arith.constant 0 : index
    %68 = vector.load %arg8[%c1_67, %c8_68, %c0_69] : memref<18x32x128xbf16, #tpu.memory_space<vmem>>, vector<16x16x128xbf16>
    %c1_70 = arith.constant 1 : index
    %c9_71 = arith.constant 9 : index
    %c0_72 = arith.constant 0 : index
    %69 = vector.load %arg8[%c1_70, %c9_71, %c0_72] : memref<18x32x128xbf16, #tpu.memory_space<vmem>>, vector<16x16x128xbf16>
    %70 = tpu.concatenate %67, %68, %69 in 2 : vector<16x16x128xbf16>, vector<16x16x128xbf16>, vector<16x16x128xbf16> -> vector<16x16x384xbf16>
    %71 = vector.shape_cast %70 : vector<16x16x384xbf16> to vector<256x384xbf16>
    %c1_73 = arith.constant 1 : index
    %c0_74 = arith.constant 0 : index
    %c0_75 = arith.constant 0 : index
    %72 = vector.load %arg4[%c1_73, %c0_74, %c0_75] : memref<3x384x128xbf16, #tpu.memory_space<vmem>>, vector<1x384x128xbf16>
    %73 = vector.shape_cast %72 : vector<1x384x128xbf16> to vector<384x128xbf16>
    %cst_76 = arith.constant dense<0.000000e+00> : vector<256x128xf32>
    %74 = tpu.matmul %71, %73, %cst_76 {dimension_numbers = #tpu.dot_dimension_numbers<[1], [0], [0], [1], [0, 0, 1, 1], [], []>} : vector<256x384xbf16>, vector<384x128xbf16>, vector<256x128xf32> -> vector<256x128xf32>
    %c0_77 = arith.constant 0 : index
    %c0_78 = arith.constant 0 : index
    %75 = vector.load %arg9[%c0_77, %c0_78] : memref<256x128xf32, #tpu.memory_space<vmem>>, vector<256x128xf32>
    %76 = arith.addf %75, %74 : vector<256x128xf32>
    %c0_79 = arith.constant 0 : index
    %c0_80 = arith.constant 0 : index
    %77 = vector.load %arg9[%c0_79, %c0_80] : memref<256x128xf32, #tpu.memory_space<vmem>>, vector<256x128xf32>
    tpu.vector_store %arg9[%c0_79, %c0_80], %76 {strides = array<i32>} : memref<256x128xf32, #tpu.memory_space<vmem>>, vector<256x128xf32>,
    %c2_81 = arith.constant 2 : index
    %c7_82 = arith.constant 7 : index
    %c0_83 = arith.constant 0 : index
    %78 = vector.load %arg8[%c2_81, %c7_82, %c0_83] : memref<18x32x128xbf16, #tpu.memory_space<vmem>>, vector<16x16x128xbf16>
    %c2_84 = arith.constant 2 : index
    %c8_85 = arith.constant 8 : index
    %c0_86 = arith.constant 0 : index
    %79 = vector.load %arg8[%c2_84, %c8_85, %c0_86] : memref<18x32x128xbf16, #tpu.memory_space<vmem>>, vector<16x16x128xbf16>
    %c2_87 = arith.constant 2 : index
    %c9_88 = arith.constant 9 : index
    %c0_89 = arith.constant 0 : index
    %80 = vector.load %arg8[%c2_87, %c9_88, %c0_89] : memref<18x32x128xbf16, #tpu.memory_space<vmem>>, vector<16x16x128xbf16>
    %81 = tpu.concatenate %78, %79, %80 in 2 : vector<16x16x128xbf16>, vector<16x16x128xbf16>, vector<16x16x128xbf16> -> vector<16x16x384xbf16>
    %82 = vector.shape_cast %81 : vector<16x16x384xbf16> to vector<256x384xbf16>
    %c2_90 = arith.constant 2 : index
    %c0_91 = arith.constant 0 : index
    %c0_92 = arith.constant 0 : index
    %83 = vector.load %arg4[%c2_90, %c0_91, %c0_92] : memref<3x384x128xbf16, #tpu.memory_space<vmem>>, vector<1x384x128xbf16>
    %84 = vector.shape_cast %83 : vector<1x384x128xbf16> to vector<384x128xbf16>
    %cst_93 = arith.constant dense<0.000000e+00> : vector<256x128xf32>
    %85 = tpu.matmul %82, %84, %cst_93 {dimension_numbers = #tpu.dot_dimension_numbers<[1], [0], [0], [1], [0, 0, 1, 1], [], []>} : vector<256x384xbf16>, vector<384x128xbf16>, vector<256x128xf32> -> vector<256x128xf32>
    %c0_94 = arith.constant 0 : index
    %c0_95 = arith.constant 0 : index
    %86 = vector.load %arg9[%c0_94, %c0_95] : memref<256x128xf32, #tpu.memory_space<vmem>>, vector<256x128xf32>
    %87 = arith.addf %86, %85 : vector<256x128xf32>
    %c0_96 = arith.constant 0 : index
    %c0_97 = arith.constant 0 : index
    %88 = vector.load %arg9[%c0_96, %c0_97] : memref<256x128xf32, #tpu.memory_space<vmem>>, vector<256x128xf32>
    tpu.vector_store %arg9[%c0_96, %c0_97], %87 {strides = array<i32>} : memref<256x128xf32, #tpu.memory_space<vmem>>, vector<256x128xf32>,
    %89 = vector.shape_cast %14 : vector<16x16x128xbf16> to vector<256x128xbf16>
    %c0_98 = arith.constant 0 : index
    %c0_99 = arith.constant 0 : index
    %90 = vector.load %arg5[%c0_98, %c0_99] : memref<128x128xbf16, #tpu.memory_space<vmem>>, vector<128x128xbf16>
    %cst_100 = arith.constant dense<0.000000e+00> : vector<256x128xf32>
    %91 = tpu.matmul %89, %90, %cst_100 {dimension_numbers = #tpu.dot_dimension_numbers<[1], [0], [0], [1], [0, 0, 1, 1], [], []>} : vector<256x128xbf16>, vector<128x128xbf16>, vector<256x128xf32> -> vector<256x128xf32>
    %c0_101 = arith.constant 0 : index
    %c0_102 = arith.constant 0 : index
    %92 = vector.load %arg9[%c0_101, %c0_102] : memref<256x128xf32, #tpu.memory_space<vmem>>, vector<256x128xf32>
    %93 = arith.addf %92, %91 : vector<256x128xf32>
    %c0_103 = arith.constant 0 : index
    %c0_104 = arith.constant 0 : index
    %94 = vector.load %arg6[%c0_103, %c0_104] : memref<1x128xf32, #tpu.memory_space<vmem>>, vector<1x128xf32>
    %95 = vector.broadcast %94 : vector<1x128xf32> to vector<256x128xf32>
    %96 = arith.addf %93, %95 : vector<256x128xf32>
    %cst_105 = arith.constant 0.000000e+00 : f32
    %97 = vector.broadcast %cst_105 : f32 to vector<256x128xf32>
    %98 = arith.maximumf %96, %97 : vector<256x128xf32>
    %99 = vector.shape_cast %98 : vector<256x128xf32> to vector<16x16x128xf32>
    %c0_106 = arith.constant 0 : index
    %c0_107 = arith.constant 0 : index
    %c0_108 = arith.constant 0 : index
    %c0_109 = arith.constant 0 : index
    %100 = vector.load %arg7[%c0_106, %c0_107, %c0_108, %c0_109] : memref<1x16x16x128xf32, #tpu.memory_space<vmem>>, vector<1x16x16x128xf32>
    %101 = vector.shape_cast %100 : vector<1x16x16x128xf32> to vector<16x16x128xf32>
    %102 = vector.shape_cast %99 : vector<16x16x128xf32> to vector<1x16x16x128xf32>
    tpu.vector_store %arg7[%c0_106, %c0_107, %c0_108, %c0_109], %102 {strides = array<i32>} : memref<1x16x16x128xf32, #tpu.memory_space<vmem>>, vector<1x16x16x128xf32>,
    return
  }
  func.func @transform_0(%arg0: i32) -> (i32, i32, i32, i32) {
    %c0_i32 = arith.constant 0 : i32
    %c0_i32_0 = arith.constant 0 : i32
    %c0_i32_1 = arith.constant 0 : i32
    %c0_i32_2 = arith.constant 0 : i32
    return %arg0, %c0_i32, %c0_i32_0, %c0_i32_1 : i32, i32, i32, i32
  }
  func.func @transform_1(%arg0: i32) -> (i32, i32, i32) {
    %c0_i32 = arith.constant 0 : i32
    %c0_i32_0 = arith.constant 0 : i32
    %c0_i32_1 = arith.constant 0 : i32
    %c0_i32_2 = arith.constant 0 : i32
    return %c0_i32, %c0_i32_0, %c0_i32_1 : i32, i32, i32
  }
  func.func @transform_2(%arg0: i32) -> (i32, i32) {
    %c0_i32 = arith.constant 0 : i32
    %c0_i32_0 = arith.constant 0 : i32
    %c0_i32_1 = arith.constant 0 : i32
    return %c0_i32, %c0_i32_0 : i32, i32
  }
  func.func @transform_3(%arg0: i32) -> (i32, i32, i32) {
    %c0_i32 = arith.constant 0 : i32
    %c0_i32_0 = arith.constant 0 : i32
    %c0_i32_1 = arith.constant 0 : i32
    %c0_i32_2 = arith.constant 0 : i32
    return %c0_i32, %c0_i32_0, %c0_i32_1 : i32, i32, i32
  }
  func.func @transform_4(%arg0: i32) -> (i32, i32) {
    %c0_i32 = arith.constant 0 : i32
    %c0_i32_0 = arith.constant 0 : i32
    %c0_i32_1 = arith.constant 0 : i32
    return %c0_i32, %c0_i32_0 : i32, i32
  }
  func.func @transform_5(%arg0: i32) -> (i32, i32) {
    %c0_i32 = arith.constant 0 : i32
    %c0_i32_0 = arith.constant 0 : i32
    %c0_i32_1 = arith.constant 0 : i32
    return %c0_i32, %c0_i32_0 : i32, i32
  }
  func.func @transform_6(%arg0: i32) -> (i32, i32, i32, i32) {
    %c0_i32 = arith.constant 0 : i32
    %c0_i32_0 = arith.constant 0 : i32
    %c0_i32_1 = arith.constant 0 : i32
    %c0_i32_2 = arith.constant 0 : i32
    return %arg0, %c0_i32, %c0_i32_0, %c0_i32_1 : i32, i32, i32, i32
  }
}

</mosaic_0001>

<llo_original>
// kernel: residual_block_forward.1
$region0: #{residual_block_forward.1}
  #allocation0 [shape = 'u32[]', space=smem, size = 0x4, offset = 0x4, fixed_abs, tag = 'smem constant byte address 0x4 - core index']
  #allocation1 [shape = 'u32[144,128]{1,0:T(1,128)}', space=vmem, size = 0x12000, scoped, tag = 'internal scratch']
  #allocation2 [shape = 'bf16[18,32,128]{2,1,0:T(8,128)(2,1)}', space=vmem, size = 0x24000, scoped, tag = 'scratch operand']
  #allocation3 [shape = 'f32[256,128]{1,0:T(8,128)}', space=vmem, size = 0x20000, scoped, tag = 'scratch operand']
  %s0 = inlined_call_operand.vmem [shape: bf16[2,18,18,128], index: 0, kind: input, shape index: {}]
  %s1 = inlined_call_operand.vmem [shape: bf16[3,384,128], index: 1, kind: input, shape index: {}]
  %s2 = inlined_call_operand.vmem [shape: f32[1,128], index: 2, kind: input, shape index: {}]
  %s3 = inlined_call_operand.vmem [shape: bf16[3,384,128], index: 3, kind: input, shape index: {}]
  %s4 = inlined_call_operand.vmem [shape: bf16[128,128], index: 4, kind: input, shape index: {}]
  %s5 = inlined_call_operand.vmem [shape: f32[1,128], index: 5, kind: input, shape index: {}]
  %s6 = inlined_call_operand.vmem [shape: f32[2,16,16,128], index: 6, kind: output, shape index: {}]
  %s7 = sld [smem:[#allocation0]]
  $region57: #{residual_block_forward.1} parent=0
    _
  %s9 = ssub.s32 1, %s7
  %s10 = scalar_select 0, %s9, %s7
  loop: start=0, step=1, limit=4
  $region2: #{residual_block_forward.1} parent=0 // loop_pre_header
    _
  $region3: #{residual_block_forward.1} parent=0 // loop_header
    %s12 = sphi 0, %s16
    %p13 = scmp.ge.s32.totalorder %s12, 4
    %s22 = sphi 0, %s24
    %s25 = sphi 0, %s22
    %s26 = sphi 0, %s25
    %s42 = sphi 0, %s26
    %s46 = sphi 0, %s46
    %s48 = sphi 0, %s46
    %s49 = sphi 0, %s48
    %s63 = sphi 0, %s49
    %s67 = sphi 0, %s67
    %s69 = sphi 0, %s67
    %s70 = sphi 0, %s69
    %s84 = sphi 0, %s70
    %s88 = sphi 0, %s88
    %s90 = sphi 0, %s88
    %s91 = sphi 0, %s90
    %s105 = sphi 0, %s91
    %s109 = sphi 0, %s109
    %s111 = sphi 0, %s109
    %s112 = sphi 0, %s111
    %s126 = sphi 0, %s112
    %s130 = sphi 0, %s130
    %s132 = sphi 0, %s130
    %s133 = sphi 0, %s132
    %s147 = sphi 0, %s133
    %s153 = sphi 0, %s155
    %s156 = sphi 0, %s153
    %s157 = sphi 0, %s156
    %s173 = sphi 0, %s157
  $region4: #{residual_block_forward.1} parent=0 // loop_header_branch
    %15 = sbr.rel (%p13) target = $region8
  $region5: #{residual_block_forward.1} parent=0 // loop_body
    %s17 = ssub.s32 %s12, 1
    %s18 = ssub.s32 %s12, 2
    %s19 = sadd.s32 %s12, 1
    %s20 = ssub.s32 %s12, %s19
    %p21 = scmp.eq.s32.totalorder %s20, 0
    %s23 = sadd.s32 %s22, 1
    %s24 = scalar_select %p21, %s22, %s23
    %p27 = pneg %p21
    %p28 = scmp.eq.s32.totalorder %s12, 1
    %p29 = por %p27, %p28
    %p30 = scmp.ne.s32.totalorder %s22, %s25
    %p31 = scmp.eq.s32.totalorder %s12, 0
    %p32 = por %p30, %p31
    %p33 = scmp.ne.s32.totalorder %s22, %s25
    %p34 = scmp.eq.s32.totalorder %s17, 1
    %p35 = por %p33, %p34
    %p36 = scmp.ne.s32.totalorder %s25, %s26
    %p37 = scmp.eq.s32.totalorder %s17, 0
    %p38 = por %p36, %p37
    %p39 = scmp.ne.s32.totalorder %s25, %s26
    %p40 = scmp.eq.s32.totalorder %s18, 1
    %p41 = por %p39, %p40
    %p43 = scmp.ne.s32.totalorder %s26, %s42
    %p44 = scmp.eq.s32.totalorder %s18, 0
    %p45 = por %p43, %p44
    %s47 = sadd.s32 %s46, 1
    %p50 = scmp.eq.s32.totalorder %s12, 1
    %p51 = scmp.ne.s32.totalorder %s46, %s48
    %p52 = scmp.eq.s32.totalorder %s12, 0
    %p53 = por %p51, %p52
    %p54 = scmp.ne.s32.totalorder %s46, %s48
    %p55 = scmp.eq.s32.totalorder %s17, 1
    %p56 = por %p54, %p55
    %p57 = scmp.ne.s32.totalorder %s48, %s49
    %p58 = scmp.eq.s32.totalorder %s17, 0
    %p59 = por %p57, %p58
    %p60 = scmp.ne.s32.totalorder %s48, %s49
    %p61 = scmp.eq.s32.totalorder %s18, 1
    %p62 = por %p60, %p61
    %p64 = scmp.ne.s32.totalorder %s49, %s63
    %p65 = scmp.eq.s32.totalorder %s18, 0
    %p66 = por %p64, %p65
    %s68 = sadd.s32 %s67, 1
    %p71 = scmp.eq.s32.totalorder %s12, 1
    %p72 = scmp.ne.s32.totalorder %s67, %s69
    %p73 = scmp.eq.s32.totalorder %s12, 0
    %p74 = por %p72, %p73
    %p75 = scmp.ne.s32.totalorder %s67, %s69
    %p76 = scmp.eq.s32.totalorder %s17, 1
    %p77 = por %p75, %p76
    %p78 = scmp.ne.s32.totalorder %s69, %s70
    %p79 = scmp.eq.s32.totalorder %s17, 0
    %p80 = por %p78, %p79
    %p81 = scmp.ne.s32.totalorder %s69, %s70
    %p82 = scmp.eq.s32.totalorder %s18, 1
    %p83 = por %p81, %p82
    %p85 = scmp.ne.s32.totalorder %s70, %s84
    %p86 = scmp.eq.s32.totalorder %s18, 0
    %p87 = por %p85, %p86
    %s89 = sadd.s32 %s88, 1
    %p92 = scmp.eq.s32.totalorder %s12, 1
    %p93 = scmp.ne.s32.totalorder %s88, %s90
    %p94 = scmp.eq.s32.totalorder %s12, 0
    %p95 = por %p93, %p94
    %p96 = scmp.ne.s32.totalorder %s88, %s90
    %p97 = scmp.eq.s32.totalorder %s17, 1
    %p98 = por %p96, %p97
    %p99 = scmp.ne.s32.totalorder %s90, %s91
    %p100 = scmp.eq.s32.totalorder %s17, 0
    %p101 = por %p99, %p100
    %p102 = scmp.ne.s32.totalorder %s90, %s91
    %p103 = scmp.eq.s32.totalorder %s18, 1
    %p104 = por %p102, %p103
    %p106 = scmp.ne.s32.totalorder %s91, %s105
    %p107 = scmp.eq.s32.totalorder %s18, 0
    %p108 = por %p106, %p107
    %s110 = sadd.s32 %s109, 1
    %p113 = scmp.eq.s32.totalorder %s12, 1
    %p114 = scmp.ne.s32.totalorder %s109, %s111
    %p115 = scmp.eq.s32.totalorder %s12, 0
    %p116 = por %p114, %p115
    %p117 = scmp.ne.s32.totalorder %s109, %s111
    %p118 = scmp.eq.s32.totalorder %s17, 1
    %p119 = por %p117, %p118
    %p120 = scmp.ne.s32.totalorder %s111, %s112
    %p121 = scmp.eq.s32.totalorder %s17, 0
    %p122 = por %p120, %p121
    %p123 = scmp.ne.s32.totalorder %s111, %s112
    %p124 = scmp.eq.s32.totalorder %s18, 1
    %p125 = por %p123, %p124
    %p127 = scmp.ne.s32.totalorder %s112, %s126
    %p128 = scmp.eq.s32.totalorder %s18, 0
    %p129 = por %p127, %p128
    %s131 = sadd.s32 %s130, 1
    %p134 = scmp.eq.s32.totalorder %s12, 1
    %p135 = scmp.ne.s32.totalorder %s130, %s132
    %p136 = scmp.eq.s32.totalorder %s12, 0
    %p137 = por %p135, %p136
    %p138 = scmp.ne.s32.totalorder %s130, %s132
    %p139 = scmp.eq.s32.totalorder %s17, 1
    %p140 = por %p138, %p139
    %p141 = scmp.ne.s32.totalorder %s132, %s133
    %p142 = scmp.eq.s32.totalorder %s17, 0
    %p143 = por %p141, %p142
    %p144 = scmp.ne.s32.totalorder %s132, %s133
    %p145 = scmp.eq.s32.totalorder %s18, 1
    %p146 = por %p144, %p145
    %p148 = scmp.ne.s32.totalorder %s133, %s147
    %p149 = scmp.eq.s32.totalorder %s18, 0
    %p150 = por %p148, %p149
    %s151 = ssub.s32 %s12, %s19
    %p152 = scmp.eq.s32.totalorder %s151, 0
    %s154 = sadd.s32 %s153, 1
    %s155 = scalar_select %p152, %s153, %s154
    %p158 = pneg %p152
    %p159 = scmp.eq.s32.totalorder %s12, 1
    %p160 = por %p158, %p159
    %p161 = scmp.ne.s32.totalorder %s153, %s156
    %p162 = scmp.eq.s32.totalorder %s12, 0
    %p163 = por %p161, %p162
    %p164 = scmp.ne.s32.totalorder %s153, %s156
    %p165 = scmp.eq.s32.totalorder %s17, 1
    %p166 = por %p164, %p165
    %p167 = scmp.ne.s32.totalorder %s156, %s157
    %p168 = scmp.eq.s32.totalorder %s17, 0
    %p169 = por %p167, %p168
    %p170 = scmp.ne.s32.totalorder %s156, %s157
    %p171 = scmp.eq.s32.totalorder %s18, 1
    %p172 = por %p170, %p171
    %p174 = scmp.ne.s32.totalorder %s157, %s173
    %p175 = scmp.eq.s32.totalorder %s18, 0
    %p176 = por %p174, %p175
    %p177 = scmp.le.s32.totalorder 1, %s12
    %p178 = scmp.lt.s32.totalorder %s12, 3
    %p179 = pnand %p177, %p178
    %p180 = pneg %p179
    // Predicated region
    $region9: #{residual_block_forward.1} parent=5 // pred_check
      _
    $region10: #{residual_block_forward.1} parent=5 // pred_check_branch
      %182 = sbr.rel (%p179) target = $region12
    $region11: #{residual_block_forward.1} parent=5 // pred_region
      %s183 = ssub.s32 %s12, 1
      // Predicated region
      $region13: #{residual_block_forward.1} parent=11 // pred_check
        %p184 = pneg %p59
      $region14: #{residual_block_forward.1} parent=11 // pred_check_branch
        %186 = sbr.rel (%p184) target = $region16
      $region15: #{residual_block_forward.1} parent=11 // pred_region
        _
      $region16: #{residual_block_forward.1} parent=11 // pred_fallthru
        _
      // Predicated region
      $region17: #{residual_block_forward.1} parent=11 // pred_check
        %p187 = pneg %p80
      $region18: #{residual_block_forward.1} parent=11 // pred_check_branch
        %189 = sbr.rel (%p187) target = $region20
      $region19: #{residual_block_forward.1} parent=11 // pred_region
        _
      $region20: #{residual_block_forward.1} parent=11 // pred_fallthru
        _
      // Predicated region
      $region21: #{residual_block_forward.1} parent=11 // pred_check
        %p190 = pneg %p101
      $region22: #{residual_block_forward.1} parent=11 // pred_check_branch
        %192 = sbr.rel (%p190) target = $region24
      $region23: #{residual_block_forward.1} parent=11 // pred_region
        _
      $region24: #{residual_block_forward.1} parent=11 // pred_fallthru
        _
      // Predicated region
      $region25: #{residual_block_forward.1} parent=11 // pred_check
        %p193 = pneg %p122
      $region26: #{residual_block_forward.1} parent=11 // pred_check_branch
        %195 = sbr.rel (%p193) target = $region28
      $region27: #{residual_block_forward.1} parent=11 // pred_region
        _
      $region28: #{residual_block_forward.1} parent=11 // pred_fallthru
        _
      // Predicated region
      $region29: #{residual_block_forward.1} parent=11 // pred_check
        %p196 = pneg %p143
      $region30: #{residual_block_forward.1} parent=11 // pred_check_branch
        %198 = sbr.rel (%p196) target = $region32
      $region31: #{residual_block_forward.1} parent=11 // pred_region
        _
      $region32: #{residual_block_forward.1} parent=11 // pred_fallthru
        _
    $region12: #{residual_block_forward.1} parent=5 // pred_fallthru
      _
    %p199 = scmp.lt.s32.totalorder %s12, 2
    // Predicated region
    $region33: #{residual_block_forward.1} parent=5 // pred_check
      %p200 = pneg %p199
    $region34: #{residual_block_forward.1} parent=5 // pred_check_branch
      %202 = sbr.rel (%p200) target = $region36
    $region35: #{residual_block_forward.1} parent=5 // pred_region
      // Predicated region
      $region37: #{residual_block_forward.1} parent=35 // pred_check
        %p203 = pneg %p32
      $region38: #{residual_block_forward.1} parent=35 // pred_check_branch
        %205 = sbr.rel (%p203) target = $region40
      $region39: #{residual_block_forward.1} parent=35 // pred_region
        %p206 = scmp.lt.s32.totalorder %s12, 1
        %s207 = scalar_select %p206, %s12, 1
        %s208 = smul.addr %s207, 54
        %s209 = smul.addr %s208, 4
        %s210 = scalar_lea.vmem %s0, %s209
      $region40: #{residual_block_forward.1} parent=35 // pred_fallthru
        _
    $region36: #{residual_block_forward.1} parent=5 // pred_fallthru
      _
    %p211 = scmp.le.s32.totalorder 1, %s12
    %p212 = scmp.lt.s32.totalorder %s12, 3
    %p213 = pnand %p211, %p212
    %p214 = pneg %p213
    // Predicated region
    $region41: #{residual_block_forward.1} parent=5 // pred_check
      _
    $region42: #{residual_block_forward.1} parent=5 // pred_check_branch
      %216 = sbr.rel (%p213) target = $region44
    $region43: #{residual_block_forward.1} parent=5 // pred_region
      %s217 = ssub.s32 %s12, 1
      %p218 = scmp.lt.s32.totalorder %s17, 1
      %s219 = scalar_select %p218, %s17, 1
      %s220 = smul.addr %s219, 54
      %s221 = smul.addr %s220, 4
      %s222 = scalar_lea.vmem %s0, %s221
      %p223 = pneg %p38
      %p224 = pneg %p35
      %p225 = pneg %p59
      %p226 = pneg %p56
      %p227 = pneg %p80
      %p228 = pneg %p77
      %p229 = pneg %p101
      %p230 = pneg %p98
      %p231 = pneg %p122
      %p232 = pneg %p119
      %p233 = pneg %p143
      %p234 = pneg %p140
      %p235 = pneg %p169
      %p236 = pneg %p166
      %p237 = scmp.lt.s32.totalorder %s17, 1
      %s238 = scalar_select %p237, %s17, 1
      %s239 = smul.addr %s238, 32
      %s240 = smul.addr %s239, 8
      %s241 = scalar_lea.vmem %s6, %s240
      %p242 = scmp.lt.s32.totalorder %s17, 1
      %s243 = scalar_select %p242, %s17, 1
      %s244 = smul.addr %s243, 54
      %s245 = smul.addr %s244, 4
      %s246 = scalar_lea.vmem %s0, %s245
      %p247 = scmp.lt.s32.totalorder %s17, 1
      %s248 = scalar_select %p247, %s17, 1
      %s249 = smul.addr %s248, 32
      %s250 = smul.addr %s249, 8
      %s251 = scalar_lea.vmem %s6, %s250
      %v253 = vld [vmem:[%s246] sm:$0xf]
      %v254 = vld [vmem:[%s246 + $0x4] sm:$0xf]
      %v255 = vld [vmem:[%s246 + $0x8] sm:$0x1]
      %v256 = vld [vmem:[%s246 + $0xc] sm:$0xf]
      %v257 = vld [vmem:[%s246 + $0x10] sm:$0xf]
      %v258 = vld [vmem:[%s246 + $0x14] sm:$0x1]
      %v259 = vld [vmem:[%s246 + $0x18] sm:$0xf]
      %v260 = vld [vmem:[%s246 + $0x1c] sm:$0xf]
      %v261 = vld [vmem:[%s246 + $0x20] sm:$0x1]
      %v262 = vld [vmem:[%s246 + $0x24] sm:$0xf]
      %v263 = vld [vmem:[%s246 + $0x28] sm:$0xf]
      %v264 = vld [vmem:[%s246 + $0x2c] sm:$0x1]
      %v265 = vld [vmem:[%s246 + $0x30] sm:$0xf]
      %v266 = vld [vmem:[%s246 + $0x34] sm:$0xf]
      %v267 = vld [vmem:[%s246 + $0x38] sm:$0x1]
      %v268 = vld [vmem:[%s246 + $0x3c] sm:$0xf]
      %v269 = vld [vmem:[%s246 + $0x40] sm:$0xf]
      %v270 = vld [vmem:[%s246 + $0x44] sm:$0x1]
      %v271 = vld [vmem:[%s246 + $0x48] sm:$0xf]
      %v272 = vld [vmem:[%s246 + $0x4c] sm:$0xf]
      %v273 = vld [vmem:[%s246 + $0x50] sm:$0x1]
      %v274 = vld [vmem:[%s246 + $0x54] sm:$0xf]
      %v275 = vld [vmem:[%s246 + $0x58] sm:$0xf]
      %v276 = vld [vmem:[%s246 + $0x5c] sm:$0x1]
      %v277 = vld [vmem:[%s246 + $0x60] sm:$0xf]
      %v278 = vld [vmem:[%s246 + $0x64] sm:$0xf]
      %v279 = vld [vmem:[%s246 + $0x68] sm:$0x1]
      %v280 = vld [vmem:[%s246 + $0x6c] sm:$0xf]
      %v281 = vld [vmem:[%s246 + $0x70] sm:$0xf]
      %v282 = vld [vmem:[%s246 + $0x74] sm:$0x1]
      %v283 = vld [vmem:[%s246 + $0x78] sm:$0xf]
      %v284 = vld [vmem:[%s246 + $0x7c] sm:$0xf]
      %v285 = vld [vmem:[%s246 + $0x80] sm:$0x1]
      %v286 = vld [vmem:[%s246 + $0x84] sm:$0xf]
      %v287 = vld [vmem:[%s246 + $0x88] sm:$0xf]
      %v288 = vld [vmem:[%s246 + $0x8c] sm:$0x1]
      %v289 = vld [vmem:[%s246 + $0x90] sm:$0xf]
      %v290 = vld [vmem:[%s246 + $0x94] sm:$0xf]
      %v291 = vld [vmem:[%s246 + $0x98] sm:$0x1]
      %v292 = vld [vmem:[%s246 + $0x9c] sm:$0xf]
      %v293 = vld [vmem:[%s246 + $0xa0] sm:$0xf]
      %v294 = vld [vmem:[%s246 + $0xa4] sm:$0x1]
      %v295 = vld [vmem:[%s246 + $0xa8] sm:$0xf]
      %v296 = vld [vmem:[%s246 + $0xac] sm:$0xf]
      %v297 = vld [vmem:[%s246 + $0xb0] sm:$0x1]
      %v298 = vld [vmem:[%s246 + $0xb4] sm:$0xf]
      %v299 = vld [vmem:[%s246 + $0xb8] sm:$0xf]
      %v300 = vld [vmem:[%s246 + $0xbc] sm:$0x1]
      %v333 = vunpack.c.l.b16 %v253
      %v334 = vunpack.c.l.b16 %v254
      %v335 = vunpack.c.l.b16 %v256
      %v336 = vunpack.c.l.b16 %v257
      %v337 = vunpack.c.l.b16 %v259
      %v338 = vunpack.c.l.b16 %v260
      %v339 = vunpack.c.l.b16 %v262
      %v340 = vunpack.c.l.b16 %v263
      %v341 = vunpack.c.l.b16 %v265
      %v342 = vunpack.c.l.b16 %v266
      %v343 = vunpack.c.l.b16 %v268
      %v344 = vunpack.c.l.b16 %v269
      %v345 = vunpack.c.l.b16 %v271
      %v346 = vunpack.c.l.b16 %v272
      %v347 = vunpack.c.l.b16 %v274
      %v348 = vunpack.c.l.b16 %v275
      %v349 = vunpack.c.l.b16 %v277
      %v350 = vunpack.c.l.b16 %v278
      %v351 = vunpack.c.l.b16 %v280
      %v352 = vunpack.c.l.b16 %v281
      %v353 = vunpack.c.l.b16 %v283
      %v354 = vunpack.c.l.b16 %v284
      %v355 = vunpack.c.l.b16 %v286
      %v356 = vunpack.c.l.b16 %v287
      %v357 = vunpack.c.l.b16 %v289
      %v358 = vunpack.c.l.b16 %v290
      %v359 = vunpack.c.l.b16 %v292
      %v360 = vunpack.c.l.b16 %v293
      %v361 = vunpack.c.l.b16 %v295
      %v362 = vunpack.c.l.b16 %v296
      %v363 = vunpack.c.l.b16 %v298
      %v364 = vunpack.c.l.b16 %v299
      %v365 = vpack.c.b16 %v334, %v333
      %v366 = vpack.c.b16 %v336, %v335
      %v367 = vpack.c.b16 %v338, %v337
      %v368 = vpack.c.b16 %v340, %v339
      %v369 = vpack.c.b16 %v342, %v341
      %v370 = vpack.c.b16 %v344, %v343
      %v371 = vpack.c.b16 %v346, %v345
      %v372 = vpack.c.b16 %v348, %v347
      %v373 = vpack.c.b16 %v350, %v349
      %v374 = vpack.c.b16 %v352, %v351
      %v375 = vpack.c.b16 %v354, %v353
      %v376 = vpack.c.b16 %v356, %v355
      %v377 = vpack.c.b16 %v358, %v357
      %v378 = vpack.c.b16 %v360, %v359
      %v379 = vpack.c.b16 %v362, %v361
      %v380 = vpack.c.b16 %v364, %v363
      %v413 = vunpack.c.l.b16 %v255
      %v414 = vunpack.c.l.b16 %v258
      %v415 = vunpack.c.l.b16 %v261
      %v416 = vunpack.c.l.b16 %v264
      %v417 = vunpack.c.l.b16 %v267
      %v418 = vunpack.c.l.b16 %v270
      %v419 = vunpack.c.l.b16 %v273
      %v420 = vunpack.c.l.b16 %v276
      %v421 = vunpack.c.l.b16 %v279
      %v422 = vunpack.c.l.b16 %v282
      %v423 = vunpack.c.l.b16 %v285
      %v424 = vunpack.c.l.b16 %v288
      %v425 = vunpack.c.l.b16 %v291
      %v426 = vunpack.c.l.b16 %v294
      %v427 = vunpack.c.l.b16 %v297
      %v428 = vunpack.c.l.b16 %v300
      %v429 = vpack.c.b16 %v413, %v413
      %v430 = vpack.c.b16 %v414, %v414
      %v431 = vpack.c.b16 %v415, %v415
      %v432 = vpack.c.b16 %v416, %v416
      %v433 = vpack.c.b16 %v417, %v417
      %v434 = vpack.c.b16 %v418, %v418
      %v435 = vpack.c.b16 %v419, %v419
      %v436 = vpack.c.b16 %v420, %v420
      %v437 = vpack.c.b16 %v421, %v421
      %v438 = vpack.c.b16 %v422, %v422
      %v439 = vpack.c.b16 %v423, %v423
      %v440 = vpack.c.b16 %v424, %v424
      %v441 = vpack.c.b16 %v425, %v425
      %v442 = vpack.c.b16 %v426, %v426
      %v443 = vpack.c.b16 %v427, %v427
      %v444 = vpack.c.b16 %v428, %v428
      %vm445 = vsmask.f32 7424
      %v447 = vshrl.u32 %v365, 16
      %v449 = vshll.u32 %v365, 16
      %v451 = vrot.slane %v449, 1
      %v452 = vor.u32 %v447, %v451
      %v454 = vshll.u32 %v429, 16
      %v456 = vrot.slane %v454, 1
      %v457 = vsel %vm445, %v452, %v456
      %v459 = vshrl.u32 %v366, 16
      %v461 = vshll.u32 %v366, 16
      %v463 = vrot.slane %v461, 1
      %v464 = vor.u32 %v459, %v463
      %v466 = vshll.u32 %v430, 16
      %v468 = vrot.slane %v466, 1
      %v469 = vsel %vm445, %v464, %v468
      %v471 = vshrl.u32 %v367, 16
      %v473 = vshll.u32 %v367, 16
      %v475 = vrot.slane %v473, 1
      %v476 = vor.u32 %v471, %v475
      %v478 = vshll.u32 %v431, 16
      %v480 = vrot.slane %v478, 1
      %v481 = vsel %vm445, %v476, %v480
      %v483 = vshrl.u32 %v368, 16
      %v485 = vshll.u32 %v368, 16
      %v487 = vrot.slane %v485, 1
      %v488 = vor.u32 %v483, %v487
      %v490 = vshll.u32 %v432, 16
      %v492 = vrot.slane %v490, 1
      %v493 = vsel %vm445, %v488, %v492
      %v495 = vshrl.u32 %v369, 16
      %v497 = vshll.u32 %v369, 16
      %v499 = vrot.slane %v497, 1
      %v500 = vor.u32 %v495, %v499
      %v502 = vshll.u32 %v433, 16
      %v504 = vrot.slane %v502, 1
      %v505 = vsel %vm445, %v500, %v504
      %v507 = vshrl.u32 %v370, 16
      %v509 = vshll.u32 %v370, 16
      %v511 = vrot.slane %v509, 1
      %v512 = vor.u32 %v507, %v511
      %v514 = vshll.u32 %v434, 16
      %v516 = vrot.slane %v514, 1
      %v517 = vsel %vm445, %v512, %v516
      %v519 = vshrl.u32 %v371, 16
      %v521 = vshll.u32 %v371, 16
      %v523 = vrot.slane %v521, 1
      %v524 = vor.u32 %v519, %v523
      %v526 = vshll.u32 %v435, 16
      %v528 = vrot.slane %v526, 1
      %v529 = vsel %vm445, %v524, %v528
      %v531 = vshrl.u32 %v372, 16
      %v533 = vshll.u32 %v372, 16
      %v535 = vrot.slane %v533, 1
      %v536 = vor.u32 %v531, %v535
      %v538 = vshll.u32 %v436, 16
      %v540 = vrot.slane %v538, 1
      %v541 = vsel %vm445, %v536, %v540
      %v543 = vshrl.u32 %v373, 16
      %v545 = vshll.u32 %v373, 16
      %v547 = vrot.slane %v545, 1
      %v548 = vor.u32 %v543, %v547
      %v550 = vshll.u32 %v437, 16
      %v552 = vrot.slane %v550, 1
      %v553 = vsel %vm445, %v548, %v552
      %v555 = vshrl.u32 %v374, 16
      %v557 = vshll.u32 %v374, 16
      %v559 = vrot.slane %v557, 1
      %v560 = vor.u32 %v555, %v559
      %v562 = vshll.u32 %v438, 16
      %v564 = vrot.slane %v562, 1
      %v565 = vsel %vm445, %v560, %v564
      %v567 = vshrl.u32 %v375, 16
      %v569 = vshll.u32 %v375, 16
      %v571 = vrot.slane %v569, 1
      %v572 = vor.u32 %v567, %v571
      %v574 = vshll.u32 %v439, 16
      %v576 = vrot.slane %v574, 1
      %v577 = vsel %vm445, %v572, %v576
      %v579 = vshrl.u32 %v376, 16
      %v581 = vshll.u32 %v376, 16
      %v583 = vrot.slane %v581, 1
      %v584 = vor.u32 %v579, %v583
      %v586 = vshll.u32 %v440, 16
      %v588 = vrot.slane %v586, 1
      %v589 = vsel %vm445, %v584, %v588
      %v591 = vshrl.u32 %v377, 16
      %v593 = vshll.u32 %v377, 16
      %v595 = vrot.slane %v593, 1
      %v596 = vor.u32 %v591, %v595
      %v598 = vshll.u32 %v441, 16
      %v600 = vrot.slane %v598, 1
      %v601 = vsel %vm445, %v596, %v600
      %v603 = vshrl.u32 %v378, 16
      %v605 = vshll.u32 %v378, 16
      %v607 = vrot.slane %v605, 1
      %v608 = vor.u32 %v603, %v607
      %v610 = vshll.u32 %v442, 16
      %v612 = vrot.slane %v610, 1
      %v613 = vsel %vm445, %v608, %v612
      %v615 = vshrl.u32 %v379, 16
      %v617 = vshll.u32 %v379, 16
      %v619 = vrot.slane %v617, 1
      %v620 = vor.u32 %v615, %v619
      %v622 = vshll.u32 %v443, 16
      %v624 = vrot.slane %v622, 1
      %v625 = vsel %vm445, %v620, %v624
      %v627 = vshrl.u32 %v380, 16
      %v629 = vshll.u32 %v380, 16
      %v631 = vrot.slane %v629, 1
      %v632 = vor.u32 %v627, %v631
      %v634 = vshll.u32 %v444, 16
      %v636 = vrot.slane %v634, 1
      %v637 = vsel %vm445, %v632, %v636
      %vm654 = vcmask 1046528
      %v655 = vrot.slane %v365, 1
      %v656 = vrot.slane %v429, 1
      %v657 = vsel %vm654, %v655, %v656
      %v658 = vrot.slane %v366, 1
      %v659 = vrot.slane %v430, 1
      %v660 = vsel %vm654, %v658, %v659
      %v661 = vrot.slane %v367, 1
      %v662 = vrot.slane %v431, 1
      %v663 = vsel %vm654, %v661, %v662
      %v664 = vrot.slane %v368, 1
      %v665 = vrot.slane %v432, 1
      %v666 = vsel %vm654, %v664, %v665
      %v667 = vrot.slane %v369, 1
      %v668 = vrot.slane %v433, 1
      %v669 = vsel %vm654, %v667, %v668
      %v670 = vrot.slane %v370, 1
      %v671 = vrot.slane %v434, 1
      %v672 = vsel %vm654, %v670, %v671
      %v673 = vrot.slane %v371, 1
      %v674 = vrot.slane %v435, 1
      %v675 = vsel %vm654, %v673, %v674
      %v676 = vrot.slane %v372, 1
      %v677 = vrot.slane %v436, 1
      %v678 = vsel %vm654, %v676, %v677
      %v679 = vrot.slane %v373, 1
      %v680 = vrot.slane %v437, 1
      %v681 = vsel %vm654, %v679, %v680
      %v682 = vrot.slane %v374, 1
      %v683 = vrot.slane %v438, 1
      %v684 = vsel %vm654, %v682, %v683
      %v685 = vrot.slane %v375, 1
      %v686 = vrot.slane %v439, 1
      %v687 = vsel %vm654, %v685, %v686
      %v688 = vrot.slane %v376, 1
      %v689 = vrot.slane %v440, 1
      %v690 = vsel %vm654, %v688, %v689
      %v691 = vrot.slane %v377, 1
      %v692 = vrot.slane %v441, 1
      %v693 = vsel %vm654, %v691, %v692
      %v694 = vrot.slane %v378, 1
      %v695 = vrot.slane %v442, 1
      %v696 = vsel %vm654, %v694, %v695
      %v697 = vrot.slane %v379, 1
      %v698 = vrot.slane %v443, 1
      %v699 = vsel %vm654, %v697, %v698
      %v700 = vrot.slane %v380, 1
      %v701 = vrot.slane %v444, 1
      %v702 = vsel %vm654, %v700, %v701
      %v719 = vld [vmem:[%s1] sm:$0xf]
      %v720 = vld [vmem:[%s1 + $0x4] sm:$0xf]
      %v721 = vld [vmem:[%s1 + $0x8] sm:$0xf]
      %v722 = vld [vmem:[%s1 + $0xc] sm:$0xf]
      %v723 = vld [vmem:[%s1 + $0x10] sm:$0xf]
      %v724 = vld [vmem:[%s1 + $0x14] sm:$0xf]
      %v725 = vld [vmem:[%s1 + $0x18] sm:$0xf]
      %v726 = vld [vmem:[%s1 + $0x1c] sm:$0xf]
      %v727 = vld [vmem:[%s1 + $0x20] sm:$0xf]
      %v728 = vld [vmem:[%s1 + $0x24] sm:$0xf]
      %v729 = vld [vmem:[%s1 + $0x28] sm:$0xf]
      %v730 = vld [vmem:[%s1 + $0x2c] sm:$0xf]
      %v731 = vld [vmem:[%s1 + $0x30] sm:$0xf]
      %v732 = vld [vmem:[%s1 + $0x34] sm:$0xf]
      %v733 = vld [vmem:[%s1 + $0x38] sm:$0xf]
      %v734 = vld [vmem:[%s1 + $0x3c] sm:$0xf]
      %v735 = vld [vmem:[%s1 + $0x40] sm:$0xf]
      %v736 = vld [vmem:[%s1 + $0x44] sm:$0xf]
      %v737 = vld [vmem:[%s1 + $0x48] sm:$0xf]
      %v738 = vld [vmem:[%s1 + $0x4c] sm:$0xf]
      %v739 = vld [vmem:[%s1 + $0x50] sm:$0xf]
      %v740 = vld [vmem:[%s1 + $0x54] sm:$0xf]
      %v741 = vld [vmem:[%s1 + $0x58] sm:$0xf]
      %v742 = vld [vmem:[%s1 + $0x5c] sm:$0xf]
      %v743 = vld [vmem:[%s1 + $0x60] sm:$0xf]
      %v744 = vld [vmem:[%s1 + $0x64] sm:$0xf]
      %v745 = vld [vmem:[%s1 + $0x68] sm:$0xf]
      %v746 = vld [vmem:[%s1 + $0x6c] sm:$0xf]
      %v747 = vld [vmem:[%s1 + $0x70] sm:$0xf]
      %v748 = vld [vmem:[%s1 + $0x74] sm:$0xf]
      %v749 = vld [vmem:[%s1 + $0x78] sm:$0xf]
      %v750 = vld [vmem:[%s1 + $0x7c] sm:$0xf]
      %v751 = vld [vmem:[%s1 + $0x80] sm:$0xf]
      %v752 = vld [vmem:[%s1 + $0x84] sm:$0xf]
      %v753 = vld [vmem:[%s1 + $0x88] sm:$0xf]
      %v754 = vld [vmem:[%s1 + $0x8c] sm:$0xf]
      %v755 = vld [vmem:[%s1 + $0x90] sm:$0xf]
      %v756 = vld [vmem:[%s1 + $0x94] sm:$0xf]
      %v757 = vld [vmem:[%s1 + $0x98] sm:$0xf]
      %v758 = vld [vmem:[%s1 + $0x9c] sm:$0xf]
      %v759 = vld [vmem:[%s1 + $0xa0] sm:$0xf]
      %v760 = vld [vmem:[%s1 + $0xa4] sm:$0xf]
      %v761 = vld [vmem:[%s1 + $0xa8] sm:$0xf]
      %v762 = vld [vmem:[%s1 + $0xac] sm:$0xf]
      %v763 = vld [vmem:[%s1 + $0xb0] sm:$0xf]
      %v764 = vld [vmem:[%s1 + $0xb4] sm:$0xf]
      %v765 = vld [vmem:[%s1 + $0xb8] sm:$0xf]
      %v766 = vld [vmem:[%s1 + $0xbc] sm:$0xf]
      %v815 = vunpack.c.l.b16 %v719
      %v816 = vunpack.c.l.b16 %v720
      %v817 = vunpack.c.l.b16 %v721
      %v818 = vunpack.c.l.b16 %v722
      %v819 = vunpack.c.l.b16 %v723
      %v820 = vunpack.c.l.b16 %v724
      %v821 = vunpack.c.l.b16 %v725
      %v822 = vunpack.c.l.b16 %v726
      %v823 = vunpack.c.l.b16 %v727
      %v824 = vunpack.c.l.b16 %v728
      %v825 = vunpack.c.l.b16 %v729
      %v826 = vunpack.c.l.b16 %v730
      %v827 = vunpack.c.l.b16 %v731
      %v828 = vunpack.c.l.b16 %v732
      %v829 = vunpack.c.l.b16 %v733
      %v830 = vunpack.c.l.b16 %v734
      %v831 = vunpack.c.l.b16 %v735
      %v832 = vunpack.c.l.b16 %v736
      %v833 = vunpack.c.l.b16 %v737
      %v834 = vunpack.c.l.b16 %v738
      %v835 = vunpack.c.l.b16 %v739
      %v836 = vunpack.c.l.b16 %v740
      %v837 = vunpack.c.l.b16 %v741
      %v838 = vunpack.c.l.b16 %v742
      %v839 = vunpack.c.l.b16 %v743
      %v840 = vunpack.c.l.b16 %v744
      %v841 = vunpack.c.l.b16 %v745
      %v842 = vunpack.c.l.b16 %v746
      %v843 = vunpack.c.l.b16 %v747
      %v844 = vunpack.c.l.b16 %v748
      %v845 = vunpack.c.l.b16 %v749
      %v846 = vunpack.c.l.b16 %v750
      %v847 = vunpack.c.l.b16 %v751
      %v848 = vunpack.c.l.b16 %v752
      %v849 = vunpack.c.l.b16 %v753
      %v850 = vunpack.c.l.b16 %v754
      %v851 = vunpack.c.l.b16 %v755
      %v852 = vunpack.c.l.b16 %v756
      %v853 = vunpack.c.l.b16 %v757
      %v854 = vunpack.c.l.b16 %v758
      %v855 = vunpack.c.l.b16 %v759
      %v856 = vunpack.c.l.b16 %v760
      %v857 = vunpack.c.l.b16 %v761
      %v858 = vunpack.c.l.b16 %v762
      %v859 = vunpack.c.l.b16 %v763
      %v860 = vunpack.c.l.b16 %v764
      %v861 = vunpack.c.l.b16 %v765
      %v862 = vunpack.c.l.b16 %v766
      %v863 = vpack.c.b16 %v816, %v815
      %v864 = vpack.c.b16 %v818, %v817
      %v865 = vpack.c.b16 %v820, %v819
      %v866 = vpack.c.b16 %v822, %v821
      %v867 = vpack.c.b16 %v824, %v823
      %v868 = vpack.c.b16 %v826, %v825
      %v869 = vpack.c.b16 %v828, %v827
      %v870 = vpack.c.b16 %v830, %v829
      %v871 = vpack.c.b16 %v832, %v831
      %v872 = vpack.c.b16 %v834, %v833
      %v873 = vpack.c.b16 %v836, %v835
      %v874 = vpack.c.b16 %v838, %v837
      %v875 = vpack.c.b16 %v840, %v839
      %v876 = vpack.c.b16 %v842, %v841
      %v877 = vpack.c.b16 %v844, %v843
      %v878 = vpack.c.b16 %v846, %v845
      %v879 = vpack.c.b16 %v848, %v847
      %v880 = vpack.c.b16 %v850, %v849
      %v881 = vpack.c.b16 %v852, %v851
      %v882 = vpack.c.b16 %v854, %v853
      %v883 = vpack.c.b16 %v856, %v855
      %v884 = vpack.c.b16 %v858, %v857
      %v885 = vpack.c.b16 %v860, %v859
      %v886 = vpack.c.b16 %v862, %v861
      %911 = vmatprep.subr.bf16.mxu0 0
      %912 = vmatpush1.bf16.msra.mxu0 %v870
      %913 = vmatprep.subr.bf16.mxu0 0
      %914 = vmatpush1.bf16.msra.mxu0 %v869
      %915 = vmatprep.subr.bf16.mxu0 0
      %916 = vmatpush1.bf16.msra.mxu0 %v868
      %917 = vmatprep.subr.bf16.mxu0 0
      %918 = vmatpush1.bf16.msra.mxu0 %v867
      %919 = vmatprep.subr.bf16.mxu0 0
      %920 = vmatpush1.bf16.msra.mxu0 %v866
      %921 = vmatprep.subr.bf16.mxu0 0
      %922 = vmatpush1.bf16.msra.mxu0 %v865
      %923 = vmatprep.subr.bf16.mxu0 0
      %924 = vmatpush1.bf16.msra.mxu0 %v864
      %925 = vmatprep.subr.bf16.mxu0 0
      %926 = vmatpush1.bf16.msra.mxu0 %v863
      %927 = vmatprep.subr.bf16.mxu0 0
      %928 = vmatpush2.bf16.msra.mxu0 %v878
      %929 = vmatprep.subr.bf16.mxu0 0
      %930 = vmatpush2.bf16.msra.mxu0 %v877
      %931 = vmatprep.subr.bf16.mxu0 0
      %932 = vmatpush2.bf16.msra.mxu0 %v876
      %933 = vmatprep.subr.bf16.mxu0 0
      %934 = vmatpush2.bf16.msra.mxu0 %v875
      %935 = vmatprep.subr.bf16.mxu0 0
      %936 = vmatpush2.bf16.msra.mxu0 %v874
      %937 = vmatprep.subr.bf16.mxu0 0
      %938 = vmatpush2.bf16.msra.mxu0 %v873
      %939 = vmatprep.subr.bf16.mxu0 0
      %940 = vmatpush2.bf16.msra.mxu0 %v872
      %941 = vmatprep.subr.bf16.mxu0 0
      %942 = vmatpush2.bf16.msra.mxu0 %v871
      %943 = vmatprep.mubr.bf16.mxu0 %v457
      %944 = vmatmul.mubr.bf16.gmra.mxu0 %v365
      %v945 = vpop.f32.mrf.mxu0
      %v946 = vadd.f32 0.0, %v945
      %v947 = vpop.f32.mrf.mxu0
      %v948 = vpop.f32.mrf.mxu0
      %v949 = vadd.f32 0.0, %v948
      %v950 = vpop.f32.mrf.mxu0
      %951 = vmatprep.mubr.bf16.mxu0 %v469
      %952 = vmatmul.mubr.bf16.gmra.mxu0 %v366
      %v953 = vpop.f32.mrf.mxu0
      %v954 = vadd.f32 0.0, %v953
      %v955 = vpop.f32.mrf.mxu0
      %v956 = vpop.f32.mrf.mxu0
      %v957 = vadd.f32 0.0, %v956
      %v958 = vpop.f32.mrf.mxu0
      %959 = vmatprep.mubr.bf16.mxu0 %v481
      %960 = vmatmul.mubr.bf16.gmra.mxu0 %v367
      %v961 = vpop.f32.mrf.mxu0
      %v962 = vadd.f32 0.0, %v961
      %v963 = vpop.f32.mrf.mxu0
      %v964 = vpop.f32.mrf.mxu0
      %v965 = vadd.f32 0.0, %v964
      %v966 = vpop.f32.mrf.mxu0
      %967 = vmatprep.mubr.bf16.mxu0 %v493
      %968 = vmatmul.mubr.bf16.gmra.mxu0 %v368
      %v969 = vpop.f32.mrf.mxu0
      %v970 = vadd.f32 0.0, %v969
      %v971 = vpop.f32.mrf.mxu0
      %v972 = vpop.f32.mrf.mxu0
      %v973 = vadd.f32 0.0, %v972
      %v974 = vpop.f32.mrf.mxu0
      %975 = vmatprep.mubr.bf16.mxu0 %v505
      %976 = vmatmul.mubr.bf16.gmra.mxu0 %v369
      %v977 = vpop.f32.mrf.mxu0
      %v978 = vadd.f32 0.0, %v977
      %v979 = vpop.f32.mrf.mxu0
      %v980 = vpop.f32.mrf.mxu0
      %v981 = vadd.f32 0.0, %v980
      %v982 = vpop.f32.mrf.mxu0
      %983 = vmatprep.mubr.bf16.mxu0 %v517
      %984 = vmatmul.mubr.bf16.gmra.mxu0 %v370
      %v985 = vpop.f32.mrf.mxu0
      %v986 = vadd.f32 0.0, %v985
      %v987 = vpop.f32.mrf.mxu0
      %v988 = vpop.f32.mrf.mxu0
      %v989 = vadd.f32 0.0, %v988
      %v990 = vpop.f32.mrf.mxu0
      %991 = vmatprep.mubr.bf16.mxu0 %v529
      %992 = vmatmul.mubr.bf16.gmra.mxu0 %v371
      %v993 = vpop.f32.mrf.mxu0
      %v994 = vadd.f32 0.0, %v993
      %v995 = vpop.f32.mrf.mxu0
      %v996 = vpop.f32.mrf.mxu0
      %v997 = vadd.f32 0.0, %v996
      %v998 = vpop.f32.mrf.mxu0
      %999 = vmatprep.mubr.bf16.mxu0 %v541
      %1000 = vmatmul.mubr.bf16.gmra.mxu0 %v372
      %v1001 = vpop.f32.mrf.mxu0
      %v1002 = vadd.f32 0.0, %v1001
      %v1003 = vpop.f32.mrf.mxu0
      %v1004 = vpop.f32.mrf.mxu0
      %v1005 = vadd.f32 0.0, %v1004
      %v1006 = vpop.f32.mrf.mxu0
      %1007 = vmatprep.mubr.bf16.mxu0 %v553
      %1008 = vmatmul.mubr.bf16.gmra.mxu0 %v373
      %v1009 = vpop.f32.mrf.mxu0
      %v1010 = vadd.f32 0.0, %v1009
      %v1011 = vpop.f32.mrf.mxu0
      %v1012 = vpop.f32.mrf.mxu0
      %v1013 = vadd.f32 0.0, %v1012
      %v1014 = vpop.f32.mrf.mxu0
      %1015 = vmatprep.mubr.bf16.mxu0 %v565
      %1016 = vmatmul.mubr.bf16.gmra.mxu0 %v374
      %v1017 = vpop.f32.mrf.mxu0
      %v1018 = vadd.f32 0.0, %v1017
      %v1019 = vpop.f32.mrf.mxu0
      %v1020 = vpop.f32.mrf.mxu0
      %v1021 = vadd.f32 0.0, %v1020
      %v1022 = vpop.f32.mrf.mxu0
      %1023 = vmatprep.mubr.bf16.mxu0 %v577
      %1024 = vmatmul.mubr.bf16.gmra.mxu0 %v375
      %v1025 = vpop.f32.mrf.mxu0
      %v1026 = vadd.f32 0.0, %v1025
      %v1027 = vpop.f32.mrf.mxu0
      %v1028 = vpop.f32.mrf.mxu0
      %v1029 = vadd.f32 0.0, %v1028
      %v1030 = vpop.f32.mrf.mxu0
      %1031 = vmatprep.mubr.bf16.mxu0 %v589
      %1032 = vmatmul.mubr.bf16.gmra.mxu0 %v376
      %v1033 = vpop.f32.mrf.mxu0
      %v1034 = vadd.f32 0.0, %v1033
      %v1035 = vpop.f32.mrf.mxu0
      %v1036 = vpop.f32.mrf.mxu0
      %v1037 = vadd.f32 0.0, %v1036
      %v1038 = vpop.f32.mrf.mxu0
      %1039 = vmatprep.mubr.bf16.mxu0 %v601
      %1040 = vmatmul.mubr.bf16.gmra.mxu0 %v377
      %v1041 = vpop.f32.mrf.mxu0
      %v1042 = vadd.f32 0.0, %v1041
      %v1043 = vpop.f32.mrf.mxu0
      %v1044 = vpop.f32.mrf.mxu0
      %v1045 = vadd.f32 0.0, %v1044
      %v1046 = vpop.f32.mrf.mxu0
      %1047 = vmatprep.mubr.bf16.mxu0 %v613
      %1048 = vmatmul.mubr.bf16.gmra.mxu0 %v378
      %v1049 = vpop.f32.mrf.mxu0
      %v1050 = vadd.f32 0.0, %v1049
      %v1051 = vpop.f32.mrf.mxu0
      %v1052 = vpop.f32.mrf.mxu0
      %v1053 = vadd.f32 0.0, %v1052
      %v1054 = vpop.f32.mrf.mxu0
      %1055 = vmatprep.mubr.bf16.mxu0 %v625
      %1056 = vmatmul.mubr.bf16.gmra.mxu0 %v379
      %v1057 = vpop.f32.mrf.mxu0
      %v1058 = vadd.f32 0.0, %v1057
      %v1059 = vpop.f32.mrf.mxu0
      %v1060 = vpop.f32.mrf.mxu0
      %v1061 = vadd.f32 0.0, %v1060
      %v1062 = vpop.f32.mrf.mxu0
      %1063 = vmatprep.mubr.bf16.mxu0 %v637
      %1064 = vmatmul.mubr.bf16.gmra.mxu0 %v380
      %v1065 = vpop.f32.mrf.mxu0
      %v1066 = vadd.f32 0.0, %v1065
      %v1067 = vpop.f32.mrf.mxu0
      %v1068 = vpop.f32.mrf.mxu0
      %v1069 = vadd.f32 0.0, %v1068
      %v1070 = vpop.f32.mrf.mxu0
      %1071 = vdwg.mxu0
      %1072 = vmatprep.subr.bf16.mxu0 0
      %1073 = vmatpush1.bf16.msra.mxu0 %v886
      %1074 = vmatprep.subr.bf16.mxu0 0
      %1075 = vmatpush1.bf16.msra.mxu0 %v885
      %1076 = vmatprep.subr.bf16.mxu0 0
      %1077 = vmatpush1.bf16.msra.mxu0 %v884
      %1078 = vmatprep.subr.bf16.mxu0 0
      %1079 = vmatpush1.bf16.msra.mxu0 %v883
      %1080 = vmatprep.subr.bf16.mxu0 0
      %1081 = vmatpush1.bf16.msra.mxu0 %v882
      %1082 = vmatprep.subr.bf16.mxu0 0
      %1083 = vmatpush1.bf16.msra.mxu0 %v881
      %1084 = vmatprep.subr.bf16.mxu0 0
      %1085 = vmatpush1.bf16.msra.mxu0 %v880
      %1086 = vmatprep.subr.bf16.mxu0 0
      %1087 = vmatpush1.bf16.msra.mxu0 %v879
      %1088 = vmatprep.subr.bf16.mxu0 0
      %1089 = vmatpush2.bf16.msra.mxu0 0
      %1090 = vmatprep.subr.bf16.mxu0 0
      %1091 = vmatpush2.bf16.msra.mxu0 0
      %1092 = vmatprep.subr.bf16.mxu0 0
      %1093 = vmatpush2.bf16.msra.mxu0 0
      %1094 = vmatprep.subr.bf16.mxu0 0
      %1095 = vmatpush2.bf16.msra.mxu0 0
      %1096 = vmatprep.subr.bf16.mxu0 0
      %1097 = vmatpush2.bf16.msra.mxu0 0
      %1098 = vmatprep.subr.bf16.mxu0 0
      %1099 = vmatpush2.bf16.msra.mxu0 0
      %1100 = vmatprep.subr.bf16.mxu0 0
      %1101 = vmatpush2.bf16.msra.mxu0 0
      %1102 = vmatprep.subr.bf16.mxu0 0
      %1103 = vmatpush2.bf16.msra.mxu0 0
      %1104 = vmatprep.mubr.bf16.mxu0 0
      %1105 = vmatmul.mubr.bf16.gmra.mxu0 %v657
      %v1106 = vpop.f32.mrf.mxu0
      %v1107 = vadd.f32 %v946, %v1106
      %v1108 = vpop.f32.mrf.mxu0
      %v1109 = vpop.f32.mrf.mxu0
      %v1110 = vadd.f32 %v949, %v1109
      %v1111 = vpop.f32.mrf.mxu0
      %1112 = vmatprep.mubr.bf16.mxu0 0
      %1113 = vmatmul.mubr.bf16.gmra.mxu0 %v660
      %v1114 = vpop.f32.mrf.mxu0
      %v1115 = vadd.f32 %v954, %v1114
      %v1116 = vpop.f32.mrf.mxu0
      %v1117 = vpop.f32.mrf.mxu0
      %v1118 = vadd.f32 %v957, %v1117
      %v1119 = vpop.f32.mrf.mxu0
      %1120 = vmatprep.mubr.bf16.mxu0 0
      %1121 = vmatmul.mubr.bf16.gmra.mxu0 %v663
      %v1122 = vpop.f32.mrf.mxu0
      %v1123 = vadd.f32 %v962, %v1122
      %v1124 = vpop.f32.mrf.mxu0
      %v1125 = vpop.f32.mrf.mxu0
      %v1126 = vadd.f32 %v965, %v1125
      %v1127 = vpop.f32.mrf.mxu0
      %1128 = vmatprep.mubr.bf16.mxu0 0
      %1129 = vmatmul.mubr.bf16.gmra.mxu0 %v666
      %v1130 = vpop.f32.mrf.mxu0
      %v1131 = vadd.f32 %v970, %v1130
      %v1132 = vpop.f32.mrf.mxu0
      %v1133 = vpop.f32.mrf.mxu0
      %v1134 = vadd.f32 %v973, %v1133
      %v1135 = vpop.f32.mrf.mxu0
      %1136 = vmatprep.mubr.bf16.mxu0 0
      %1137 = vmatmul.mubr.bf16.gmra.mxu0 %v669
      %v1138 = vpop.f32.mrf.mxu0
      %v1139 = vadd.f32 %v978, %v1138
      %v1140 = vpop.f32.mrf.mxu0
      %v1141 = vpop.f32.mrf.mxu0
      %v1142 = vadd.f32 %v981, %v1141
      %v1143 = vpop.f32.mrf.mxu0
      %1144 = vmatprep.mubr.bf16.mxu0 0
      %1145 = vmatmul.mubr.bf16.gmra.mxu0 %v672
      %v1146 = vpop.f32.mrf.mxu0
      %v1147 = vadd.f32 %v986, %v1146
      %v1148 = vpop.f32.mrf.mxu0
      %v1149 = vpop.f32.mrf.mxu0
      %v1150 = vadd.f32 %v989, %v1149
      %v1151 = vpop.f32.mrf.mxu0
      %1152 = vmatprep.mubr.bf16.mxu0 0
      %1153 = vmatmul.mubr.bf16.gmra.mxu0 %v675
      %v1154 = vpop.f32.mrf.mxu0
      %v1155 = vadd.f32 %v994, %v1154
      %v1156 = vpop.f32.mrf.mxu0
      %v1157 = vpop.f32.mrf.mxu0
      %v1158 = vadd.f32 %v997, %v1157
      %v1159 = vpop.f32.mrf.mxu0
      %1160 = vmatprep.mubr.bf16.mxu0 0
      %1161 = vmatmul.mubr.bf16.gmra.mxu0 %v678
      %v1162 = vpop.f32.mrf.mxu0
      %v1163 = vadd.f32 %v1002, %v1162
      %v1164 = vpop.f32.mrf.mxu0
      %v1165 = vpop.f32.mrf.mxu0
      %v1166 = vadd.f32 %v1005, %v1165
      %v1167 = vpop.f32.mrf.mxu0
      %1168 = vmatprep.mubr.bf16.mxu0 0
      %1169 = vmatmul.mubr.bf16.gmra.mxu0 %v681
      %v1170 = vpop.f32.mrf.mxu0
      %v1171 = vadd.f32 %v1010, %v1170
      %v1172 = vpop.f32.mrf.mxu0
      %v1173 = vpop.f32.mrf.mxu0
      %v1174 = vadd.f32 %v1013, %v1173
      %v1175 = vpop.f32.mrf.mxu0
      %1176 = vmatprep.mubr.bf16.mxu0 0
      %1177 = vmatmul.mubr.bf16.gmra.mxu0 %v684
      %v1178 = vpop.f32.mrf.mxu0
      %v1179 = vadd.f32 %v1018, %v1178
      %v1180 = vpop.f32.mrf.mxu0
      %v1181 = vpop.f32.mrf.mxu0
      %v1182 = vadd.f32 %v1021, %v1181
      %v1183 = vpop.f32.mrf.mxu0
      %1184 = vmatprep.mubr.bf16.mxu0 0
      %1185 = vmatmul.mubr.bf16.gmra.mxu0 %v687
      %v1186 = vpop.f32.mrf.mxu0
      %v1187 = vadd.f32 %v1026, %v1186
      %v1188 = vpop.f32.mrf.mxu0
      %v1189 = vpop.f32.mrf.mxu0
      %v1190 = vadd.f32 %v1029, %v1189
      %v1191 = vpop.f32.mrf.mxu0
      %1192 = vmatprep.mubr.bf16.mxu0 0
      %1193 = vmatmul.mubr.bf16.gmra.mxu0 %v690
      %v1194 = vpop.f32.mrf.mxu0
      %v1195 = vadd.f32 %v1034, %v1194
      %v1196 = vpop.f32.mrf.mxu0
      %v1197 = vpop.f32.mrf.mxu0
      %v1198 = vadd.f32 %v1037, %v1197
      %v1199 = vpop.f32.mrf.mxu0
      %1200 = vmatprep.mubr.bf16.mxu0 0
      %1201 = vmatmul.mubr.bf16.gmra.mxu0 %v693
      %v1202 = vpop.f32.mrf.mxu0
      %v1203 = vadd.f32 %v1042, %v1202
      %v1204 = vpop.f32.mrf.mxu0
      %v1205 = vpop.f32.mrf.mxu0
      %v1206 = vadd.f32 %v1045, %v1205
      %v1207 = vpop.f32.mrf.mxu0
      %1208 = vmatprep.mubr.bf16.mxu0 0
      %1209 = vmatmul.mubr.bf16.gmra.mxu0 %v696
      %v1210 = vpop.f32.mrf.mxu0
      %v1211 = vadd.f32 %v1050, %v1210
      %v1212 = vpop.f32.mrf.mxu0
      %v1213 = vpop.f32.mrf.mxu0
      %v1214 = vadd.f32 %v1053, %v1213
      %v1215 = vpop.f32.mrf.mxu0
      %1216 = vmatprep.mubr.bf16.mxu0 0
      %1217 = vmatmul.mubr.bf16.gmra.mxu0 %v699
      %v1218 = vpop.f32.mrf.mxu0
      %v1219 = vadd.f32 %v1058, %v1218
      %v1220 = vpop.f32.mrf.mxu0
      %v1221 = vpop.f32.mrf.mxu0
      %v1222 = vadd.f32 %v1061, %v1221
      %v1223 = vpop.f32.mrf.mxu0
      %1224 = vmatprep.mubr.bf16.mxu0 0
      %1225 = vmatmul.mubr.bf16.gmra.mxu0 %v702
      %v1226 = vpop.f32.mrf.mxu0
      %v1227 = vadd.f32 %v1066, %v1226
      %v1228 = vpop.f32.mrf.mxu0
      %v1229 = vpop.f32.mrf.mxu0
      %v1230 = vadd.f32 %v1069, %v1229
      %v1231 = vpop.f32.mrf.mxu0
      %1232 = vdwg.mxu0
      %1233 = vst [vmem:[#allocation3] sm:$0xff] %v1107
      %1234 = vst [vmem:[#allocation3 + $0x8] sm:$0xff] %v1110
      %1235 = vst [vmem:[#allocation3 + $0x10] sm:$0xff] %v1115
      %1236 = vst [vmem:[#allocation3 + $0x18] sm:$0xff] %v1118
      %1237 = vst [vmem:[#allocation3 + $0x20] sm:$0xff] %v1123
      %1238 = vst [vmem:[#allocation3 + $0x28] sm:$0xff] %v1126
      %1239 = vst [vmem:[#allocation3 + $0x30] sm:$0xff] %v1131
      %1240 = vst [vmem:[#allocation3 + $0x38] sm:$0xff] %v1134
      %1241 = vst [vmem:[#allocation3 + $0x40] sm:$0xff] %v1139
      %1242 = vst [vmem:[#allocation3 + $0x48] sm:$0xff] %v1142
      %1243 = vst [vmem:[#allocation3 + $0x50] sm:$0xff] %v1147
      %1244 = vst [vmem:[#allocation3 + $0x58] sm:$0xff] %v1150
      %1245 = vst [vmem:[#allocation3 + $0x60] sm:$0xff] %v1155
      %1246 = vst [vmem:[#allocation3 + $0x68] sm:$0xff] %v1158
      %1247 = vst [vmem:[#allocation3 + $0x70] sm:$0xff] %v1163
      %1248 = vst [vmem:[#allocation3 + $0x78] sm:$0xff] %v1166
      %1249 = vst [vmem:[#allocation3 + $0x80] sm:$0xff] %v1171
      %1250 = vst [vmem:[#allocation3 + $0x88] sm:$0xff] %v1174
      %1251 = vst [vmem:[#allocation3 + $0x90] sm:$0xff] %v1179
      %1252 = vst [vmem:[#allocation3 + $0x98] sm:$0xff] %v1182
      %1253 = vst [vmem:[#allocation3 + $0xa0] sm:$0xff] %v1187
      %1254 = vst [vmem:[#allocation3 + $0xa8] sm:$0xff] %v1190
      %1255 = vst [vmem:[#allocation3 + $0xb0] sm:$0xff] %v1195
      %1256 = vst [vmem:[#allocation3 + $0xb8] sm:$0xff] %v1198
      %1257 = vst [vmem:[#allocation3 + $0xc0] sm:$0xff] %v1203
      %1258 = vst [vmem:[#allocation3 + $0xc8] sm:$0xff] %v1206
      %1259 = vst [vmem:[#allocation3 + $0xd0] sm:$0xff] %v1211
      %1260 = vst [vmem:[#allocation3 + $0xd8] sm:$0xff] %v1214
      %1261 = vst [vmem:[#allocation3 + $0xe0] sm:$0xff] %v1219
      %1262 = vst [vmem:[#allocation3 + $0xe8] sm:$0xff] %v1222
      %1263 = vst [vmem:[#allocation3 + $0xf0] sm:$0xff] %v1227
      %1264 = vst [vmem:[#allocation3 + $0xf8] sm:$0xff] %v1230
      %s1265 = scalar_lea.vmem %s246, 12
      %v1266 = vld [vmem:[%s1265] sm:$0xf]
      %v1267 = vld [vmem:[%s1265 + $0x4] sm:$0xf]
      %v1268 = vld [vmem:[%s1265 + $0x8] sm:$0x1]
      %v1269 = vld [vmem:[%s1265 + $0xc] sm:$0xf]
      %v1270 = vld [vmem:[%s1265 + $0x10] sm:$0xf]
      %v1271 = vld [vmem:[%s1265 + $0x14] sm:$0x1]
      %v1272 = vld [vmem:[%s1265 + $0x18] sm:$0xf]
      %v1273 = vld [vmem:[%s1265 + $0x1c] sm:$0xf]
      %v1274 = vld [vmem:[%s1265 + $0x20] sm:$0x1]
      %v1275 = vld [vmem:[%s1265 + $0x24] sm:$0xf]
      %v1276 = vld [vmem:[%s1265 + $0x28] sm:$0xf]
      %v1277 = vld [vmem:[%s1265 + $0x2c] sm:$0x1]
      %v1278 = vld [vmem:[%s1265 + $0x30] sm:$0xf]
      %v1279 = vld [vmem:[%s1265 + $0x34] sm:$0xf]
      %v1280 = vld [vmem:[%s1265 + $0x38] sm:$0x1]
      %v1281 = vld [vmem:[%s1265 + $0x3c] sm:$0xf]
      %v1282 = vld [vmem:[%s1265 + $0x40] sm:$0xf]
      %v1283 = vld [vmem:[%s1265 + $0x44] sm:$0x1]
      %v1284 = vld [vmem:[%s1265 + $0x48] sm:$0xf]
      %v1285 = vld [vmem:[%s1265 + $0x4c] sm:$0xf]
      %v1286 = vld [vmem:[%s1265 + $0x50] sm:$0x1]
      %v1287 = vld [vmem:[%s1265 + $0x54] sm:$0xf]
      %v1288 = vld [vmem:[%s1265 + $0x58] sm:$0xf]
      %v1289 = vld [vmem:[%s1265 + $0x5c] sm:$0x1]
      %v1290 = vld [vmem:[%s1265 + $0x60] sm:$0xf]
      %v1291 = vld [vmem:[%s1265 + $0x64] sm:$0xf]
      %v1292 = vld [vmem:[%s1265 + $0x68] sm:$0x1]
      %v1293 = vld [vmem:[%s1265 + $0x6c] sm:$0xf]
      %v1294 = vld [vmem:[%s1265 + $0x70] sm:$0xf]
      %v1295 = vld [vmem:[%s1265 + $0x74] sm:$0x1]
      %v1296 = vld [vmem:[%s1265 + $0x78] sm:$0xf]
      %v1297 = vld [vmem:[%s1265 + $0x7c] sm:$0xf]
      %v1298 = vld [vmem:[%s1265 + $0x80] sm:$0x1]
      %v1299 = vld [vmem:[%s1265 + $0x84] sm:$0xf]
      %v1300 = vld [vmem:[%s1265 + $0x88] sm:$0xf]
      %v1301 = vld [vmem:[%s1265 + $0x8c] sm:$0x1]
      %v1302 = vld [vmem:[%s1265 + $0x90] sm:$0xf]
      %v1303 = vld [vmem:[%s1265 + $0x94] sm:$0xf]
      %v1304 = vld [vmem:[%s1265 + $0x98] sm:$0x1]
      %v1305 = vld [vmem:[%s1265 + $0x9c] sm:$0xf]
      %v1306 = vld [vmem:[%s1265 + $0xa0] sm:$0xf]
      %v1307 = vld [vmem:[%s1265 + $0xa4] sm:$0x1]
      %v1308 = vld [vmem:[%s1265 + $0xa8] sm:$0xf]
      %v1309 = vld [vmem:[%s1265 + $0xac] sm:$0xf]
      %v1310 = vld [vmem:[%s1265 + $0xb0] sm:$0x1]
      %v1311 = vld [vmem:[%s1265 + $0xb4] sm:$0xf]
      %v1312 = vld [vmem:[%s1265 + $0xb8] sm:$0xf]
      %v1313 = vld [vmem:[%s1265 + $0xbc] sm:$0x1]
      %v1346 = vunpack.c.l.b16 %v1266
      %v1347 = vunpack.c.l.b16 %v1267
      %v1348 = vunpack.c.l.b16 %v1269
      %v1349 = vunpack.c.l.b16 %v1270
      %v1350 = vunpack.c.l.b16 %v1272
      %v1351 = vunpack.c.l.b16 %v1273
      %v1352 = vunpack.c.l.b16 %v1275
      %v1353 = vunpack.c.l.b16 %v1276
      %v1354 = vunpack.c.l.b16 %v1278
      %v1355 = vunpack.c.l.b16 %v1279
      %v1356 = vunpack.c.l.b16 %v1281
      %v1357 = vunpack.c.l.b16 %v1282
      %v1358 = vunpack.c.l.b16 %v1284
      %v1359 = vunpack.c.l.b16 %v1285
      %v1360 = vunpack.c.l.b16 %v1287
      %v1361 = vunpack.c.l.b16 %v1288
      %v1362 = vunpack.c.l.b16 %v1290
      %v1363 = vunpack.c.l.b16 %v1291
      %v1364 = vunpack.c.l.b16 %v1293
      %v1365 = vunpack.c.l.b16 %v1294
      %v1366 = vunpack.c.l.b16 %v1296
      %v1367 = vunpack.c.l.b16 %v1297
      %v1368 = vunpack.c.l.b16 %v1299
      %v1369 = vunpack.c.l.b16 %v1300
      %v1370 = vunpack.c.l.b16 %v1302
      %v1371 = vunpack.c.l.b16 %v1303
      %v1372 = vunpack.c.l.b16 %v1305
      %v1373 = vunpack.c.l.b16 %v1306
      %v1374 = vunpack.c.l.b16 %v1308
      %v1375 = vunpack.c.l.b16 %v1309
      %v1376 = vunpack.c.l.b16 %v1311
      %v1377 = vunpack.c.l.b16 %v1312
      %v1378 = vpack.c.b16 %v1347, %v1346
      %v1379 = vpack.c.b16 %v1349, %v1348
      %v1380 = vpack.c.b16 %v1351, %v1350
      %v1381 = vpack.c.b16 %v1353, %v1352
      %v1382 = vpack.c.b16 %v1355, %v1354
      %v1383 = vpack.c.b16 %v1357, %v1356
      %v1384 = vpack.c.b16 %v1359, %v1358
      %v1385 = vpack.c.b16 %v1361, %v1360
      %v1386 = vpack.c.b16 %v1363, %v1362
      %v1387 = vpack.c.b16 %v1365, %v1364
      %v1388 = vpack.c.b16 %v1367, %v1366
      %v1389 = vpack.c.b16 %v1369, %v1368
      %v1390 = vpack.c.b16 %v1371, %v1370
      %v1391 = vpack.c.b16 %v1373, %v1372
      %v1392 = vpack.c.b16 %v1375, %v1374
      %v1393 = vpack.c.b16 %v1377, %v1376
      %v1426 = vunpack.c.l.b16 %v1268
      %v1427 = vunpack.c.l.b16 %v1271
      %v1428 = vunpack.c.l.b16 %v1274
      %v1429 = vunpack.c.l.b16 %v1277
      %v1430 = vunpack.c.l.b16 %v1280
      %v1431 = vunpack.c.l.b16 %v1283
      %v1432 = vunpack.c.l.b16 %v1286
      %v1433 = vunpack.c.l.b16 %v1289
      %v1434 = vunpack.c.l.b16 %v1292
      %v1435 = vunpack.c.l.b16 %v1295
      %v1436 = vunpack.c.l.b16 %v1298
      %v1437 = vunpack.c.l.b16 %v1301
      %v1438 = vunpack.c.l.b16 %v1304
      %v1439 = vunpack.c.l.b16 %v1307
      %v1440 = vunpack.c.l.b16 %v1310
      %v1441 = vunpack.c.l.b16 %v1313
      %v1442 = vpack.c.b16 %v1426, %v1426
      %v1443 = vpack.c.b16 %v1427, %v1427
      %v1444 = vpack.c.b16 %v1428, %v1428
      %v1445 = vpack.c.b16 %v1429, %v1429
      %v1446 = vpack.c.b16 %v1430, %v1430
      %v1447 = vpack.c.b16 %v1431, %v1431
      %v1448 = vpack.c.b16 %v1432, %v1432
      %v1449 = vpack.c.b16 %v1433, %v1433
      %v1450 = vpack.c.b16 %v1434, %v1434
      %v1451 = vpack.c.b16 %v1435, %v1435
      %v1452 = vpack.c.b16 %v1436, %v1436
      %v1453 = vpack.c.b16 %v1437, %v1437
      %v1454 = vpack.c.b16 %v1438, %v1438
      %v1455 = vpack.c.b16 %v1439, %v1439
      %v1456 = vpack.c.b16 %v1440, %v1440
      %v1457 = vpack.c.b16 %v1441, %v1441
      %v1459 = vshrl.u32 %v1378, 16
      %v1461 = vshll.u32 %v1378, 16
      %v1463 = vrot.slane %v1461, 1
      %v1464 = vor.u32 %v1459, %v1463
      %v1466 = vshll.u32 %v1442, 16
      %v1468 = vrot.slane %v1466, 1
      %v1469 = vsel %vm445, %v1464, %v1468
      %v1471 = vshrl.u32 %v1379, 16
      %v1473 = vshll.u32 %v1379, 16
      %v1475 = vrot.slane %v1473, 1
      %v1476 = vor.u32 %v1471, %v1475
      %v1478 = vshll.u32 %v1443, 16
      %v1480 = vrot.slane %v1478, 1
      %v1481 = vsel %vm445, %v1476, %v1480
      %v1483 = vshrl.u32 %v1380, 16
      %v1485 = vshll.u32 %v1380, 16
      %v1487 = vrot.slane %v1485, 1
      %v1488 = vor.u32 %v1483, %v1487
      %v1490 = vshll.u32 %v1444, 16
      %v1492 = vrot.slane %v1490, 1
      %v1493 = vsel %vm445, %v1488, %v1492
      %v1495 = vshrl.u32 %v1381, 16
      %v1497 = vshll.u32 %v1381, 16
      %v1499 = vrot.slane %v1497, 1
      %v1500 = vor.u32 %v1495, %v1499
      %v1502 = vshll.u32 %v1445, 16
      %v1504 = vrot.slane %v1502, 1
      %v1505 = vsel %vm445, %v1500, %v1504
      %v1507 = vshrl.u32 %v1382, 16
      %v1509 = vshll.u32 %v1382, 16
      %v1511 = vrot.slane %v1509, 1
      %v1512 = vor.u32 %v1507, %v1511
      %v1514 = vshll.u32 %v1446, 16
      %v1516 = vrot.slane %v1514, 1
      %v1517 = vsel %vm445, %v1512, %v1516
      %v1519 = vshrl.u32 %v1383, 16
      %v1521 = vshll.u32 %v1383, 16
      %v1523 = vrot.slane %v1521, 1
      %v1524 = vor.u32 %v1519, %v1523
      %v1526 = vshll.u32 %v1447, 16
      %v1528 = vrot.slane %v1526, 1
      %v1529 = vsel %vm445, %v1524, %v1528
      %v1531 = vshrl.u32 %v1384, 16
      %v1533 = vshll.u32 %v1384, 16
      %v1535 = vrot.slane %v1533, 1
      %v1536 = vor.u32 %v1531, %v1535
      %v1538 = vshll.u32 %v1448, 16
      %v1540 = vrot.slane %v1538, 1
      %v1541 = vsel %vm445, %v1536, %v1540
      %v1543 = vshrl.u32 %v1385, 16
      %v1545 = vshll.u32 %v1385, 16
      %v1547 = vrot.slane %v1545, 1
      %v1548 = vor.u32 %v1543, %v1547
      %v1550 = vshll.u32 %v1449, 16
      %v1552 = vrot.slane %v1550, 1
      %v1553 = vsel %vm445, %v1548, %v1552
      %v1555 = vshrl.u32 %v1386, 16
      %v1557 = vshll.u32 %v1386, 16
      %v1559 = vrot.slane %v1557, 1
      %v1560 = vor.u32 %v1555, %v1559
      %v1562 = vshll.u32 %v1450, 16
      %v1564 = vrot.slane %v1562, 1
      %v1565 = vsel %vm445, %v1560, %v1564
      %v1567 = vshrl.u32 %v1387, 16
      %v1569 = vshll.u32 %v1387, 16
      %v1571 = vrot.slane %v1569, 1
      %v1572 = vor.u32 %v1567, %v1571
      %v1574 = vshll.u32 %v1451, 16
      %v1576 = vrot.slane %v1574, 1
      %v1577 = vsel %vm445, %v1572, %v1576
      %v1579 = vshrl.u32 %v1388, 16
      %v1581 = vshll.u32 %v1388, 16
      %v1583 = vrot.slane %v1581, 1
      %v1584 = vor.u32 %v1579, %v1583
      %v1586 = vshll.u32 %v1452, 16
      %v1588 = vrot.slane %v1586, 1
      %v1589 = vsel %vm445, %v1584, %v1588
      %v1591 = vshrl.u32 %v1389, 16
      %v1593 = vshll.u32 %v1389, 16
      %v1595 = vrot.slane %v1593, 1
      %v1596 = vor.u32 %v1591, %v1595
      %v1598 = vshll.u32 %v1453, 16
      %v1600 = vrot.slane %v1598, 1
      %v1601 = vsel %vm445, %v1596, %v1600
      %v1603 = vshrl.u32 %v1390, 16
      %v1605 = vshll.u32 %v1390, 16
      %v1607 = vrot.slane %v1605, 1
      %v1608 = vor.u32 %v1603, %v1607
      %v1610 = vshll.u32 %v1454, 16
      %v1612 = vrot.slane %v1610, 1
      %v1613 = vsel %vm445, %v1608, %v1612
      %v1615 = vshrl.u32 %v1391, 16
      %v1617 = vshll.u32 %v1391, 16
      %v1619 = vrot.slane %v1617, 1
      %v1620 = vor.u32 %v1615, %v1619
      %v1622 = vshll.u32 %v1455, 16
      %v1624 = vrot.slane %v1622, 1
      %v1625 = vsel %vm445, %v1620, %v1624
      %v1627 = vshrl.u32 %v1392, 16
      %v1629 = vshll.u32 %v1392, 16
      %v1631 = vrot.slane %v1629, 1
      %v1632 = vor.u32 %v1627, %v1631
      %v1634 = vshll.u32 %v1456, 16
      %v1636 = vrot.slane %v1634, 1
      %v1637 = vsel %vm445, %v1632, %v1636
      %v1639 = vshrl.u32 %v1393, 16
      %v1641 = vshll.u32 %v1393, 16
      %v1643 = vrot.slane %v1641, 1
      %v1644 = vor.u32 %v1639, %v1643
      %v1646 = vshll.u32 %v1457, 16
      %v1648 = vrot.slane %v1646, 1
      %v1649 = vsel %vm445, %v1644, %v1648
      %v1666 = vrot.slane %v1378, 1
      %v1667 = vrot.slane %v1442, 1
      %v1668 = vsel %vm654, %v1666, %v1667
      %v1669 = vrot.slane %v1379, 1
      %v1670 = vrot.slane %v1443, 1
      %v1671 = vsel %vm654, %v1669, %v1670
      %v1672 = vrot.slane %v1380, 1
      %v1673 = vrot.slane %v1444, 1
      %v1674 = vsel %vm654, %v1672, %v1673
      %v1675 = vrot.slane %v1381, 1
      %v1676 = vrot.slane %v1445, 1
      %v1677 = vsel %vm654, %v1675, %v1676
      %v1678 = vrot.slane %v1382, 1
      %v1679 = vrot.slane %v1446, 1
      %v1680 = vsel %vm654, %v1678, %v1679
      %v1681 = vrot.slane %v1383, 1
      %v1682 = vrot.slane %v1447, 1
      %v1683 = vsel %vm654, %v1681, %v1682
      %v1684 = vrot.slane %v1384, 1
      %v1685 = vrot.slane %v1448, 1
      %v1686 = vsel %vm654, %v1684, %v1685
      %v1687 = vrot.slane %v1385, 1
      %v1688 = vrot.slane %v1449, 1
      %v1689 = vsel %vm654, %v1687, %v1688
      %v1690 = vrot.slane %v1386, 1
      %v1691 = vrot.slane %v1450, 1
      %v1692 = vsel %vm654, %v1690, %v1691
      %v1693 = vrot.slane %v1387, 1
      %v1694 = vrot.slane %v1451, 1
      %v1695 = vsel %vm654, %v1693, %v1694
      %v1696 = vrot.slane %v1388, 1
      %v1697 = vrot.slane %v1452, 1
      %v1698 = vsel %vm654, %v1696, %v1697
      %v1699 = vrot.slane %v1389, 1
      %v1700 = vrot.slane %v1453, 1
      %v1701 = vsel %vm654, %v1699, %v1700
      %v1702 = vrot.slane %v1390, 1
      %v1703 = vrot.slane %v1454, 1
      %v1704 = vsel %vm654, %v1702, %v1703
      %v1705 = vrot.slane %v1391, 1
      %v1706 = vrot.slane %v1455, 1
      %v1707 = vsel %vm654, %v1705, %v1706
      %v1708 = vrot.slane %v1392, 1
      %v1709 = vrot.slane %v1456, 1
      %v1710 = vsel %vm654, %v1708, %v1709
      %v1711 = vrot.slane %v1393, 1
      %v1712 = vrot.slane %v1457, 1
      %v1713 = vsel %vm654, %v1711, %v1712
      %s1730 = scalar_lea.vmem %s1, 192
      %v1731 = vld [vmem:[%s1730] sm:$0xf]
      %v1732 = vld [vmem:[%s1730 + $0x4] sm:$0xf]
      %v1733 = vld [vmem:[%s1730 + $0x8] sm:$0xf]
      %v1734 = vld [vmem:[%s1730 + $0xc] sm:$0xf]
      %v1735 = vld [vmem:[%s1730 + $0x10] sm:$0xf]
      %v1736 = vld [vmem:[%s1730 + $0x14] sm:$0xf]
      %v1737 = vld [vmem:[%s1730 + $0x18] sm:$0xf]
      %v1738 = vld [vmem:[%s1730 + $0x1c] sm:$0xf]
      %v1739 = vld [vmem:[%s1730 + $0x20] sm:$0xf]
      %v1740 = vld [vmem:[%s1730 + $0x24] sm:$0xf]
      %v1741 = vld [vmem:[%s1730 + $0x28] sm:$0xf]
      %v1742 = vld [vmem:[%s1730 + $0x2c] sm:$0xf]
      %v1743 = vld [vmem:[%s1730 + $0x30] sm:$0xf]
      %v1744 = vld [vmem:[%s1730 + $0x34] sm:$0xf]
      %v1745 = vld [vmem:[%s1730 + $0x38] sm:$0xf]
      %v1746 = vld [vmem:[%s1730 + $0x3c] sm:$0xf]
      %v1747 = vld [vmem:[%s1730 + $0x40] sm:$0xf]
      %v1748 = vld [vmem:[%s1730 + $0x44] sm:$0xf]
      %v1749 = vld [vmem:[%s1730 + $0x48] sm:$0xf]
      %v1750 = vld [vmem:[%s1730 + $0x4c] sm:$0xf]
      %v1751 = vld [vmem:[%s1730 + $0x50] sm:$0xf]
      %v1752 = vld [vmem:[%s1730 + $0x54] sm:$0xf]
      %v1753 = vld [vmem:[%s1730 + $0x58] sm:$0xf]
      %v1754 = vld [vmem:[%s1730 + $0x5c] sm:$0xf]
      %v1755 = vld [vmem:[%s1730 + $0x60] sm:$0xf]
      %v1756 = vld [vmem:[%s1730 + $0x64] sm:$0xf]
      %v1757 = vld [vmem:[%s1730 + $0x68] sm:$0xf]
      %v1758 = vld [vmem:[%s1730 + $0x6c] sm:$0xf]
      %v1759 = vld [vmem:[%s1730 + $0x70] sm:$0xf]
      %v1760 = vld [vmem:[%s1730 + $0x74] sm:$0xf]
      %v1761 = vld [vmem:[%s1730 + $0x78] sm:$0xf]
      %v1762 = vld [vmem:[%s1730 + $0x7c] sm:$0xf]
      %v1763 = vld [vmem:[%s1730 + $0x80] sm:$0xf]
      %v1764 = vld [vmem:[%s1730 + $0x84] sm:$0xf]
      %v1765 = vld [vmem:[%s1730 + $0x88] sm:$0xf]
      %v1766 = vld [vmem:[%s1730 + $0x8c] sm:$0xf]
      %v1767 = vld [vmem:[%s1730 + $0x90] sm:$0xf]
      %v1768 = vld [vmem:[%s1730 + $0x94] sm:$0xf]
      %v1769 = vld [vmem:[%s1730 + $0x98] sm:$0xf]
      %v1770 = vld [vmem:[%s1730 + $0x9c] sm:$0xf]
      %v1771 = vld [vmem:[%s1730 + $0xa0] sm:$0xf]
      %v1772 = vld [vmem:[%s1730 + $0xa4] sm:$0xf]
      %v1773 = vld [vmem:[%s1730 + $0xa8] sm:$0xf]
      %v1774 = vld [vmem:[%s1730 + $0xac] sm:$0xf]
      %v1775 = vld [vmem:[%s1730 + $0xb0] sm:$0xf]
      %v1776 = vld [vmem:[%s1730 + $0xb4] sm:$0xf]
      %v1777 = vld [vmem:[%s1730 + $0xb8] sm:$0xf]
      %v1778 = vld [vmem:[%s1730 + $0xbc] sm:$0xf]
      %v1827 = vunpack.c.l.b16 %v1731
      %v1828 = vunpack.c.l.b16 %v1732
      %v1829 = vunpack.c.l.b16 %v1733
      %v1830 = vunpack.c.l.b16 %v1734
      %v1831 = vunpack.c.l.b16 %v1735
      %v1832 = vunpack.c.l.b16 %v1736
      %v1833 = vunpack.c.l.b16 %v1737
      %v1834 = vunpack.c.l.b16 %v1738
      %v1835 = vunpack.c.l.b16 %v1739
      %v1836 = vunpack.c.l.b16 %v1740
      %v1837 = vunpack.c.l.b16 %v1741
      %v1838 = vunpack.c.l.b16 %v1742
      %v1839 = vunpack.c.l.b16 %v1743
      %v1840 = vunpack.c.l.b16 %v1744
      %v1841 = vunpack.c.l.b16 %v1745
      %v1842 = vunpack.c.l.b16 %v1746
      %v1843 = vunpack.c.l.b16 %v1747
      %v1844 = vunpack.c.l.b16 %v1748
      %v1845 = vunpack.c.l.b16 %v1749
      %v1846 = vunpack.c.l.b16 %v1750
      %v1847 = vunpack.c.l.b16 %v1751
      %v1848 = vunpack.c.l.b16 %v1752
      %v1849 = vunpack.c.l.b16 %v1753
      %v1850 = vunpack.c.l.b16 %v1754
      %v1851 = vunpack.c.l.b16 %v1755
      %v1852 = vunpack.c.l.b16 %v1756
      %v1853 = vunpack.c.l.b16 %v1757
      %v1854 = vunpack.c.l.b16 %v1758
      %v1855 = vunpack.c.l.b16 %v1759
      %v1856 = vunpack.c.l.b16 %v1760
      %v1857 = vunpack.c.l.b16 %v1761
      %v1858 = vunpack.c.l.b16 %v1762
      %v1859 = vunpack.c.l.b16 %v1763
      %v1860 = vunpack.c.l.b16 %v1764
      %v1861 = vunpack.c.l.b16 %v1765
      %v1862 = vunpack.c.l.b16 %v1766
      %v1863 = vunpack.c.l.b16 %v1767
      %v1864 = vunpack.c.l.b16 %v1768
      %v1865 = vunpack.c.l.b16 %v1769
      %v1866 = vunpack.c.l.b16 %v1770
      %v1867 = vunpack.c.l.b16 %v1771
      %v1868 = vunpack.c.l.b16 %v1772
      %v1869 = vunpack.c.l.b16 %v1773
      %v1870 = vunpack.c.l.b16 %v1774
      %v1871 = vunpack.c.l.b16 %v1775
      %v1872 = vunpack.c.l.b16 %v1776
      %v1873 = vunpack.c.l.b16 %v1777
      %v1874 = vunpack.c.l.b16 %v1778
      %v1875 = vpack.c.b16 %v1828, %v1827
      %v1876 = vpack.c.b16 %v1830, %v1829
      %v1877 = vpack.c.b16 %v1832, %v1831
      %v1878 = vpack.c.b16 %v1834, %v1833
      %v1879 = vpack.c.b16 %v1836, %v1835
      %v1880 = vpack.c.b16 %v1838, %v1837
      %v1881 = vpack.c.b16 %v1840, %v1839
      %v1882 = vpack.c.b16 %v1842, %v1841
      %v1883 = vpack.c.b16 %v1844, %v1843
      %v1884 = vpack.c.b16 %v1846, %v1845
      %v1885 = vpack.c.b16 %v1848, %v1847
      %v1886 = vpack.c.b16 %v1850, %v1849
      %v1887 = vpack.c.b16 %v1852, %v1851
      %v1888 = vpack.c.b16 %v1854, %v1853
      %v1889 = vpack.c.b16 %v1856, %v1855
      %v1890 = vpack.c.b16 %v1858, %v1857
      %v1891 = vpack.c.b16 %v1860, %v1859
      %v1892 = vpack.c.b16 %v1862, %v1861
      %v1893 = vpack.c.b16 %v1864, %v1863
      %v1894 = vpack.c.b16 %v1866, %v1865
      %v1895 = vpack.c.b16 %v1868, %v1867
      %v1896 = vpack.c.b16 %v1870, %v1869
      %v1897 = vpack.c.b16 %v1872, %v1871
      %v1898 = vpack.c.b16 %v1874, %v1873
      %1923 = vmatprep.subr.bf16.mxu0 0
      %1924 = vmatpush1.bf16.msra.mxu0 %v1882
      %1925 = vmatprep.subr.bf16.mxu0 0
      %1926 = vmatpush1.bf16.msra.mxu0 %v1881
      %1927 = vmatprep.subr.bf16.mxu0 0
      %1928 = vmatpush1.bf16.msra.mxu0 %v1880
      %1929 = vmatprep.subr.bf16.mxu0 0
      %1930 = vmatpush1.bf16.msra.mxu0 %v1879
      %1931 = vmatprep.subr.bf16.mxu0 0
      %1932 = vmatpush1.bf16.msra.mxu0 %v1878
      %1933 = vmatprep.subr.bf16.mxu0 0
      %1934 = vmatpush1.bf16.msra.mxu0 %v1877
      %1935 = vmatprep.subr.bf16.mxu0 0
      %1936 = vmatpush1.bf16.msra.mxu0 %v1876
      %1937 = vmatprep.subr.bf16.mxu0 0
      %1938 = vmatpush1.bf16.msra.mxu0 %v1875
      %1939 = vmatprep.subr.bf16.mxu0 0
      %1940 = vmatpush2.bf16.msra.mxu0 %v1890
      %1941 = vmatprep.subr.bf16.mxu0 0
      %1942 = vmatpush2.bf16.msra.mxu0 %v1889
      %1943 = vmatprep.subr.bf16.mxu0 0
      %1944 = vmatpush2.bf16.msra.mxu0 %v1888
      %1945 = vmatprep.subr.bf16.mxu0 0
      %1946 = vmatpush2.bf16.msra.mxu0 %v1887
      %1947 = vmatprep.subr.bf16.mxu0 0
      %1948 = vmatpush2.bf16.msra.mxu0 %v1886
      %1949 = vmatprep.subr.bf16.mxu0 0
      %1950 = vmatpush2.bf16.msra.mxu0 %v1885
      %1951 = vmatprep.subr.bf16.mxu0 0
      %1952 = vmatpush2.bf16.msra.mxu0 %v1884
      %1953 = vmatprep.subr.bf16.mxu0 0
      %1954 = vmatpush2.bf16.msra.mxu0 %v1883
      %1955 = vmatprep.mubr.bf16.mxu0 %v1469
      %1956 = vmatmul.mubr.bf16.gmra.mxu0 %v1378
      %v1957 = vpop.f32.mrf.mxu0
      %v1958 = vadd.f32 0.0, %v1957
      %v1959 = vpop.f32.mrf.mxu0
      %v1960 = vpop.f32.mrf.mxu0
      %v1961 = vadd.f32 0.0, %v1960
      %v1962 = vpop.f32.mrf.mxu0
      %1963 = vmatprep.mubr.bf16.mxu0 %v1481
      %1964 = vmatmul.mubr.bf16.gmra.mxu0 %v1379
      %v1965 = vpop.f32.mrf.mxu0
      %v1966 = vadd.f32 0.0, %v1965
      %v1967 = vpop.f32.mrf.mxu0
      %v1968 = vpop.f32.mrf.mxu0
      %v1969 = vadd.f32 0.0, %v1968
      %v1970 = vpop.f32.mrf.mxu0
      %1971 = vmatprep.mubr.bf16.mxu0 %v1493
      %1972 = vmatmul.mubr.bf16.gmra.mxu0 %v1380
      %v1973 = vpop.f32.mrf.mxu0
      %v1974 = vadd.f32 0.0, %v1973
      %v1975 = vpop.f32.mrf.mxu0
      %v1976 = vpop.f32.mrf.mxu0
      %v1977 = vadd.f32 0.0, %v1976
      %v1978 = vpop.f32.mrf.mxu0
      %1979 = vmatprep.mubr.bf16.mxu0 %v1505
      %1980 = vmatmul.mubr.bf16.gmra.mxu0 %v1381
      %v1981 = vpop.f32.mrf.mxu0
      %v1982 = vadd.f32 0.0, %v1981
      %v1983 = vpop.f32.mrf.mxu0
      %v1984 = vpop.f32.mrf.mxu0
      %v1985 = vadd.f32 0.0, %v1984
      %v1986 = vpop.f32.mrf.mxu0
      %1987 = vmatprep.mubr.bf16.mxu0 %v1517
      %1988 = vmatmul.mubr.bf16.gmra.mxu0 %v1382
      %v1989 = vpop.f32.mrf.mxu0
      %v1990 = vadd.f32 0.0, %v1989
      %v1991 = vpop.f32.mrf.mxu0
      %v1992 = vpop.f32.mrf.mxu0
      %v1993 = vadd.f32 0.0, %v1992
      %v1994 = vpop.f32.mrf.mxu0
      %1995 = vmatprep.mubr.bf16.mxu0 %v1529
      %1996 = vmatmul.mubr.bf16.gmra.mxu0 %v1383
      %v1997 = vpop.f32.mrf.mxu0
      %v1998 = vadd.f32 0.0, %v1997
      %v1999 = vpop.f32.mrf.mxu0
      %v2000 = vpop.f32.mrf.mxu0
      %v2001 = vadd.f32 0.0, %v2000
      %v2002 = vpop.f32.mrf.mxu0
      %2003 = vmatprep.mubr.bf16.mxu0 %v1541
      %2004 = vmatmul.mubr.bf16.gmra.mxu0 %v1384
      %v2005 = vpop.f32.mrf.mxu0
      %v2006 = vadd.f32 0.0, %v2005
      %v2007 = vpop.f32.mrf.mxu0
      %v2008 = vpop.f32.mrf.mxu0
      %v2009 = vadd.f32 0.0, %v2008
      %v2010 = vpop.f32.mrf.mxu0
      %2011 = vmatprep.mubr.bf16.mxu0 %v1553
      %2012 = vmatmul.mubr.bf16.gmra.mxu0 %v1385
      %v2013 = vpop.f32.mrf.mxu0
      %v2014 = vadd.f32 0.0, %v2013
      %v2015 = vpop.f32.mrf.mxu0
      %v2016 = vpop.f32.mrf.mxu0
      %v2017 = vadd.f32 0.0, %v2016
      %v2018 = vpop.f32.mrf.mxu0
      %2019 = vmatprep.mubr.bf16.mxu0 %v1565
      %2020 = vmatmul.mubr.bf16.gmra.mxu0 %v1386
      %v2021 = vpop.f32.mrf.mxu0
      %v2022 = vadd.f32 0.0, %v2021
      %v2023 = vpop.f32.mrf.mxu0
      %v2024 = vpop.f32.mrf.mxu0
      %v2025 = vadd.f32 0.0, %v2024
      %v2026 = vpop.f32.mrf.mxu0
      %2027 = vmatprep.mubr.bf16.mxu0 %v1577
      %2028 = vmatmul.mubr.bf16.gmra.mxu0 %v1387
      %v2029 = vpop.f32.mrf.mxu0
      %v2030 = vadd.f32 0.0, %v2029
      %v2031 = vpop.f32.mrf.mxu0
      %v2032 = vpop.f32.mrf.mxu0
      %v2033 = vadd.f32 0.0, %v2032
      %v2034 = vpop.f32.mrf.mxu0
      %2035 = vmatprep.mubr.bf16.mxu0 %v1589
      %2036 = vmatmul.mubr.bf16.gmra.mxu0 %v1388
      %v2037 = vpop.f32.mrf.mxu0
      %v2038 = vadd.f32 0.0, %v2037
      %v2039 = vpop.f32.mrf.mxu0
      %v2040 = vpop.f32.mrf.mxu0
      %v2041 = vadd.f32 0.0, %v2040
      %v2042 = vpop.f32.mrf.mxu0
      %2043 = vmatprep.mubr.bf16.mxu0 %v1601
      %2044 = vmatmul.mubr.bf16.gmra.mxu0 %v1389
      %v2045 = vpop.f32.mrf.mxu0
      %v2046 = vadd.f32 0.0, %v2045
      %v2047 = vpop.f32.mrf.mxu0
      %v2048 = vpop.f32.mrf.mxu0
      %v2049 = vadd.f32 0.0, %v2048
      %v2050 = vpop.f32.mrf.mxu0
      %2051 = vmatprep.mubr.bf16.mxu0 %v1613
      %2052 = vmatmul.mubr.bf16.gmra.mxu0 %v1390
      %v2053 = vpop.f32.mrf.mxu0
      %v2054 = vadd.f32 0.0, %v2053
      %v2055 = vpop.f32.mrf.mxu0
      %v2056 = vpop.f32.mrf.mxu0
      %v2057 = vadd.f32 0.0, %v2056
      %v2058 = vpop.f32.mrf.mxu0
      %2059 = vmatprep.mubr.bf16.mxu0 %v1625
      %2060 = vmatmul.mubr.bf16.gmra.mxu0 %v1391
      %v2061 = vpop.f32.mrf.mxu0
      %v2062 = vadd.f32 0.0, %v2061
      %v2063 = vpop.f32.mrf.mxu0
      %v2064 = vpop.f32.mrf.mxu0
      %v2065 = vadd.f32 0.0, %v2064
      %v2066 = vpop.f32.mrf.mxu0
      %2067 = vmatprep.mubr.bf16.mxu0 %v1637
      %2068 = vmatmul.mubr.bf16.gmra.mxu0 %v1392
      %v2069 = vpop.f32.mrf.mxu0
      %v2070 = vadd.f32 0.0, %v2069
      %v2071 = vpop.f32.mrf.mxu0
      %v2072 = vpop.f32.mrf.mxu0
      %v2073 = vadd.f32 0.0, %v2072
      %v2074 = vpop.f32.mrf.mxu0
      %2075 = vmatprep.mubr.bf16.mxu0 %v1649
      %2076 = vmatmul.mubr.bf16.gmra.mxu0 %v1393
      %v2077 = vpop.f32.mrf.mxu0
      %v2078 = vadd.f32 0.0, %v2077
      %v2079 = vpop.f32.mrf.mxu0
      %v2080 = vpop.f32.mrf.mxu0
      %v2081 = vadd.f32 0.0, %v2080
      %v2082 = vpop.f32.mrf.mxu0
      %2083 = vdwg.mxu0
      %2084 = vmatprep.subr.bf16.mxu0 0
      %2085 = vmatpush1.bf16.msra.mxu0 %v1898
      %2086 = vmatprep.subr.bf16.mxu0 0
      %2087 = vmatpush1.bf16.msra.mxu0 %v1897
      %2088 = vmatprep.subr.bf16.mxu0 0
      %2089 = vmatpush1.bf16.msra.mxu0 %v1896
      %2090 = vmatprep.subr.bf16.mxu0 0
      %2091 = vmatpush1.bf16.msra.mxu0 %v1895
      %2092 = vmatprep.subr.bf16.mxu0 0
      %2093 = vmatpush1.bf16.msra.mxu0 %v1894
      %2094 = vmatprep.subr.bf16.mxu0 0
      %2095 = vmatpush1.bf16.msra.mxu0 %v1893
      %2096 = vmatprep.subr.bf16.mxu0 0
      %2097 = vmatpush1.bf16.msra.mxu0 %v1892
      %2098 = vmatprep.subr.bf16.mxu0 0
      %2099 = vmatpush1.bf16.msra.mxu0 %v1891
      %2100 = vmatprep.subr.bf16.mxu0 0
      %2101 = vmatpush2.bf16.msra.mxu0 0
      %2102 = vmatprep.subr.bf16.mxu0 0
      %2103 = vmatpush2.bf16.msra.mxu0 0
      %2104 = vmatprep.subr.bf16.mxu0 0
      %2105 = vmatpush2.bf16.msra.mxu0 0
      %2106 = vmatprep.subr.bf16.mxu0 0
      %2107 = vmatpush2.bf16.msra.mxu0 0
      %2108 = vmatprep.subr.bf16.mxu0 0
      %2109 = vmatpush2.bf16.msra.mxu0 0
      %2110 = vmatprep.subr.bf16.mxu0 0
      %2111 = vmatpush2.bf16.msra.mxu0 0
      %2112 = vmatprep.subr.bf16.mxu0 0
      %2113 = vmatpush2.bf16.msra.mxu0 0
      %2114 = vmatprep.subr.bf16.mxu0 0
      %2115 = vmatpush2.bf16.msra.mxu0 0
      %2116 = vmatprep.mubr.bf16.mxu0 0
      %2117 = vmatmul.mubr.bf16.gmra.mxu0 %v1668
      %v2118 = vpop.f32.mrf.mxu0
      %v2119 = vadd.f32 %v1958, %v2118
      %v2120 = vpop.f32.mrf.mxu0
      %v2121 = vpop.f32.mrf.mxu0
      %v2122 = vadd.f32 %v1961, %v2121
      %v2123 = vpop.f32.mrf.mxu0
      %2124 = vmatprep.mubr.bf16.mxu0 0
      %2125 = vmatmul.mubr.bf16.gmra.mxu0 %v1671
      %v2126 = vpop.f32.mrf.mxu0
      %v2127 = vadd.f32 %v1966, %v2126
      %v2128 = vpop.f32.mrf.mxu0
      %v2129 = vpop.f32.mrf.mxu0
      %v2130 = vadd.f32 %v1969, %v2129
      %v2131 = vpop.f32.mrf.mxu0
      %2132 = vmatprep.mubr.bf16.mxu0 0
      %2133 = vmatmul.mubr.bf16.gmra.mxu0 %v1674
      %v2134 = vpop.f32.mrf.mxu0
      %v2135 = vadd.f32 %v1974, %v2134
      %v2136 = vpop.f32.mrf.mxu0
      %v2137 = vpop.f32.mrf.mxu0
      %v2138 = vadd.f32 %v1977, %v2137
      %v2139 = vpop.f32.mrf.mxu0
      %2140 = vmatprep.mubr.bf16.mxu0 0
      %2141 = vmatmul.mubr.bf16.gmra.mxu0 %v1677
      %v2142 = vpop.f32.mrf.mxu0
      %v2143 = vadd.f32 %v1982, %v2142
      %v2144 = vpop.f32.mrf.mxu0
      %v2145 = vpop.f32.mrf.mxu0
      %v2146 = vadd.f32 %v1985, %v2145
      %v2147 = vpop.f32.mrf.mxu0
      %2148 = vmatprep.mubr.bf16.mxu0 0
      %2149 = vmatmul.mubr.bf16.gmra.mxu0 %v1680
      %v2150 = vpop.f32.mrf.mxu0
      %v2151 = vadd.f32 %v1990, %v2150
      %v2152 = vpop.f32.mrf.mxu0
      %v2153 = vpop.f32.mrf.mxu0
      %v2154 = vadd.f32 %v1993, %v2153
      %v2155 = vpop.f32.mrf.mxu0
      %2156 = vmatprep.mubr.bf16.mxu0 0
      %2157 = vmatmul.mubr.bf16.gmra.mxu0 %v1683
      %v2158 = vpop.f32.mrf.mxu0
      %v2159 = vadd.f32 %v1998, %v2158
      %v2160 = vpop.f32.mrf.mxu0
      %v2161 = vpop.f32.mrf.mxu0
      %v2162 = vadd.f32 %v2001, %v2161
      %v2163 = vpop.f32.mrf.mxu0
      %2164 = vmatprep.mubr.bf16.mxu0 0
      %2165 = vmatmul.mubr.bf16.gmra.mxu0 %v1686
      %v2166 = vpop.f32.mrf.mxu0
      %v2167 = vadd.f32 %v2006, %v2166
      %v2168 = vpop.f32.mrf.mxu0
      %v2169 = vpop.f32.mrf.mxu0
      %v2170 = vadd.f32 %v2009, %v2169
      %v2171 = vpop.f32.mrf.mxu0
      %2172 = vmatprep.mubr.bf16.mxu0 0
      %2173 = vmatmul.mubr.bf16.gmra.mxu0 %v1689
      %v2174 = vpop.f32.mrf.mxu0
      %v2175 = vadd.f32 %v2014, %v2174
      %v2176 = vpop.f32.mrf.mxu0
      %v2177 = vpop.f32.mrf.mxu0
      %v2178 = vadd.f32 %v2017, %v2177
      %v2179 = vpop.f32.mrf.mxu0
      %2180 = vmatprep.mubr.bf16.mxu0 0
      %2181 = vmatmul.mubr.bf16.gmra.mxu0 %v1692
      %v2182 = vpop.f32.mrf.mxu0
      %v2183 = vadd.f32 %v2022, %v2182
      %v2184 = vpop.f32.mrf.mxu0
      %v2185 = vpop.f32.mrf.mxu0
      %v2186 = vadd.f32 %v2025, %v2185
      %v2187 = vpop.f32.mrf.mxu0
      %2188 = vmatprep.mubr.bf16.mxu0 0
      %2189 = vmatmul.mubr.bf16.gmra.mxu0 %v1695
      %v2190 = vpop.f32.mrf.mxu0
      %v2191 = vadd.f32 %v2030, %v2190
      %v2192 = vpop.f32.mrf.mxu0
      %v2193 = vpop.f32.mrf.mxu0
      %v2194 = vadd.f32 %v2033, %v2193
      %v2195 = vpop.f32.mrf.mxu0
      %2196 = vmatprep.mubr.bf16.mxu0 0
      %2197 = vmatmul.mubr.bf16.gmra.mxu0 %v1698
      %v2198 = vpop.f32.mrf.mxu0
      %v2199 = vadd.f32 %v2038, %v2198
      %v2200 = vpop.f32.mrf.mxu0
      %v2201 = vpop.f32.mrf.mxu0
      %v2202 = vadd.f32 %v2041, %v2201
      %v2203 = vpop.f32.mrf.mxu0
      %2204 = vmatprep.mubr.bf16.mxu0 0
      %2205 = vmatmul.mubr.bf16.gmra.mxu0 %v1701
      %v2206 = vpop.f32.mrf.mxu0
      %v2207 = vadd.f32 %v2046, %v2206
      %v2208 = vpop.f32.mrf.mxu0
      %v2209 = vpop.f32.mrf.mxu0
      %v2210 = vadd.f32 %v2049, %v2209
      %v2211 = vpop.f32.mrf.mxu0
      %2212 = vmatprep.mubr.bf16.mxu0 0
      %2213 = vmatmul.mubr.bf16.gmra.mxu0 %v1704
      %v2214 = vpop.f32.mrf.mxu0
      %v2215 = vadd.f32 %v2054, %v2214
      %v2216 = vpop.f32.mrf.mxu0
      %v2217 = vpop.f32.mrf.mxu0
      %v2218 = vadd.f32 %v2057, %v2217
      %v2219 = vpop.f32.mrf.mxu0
      %2220 = vmatprep.mubr.bf16.mxu0 0
      %2221 = vmatmul.mubr.bf16.gmra.mxu0 %v1707
      %v2222 = vpop.f32.mrf.mxu0
      %v2223 = vadd.f32 %v2062, %v2222
      %v2224 = vpop.f32.mrf.mxu0
      %v2225 = vpop.f32.mrf.mxu0
      %v2226 = vadd.f32 %v2065, %v2225
      %v2227 = vpop.f32.mrf.mxu0
      %2228 = vmatprep.mubr.bf16.mxu0 0
      %2229 = vmatmul.mubr.bf16.gmra.mxu0 %v1710
      %v2230 = vpop.f32.mrf.mxu0
      %v2231 = vadd.f32 %v2070, %v2230
      %v2232 = vpop.f32.mrf.mxu0
      %v2233 = vpop.f32.mrf.mxu0
      %v2234 = vadd.f32 %v2073, %v2233
      %v2235 = vpop.f32.mrf.mxu0
      %2236 = vmatprep.mubr.bf16.mxu0 0
      %2237 = vmatmul.mubr.bf16.gmra.mxu0 %v1713
      %v2238 = vpop.f32.mrf.mxu0
      %v2239 = vadd.f32 %v2078, %v2238
      %v2240 = vpop.f32.mrf.mxu0
      %v2241 = vpop.f32.mrf.mxu0
      %v2242 = vadd.f32 %v2081, %v2241
      %v2243 = vpop.f32.mrf.mxu0
      %2244 = vdwg.mxu0
      %v2245 = vld [vmem:[#allocation3] sm:$0xff]
      %v2246 = vld [vmem:[#allocation3 + $0x8] sm:$0xff]
      %v2247 = vld [vmem:[#allocation3 + $0x10] sm:$0xff]
      %v2248 = vld [vmem:[#allocation3 + $0x18] sm:$0xff]
      %v2249 = vld [vmem:[#allocation3 + $0x20] sm:$0xff]
      %v2250 = vld [vmem:[#allocation3 + $0x28] sm:$0xff]
      %v2251 = vld [vmem:[#allocation3 + $0x30] sm:$0xff]
      %v2252 = vld [vmem:[#allocation3 + $0x38] sm:$0xff]
      %v2253 = vld [vmem:[#allocation3 + $0x40] sm:$0xff]
      %v2254 = vld [vmem:[#allocation3 + $0x48] sm:$0xff]
      %v2255 = vld [vmem:[#allocation3 + $0x50] sm:$0xff]
      %v2256 = vld [vmem:[#allocation3 + $0x58] sm:$0xff]
      %v2257 = vld [vmem:[#allocation3 + $0x60] sm:$0xff]
      %v2258 = vld [vmem:[#allocation3 + $0x68] sm:$0xff]
      %v2259 = vld [vmem:[#allocation3 + $0x70] sm:$0xff]
      %v2260 = vld [vmem:[#allocation3 + $0x78] sm:$0xff]
      %v2261 = vld [vmem:[#allocation3 + $0x80] sm:$0xff]
      %v2262 = vld [vmem:[#allocation3 + $0x88] sm:$0xff]
      %v2263 = vld [vmem:[#allocation3 + $0x90] sm:$0xff]
      %v2264 = vld [vmem:[#allocation3 + $0x98] sm:$0xff]
      %v2265 = vld [vmem:[#allocation3 + $0xa0] sm:$0xff]
      %v2266 = vld [vmem:[#allocation3 + $0xa8] sm:$0xff]
      %v2267 = vld [vmem:[#allocation3 + $0xb0] sm:$0xff]
      %v2268 = vld [vmem:[#allocation3 + $0xb8] sm:$0xff]
      %v2269 = vld [vmem:[#allocation3 + $0xc0] sm:$0xff]
      %v2270 = vld [vmem:[#allocation3 + $0xc8] sm:$0xff]
      %v2271 = vld [vmem:[#allocation3 + $0xd0] sm:$0xff]
      %v2272 = vld [vmem:[#allocation3 + $0xd8] sm:$0xff]
      %v2273 = vld [vmem:[#allocation3 + $0xe0] sm:$0xff]
      %v2274 = vld [vmem:[#allocation3 + $0xe8] sm:$0xff]
      %v2275 = vld [vmem:[#allocation3 + $0xf0] sm:$0xff]
      %v2276 = vld [vmem:[#allocation3 + $0xf8] sm:$0xff]
      %v2277 = vadd.f32 %v2245, %v2119
      %v2278 = vadd.f32 %v2246, %v2122
      %v2279 = vadd.f32 %v2247, %v2127
      %v2280 = vadd.f32 %v2248, %v2130
      %v2281 = vadd.f32 %v2249, %v2135
      %v2282 = vadd.f32 %v2250, %v2138
      %v2283 = vadd.f32 %v2251, %v2143
      %v2284 = vadd.f32 %v2252, %v2146
      %v2285 = vadd.f32 %v2253, %v2151
      %v2286 = vadd.f32 %v2254, %v2154
      %v2287 = vadd.f32 %v2255, %v2159
      %v2288 = vadd.f32 %v2256, %v2162
      %v2289 = vadd.f32 %v2257, %v2167
      %v2290 = vadd.f32 %v2258, %v2170
      %v2291 = vadd.f32 %v2259, %v2175
      %v2292 = vadd.f32 %v2260, %v2178
      %v2293 = vadd.f32 %v2261, %v2183
      %v2294 = vadd.f32 %v2262, %v2186
      %v2295 = vadd.f32 %v2263, %v2191
      %v2296 = vadd.f32 %v2264, %v2194
      %v2297 = vadd.f32 %v2265, %v2199
      %v2298 = vadd.f32 %v2266, %v2202
      %v2299 = vadd.f32 %v2267, %v2207
      %v2300 = vadd.f32 %v2268, %v2210
      %v2301 = vadd.f32 %v2269, %v2215
      %v2302 = vadd.f32 %v2270, %v2218
      %v2303 = vadd.f32 %v2271, %v2223
      %v2304 = vadd.f32 %v2272, %v2226
      %v2305 = vadd.f32 %v2273, %v2231
      %v2306 = vadd.f32 %v2274, %v2234
      %v2307 = vadd.f32 %v2275, %v2239
      %v2308 = vadd.f32 %v2276, %v2242
      %2309 = vst [vmem:[#allocation3] sm:$0xff] %v2277
      %2310 = vst [vmem:[#allocation3 + $0x8] sm:$0xff] %v2278
      %2311 = vst [vmem:[#allocation3 + $0x10] sm:$0xff] %v2279
      %2312 = vst [vmem:[#allocation3 + $0x18] sm:$0xff] %v2280
      %2313 = vst [vmem:[#allocation3 + $0x20] sm:$0xff] %v2281
      %2314 = vst [vmem:[#allocation3 + $0x28] sm:$0xff] %v2282
      %2315 = vst [vmem:[#allocation3 + $0x30] sm:$0xff] %v2283
      %2316 = vst [vmem:[#allocation3 + $0x38] sm:$0xff] %v2284
      %2317 = vst [vmem:[#allocation3 + $0x40] sm:$0xff] %v2285
      %2318 = vst [vmem:[#allocation3 + $0x48] sm:$0xff] %v2286
      %2319 = vst [vmem:[#allocation3 + $0x50] sm:$0xff] %v2287
      %2320 = vst [vmem:[#allocation3 + $0x58] sm:$0xff] %v2288
      %2321 = vst [vmem:[#allocation3 + $0x60] sm:$0xff] %v2289
      %2322 = vst [vmem:[#allocation3 + $0x68] sm:$0xff] %v2290
      %2323 = vst [vmem:[#allocation3 + $0x70] sm:$0xff] %v2291
      %2324 = vst [vmem:[#allocation3 + $0x78] sm:$0xff] %v2292
      %2325 = vst [vmem:[#allocation3 + $0x80] sm:$0xff] %v2293
      %2326 = vst [vmem:[#allocation3 + $0x88] sm:$0xff] %v2294
      %2327 = vst [vmem:[#allocation3 + $0x90] sm:$0xff] %v2295
      %2328 = vst [vmem:[#allocation3 + $0x98] sm:$0xff] %v2296
      %2329 = vst [vmem:[#allocation3 + $0xa0] sm:$0xff] %v2297
      %2330 = vst [vmem:[#allocation3 + $0xa8] sm:$0xff] %v2298
      %2331 = vst [vmem:[#allocation3 + $0xb0] sm:$0xff] %v2299
      %2332 = vst [vmem:[#allocation3 + $0xb8] sm:$0xff] %v2300
      %2333 = vst [vmem:[#allocation3 + $0xc0] sm:$0xff] %v2301
      %2334 = vst [vmem:[#allocation3 + $0xc8] sm:$0xff] %v2302
      %2335 = vst [vmem:[#allocation3 + $0xd0] sm:$0xff] %v2303
      %2336 = vst [vmem:[#allocation3 + $0xd8] sm:$0xff] %v2304
      %2337 = vst [vmem:[#allocation3 + $0xe0] sm:$0xff] %v2305
      %2338 = vst [vmem:[#allocation3 + $0xe8] sm:$0xff] %v2306
      %2339 = vst [vmem:[#allocation3 + $0xf0] sm:$0xff] %v2307
      %2340 = vst [vmem:[#allocation3 + $0xf8] sm:$0xff] %v2308
      %s2341 = scalar_lea.vmem %s246, 24
      %v2342 = vld [vmem:[%s2341] sm:$0xf]
      %v2343 = vld [vmem:[%s2341 + $0x4] sm:$0xf]
      %v2344 = vld [vmem:[%s2341 + $0x8] sm:$0x1]
      %v2345 = vld [vmem:[%s2341 + $0xc] sm:$0xf]
      %v2346 = vld [vmem:[%s2341 + $0x10] sm:$0xf]
      %v2347 = vld [vmem:[%s2341 + $0x14] sm:$0x1]
      %v2348 = vld [vmem:[%s2341 + $0x18] sm:$0xf]
      %v2349 = vld [vmem:[%s2341 + $0x1c] sm:$0xf]
      %v2350 = vld [vmem:[%s2341 + $0x20] sm:$0x1]
      %v2351 = vld [vmem:[%s2341 + $0x24] sm:$0xf]
      %v2352 = vld [vmem:[%s2341 + $0x28] sm:$0xf]
      %v2353 = vld [vmem:[%s2341 + $0x2c] sm:$0x1]
      %v2354 = vld [vmem:[%s2341 + $0x30] sm:$0xf]
      %v2355 = vld [vmem:[%s2341 + $0x34] sm:$0xf]
      %v2356 = vld [vmem:[%s2341 + $0x38] sm:$0x1]
      %v2357 = vld [vmem:[%s2341 + $0x3c] sm:$0xf]
      %v2358 = vld [vmem:[%s2341 + $0x40] sm:$0xf]
      %v2359 = vld [vmem:[%s2341 + $0x44] sm:$0x1]
      %v2360 = vld [vmem:[%s2341 + $0x48] sm:$0xf]
      %v2361 = vld [vmem:[%s2341 + $0x4c] sm:$0xf]
      %v2362 = vld [vmem:[%s2341 + $0x50] sm:$0x1]
      %v2363 = vld [vmem:[%s2341 + $0x54] sm:$0xf]
      %v2364 = vld [vmem:[%s2341 + $0x58] sm:$0xf]
      %v2365 = vld [vmem:[%s2341 + $0x5c] sm:$0x1]
      %v2366 = vld [vmem:[%s2341 + $0x60] sm:$0xf]
      %v2367 = vld [vmem:[%s2341 + $0x64] sm:$0xf]
      %v2368 = vld [vmem:[%s2341 + $0x68] sm:$0x1]
      %v2369 = vld [vmem:[%s2341 + $0x6c] sm:$0xf]
      %v2370 = vld [vmem:[%s2341 + $0x70] sm:$0xf]
      %v2371 = vld [vmem:[%s2341 + $0x74] sm:$0x1]
      %v2372 = vld [vmem:[%s2341 + $0x78] sm:$0xf]
      %v2373 = vld [vmem:[%s2341 + $0x7c] sm:$0xf]
      %v2374 = vld [vmem:[%s2341 + $0x80] sm:$0x1]
      %v2375 = vld [vmem:[%s2341 + $0x84] sm:$0xf]
      %v2376 = vld [vmem:[%s2341 + $0x88] sm:$0xf]
      %v2377 = vld [vmem:[%s2341 + $0x8c] sm:$0x1]
      %v2378 = vld [vmem:[%s2341 + $0x90] sm:$0xf]
      %v2379 = vld [vmem:[%s2341 + $0x94] sm:$0xf]
      %v2380 = vld [vmem:[%s2341 + $0x98] sm:$0x1]
      %v2381 = vld [vmem:[%s2341 + $0x9c] sm:$0xf]
      %v2382 = vld [vmem:[%s2341 + $0xa0] sm:$0xf]
      %v2383 = vld [vmem:[%s2341 + $0xa4] sm:$0x1]
      %v2384 = vld [vmem:[%s2341 + $0xa8] sm:$0xf]
      %v2385 = vld [vmem:[%s2341 + $0xac] sm:$0xf]
      %v2386 = vld [vmem:[%s2341 + $0xb0] sm:$0x1]
      %v2387 = vld [vmem:[%s2341 + $0xb4] sm:$0xf]
      %v2388 = vld [vmem:[%s2341 + $0xb8] sm:$0xf]
      %v2389 = vld [vmem:[%s2341 + $0xbc] sm:$0x1]
      %v2422 = vunpack.c.l.b16 %v2342
      %v2423 = vunpack.c.l.b16 %v2343
      %v2424 = vunpack.c.l.b16 %v2345
      %v2425 = vunpack.c.l.b16 %v2346
      %v2426 = vunpack.c.l.b16 %v2348
      %v2427 = vunpack.c.l.b16 %v2349
      %v2428 = vunpack.c.l.b16 %v2351
      %v2429 = vunpack.c.l.b16 %v2352
      %v2430 = vunpack.c.l.b16 %v2354
      %v2431 = vunpack.c.l.b16 %v2355
      %v2432 = vunpack.c.l.b16 %v2357
      %v2433 = vunpack.c.l.b16 %v2358
      %v2434 = vunpack.c.l.b16 %v2360
      %v2435 = vunpack.c.l.b16 %v2361
      %v2436 = vunpack.c.l.b16 %v2363
      %v2437 = vunpack.c.l.b16 %v2364
      %v2438 = vunpack.c.l.b16 %v2366
      %v2439 = vunpack.c.l.b16 %v2367
      %v2440 = vunpack.c.l.b16 %v2369
      %v2441 = vunpack.c.l.b16 %v2370
      %v2442 = vunpack.c.l.b16 %v2372
      %v2443 = vunpack.c.l.b16 %v2373
      %v2444 = vunpack.c.l.b16 %v2375
      %v2445 = vunpack.c.l.b16 %v2376
      %v2446 = vunpack.c.l.b16 %v2378
      %v2447 = vunpack.c.l.b16 %v2379
      %v2448 = vunpack.c.l.b16 %v2381
      %v2449 = vunpack.c.l.b16 %v2382
      %v2450 = vunpack.c.l.b16 %v2384
      %v2451 = vunpack.c.l.b16 %v2385
      %v2452 = vunpack.c.l.b16 %v2387
      %v2453 = vunpack.c.l.b16 %v2388
      %v2454 = vpack.c.b16 %v2423, %v2422
      %v2455 = vpack.c.b16 %v2425, %v2424
      %v2456 = vpack.c.b16 %v2427, %v2426
      %v2457 = vpack.c.b16 %v2429, %v2428
      %v2458 = vpack.c.b16 %v2431, %v2430
      %v2459 = vpack.c.b16 %v2433, %v2432
      %v2460 = vpack.c.b16 %v2435, %v2434
      %v2461 = vpack.c.b16 %v2437, %v2436
      %v2462 = vpack.c.b16 %v2439, %v2438
      %v2463 = vpack.c.b16 %v2441, %v2440
      %v2464 = vpack.c.b16 %v2443, %v2442
      %v2465 = vpack.c.b16 %v2445, %v2444
      %v2466 = vpack.c.b16 %v2447, %v2446
      %v2467 = vpack.c.b16 %v2449, %v2448
      %v2468 = vpack.c.b16 %v2451, %v2450
      %v2469 = vpack.c.b16 %v2453, %v2452
      %v2502 = vunpack.c.l.b16 %v2344
      %v2503 = vunpack.c.l.b16 %v2347
      %v2504 = vunpack.c.l.b16 %v2350
      %v2505 = vunpack.c.l.b16 %v2353
      %v2506 = vunpack.c.l.b16 %v2356
      %v2507 = vunpack.c.l.b16 %v2359
      %v2508 = vunpack.c.l.b16 %v2362
      %v2509 = vunpack.c.l.b16 %v2365
      %v2510 = vunpack.c.l.b16 %v2368
      %v2511 = vunpack.c.l.b16 %v2371
      %v2512 = vunpack.c.l.b16 %v2374
      %v2513 = vunpack.c.l.b16 %v2377
      %v2514 = vunpack.c.l.b16 %v2380
      %v2515 = vunpack.c.l.b16 %v2383
      %v2516 = vunpack.c.l.b16 %v2386
      %v2517 = vunpack.c.l.b16 %v2389
      %v2518 = vpack.c.b16 %v2502, %v2502
      %v2519 = vpack.c.b16 %v2503, %v2503
      %v2520 = vpack.c.b16 %v2504, %v2504
      %v2521 = vpack.c.b16 %v2505, %v2505
      %v2522 = vpack.c.b16 %v2506, %v2506
      %v2523 = vpack.c.b16 %v2507, %v2507
      %v2524 = vpack.c.b16 %v2508, %v2508
      %v2525 = vpack.c.b16 %v2509, %v2509
      %v2526 = vpack.c.b16 %v2510, %v2510
      %v2527 = vpack.c.b16 %v2511, %v2511
      %v2528 = vpack.c.b16 %v2512, %v2512
      %v2529 = vpack.c.b16 %v2513, %v2513
      %v2530 = vpack.c.b16 %v2514, %v2514
      %v2531 = vpack.c.b16 %v2515, %v2515
      %v2532 = vpack.c.b16 %v2516, %v2516
      %v2533 = vpack.c.b16 %v2517, %v2517
      %v2535 = vshrl.u32 %v2454, 16
      %v2537 = vshll.u32 %v2454, 16
      %v2539 = vrot.slane %v2537, 1
      %v2540 = vor.u32 %v2535, %v2539
      %v2542 = vshll.u32 %v2518, 16
      %v2544 = vrot.slane %v2542, 1
      %v2545 = vsel %vm445, %v2540, %v2544
      %v2547 = vshrl.u32 %v2455, 16
      %v2549 = vshll.u32 %v2455, 16
      %v2551 = vrot.slane %v2549, 1
      %v2552 = vor.u32 %v2547, %v2551
      %v2554 = vshll.u32 %v2519, 16
      %v2556 = vrot.slane %v2554, 1
      %v2557 = vsel %vm445, %v2552, %v2556
      %v2559 = vshrl.u32 %v2456, 16
      %v2561 = vshll.u32 %v2456, 16
      %v2563 = vrot.slane %v2561, 1
      %v2564 = vor.u32 %v2559, %v2563
      %v2566 = vshll.u32 %v2520, 16
      %v2568 = vrot.slane %v2566, 1
      %v2569 = vsel %vm445, %v2564, %v2568
      %v2571 = vshrl.u32 %v2457, 16
      %v2573 = vshll.u32 %v2457, 16
      %v2575 = vrot.slane %v2573, 1
      %v2576 = vor.u32 %v2571, %v2575
      %v2578 = vshll.u32 %v2521, 16
      %v2580 = vrot.slane %v2578, 1
      %v2581 = vsel %vm445, %v2576, %v2580
      %v2583 = vshrl.u32 %v2458, 16
      %v2585 = vshll.u32 %v2458, 16
      %v2587 = vrot.slane %v2585, 1
      %v2588 = vor.u32 %v2583, %v2587
      %v2590 = vshll.u32 %v2522, 16
      %v2592 = vrot.slane %v2590, 1
      %v2593 = vsel %vm445, %v2588, %v2592
      %v2595 = vshrl.u32 %v2459, 16
      %v2597 = vshll.u32 %v2459, 16
      %v2599 = vrot.slane %v2597, 1
      %v2600 = vor.u32 %v2595, %v2599
      %v2602 = vshll.u32 %v2523, 16
      %v2604 = vrot.slane %v2602, 1
      %v2605 = vsel %vm445, %v2600, %v2604
      %v2607 = vshrl.u32 %v2460, 16
      %v2609 = vshll.u32 %v2460, 16
      %v2611 = vrot.slane %v2609, 1
      %v2612 = vor.u32 %v2607, %v2611
      %v2614 = vshll.u32 %v2524, 16
      %v2616 = vrot.slane %v2614, 1
      %v2617 = vsel %vm445, %v2612, %v2616
      %v2619 = vshrl.u32 %v2461, 16
      %v2621 = vshll.u32 %v2461, 16
      %v2623 = vrot.slane %v2621, 1
      %v2624 = vor.u32 %v2619, %v2623
      %v2626 = vshll.u32 %v2525, 16
      %v2628 = vrot.slane %v2626, 1
      %v2629 = vsel %vm445, %v2624, %v2628
      %v2631 = vshrl.u32 %v2462, 16
      %v2633 = vshll.u32 %v2462, 16
      %v2635 = vrot.slane %v2633, 1
      %v2636 = vor.u32 %v2631, %v2635
      %v2638 = vshll.u32 %v2526, 16
      %v2640 = vrot.slane %v2638, 1
      %v2641 = vsel %vm445, %v2636, %v2640
      %v2643 = vshrl.u32 %v2463, 16
      %v2645 = vshll.u32 %v2463, 16
      %v2647 = vrot.slane %v2645, 1
      %v2648 = vor.u32 %v2643, %v2647
      %v2650 = vshll.u32 %v2527, 16
      %v2652 = vrot.slane %v2650, 1
      %v2653 = vsel %vm445, %v2648, %v2652
      %v2655 = vshrl.u32 %v2464, 16
      %v2657 = vshll.u32 %v2464, 16
      %v2659 = vrot.slane %v2657, 1
      %v2660 = vor.u32 %v2655, %v2659
      %v2662 = vshll.u32 %v2528, 16
      %v2664 = vrot.slane %v2662, 1
      %v2665 = vsel %vm445, %v2660, %v2664
      %v2667 = vshrl.u32 %v2465, 16
      %v2669 = vshll.u32 %v2465, 16
      %v2671 = vrot.slane %v2669, 1
      %v2672 = vor.u32 %v2667, %v2671
      %v2674 = vshll.u32 %v2529, 16
      %v2676 = vrot.slane %v2674, 1
      %v2677 = vsel %vm445, %v2672, %v2676
      %v2679 = vshrl.u32 %v2466, 16
      %v2681 = vshll.u32 %v2466, 16
      %v2683 = vrot.slane %v2681, 1
      %v2684 = vor.u32 %v2679, %v2683
      %v2686 = vshll.u32 %v2530, 16
      %v2688 = vrot.slane %v2686, 1
      %v2689 = vsel %vm445, %v2684, %v2688
      %v2691 = vshrl.u32 %v2467, 16
      %v2693 = vshll.u32 %v2467, 16
      %v2695 = vrot.slane %v2693, 1
      %v2696 = vor.u32 %v2691, %v2695
      %v2698 = vshll.u32 %v2531, 16
      %v2700 = vrot.slane %v2698, 1
      %v2701 = vsel %vm445, %v2696, %v2700
      %v2703 = vshrl.u32 %v2468, 16
      %v2705 = vshll.u32 %v2468, 16
      %v2707 = vrot.slane %v2705, 1
      %v2708 = vor.u32 %v2703, %v2707
      %v2710 = vshll.u32 %v2532, 16
      %v2712 = vrot.slane %v2710, 1
      %v2713 = vsel %vm445, %v2708, %v2712
      %v2715 = vshrl.u32 %v2469, 16
      %v2717 = vshll.u32 %v2469, 16
      %v2719 = vrot.slane %v2717, 1
      %v2720 = vor.u32 %v2715, %v2719
      %v2722 = vshll.u32 %v2533, 16
      %v2724 = vrot.slane %v2722, 1
      %v2725 = vsel %vm445, %v2720, %v2724
      %v2742 = vrot.slane %v2454, 1
      %v2743 = vrot.slane %v2518, 1
      %v2744 = vsel %vm654, %v2742, %v2743
      %v2745 = vrot.slane %v2455, 1
      %v2746 = vrot.slane %v2519, 1
      %v2747 = vsel %vm654, %v2745, %v2746
      %v2748 = vrot.slane %v2456, 1
      %v2749 = vrot.slane %v2520, 1
      %v2750 = vsel %vm654, %v2748, %v2749
      %v2751 = vrot.slane %v2457, 1
      %v2752 = vrot.slane %v2521, 1
      %v2753 = vsel %vm654, %v2751, %v2752
      %v2754 = vrot.slane %v2458, 1
      %v2755 = vrot.slane %v2522, 1
      %v2756 = vsel %vm654, %v2754, %v2755
      %v2757 = vrot.slane %v2459, 1
      %v2758 = vrot.slane %v2523, 1
      %v2759 = vsel %vm654, %v2757, %v2758
      %v2760 = vrot.slane %v2460, 1
      %v2761 = vrot.slane %v2524, 1
      %v2762 = vsel %vm654, %v2760, %v2761
      %v2763 = vrot.slane %v2461, 1
      %v2764 = vrot.slane %v2525, 1
      %v2765 = vsel %vm654, %v2763, %v2764
      %v2766 = vrot.slane %v2462, 1
      %v2767 = vrot.slane %v2526, 1
      %v2768 = vsel %vm654, %v2766, %v2767
      %v2769 = vrot.slane %v2463, 1
      %v2770 = vrot.slane %v2527, 1
      %v2771 = vsel %vm654, %v2769, %v2770
      %v2772 = vrot.slane %v2464, 1
      %v2773 = vrot.slane %v2528, 1
      %v2774 = vsel %vm654, %v2772, %v2773
      %v2775 = vrot.slane %v2465, 1
      %v2776 = vrot.slane %v2529, 1
      %v2777 = vsel %vm654, %v2775, %v2776
      %v2778 = vrot.slane %v2466, 1
      %v2779 = vrot.slane %v2530, 1
      %v2780 = vsel %vm654, %v2778, %v2779
      %v2781 = vrot.slane %v2467, 1
      %v2782 = vrot.slane %v2531, 1
      %v2783 = vsel %vm654, %v2781, %v2782
      %v2784 = vrot.slane %v2468, 1
      %v2785 = vrot.slane %v2532, 1
      %v2786 = vsel %vm654, %v2784, %v2785
      %v2787 = vrot.slane %v2469, 1
      %v2788 = vrot.slane %v2533, 1
      %v2789 = vsel %vm654, %v2787, %v2788
      %s2806 = scalar_lea.vmem %s1, 384
      %v2807 = vld [vmem:[%s2806] sm:$0xf]
      %v2808 = vld [vmem:[%s2806 + $0x4] sm:$0xf]
      %v2809 = vld [vmem:[%s2806 + $0x8] sm:$0xf]
      %v2810 = vld [vmem:[%s2806 + $0xc] sm:$0xf]
      %v2811 = vld [vmem:[%s2806 + $0x10] sm:$0xf]
      %v2812 = vld [vmem:[%s2806 + $0x14] sm:$0xf]
      %v2813 = vld [vmem:[%s2806 + $0x18] sm:$0xf]
      %v2814 = vld [vmem:[%s2806 + $0x1c] sm:$0xf]
      %v2815 = vld [vmem:[%s2806 + $0x20] sm:$0xf]
      %v2816 = vld [vmem:[%s2806 + $0x24] sm:$0xf]
      %v2817 = vld [vmem:[%s2806 + $0x28] sm:$0xf]
      %v2818 = vld [vmem:[%s2806 + $0x2c] sm:$0xf]
      %v2819 = vld [vmem:[%s2806 + $0x30] sm:$0xf]
      %v2820 = vld [vmem:[%s2806 + $0x34] sm:$0xf]
      %v2821 = vld [vmem:[%s2806 + $0x38] sm:$0xf]
      %v2822 = vld [vmem:[%s2806 + $0x3c] sm:$0xf]
      %v2823 = vld [vmem:[%s2806 + $0x40] sm:$0xf]
      %v2824 = vld [vmem:[%s2806 + $0x44] sm:$0xf]
      %v2825 = vld [vmem:[%s2806 + $0x48] sm:$0xf]
      %v2826 = vld [vmem:[%s2806 + $0x4c] sm:$0xf]
      %v2827 = vld [vmem:[%s2806 + $0x50] sm:$0xf]
      %v2828 = vld [vmem:[%s2806 + $0x54] sm:$0xf]
      %v2829 = vld [vmem:[%s2806 + $0x58] sm:$0xf]
      %v2830 = vld [vmem:[%s2806 + $0x5c] sm:$0xf]
      %v2831 = vld [vmem:[%s2806 + $0x60] sm:$0xf]
      %v2832 = vld [vmem:[%s2806 + $0x64] sm:$0xf]
      %v2833 = vld [vmem:[%s2806 + $0x68] sm:$0xf]
      %v2834 = vld [vmem:[%s2806 + $0x6c] sm:$0xf]
      %v2835 = vld [vmem:[%s2806 + $0x70] sm:$0xf]
      %v2836 = vld [vmem:[%s2806 + $0x74] sm:$0xf]
      %v2837 = vld [vmem:[%s2806 + $0x78] sm:$0xf]
      %v2838 = vld [vmem:[%s2806 + $0x7c] sm:$0xf]
      %v2839 = vld [vmem:[%s2806 + $0x80] sm:$0xf]
      %v2840 = vld [vmem:[%s2806 + $0x84] sm:$0xf]
      %v2841 = vld [vmem:[%s2806 + $0x88] sm:$0xf]
      %v2842 = vld [vmem:[%s2806 + $0x8c] sm:$0xf]
      %v2843 = vld [vmem:[%s2806 + $0x90] sm:$0xf]
      %v2844 = vld [vmem:[%s2806 + $0x94] sm:$0xf]
      %v2845 = vld [vmem:[%s2806 + $0x98] sm:$0xf]
      %v2846 = vld [vmem:[%s2806 + $0x9c] sm:$0xf]
      %v2847 = vld [vmem:[%s2806 + $0xa0] sm:$0xf]
      %v2848 = vld [vmem:[%s2806 + $0xa4] sm:$0xf]
      %v2849 = vld [vmem:[%s2806 + $0xa8] sm:$0xf]
      %v2850 = vld [vmem:[%s2806 + $0xac] sm:$0xf]
      %v2851 = vld [vmem:[%s2806 + $0xb0] sm:$0xf]
      %v2852 = vld [vmem:[%s2806 + $0xb4] sm:$0xf]
      %v2853 = vld [vmem:[%s2806 + $0xb8] sm:$0xf]
      %v2854 = vld [vmem:[%s2806 + $0xbc] sm:$0xf]
      %v2903 = vunpack.c.l.b16 %v2807
      %v2904 = vunpack.c.l.b16 %v2808
      %v2905 = vunpack.c.l.b16 %v2809
      %v2906 = vunpack.c.l.b16 %v2810
      %v2907 = vunpack.c.l.b16 %v2811
      %v2908 = vunpack.c.l.b16 %v2812
      %v2909 = vunpack.c.l.b16 %v2813
      %v2910 = vunpack.c.l.b16 %v2814
      %v2911 = vunpack.c.l.b16 %v2815
      %v2912 = vunpack.c.l.b16 %v2816
      %v2913 = vunpack.c.l.b16 %v2817
      %v2914 = vunpack.c.l.b16 %v2818
      %v2915 = vunpack.c.l.b16 %v2819
      %v2916 = vunpack.c.l.b16 %v2820
      %v2917 = vunpack.c.l.b16 %v2821
      %v2918 = vunpack.c.l.b16 %v2822
      %v2919 = vunpack.c.l.b16 %v2823
      %v2920 = vunpack.c.l.b16 %v2824
      %v2921 = vunpack.c.l.b16 %v2825
      %v2922 = vunpack.c.l.b16 %v2826
      %v2923 = vunpack.c.l.b16 %v2827
      %v2924 = vunpack.c.l.b16 %v2828
      %v2925 = vunpack.c.l.b16 %v2829
      %v2926 = vunpack.c.l.b16 %v2830
      %v2927 = vunpack.c.l.b16 %v2831
      %v2928 = vunpack.c.l.b16 %v2832
      %v2929 = vunpack.c.l.b16 %v2833
      %v2930 = vunpack.c.l.b16 %v2834
      %v2931 = vunpack.c.l.b16 %v2835
      %v2932 = vunpack.c.l.b16 %v2836
      %v2933 = vunpack.c.l.b16 %v2837
      %v2934 = vunpack.c.l.b16 %v2838
      %v2935 = vunpack.c.l.b16 %v2839
      %v2936 = vunpack.c.l.b16 %v2840
      %v2937 = vunpack.c.l.b16 %v2841
      %v2938 = vunpack.c.l.b16 %v2842
      %v2939 = vunpack.c.l.b16 %v2843
      %v2940 = vunpack.c.l.b16 %v2844
      %v2941 = vunpack.c.l.b16 %v2845
      %v2942 = vunpack.c.l.b16 %v2846
      %v2943 = vunpack.c.l.b16 %v2847
      %v2944 = vunpack.c.l.b16 %v2848
      %v2945 = vunpack.c.l.b16 %v2849
      %v2946 = vunpack.c.l.b16 %v2850
      %v2947 = vunpack.c.l.b16 %v2851
      %v2948 = vunpack.c.l.b16 %v2852
      %v2949 = vunpack.c.l.b16 %v2853
      %v2950 = vunpack.c.l.b16 %v2854
      %v2951 = vpack.c.b16 %v2904, %v2903
      %v2952 = vpack.c.b16 %v2906, %v2905
      %v2953 = vpack.c.b16 %v2908, %v2907
      %v2954 = vpack.c.b16 %v2910, %v2909
      %v2955 = vpack.c.b16 %v2912, %v2911
      %v2956 = vpack.c.b16 %v2914, %v2913
      %v2957 = vpack.c.b16 %v2916, %v2915
      %v2958 = vpack.c.b16 %v2918, %v2917
      %v2959 = vpack.c.b16 %v2920, %v2919
      %v2960 = vpack.c.b16 %v2922, %v2921
      %v2961 = vpack.c.b16 %v2924, %v2923
      %v2962 = vpack.c.b16 %v2926, %v2925
      %v2963 = vpack.c.b16 %v2928, %v2927
      %v2964 = vpack.c.b16 %v2930, %v2929
      %v2965 = vpack.c.b16 %v2932, %v2931
      %v2966 = vpack.c.b16 %v2934, %v2933
      %v2967 = vpack.c.b16 %v2936, %v2935
      %v2968 = vpack.c.b16 %v2938, %v2937
      %v2969 = vpack.c.b16 %v2940, %v2939
      %v2970 = vpack.c.b16 %v2942, %v2941
      %v2971 = vpack.c.b16 %v2944, %v2943
      %v2972 = vpack.c.b16 %v2946, %v2945
      %v2973 = vpack.c.b16 %v2948, %v2947
      %v2974 = vpack.c.b16 %v2950, %v2949
      %2999 = vmatprep.subr.bf16.mxu0 0
      %3000 = vmatpush1.bf16.msra.mxu0 %v2958
      %3001 = vmatprep.subr.bf16.mxu0 0
      %3002 = vmatpush1.bf16.msra.mxu0 %v2957
      %3003 = vmatprep.subr.bf16.mxu0 0
      %3004 = vmatpush1.bf16.msra.mxu0 %v2956
      %3005 = vmatprep.subr.bf16.mxu0 0
      %3006 = vmatpush1.bf16.msra.mxu0 %v2955
      %3007 = vmatprep.subr.bf16.mxu0 0
      %3008 = vmatpush1.bf16.msra.mxu0 %v2954
      %3009 = vmatprep.subr.bf16.mxu0 0
      %3010 = vmatpush1.bf16.msra.mxu0 %v2953
      %3011 = vmatprep.subr.bf16.mxu0 0
      %3012 = vmatpush1.bf16.msra.mxu0 %v2952
      %3013 = vmatprep.subr.bf16.mxu0 0
      %3014 = vmatpush1.bf16.msra.mxu0 %v2951
      %3015 = vmatprep.subr.bf16.mxu0 0
      %3016 = vmatpush2.bf16.msra.mxu0 %v2966
      %3017 = vmatprep.subr.bf16.mxu0 0
      %3018 = vmatpush2.bf16.msra.mxu0 %v2965
      %3019 = vmatprep.subr.bf16.mxu0 0
      %3020 = vmatpush2.bf16.msra.mxu0 %v2964
      %3021 = vmatprep.subr.bf16.mxu0 0
      %3022 = vmatpush2.bf16.msra.mxu0 %v2963
      %3023 = vmatprep.subr.bf16.mxu0 0
      %3024 = vmatpush2.bf16.msra.mxu0 %v2962
      %3025 = vmatprep.subr.bf16.mxu0 0
      %3026 = vmatpush2.bf16.msra.mxu0 %v2961
      %3027 = vmatprep.subr.bf16.mxu0 0
      %3028 = vmatpush2.bf16.msra.mxu0 %v2960
      %3029 = vmatprep.subr.bf16.mxu0 0
      %3030 = vmatpush2.bf16.msra.mxu0 %v2959
      %3031 = vmatprep.mubr.bf16.mxu0 %v2545
      %3032 = vmatmul.mubr.bf16.gmra.mxu0 %v2454
      %v3033 = vpop.f32.mrf.mxu0
      %v3034 = vadd.f32 0.0, %v3033
      %v3035 = vpop.f32.mrf.mxu0
      %v3036 = vpop.f32.mrf.mxu0
      %v3037 = vadd.f32 0.0, %v3036
      %v3038 = vpop.f32.mrf.mxu0
      %3039 = vmatprep.mubr.bf16.mxu0 %v2557
      %3040 = vmatmul.mubr.bf16.gmra.mxu0 %v2455
      %v3041 = vpop.f32.mrf.mxu0
      %v3042 = vadd.f32 0.0, %v3041
      %v3043 = vpop.f32.mrf.mxu0
      %v3044 = vpop.f32.mrf.mxu0
      %v3045 = vadd.f32 0.0, %v3044
      %v3046 = vpop.f32.mrf.mxu0
      %3047 = vmatprep.mubr.bf16.mxu0 %v2569
      %3048 = vmatmul.mubr.bf16.gmra.mxu0 %v2456
      %v3049 = vpop.f32.mrf.mxu0
      %v3050 = vadd.f32 0.0, %v3049
      %v3051 = vpop.f32.mrf.mxu0
      %v3052 = vpop.f32.mrf.mxu0
      %v3053 = vadd.f32 0.0, %v3052
      %v3054 = vpop.f32.mrf.mxu0
      %3055 = vmatprep.mubr.bf16.mxu0 %v2581
      %3056 = vmatmul.mubr.bf16.gmra.mxu0 %v2457
      %v3057 = vpop.f32.mrf.mxu0
      %v3058 = vadd.f32 0.0, %v3057
      %v3059 = vpop.f32.mrf.mxu0
      %v3060 = vpop.f32.mrf.mxu0
      %v3061 = vadd.f32 0.0, %v3060
      %v3062 = vpop.f32.mrf.mxu0
      %3063 = vmatprep.mubr.bf16.mxu0 %v2593
      %3064 = vmatmul.mubr.bf16.gmra.mxu0 %v2458
      %v3065 = vpop.f32.mrf.mxu0
      %v3066 = vadd.f32 0.0, %v3065
      %v3067 = vpop.f32.mrf.mxu0
      %v3068 = vpop.f32.mrf.mxu0
      %v3069 = vadd.f32 0.0, %v3068
      %v3070 = vpop.f32.mrf.mxu0
      %3071 = vmatprep.mubr.bf16.mxu0 %v2605
      %3072 = vmatmul.mubr.bf16.gmra.mxu0 %v2459
      %v3073 = vpop.f32.mrf.mxu0
      %v3074 = vadd.f32 0.0, %v3073
      %v3075 = vpop.f32.mrf.mxu0
      %v3076 = vpop.f32.mrf.mxu0
      %v3077 = vadd.f32 0.0, %v3076
      %v3078 = vpop.f32.mrf.mxu0
      %3079 = vmatprep.mubr.bf16.mxu0 %v2617
      %3080 = vmatmul.mubr.bf16.gmra.mxu0 %v2460
      %v3081 = vpop.f32.mrf.mxu0
      %v3082 = vadd.f32 0.0, %v3081
      %v3083 = vpop.f32.mrf.mxu0
      %v3084 = vpop.f32.mrf.mxu0
      %v3085 = vadd.f32 0.0, %v3084
      %v3086 = vpop.f32.mrf.mxu0
      %3087 = vmatprep.mubr.bf16.mxu0 %v2629
      %3088 = vmatmul.mubr.bf16.gmra.mxu0 %v2461
      %v3089 = vpop.f32.mrf.mxu0
      %v3090 = vadd.f32 0.0, %v3089
      %v3091 = vpop.f32.mrf.mxu0
      %v3092 = vpop.f32.mrf.mxu0
      %v3093 = vadd.f32 0.0, %v3092
      %v3094 = vpop.f32.mrf.mxu0
      %3095 = vmatprep.mubr.bf16.mxu0 %v2641
      %3096 = vmatmul.mubr.bf16.gmra.mxu0 %v2462
      %v3097 = vpop.f32.mrf.mxu0
      %v3098 = vadd.f32 0.0, %v3097
      %v3099 = vpop.f32.mrf.mxu0
      %v3100 = vpop.f32.mrf.mxu0
      %v3101 = vadd.f32 0.0, %v3100
      %v3102 = vpop.f32.mrf.mxu0
      %3103 = vmatprep.mubr.bf16.mxu0 %v2653
      %3104 = vmatmul.mubr.bf16.gmra.mxu0 %v2463
      %v3105 = vpop.f32.mrf.mxu0
      %v3106 = vadd.f32 0.0, %v3105
      %v3107 = vpop.f32.mrf.mxu0
      %v3108 = vpop.f32.mrf.mxu0
      %v3109 = vadd.f32 0.0, %v3108
      %v3110 = vpop.f32.mrf.mxu0
      %3111 = vmatprep.mubr.bf16.mxu0 %v2665
      %3112 = vmatmul.mubr.bf16.gmra.mxu0 %v2464
      %v3113 = vpop.f32.mrf.mxu0
      %v3114 = vadd.f32 0.0, %v3113
      %v3115 = vpop.f32.mrf.mxu0
      %v3116 = vpop.f32.mrf.mxu0
      %v3117 = vadd.f32 0.0, %v3116
      %v3118 = vpop.f32.mrf.mxu0
      %3119 = vmatprep.mubr.bf16.mxu0 %v2677
      %3120 = vmatmul.mubr.bf16.gmra.mxu0 %v2465
      %v3121 = vpop.f32.mrf.mxu0
      %v3122 = vadd.f32 0.0, %v3121
      %v3123 = vpop.f32.mrf.mxu0
      %v3124 = vpop.f32.mrf.mxu0
      %v3125 = vadd.f32 0.0, %v3124
      %v3126 = vpop.f32.mrf.mxu0
      %3127 = vmatprep.mubr.bf16.mxu0 %v2689
      %3128 = vmatmul.mubr.bf16.gmra.mxu0 %v2466
      %v3129 = vpop.f32.mrf.mxu0
      %v3130 = vadd.f32 0.0, %v3129
      %v3131 = vpop.f32.mrf.mxu0
      %v3132 = vpop.f32.mrf.mxu0
      %v3133 = vadd.f32 0.0, %v3132
      %v3134 = vpop.f32.mrf.mxu0
      %3135 = vmatprep.mubr.bf16.mxu0 %v2701
      %3136 = vmatmul.mubr.bf16.gmra.mxu0 %v2467
      %v3137 = vpop.f32.mrf.mxu0
      %v3138 = vadd.f32 0.0, %v3137
      %v3139 = vpop.f32.mrf.mxu0
      %v3140 = vpop.f32.mrf.mxu0
      %v3141 = vadd.f32 0.0, %v3140
      %v3142 = vpop.f32.mrf.mxu0
      %3143 = vmatprep.mubr.bf16.mxu0 %v2713
      %3144 = vmatmul.mubr.bf16.gmra.mxu0 %v2468
      %v3145 = vpop.f32.mrf.mxu0
      %v3146 = vadd.f32 0.0, %v3145
      %v3147 = vpop.f32.mrf.mxu0
      %v3148 = vpop.f32.mrf.mxu0
      %v3149 = vadd.f32 0.0, %v3148
      %v3150 = vpop.f32.mrf.mxu0
      %3151 = vmatprep.mubr.bf16.mxu0 %v2725
      %3152 = vmatmul.mubr.bf16.gmra.mxu0 %v2469
      %v3153 = vpop.f32.mrf.mxu0
      %v3154 = vadd.f32 0.0, %v3153
      %v3155 = vpop.f32.mrf.mxu0
      %v3156 = vpop.f32.mrf.mxu0
      %v3157 = vadd.f32 0.0, %v3156
      %v3158 = vpop.f32.mrf.mxu0
      %3159 = vdwg.mxu0
      %3160 = vmatprep.subr.bf16.mxu0 0
      %3161 = vmatpush1.bf16.msra.mxu0 %v2974
      %3162 = vmatprep.subr.bf16.mxu0 0
      %3163 = vmatpush1.bf16.msra.mxu0 %v2973
      %3164 = vmatprep.subr.bf16.mxu0 0
      %3165 = vmatpush1.bf16.msra.mxu0 %v2972
      %3166 = vmatprep.subr.bf16.mxu0 0
      %3167 = vmatpush1.bf16.msra.mxu0 %v2971
      %3168 = vmatprep.subr.bf16.mxu0 0
      %3169 = vmatpush1.bf16.msra.mxu0 %v2970
      %3170 = vmatprep.subr.bf16.mxu0 0
      %3171 = vmatpush1.bf16.msra.mxu0 %v2969
      %3172 = vmatprep.subr.bf16.mxu0 0
      %3173 = vmatpush1.bf16.msra.mxu0 %v2968
      %3174 = vmatprep.subr.bf16.mxu0 0
      %3175 = vmatpush1.bf16.msra.mxu0 %v2967
      %3176 = vmatprep.subr.bf16.mxu0 0
      %3177 = vmatpush2.bf16.msra.mxu0 0
      %3178 = vmatprep.subr.bf16.mxu0 0
      %3179 = vmatpush2.bf16.msra.mxu0 0
      %3180 = vmatprep.subr.bf16.mxu0 0
      %3181 = vmatpush2.bf16.msra.mxu0 0
      %3182 = vmatprep.subr.bf16.mxu0 0
      %3183 = vmatpush2.bf16.msra.mxu0 0
      %3184 = vmatprep.subr.bf16.mxu0 0
      %3185 = vmatpush2.bf16.msra.mxu0 0
      %3186 = vmatprep.subr.bf16.mxu0 0
      %3187 = vmatpush2.bf16.msra.mxu0 0
      %3188 = vmatprep.subr.bf16.mxu0 0
      %3189 = vmatpush2.bf16.msra.mxu0 0
      %3190 = vmatprep.subr.bf16.mxu0 0
      %3191 = vmatpush2.bf16.msra.mxu0 0
      %3192 = vmatprep.mubr.bf16.mxu0 0
      %3193 = vmatmul.mubr.bf16.gmra.mxu0 %v2744
      %v3194 = vpop.f32.mrf.mxu0
      %v3195 = vadd.f32 %v3034, %v3194
      %v3196 = vpop.f32.mrf.mxu0
      %v3197 = vpop.f32.mrf.mxu0
      %v3198 = vadd.f32 %v3037, %v3197
      %v3199 = vpop.f32.mrf.mxu0
      %3200 = vmatprep.mubr.bf16.mxu0 0
      %3201 = vmatmul.mubr.bf16.gmra.mxu0 %v2747
      %v3202 = vpop.f32.mrf.mxu0
      %v3203 = vadd.f32 %v3042, %v3202
      %v3204 = vpop.f32.mrf.mxu0
      %v3205 = vpop.f32.mrf.mxu0
      %v3206 = vadd.f32 %v3045, %v3205
      %v3207 = vpop.f32.mrf.mxu0
      %3208 = vmatprep.mubr.bf16.mxu0 0
      %3209 = vmatmul.mubr.bf16.gmra.mxu0 %v2750
      %v3210 = vpop.f32.mrf.mxu0
      %v3211 = vadd.f32 %v3050, %v3210
      %v3212 = vpop.f32.mrf.mxu0
      %v3213 = vpop.f32.mrf.mxu0
      %v3214 = vadd.f32 %v3053, %v3213
      %v3215 = vpop.f32.mrf.mxu0
      %3216 = vmatprep.mubr.bf16.mxu0 0
      %3217 = vmatmul.mubr.bf16.gmra.mxu0 %v2753
      %v3218 = vpop.f32.mrf.mxu0
      %v3219 = vadd.f32 %v3058, %v3218
      %v3220 = vpop.f32.mrf.mxu0
      %v3221 = vpop.f32.mrf.mxu0
      %v3222 = vadd.f32 %v3061, %v3221
      %v3223 = vpop.f32.mrf.mxu0
      %3224 = vmatprep.mubr.bf16.mxu0 0
      %3225 = vmatmul.mubr.bf16.gmra.mxu0 %v2756
      %v3226 = vpop.f32.mrf.mxu0
      %v3227 = vadd.f32 %v3066, %v3226
      %v3228 = vpop.f32.mrf.mxu0
      %v3229 = vpop.f32.mrf.mxu0
      %v3230 = vadd.f32 %v3069, %v3229
      %v3231 = vpop.f32.mrf.mxu0
      %3232 = vmatprep.mubr.bf16.mxu0 0
      %3233 = vmatmul.mubr.bf16.gmra.mxu0 %v2759
      %v3234 = vpop.f32.mrf.mxu0
      %v3235 = vadd.f32 %v3074, %v3234
      %v3236 = vpop.f32.mrf.mxu0
      %v3237 = vpop.f32.mrf.mxu0
      %v3238 = vadd.f32 %v3077, %v3237
      %v3239 = vpop.f32.mrf.mxu0
      %3240 = vmatprep.mubr.bf16.mxu0 0
      %3241 = vmatmul.mubr.bf16.gmra.mxu0 %v2762
      %v3242 = vpop.f32.mrf.mxu0
      %v3243 = vadd.f32 %v3082, %v3242
      %v3244 = vpop.f32.mrf.mxu0
      %v3245 = vpop.f32.mrf.mxu0
      %v3246 = vadd.f32 %v3085, %v3245
      %v3247 = vpop.f32.mrf.mxu0
      %3248 = vmatprep.mubr.bf16.mxu0 0
      %3249 = vmatmul.mubr.bf16.gmra.mxu0 %v2765
      %v3250 = vpop.f32.mrf.mxu0
      %v3251 = vadd.f32 %v3090, %v3250
      %v3252 = vpop.f32.mrf.mxu0
      %v3253 = vpop.f32.mrf.mxu0
      %v3254 = vadd.f32 %v3093, %v3253
      %v3255 = vpop.f32.mrf.mxu0
      %3256 = vmatprep.mubr.bf16.mxu0 0
      %3257 = vmatmul.mubr.bf16.gmra.mxu0 %v2768
      %v3258 = vpop.f32.mrf.mxu0
      %v3259 = vadd.f32 %v3098, %v3258
      %v3260 = vpop.f32.mrf.mxu0
      %v3261 = vpop.f32.mrf.mxu0
      %v3262 = vadd.f32 %v3101, %v3261
      %v3263 = vpop.f32.mrf.mxu0
      %3264 = vmatprep.mubr.bf16.mxu0 0
      %3265 = vmatmul.mubr.bf16.gmra.mxu0 %v2771
      %v3266 = vpop.f32.mrf.mxu0
      %v3267 = vadd.f32 %v3106, %v3266
      %v3268 = vpop.f32.mrf.mxu0
      %v3269 = vpop.f32.mrf.mxu0
      %v3270 = vadd.f32 %v3109, %v3269
      %v3271 = vpop.f32.mrf.mxu0
      %3272 = vmatprep.mubr.bf16.mxu0 0
      %3273 = vmatmul.mubr.bf16.gmra.mxu0 %v2774
      %v3274 = vpop.f32.mrf.mxu0
      %v3275 = vadd.f32 %v3114, %v3274
      %v3276 = vpop.f32.mrf.mxu0
      %v3277 = vpop.f32.mrf.mxu0
      %v3278 = vadd.f32 %v3117, %v3277
      %v3279 = vpop.f32.mrf.mxu0
      %3280 = vmatprep.mubr.bf16.mxu0 0
      %3281 = vmatmul.mubr.bf16.gmra.mxu0 %v2777
      %v3282 = vpop.f32.mrf.mxu0
      %v3283 = vadd.f32 %v3122, %v3282
      %v3284 = vpop.f32.mrf.mxu0
      %v3285 = vpop.f32.mrf.mxu0
      %v3286 = vadd.f32 %v3125, %v3285
      %v3287 = vpop.f32.mrf.mxu0
      %3288 = vmatprep.mubr.bf16.mxu0 0
      %3289 = vmatmul.mubr.bf16.gmra.mxu0 %v2780
      %v3290 = vpop.f32.mrf.mxu0
      %v3291 = vadd.f32 %v3130, %v3290
      %v3292 = vpop.f32.mrf.mxu0
      %v3293 = vpop.f32.mrf.mxu0
      %v3294 = vadd.f32 %v3133, %v3293
      %v3295 = vpop.f32.mrf.mxu0
      %3296 = vmatprep.mubr.bf16.mxu0 0
      %3297 = vmatmul.mubr.bf16.gmra.mxu0 %v2783
      %v3298 = vpop.f32.mrf.mxu0
      %v3299 = vadd.f32 %v3138, %v3298
      %v3300 = vpop.f32.mrf.mxu0
      %v3301 = vpop.f32.mrf.mxu0
      %v3302 = vadd.f32 %v3141, %v3301
      %v3303 = vpop.f32.mrf.mxu0
      %3304 = vmatprep.mubr.bf16.mxu0 0
      %3305 = vmatmul.mubr.bf16.gmra.mxu0 %v2786
      %v3306 = vpop.f32.mrf.mxu0
      %v3307 = vadd.f32 %v3146, %v3306
      %v3308 = vpop.f32.mrf.mxu0
      %v3309 = vpop.f32.mrf.mxu0
      %v3310 = vadd.f32 %v3149, %v3309
      %v3311 = vpop.f32.mrf.mxu0
      %3312 = vmatprep.mubr.bf16.mxu0 0
      %3313 = vmatmul.mubr.bf16.gmra.mxu0 %v2789
      %v3314 = vpop.f32.mrf.mxu0
      %v3315 = vadd.f32 %v3154, %v3314
      %v3316 = vpop.f32.mrf.mxu0
      %v3317 = vpop.f32.mrf.mxu0
      %v3318 = vadd.f32 %v3157, %v3317
      %v3319 = vpop.f32.mrf.mxu0
      %3320 = vdwg.mxu0
      %v3321 = vld [vmem:[#allocation3] sm:$0xff]
      %v3322 = vld [vmem:[#allocation3 + $0x8] sm:$0xff]
      %v3323 = vld [vmem:[#allocation3 + $0x10] sm:$0xff]
      %v3324 = vld [vmem:[#allocation3 + $0x18] sm:$0xff]
      %v3325 = vld [vmem:[#allocation3 + $0x20] sm:$0xff]
      %v3326 = vld [vmem:[#allocation3 + $0x28] sm:$0xff]
      %v3327 = vld [vmem:[#allocation3 + $0x30] sm:$0xff]
      %v3328 = vld [vmem:[#allocation3 + $0x38] sm:$0xff]
      %v3329 = vld [vmem:[#allocation3 + $0x40] sm:$0xff]
      %v3330 = vld [vmem:[#allocation3 + $0x48] sm:$0xff]
      %v3331 = vld [vmem:[#allocation3 + $0x50] sm:$0xff]
      %v3332 = vld [vmem:[#allocation3 + $0x58] sm:$0xff]
      %v3333 = vld [vmem:[#allocation3 + $0x60] sm:$0xff]
      %v3334 = vld [vmem:[#allocation3 + $0x68] sm:$0xff]
      %v3335 = vld [vmem:[#allocation3 + $0x70] sm:$0xff]
      %v3336 = vld [vmem:[#allocation3 + $0x78] sm:$0xff]
      %v3337 = vld [vmem:[#allocation3 + $0x80] sm:$0xff]
      %v3338 = vld [vmem:[#allocation3 + $0x88] sm:$0xff]
      %v3339 = vld [vmem:[#allocation3 + $0x90] sm:$0xff]
      %v3340 = vld [vmem:[#allocation3 + $0x98] sm:$0xff]
      %v3341 = vld [vmem:[#allocation3 + $0xa0] sm:$0xff]
      %v3342 = vld [vmem:[#allocation3 + $0xa8] sm:$0xff]
      %v3343 = vld [vmem:[#allocation3 + $0xb0] sm:$0xff]
      %v3344 = vld [vmem:[#allocation3 + $0xb8] sm:$0xff]
      %v3345 = vld [vmem:[#allocation3 + $0xc0] sm:$0xff]
      %v3346 = vld [vmem:[#allocation3 + $0xc8] sm:$0xff]
      %v3347 = vld [vmem:[#allocation3 + $0xd0] sm:$0xff]
      %v3348 = vld [vmem:[#allocation3 + $0xd8] sm:$0xff]
      %v3349 = vld [vmem:[#allocation3 + $0xe0] sm:$0xff]
      %v3350 = vld [vmem:[#allocation3 + $0xe8] sm:$0xff]
      %v3351 = vld [vmem:[#allocation3 + $0xf0] sm:$0xff]
      %v3352 = vld [vmem:[#allocation3 + $0xf8] sm:$0xff]
      %v3353 = vadd.f32 %v3321, %v3195
      %v3354 = vadd.f32 %v3322, %v3198
      %v3355 = vadd.f32 %v3323, %v3203
      %v3356 = vadd.f32 %v3324, %v3206
      %v3357 = vadd.f32 %v3325, %v3211
      %v3358 = vadd.f32 %v3326, %v3214
      %v3359 = vadd.f32 %v3327, %v3219
      %v3360 = vadd.f32 %v3328, %v3222
      %v3361 = vadd.f32 %v3329, %v3227
      %v3362 = vadd.f32 %v3330, %v3230
      %v3363 = vadd.f32 %v3331, %v3235
      %v3364 = vadd.f32 %v3332, %v3238
      %v3365 = vadd.f32 %v3333, %v3243
      %v3366 = vadd.f32 %v3334, %v3246
      %v3367 = vadd.f32 %v3335, %v3251
      %v3368 = vadd.f32 %v3336, %v3254
      %v3369 = vadd.f32 %v3337, %v3259
      %v3370 = vadd.f32 %v3338, %v3262
      %v3371 = vadd.f32 %v3339, %v3267
      %v3372 = vadd.f32 %v3340, %v3270
      %v3373 = vadd.f32 %v3341, %v3275
      %v3374 = vadd.f32 %v3342, %v3278
      %v3375 = vadd.f32 %v3343, %v3283
      %v3376 = vadd.f32 %v3344, %v3286
      %v3377 = vadd.f32 %v3345, %v3291
      %v3378 = vadd.f32 %v3346, %v3294
      %v3379 = vadd.f32 %v3347, %v3299
      %v3380 = vadd.f32 %v3348, %v3302
      %v3381 = vadd.f32 %v3349, %v3307
      %v3382 = vadd.f32 %v3350, %v3310
      %v3383 = vadd.f32 %v3351, %v3315
      %v3384 = vadd.f32 %v3352, %v3318
      %3385 = vst [vmem:[#allocation3] sm:$0xff] %v3353
      %3386 = vst [vmem:[#allocation3 + $0x8] sm:$0xff] %v3354
      %3387 = vst [vmem:[#allocation3 + $0x10] sm:$0xff] %v3355
      %3388 = vst [vmem:[#allocation3 + $0x18] sm:$0xff] %v3356
      %3389 = vst [vmem:[#allocation3 + $0x20] sm:$0xff] %v3357
      %3390 = vst [vmem:[#allocation3 + $0x28] sm:$0xff] %v3358
      %3391 = vst [vmem:[#allocation3 + $0x30] sm:$0xff] %v3359
      %3392 = vst [vmem:[#allocation3 + $0x38] sm:$0xff] %v3360
      %3393 = vst [vmem:[#allocation3 + $0x40] sm:$0xff] %v3361
      %3394 = vst [vmem:[#allocation3 + $0x48] sm:$0xff] %v3362
      %3395 = vst [vmem:[#allocation3 + $0x50] sm:$0xff] %v3363
      %3396 = vst [vmem:[#allocation3 + $0x58] sm:$0xff] %v3364
      %3397 = vst [vmem:[#allocation3 + $0x60] sm:$0xff] %v3365
      %3398 = vst [vmem:[#allocation3 + $0x68] sm:$0xff] %v3366
      %3399 = vst [vmem:[#allocation3 + $0x70] sm:$0xff] %v3367
      %3400 = vst [vmem:[#allocation3 + $0x78] sm:$0xff] %v3368
      %3401 = vst [vmem:[#allocation3 + $0x80] sm:$0xff] %v3369
      %3402 = vst [vmem:[#allocation3 + $0x88] sm:$0xff] %v3370
      %3403 = vst [vmem:[#allocation3 + $0x90] sm:$0xff] %v3371
      %3404 = vst [vmem:[#allocation3 + $0x98] sm:$0xff] %v3372
      %3405 = vst [vmem:[#allocation3 + $0xa0] sm:$0xff] %v3373
      %3406 = vst [vmem:[#allocation3 + $0xa8] sm:$0xff] %v3374
      %3407 = vst [vmem:[#allocation3 + $0xb0] sm:$0xff] %v3375
      %3408 = vst [vmem:[#allocation3 + $0xb8] sm:$0xff] %v3376
      %3409 = vst [vmem:[#allocation3 + $0xc0] sm:$0xff] %v3377
      %3410 = vst [vmem:[#allocation3 + $0xc8] sm:$0xff] %v3378
      %3411 = vst [vmem:[#allocation3 + $0xd0] sm:$0xff] %v3379
      %3412 = vst [vmem:[#allocation3 + $0xd8] sm:$0xff] %v3380
      %3413 = vst [vmem:[#allocation3 + $0xe0] sm:$0xff] %v3381
      %3414 = vst [vmem:[#allocation3 + $0xe8] sm:$0xff] %v3382
      %3415 = vst [vmem:[#allocation3 + $0xf0] sm:$0xff] %v3383
      %3416 = vst [vmem:[#allocation3 + $0xf8] sm:$0xff] %v3384
      %v3417 = vld [vmem:[#allocation3] sm:$0xff]
      %v3418 = vld [vmem:[#allocation3 + $0x8] sm:$0xff]
      %v3419 = vld [vmem:[#allocation3 + $0x10] sm:$0xff]
      %v3420 = vld [vmem:[#allocation3 + $0x18] sm:$0xff]
      %v3421 = vld [vmem:[#allocation3 + $0x20] sm:$0xff]
      %v3422 = vld [vmem:[#allocation3 + $0x28] sm:$0xff]
      %v3423 = vld [vmem:[#allocation3 + $0x30] sm:$0xff]
      %v3424 = vld [vmem:[#allocation3 + $0x38] sm:$0xff]
      %v3425 = vld [vmem:[#allocation3 + $0x40] sm:$0xff]
      %v3426 = vld [vmem:[#allocation3 + $0x48] sm:$0xff]
      %v3427 = vld [vmem:[#allocation3 + $0x50] sm:$0xff]
      %v3428 = vld [vmem:[#allocation3 + $0x58] sm:$0xff]
      %v3429 = vld [vmem:[#allocation3 + $0x60] sm:$0xff]
      %v3430 = vld [vmem:[#allocation3 + $0x68] sm:$0xff]
      %v3431 = vld [vmem:[#allocation3 + $0x70] sm:$0xff]
      %v3432 = vld [vmem:[#allocation3 + $0x78] sm:$0xff]
      %v3433 = vld [vmem:[#allocation3 + $0x80] sm:$0xff]
      %v3434 = vld [vmem:[#allocation3 + $0x88] sm:$0xff]
      %v3435 = vld [vmem:[#allocation3 + $0x90] sm:$0xff]
      %v3436 = vld [vmem:[#allocation3 + $0x98] sm:$0xff]
      %v3437 = vld [vmem:[#allocation3 + $0xa0] sm:$0xff]
      %v3438 = vld [vmem:[#allocation3 + $0xa8] sm:$0xff]
      %v3439 = vld [vmem:[#allocation3 + $0xb0] sm:$0xff]
      %v3440 = vld [vmem:[#allocation3 + $0xb8] sm:$0xff]
      %v3441 = vld [vmem:[#allocation3 + $0xc0] sm:$0xff]
      %v3442 = vld [vmem:[#allocation3 + $0xc8] sm:$0xff]
      %v3443 = vld [vmem:[#allocation3 + $0xd0] sm:$0xff]
      %v3444 = vld [vmem:[#allocation3 + $0xd8] sm:$0xff]
      %v3445 = vld [vmem:[#allocation3 + $0xe0] sm:$0xff]
      %v3446 = vld [vmem:[#allocation3 + $0xe8] sm:$0xff]
      %v3447 = vld [vmem:[#allocation3 + $0xf0] sm:$0xff]
      %v3448 = vld [vmem:[#allocation3 + $0xf8] sm:$0xff]
      %v3449 = vld [vmem:[%s2] sm:$0x1]
      %v3451 = vlaneseq
      %v3452 = vshrl.u32 %v3451, 7
      %v3453 = vsub.s32 0, %v3452
      %v3454 = vrot.slane %v3449, %v3453
      %v3456 = vadd.f32 %v3417, %v3454
      %v3457 = vadd.f32 %v3418, %v3454
      %v3458 = vadd.f32 %v3419, %v3454
      %v3459 = vadd.f32 %v3420, %v3454
      %v3460 = vadd.f32 %v3421, %v3454
      %v3461 = vadd.f32 %v3422, %v3454
      %v3462 = vadd.f32 %v3423, %v3454
      %v3463 = vadd.f32 %v3424, %v3454
      %v3464 = vadd.f32 %v3425, %v3454
      %v3465 = vadd.f32 %v3426, %v3454
      %v3466 = vadd.f32 %v3427, %v3454
      %v3467 = vadd.f32 %v3428, %v3454
      %v3468 = vadd.f32 %v3429, %v3454
      %v3469 = vadd.f32 %v3430, %v3454
      %v3470 = vadd.f32 %v3431, %v3454
      %v3471 = vadd.f32 %v3432, %v3454
      %v3472 = vadd.f32 %v3433, %v3454
      %v3473 = vadd.f32 %v3434, %v3454
      %v3474 = vadd.f32 %v3435, %v3454
      %v3475 = vadd.f32 %v3436, %v3454
      %v3476 = vadd.f32 %v3437, %v3454
      %v3477 = vadd.f32 %v3438, %v3454
      %v3478 = vadd.f32 %v3439, %v3454
      %v3479 = vadd.f32 %v3440, %v3454
      %v3480 = vadd.f32 %v3441, %v3454
      %v3481 = vadd.f32 %v3442, %v3454
      %v3482 = vadd.f32 %v3443, %v3454
      %v3483 = vadd.f32 %v3444, %v3454
      %v3484 = vadd.f32 %v3445, %v3454
      %v3485 = vadd.f32 %v3446, %v3454
      %v3486 = vadd.f32 %v3447, %v3454
      %v3487 = vadd.f32 %v3448, %v3454
      %v3488 = vmax.f32 %v3456, 0.0
      %v3489 = vmax.f32 %v3457, 0.0
      %v3490 = vmax.f32 %v3458, 0.0
      %v3491 = vmax.f32 %v3459, 0.0
      %v3492 = vmax.f32 %v3460, 0.0
      %v3493 = vmax.f32 %v3461, 0.0
      %v3494 = vmax.f32 %v3462, 0.0
      %v3495 = vmax.f32 %v3463, 0.0
      %v3496 = vmax.f32 %v3464, 0.0
      %v3497 = vmax.f32 %v3465, 0.0
      %v3498 = vmax.f32 %v3466, 0.0
      %v3499 = vmax.f32 %v3467, 0.0
      %v3500 = vmax.f32 %v3468, 0.0
      %v3501 = vmax.f32 %v3469, 0.0
      %v3502 = vmax.f32 %v3470, 0.0
      %v3503 = vmax.f32 %v3471, 0.0
      %v3504 = vmax.f32 %v3472, 0.0
      %v3505 = vmax.f32 %v3473, 0.0
      %v3506 = vmax.f32 %v3474, 0.0
      %v3507 = vmax.f32 %v3475, 0.0
      %v3508 = vmax.f32 %v3476, 0.0
      %v3509 = vmax.f32 %v3477, 0.0
      %v3510 = vmax.f32 %v3478, 0.0
      %v3511 = vmax.f32 %v3479, 0.0
      %v3512 = vmax.f32 %v3480, 0.0
      %v3513 = vmax.f32 %v3481, 0.0
      %v3514 = vmax.f32 %v3482, 0.0
      %v3515 = vmax.f32 %v3483, 0.0
      %v3516 = vmax.f32 %v3484, 0.0
      %v3517 = vmax.f32 %v3485, 0.0
      %v3518 = vmax.f32 %v3486, 0.0
      %v3519 = vmax.f32 %v3487, 0.0
      %v3520 = vpack.c.bf16 %v3489, %v3488
      %v3521 = vpack.c.bf16 %v3491, %v3490
      %v3522 = vpack.c.bf16 %v3493, %v3492
      %v3523 = vpack.c.bf16 %v3495, %v3494
      %v3524 = vpack.c.bf16 %v3497, %v3496
      %v3525 = vpack.c.bf16 %v3499, %v3498
      %v3526 = vpack.c.bf16 %v3501, %v3500
      %v3527 = vpack.c.bf16 %v3503, %v3502
      %v3528 = vpack.c.bf16 %v3505, %v3504
      %v3529 = vpack.c.bf16 %v3507, %v3506
      %v3530 = vpack.c.bf16 %v3509, %v3508
      %v3531 = vpack.c.bf16 %v3511, %v3510
      %v3532 = vpack.c.bf16 %v3513, %v3512
      %v3533 = vpack.c.bf16 %v3515, %v3514
      %v3534 = vpack.c.bf16 %v3517, %v3516
      %v3535 = vpack.c.bf16 %v3519, %v3518
      %3536 = vst [vmem:[#allocation2] sm:$0xf] 0
      %3537 = vst [vmem:[#allocation2 + $0x4] sm:$0xf] 0
      %3538 = vst [vmem:[#allocation2 + $0x8] sm:$0xf] 0
      %3539 = vst [vmem:[#allocation2 + $0xc] sm:$0xf] 0
      %s3540 = scalar_lea.vmem [#allocation2], 272
      %3541 = vst [vmem:[%s3540] sm:$0xf] 0
      %3542 = vst [vmem:[%s3540 + $0x4] sm:$0xf] 0
      %3543 = vst [vmem:[%s3540 + $0x8] sm:$0xf] 0
      %3544 = vst [vmem:[%s3540 + $0xc] sm:$0xf] 0
      %s3545 = scalar_lea.vmem [#allocation2], 16
      %3546 = vst [vmem:[%s3545] sm:$0xf] 0
      %3547 = vst [vmem:[%s3545 + $0x10] sm:$0xf] 0
      %3548 = vst [vmem:[%s3545 + $0x20] sm:$0xf] 0
      %3549 = vst [vmem:[%s3545 + $0x30] sm:$0xf] 0
      %3550 = vst [vmem:[%s3545 + $0x40] sm:$0xf] 0
      %3551 = vst [vmem:[%s3545 + $0x50] sm:$0xf] 0
      %3552 = vst [vmem:[%s3545 + $0x60] sm:$0xf] 0
      %3553 = vst [vmem:[%s3545 + $0x70] sm:$0xf] 0
      %3554 = vst [vmem:[%s3545 + $0x80] sm:$0xf] 0
      %3555 = vst [vmem:[%s3545 + $0x90] sm:$0xf] 0
      %3556 = vst [vmem:[%s3545 + $0xa0] sm:$0xf] 0
      %3557 = vst [vmem:[%s3545 + $0xb0] sm:$0xf] 0
      %3558 = vst [vmem:[%s3545 + $0xc0] sm:$0xf] 0
      %3559 = vst [vmem:[%s3545 + $0xd0] sm:$0xf] 0
      %3560 = vst [vmem:[%s3545 + $0xe0] sm:$0xf] 0
      %3561 = vst [vmem:[%s3545 + $0xf0] sm:$0xf] 0
      %3562 = vst [vmem:[%s3545 + $0xc] sm:$0xf] 0
      %3563 = vst [vmem:[%s3545 + $0x1c] sm:$0xf] 0
      %3564 = vst [vmem:[%s3545 + $0x2c] sm:$0xf] 0
      %3565 = vst [vmem:[%s3545 + $0x3c] sm:$0xf] 0
      %3566 = vst [vmem:[%s3545 + $0x4c] sm:$0xf] 0
      %3567 = vst [vmem:[%s3545 + $0x5c] sm:$0xf] 0
      %3568 = vst [vmem:[%s3545 + $0x6c] sm:$0xf] 0
      %3569 = vst [vmem:[%s3545 + $0x7c] sm:$0xf] 0
      %3570 = vst [vmem:[%s3545 + $0x8c] sm:$0xf] 0
      %3571 = vst [vmem:[%s3545 + $0x9c] sm:$0xf] 0
      %3572 = vst [vmem:[%s3545 + $0xac] sm:$0xf] 0
      %3573 = vst [vmem:[%s3545 + $0xbc] sm:$0xf] 0
      %3574 = vst [vmem:[%s3545 + $0xcc] sm:$0xf] 0
      %3575 = vst [vmem:[%s3545 + $0xdc] sm:$0xf] 0
      %3576 = vst [vmem:[%s3545 + $0xec] sm:$0xf] 0
      %3577 = vst [vmem:[%s3545 + $0xfc] sm:$0xf] 0
      %v3594 = vunpack.c.l.b16 %v3520
      %v3595 = vunpack.c.h.b16 %v3520
      %v3596 = vunpack.c.l.b16 %v3521
      %v3597 = vunpack.c.h.b16 %v3521
      %v3598 = vunpack.c.l.b16 %v3522
      %v3599 = vunpack.c.h.b16 %v3522
      %v3600 = vunpack.c.l.b16 %v3523
      %v3601 = vunpack.c.h.b16 %v3523
      %v3602 = vunpack.c.l.b16 %v3524
      %v3603 = vunpack.c.h.b16 %v3524
      %v3604 = vunpack.c.l.b16 %v3525
      %v3605 = vunpack.c.h.b16 %v3525
      %v3606 = vunpack.c.l.b16 %v3526
      %v3607 = vunpack.c.h.b16 %v3526
      %v3608 = vunpack.c.l.b16 %v3527
      %v3609 = vunpack.c.h.b16 %v3527
      %v3610 = vunpack.c.l.b16 %v3528
      %v3611 = vunpack.c.h.b16 %v3528
      %v3612 = vunpack.c.l.b16 %v3529
      %v3613 = vunpack.c.h.b16 %v3529
      %v3614 = vunpack.c.l.b16 %v3530
      %v3615 = vunpack.c.h.b16 %v3530
      %v3616 = vunpack.c.l.b16 %v3531
      %v3617 = vunpack.c.h.b16 %v3531
      %v3618 = vunpack.c.l.b16 %v3532
      %v3619 = vunpack.c.h.b16 %v3532
      %v3620 = vunpack.c.l.b16 %v3533
      %v3621 = vunpack.c.h.b16 %v3533
      %v3622 = vunpack.c.l.b16 %v3534
      %v3623 = vunpack.c.h.b16 %v3534
      %v3624 = vunpack.c.l.b16 %v3535
      %v3625 = vunpack.c.h.b16 %v3535
      %v3626 = vpack.c.b16 %v3594, %v3594
      %v3627 = vpack.c.b16 %v3595, %v3595
      %v3628 = vpack.c.b16 %v3596, %v3596
      %v3629 = vpack.c.b16 %v3597, %v3597
      %v3630 = vpack.c.b16 %v3598, %v3598
      %v3631 = vpack.c.b16 %v3599, %v3599
      %v3632 = vpack.c.b16 %v3600, %v3600
      %v3633 = vpack.c.b16 %v3601, %v3601
      %v3634 = vpack.c.b16 %v3602, %v3602
      %v3635 = vpack.c.b16 %v3603, %v3603
      %v3636 = vpack.c.b16 %v3604, %v3604
      %v3637 = vpack.c.b16 %v3605, %v3605
      %v3638 = vpack.c.b16 %v3606, %v3606
      %v3639 = vpack.c.b16 %v3607, %v3607
      %v3640 = vpack.c.b16 %v3608, %v3608
      %v3641 = vpack.c.b16 %v3609, %v3609
      %v3642 = vpack.c.b16 %v3610, %v3610
      %v3643 = vpack.c.b16 %v3611, %v3611
      %v3644 = vpack.c.b16 %v3612, %v3612
      %v3645 = vpack.c.b16 %v3613, %v3613
      %v3646 = vpack.c.b16 %v3614, %v3614
      %v3647 = vpack.c.b16 %v3615, %v3615
      %v3648 = vpack.c.b16 %v3616, %v3616
      %v3649 = vpack.c.b16 %v3617, %v3617
      %v3650 = vpack.c.b16 %v3618, %v3618
      %v3651 = vpack.c.b16 %v3619, %v3619
      %v3652 = vpack.c.b16 %v3620, %v3620
      %v3653 = vpack.c.b16 %v3621, %v3621
      %v3654 = vpack.c.b16 %v3622, %v3622
      %v3655 = vpack.c.b16 %v3623, %v3623
      %v3656 = vpack.c.b16 %v3624, %v3624
      %v3657 = vpack.c.b16 %v3625, %v3625
      %3690 = vst [vmem:[%s3545 + $0x4] sm:$0xf] %v3626
      %3691 = vst [vmem:[%s3545 + $0x8] sm:$0xf] %v3627
      %3692 = vst [vmem:[%s3545 + $0x14] sm:$0xf] %v3628
      %3693 = vst [vmem:[%s3545 + $0x18] sm:$0xf] %v3629
      %3694 = vst [vmem:[%s3545 + $0x24] sm:$0xf] %v3630
      %3695 = vst [vmem:[%s3545 + $0x28] sm:$0xf] %v3631
      %3696 = vst [vmem:[%s3545 + $0x34] sm:$0xf] %v3632
      %3697 = vst [vmem:[%s3545 + $0x38] sm:$0xf] %v3633
      %3698 = vst [vmem:[%s3545 + $0x44] sm:$0xf] %v3634
      %3699 = vst [vmem:[%s3545 + $0x48] sm:$0xf] %v3635
      %3700 = vst [vmem:[%s3545 + $0x54] sm:$0xf] %v3636
      %3701 = vst [vmem:[%s3545 + $0x58] sm:$0xf] %v3637
      %3702 = vst [vmem:[%s3545 + $0x64] sm:$0xf] %v3638
      %3703 = vst [vmem:[%s3545 + $0x68] sm:$0xf] %v3639
      %3704 = vst [vmem:[%s3545 + $0x74] sm:$0xf] %v3640
      %3705 = vst [vmem:[%s3545 + $0x78] sm:$0xf] %v3641
      %3706 = vst [vmem:[%s3545 + $0x84] sm:$0xf] %v3642
      %3707 = vst [vmem:[%s3545 + $0x88] sm:$0xf] %v3643
      %3708 = vst [vmem:[%s3545 + $0x94] sm:$0xf] %v3644
      %3709 = vst [vmem:[%s3545 + $0x98] sm:$0xf] %v3645
      %3710 = vst [vmem:[%s3545 + $0xa4] sm:$0xf] %v3646
      %3711 = vst [vmem:[%s3545 + $0xa8] sm:$0xf] %v3647
      %3712 = vst [vmem:[%s3545 + $0xb4] sm:$0xf] %v3648
      %3713 = vst [vmem:[%s3545 + $0xb8] sm:$0xf] %v3649
      %3714 = vst [vmem:[%s3545 + $0xc4] sm:$0xf] %v3650
      %3715 = vst [vmem:[%s3545 + $0xc8] sm:$0xf] %v3651
      %3716 = vst [vmem:[%s3545 + $0xd4] sm:$0xf] %v3652
      %3717 = vst [vmem:[%s3545 + $0xd8] sm:$0xf] %v3653
      %3718 = vst [vmem:[%s3545 + $0xe4] sm:$0xf] %v3654
      %3719 = vst [vmem:[%s3545 + $0xe8] sm:$0xf] %v3655
      %3720 = vst [vmem:[%s3545 + $0xf4] sm:$0xf] %v3656
      %3721 = vst [vmem:[%s3545 + $0xf8] sm:$0xf] %v3657
      %v3722 = vld [vmem:[#allocation2] sm:$0x8]
      %v3723 = vld [vmem:[#allocation2 + $0x4] sm:$0xf]
      %v3724 = vld [vmem:[#allocation2 + $0x8] sm:$0xf]
      %v3725 = vld [vmem:[#allocation2 + $0x10] sm:$0x8]
      %v3726 = vld [vmem:[#allocation2 + $0x14] sm:$0xf]
      %v3727 = vld [vmem:[#allocation2 + $0x18] sm:$0xf]
      %v3728 = vld [vmem:[#allocation2 + $0x20] sm:$0x8]
      %v3729 = vld [vmem:[#allocation2 + $0x24] sm:$0xf]
      %v3730 = vld [vmem:[#allocation2 + $0x28] sm:$0xf]
      %v3731 = vld [vmem:[#allocation2 + $0x30] sm:$0x8]
      %v3732 = vld [vmem:[#allocation2 + $0x34] sm:$0xf]
      %v3733 = vld [vmem:[#allocation2 + $0x38] sm:$0xf]
      %v3734 = vld [vmem:[#allocation2 + $0x40] sm:$0x8]
      %v3735 = vld [vmem:[#allocation2 + $0x44] sm:$0xf]
      %v3736 = vld [vmem:[#allocation2 + $0x48] sm:$0xf]
      %v3737 = vld [vmem:[#allocation2 + $0x50] sm:$0x8]
      %v3738 = vld [vmem:[#allocation2 + $0x54] sm:$0xf]
      %v3739 = vld [vmem:[#allocation2 + $0x58] sm:$0xf]
      %v3740 = vld [vmem:[#allocation2 + $0x60] sm:$0x8]
      %v3741 = vld [vmem:[#allocation2 + $0x64] sm:$0xf]
      %v3742 = vld [vmem:[#allocation2 + $0x68] sm:$0xf]
      %v3743 = vld [vmem:[#allocation2 + $0x70] sm:$0x8]
      %v3744 = vld [vmem:[#allocation2 + $0x74] sm:$0xf]
      %v3745 = vld [vmem:[#allocation2 + $0x78] sm:$0xf]
      %v3746 = vld [vmem:[#allocation2 + $0x80] sm:$0x8]
      %v3747 = vld [vmem:[#allocation2 + $0x84] sm:$0xf]
      %v3748 = vld [vmem:[#allocation2 + $0x88] sm:$0xf]
      %v3749 = vld [vmem:[#allocation2 + $0x90] sm:$0x8]
      %v3750 = vld [vmem:[#allocation2 + $0x94] sm:$0xf]
      %v3751 = vld [vmem:[#allocation2 + $0x98] sm:$0xf]
      %v3752 = vld [vmem:[#allocation2 + $0xa0] sm:$0x8]
      %v3753 = vld [vmem:[#allocation2 + $0xa4] sm:$0xf]
      %v3754 = vld [vmem:[#allocation2 + $0xa8] sm:$0xf]
      %v3755 = vld [vmem:[#allocation2 + $0xb0] sm:$0x8]
      %v3756 = vld [vmem:[#allocation2 + $0xb4] sm:$0xf]
      %v3757 = vld [vmem:[#allocation2 + $0xb8] sm:$0xf]
      %v3758 = vld [vmem:[#allocation2 + $0xc0] sm:$0x8]
      %v3759 = vld [vmem:[#allocation2 + $0xc4] sm:$0xf]
      %v3760 = vld [vmem:[#allocation2 + $0xc8] sm:$0xf]
      %v3761 = vld [vmem:[#allocation2 + $0xd0] sm:$0x8]
      %v3762 = vld [vmem:[#allocation2 + $0xd4] sm:$0xf]
      %v3763 = vld [vmem:[#allocation2 + $0xd8] sm:$0xf]
      %v3764 = vld [vmem:[#allocation2 + $0xe0] sm:$0x8]
      %v3765 = vld [vmem:[#allocation2 + $0xe4] sm:$0xf]
      %v3766 = vld [vmem:[#allocation2 + $0xe8] sm:$0xf]
      %v3767 = vld [vmem:[#allocation2 + $0xf0] sm:$0x8]
      %v3768 = vld [vmem:[#allocation2 + $0xf4] sm:$0xf]
      %v3769 = vld [vmem:[#allocation2 + $0xf8] sm:$0xf]
      %v3770 = vld [vmem:[#allocation2 + $0xc] sm:$0x1]
      %v3771 = vld [vmem:[#allocation2 + $0x1c] sm:$0x1]
      %v3772 = vld [vmem:[#allocation2 + $0x2c] sm:$0x1]
      %v3773 = vld [vmem:[#allocation2 + $0x3c] sm:$0x1]
      %v3774 = vld [vmem:[#allocation2 + $0x4c] sm:$0x1]
      %v3775 = vld [vmem:[#allocation2 + $0x5c] sm:$0x1]
      %v3776 = vld [vmem:[#allocation2 + $0x6c] sm:$0x1]
      %v3777 = vld [vmem:[#allocation2 + $0x7c] sm:$0x1]
      %v3778 = vld [vmem:[#allocation2 + $0x8c] sm:$0x1]
      %v3779 = vld [vmem:[#allocation2 + $0x9c] sm:$0x1]
      %v3780 = vld [vmem:[#allocation2 + $0xac] sm:$0x1]
      %v3781 = vld [vmem:[#allocation2 + $0xbc] sm:$0x1]
      %v3782 = vld [vmem:[#allocation2 + $0xcc] sm:$0x1]
      %v3783 = vld [vmem:[#allocation2 + $0xdc] sm:$0x1]
      %v3784 = vld [vmem:[#allocation2 + $0xec] sm:$0x1]
      %v3785 = vld [vmem:[#allocation2 + $0xfc] sm:$0x1]
      %v3834 = vunpack.c.l.b16 %v3722
      %v3835 = vunpack.c.l.b16 %v3723
      %v3836 = vunpack.c.l.b16 %v3724
      %v3837 = vunpack.c.l.b16 %v3725
      %v3838 = vunpack.c.l.b16 %v3726
      %v3839 = vunpack.c.l.b16 %v3727
      %v3840 = vunpack.c.l.b16 %v3728
      %v3841 = vunpack.c.l.b16 %v3729
      %v3842 = vunpack.c.l.b16 %v3730
      %v3843 = vunpack.c.l.b16 %v3731
      %v3844 = vunpack.c.l.b16 %v3732
      %v3845 = vunpack.c.l.b16 %v3733
      %v3846 = vunpack.c.l.b16 %v3734
      %v3847 = vunpack.c.l.b16 %v3735
      %v3848 = vunpack.c.l.b16 %v3736
      %v3849 = vunpack.c.l.b16 %v3737
      %v3850 = vunpack.c.l.b16 %v3738
      %v3851 = vunpack.c.l.b16 %v3739
      %v3852 = vunpack.c.l.b16 %v3740
      %v3853 = vunpack.c.l.b16 %v3741
      %v3854 = vunpack.c.l.b16 %v3742
      %v3855 = vunpack.c.l.b16 %v3743
      %v3856 = vunpack.c.l.b16 %v3744
      %v3857 = vunpack.c.l.b16 %v3745
      %v3858 = vunpack.c.l.b16 %v3746
      %v3859 = vunpack.c.l.b16 %v3747
      %v3860 = vunpack.c.l.b16 %v3748
      %v3861 = vunpack.c.l.b16 %v3749
      %v3862 = vunpack.c.l.b16 %v3750
      %v3863 = vunpack.c.l.b16 %v3751
      %v3864 = vunpack.c.l.b16 %v3752
      %v3865 = vunpack.c.l.b16 %v3753
      %v3866 = vunpack.c.l.b16 %v3754
      %v3867 = vunpack.c.l.b16 %v3755
      %v3868 = vunpack.c.l.b16 %v3756
      %v3869 = vunpack.c.l.b16 %v3757
      %v3870 = vunpack.c.l.b16 %v3758
      %v3871 = vunpack.c.l.b16 %v3759
      %v3872 = vunpack.c.l.b16 %v3760
      %v3873 = vunpack.c.l.b16 %v3761
      %v3874 = vunpack.c.l.b16 %v3762
      %v3875 = vunpack.c.l.b16 %v3763
      %v3876 = vunpack.c.l.b16 %v3764
      %v3877 = vunpack.c.l.b16 %v3765
      %v3878 = vunpack.c.l.b16 %v3766
      %v3879 = vunpack.c.l.b16 %v3767
      %v3880 = vunpack.c.l.b16 %v3768
      %v3881 = vunpack.c.l.b16 %v3769
      %v3882 = vpack.c.b16 %v3835, %v3834
      %v3883 = vpack.c.b16 %v3836, %v3836
      %v3884 = vpack.c.b16 %v3838, %v3837
      %v3885 = vpack.c.b16 %v3839, %v3839
      %v3886 = vpack.c.b16 %v3841, %v3840
      %v3887 = vpack.c.b16 %v3842, %v3842
      %v3888 = vpack.c.b16 %v3844, %v3843
      %v3889 = vpack.c.b16 %v3845, %v3845
      %v3890 = vpack.c.b16 %v3847, %v3846
      %v3891 = vpack.c.b16 %v3848, %v3848
      %v3892 = vpack.c.b16 %v3850, %v3849
      %v3893 = vpack.c.b16 %v3851, %v3851
      %v3894 = vpack.c.b16 %v3853, %v3852
      %v3895 = vpack.c.b16 %v3854, %v3854
      %v3896 = vpack.c.b16 %v3856, %v3855
      %v3897 = vpack.c.b16 %v3857, %v3857
      %v3898 = vpack.c.b16 %v3859, %v3858
      %v3899 = vpack.c.b16 %v3860, %v3860
      %v3900 = vpack.c.b16 %v3862, %v3861
      %v3901 = vpack.c.b16 %v3863, %v3863
      %v3902 = vpack.c.b16 %v3865, %v3864
      %v3903 = vpack.c.b16 %v3866, %v3866
      %v3904 = vpack.c.b16 %v3868, %v3867
      %v3905 = vpack.c.b16 %v3869, %v3869
      %v3906 = vpack.c.b16 %v3871, %v3870
      %v3907 = vpack.c.b16 %v3872, %v3872
      %v3908 = vpack.c.b16 %v3874, %v3873
      %v3909 = vpack.c.b16 %v3875, %v3875
      %v3910 = vpack.c.b16 %v3877, %v3876
      %v3911 = vpack.c.b16 %v3878, %v3878
      %v3912 = vpack.c.b16 %v3880, %v3879
      %v3913 = vpack.c.b16 %v3881, %v3881
      %v3914 = vpack.c.b16 %v3836, %v3835
      %v3915 = vpack.c.b16 %v3839, %v3838
      %v3916 = vpack.c.b16 %v3842, %v3841
      %v3917 = vpack.c.b16 %v3845, %v3844
      %v3918 = vpack.c.b16 %v3848, %v3847
      %v3919 = vpack.c.b16 %v3851, %v3850
      %v3920 = vpack.c.b16 %v3854, %v3853
      %v3921 = vpack.c.b16 %v3857, %v3856
      %v3922 = vpack.c.b16 %v3860, %v3859
      %v3923 = vpack.c.b16 %v3863, %v3862
      %v3924 = vpack.c.b16 %v3866, %v3865
      %v3925 = vpack.c.b16 %v3869, %v3868
      %v3926 = vpack.c.b16 %v3872, %v3871
      %v3927 = vpack.c.b16 %v3875, %v3874
      %v3928 = vpack.c.b16 %v3878, %v3877
      %v3929 = vpack.c.b16 %v3881, %v3880
      %v3931 = vshrl.u32 %v3914, 16
      %v3933 = vrot.slane %v3931, 4
      %v3934 = vshll.u32 %v3914, 16
      %v3936 = vrot.slane %v3934, 5
      %v3937 = vor.u32 %v3933, %v3936
      %v3939 = vshrl.u32 %v3915, 16
      %v3941 = vrot.slane %v3939, 4
      %v3942 = vshll.u32 %v3915, 16
      %v3944 = vrot.slane %v3942, 5
      %v3945 = vor.u32 %v3941, %v3944
      %v3947 = vshrl.u32 %v3916, 16
      %v3949 = vrot.slane %v3947, 4
      %v3950 = vshll.u32 %v3916, 16
      %v3952 = vrot.slane %v3950, 5
      %v3953 = vor.u32 %v3949, %v3952
      %v3955 = vshrl.u32 %v3917, 16
      %v3957 = vrot.slane %v3955, 4
      %v3958 = vshll.u32 %v3917, 16
      %v3960 = vrot.slane %v3958, 5
      %v3961 = vor.u32 %v3957, %v3960
      %v3963 = vshrl.u32 %v3918, 16
      %v3965 = vrot.slane %v3963, 4
      %v3966 = vshll.u32 %v3918, 16
      %v3968 = vrot.slane %v3966, 5
      %v3969 = vor.u32 %v3965, %v3968
      %v3971 = vshrl.u32 %v3919, 16
      %v3973 = vrot.slane %v3971, 4
      %v3974 = vshll.u32 %v3919, 16
      %v3976 = vrot.slane %v3974, 5
      %v3977 = vor.u32 %v3973, %v3976
      %v3979 = vshrl.u32 %v3920, 16
      %v3981 = vrot.slane %v3979, 4
      %v3982 = vshll.u32 %v3920, 16
      %v3984 = vrot.slane %v3982, 5
      %v3985 = vor.u32 %v3981, %v3984
      %v3987 = vshrl.u32 %v3921, 16
      %v3989 = vrot.slane %v3987, 4
      %v3990 = vshll.u32 %v3921, 16
      %v3992 = vrot.slane %v3990, 5
      %v3993 = vor.u32 %v3989, %v3992
      %v3995 = vshrl.u32 %v3922, 16
      %v3997 = vrot.slane %v3995, 4
      %v3998 = vshll.u32 %v3922, 16
      %v4000 = vrot.slane %v3998, 5
      %v4001 = vor.u32 %v3997, %v4000
      %v4003 = vshrl.u32 %v3923, 16
      %v4005 = vrot.slane %v4003, 4
      %v4006 = vshll.u32 %v3923, 16
      %v4008 = vrot.slane %v4006, 5
      %v4009 = vor.u32 %v4005, %v4008
      %v4011 = vshrl.u32 %v3924, 16
      %v4013 = vrot.slane %v4011, 4
      %v4014 = vshll.u32 %v3924, 16
      %v4016 = vrot.slane %v4014, 5
      %v4017 = vor.u32 %v4013, %v4016
      %v4019 = vshrl.u32 %v3925, 16
      %v4021 = vrot.slane %v4019, 4
      %v4022 = vshll.u32 %v3925, 16
      %v4024 = vrot.slane %v4022, 5
      %v4025 = vor.u32 %v4021, %v4024
      %v4027 = vshrl.u32 %v3926, 16
      %v4029 = vrot.slane %v4027, 4
      %v4030 = vshll.u32 %v3926, 16
      %v4032 = vrot.slane %v4030, 5
      %v4033 = vor.u32 %v4029, %v4032
      %v4035 = vshrl.u32 %v3927, 16
      %v4037 = vrot.slane %v4035, 4
      %v4038 = vshll.u32 %v3927, 16
      %v4040 = vrot.slane %v4038, 5
      %v4041 = vor.u32 %v4037, %v4040
      %v4043 = vshrl.u32 %v3928, 16
      %v4045 = vrot.slane %v4043, 4
      %v4046 = vshll.u32 %v3928, 16
      %v4048 = vrot.slane %v4046, 5
      %v4049 = vor.u32 %v4045, %v4048
      %v4051 = vshrl.u32 %v3929, 16
      %v4053 = vrot.slane %v4051, 4
      %v4054 = vshll.u32 %v3929, 16
      %v4056 = vrot.slane %v4054, 5
      %v4057 = vor.u32 %v4053, %v4056
      %v4074 = vunpack.c.l.b16 %v3770
      %v4075 = vunpack.c.l.b16 %v3771
      %v4076 = vunpack.c.l.b16 %v3772
      %v4077 = vunpack.c.l.b16 %v3773
      %v4078 = vunpack.c.l.b16 %v3774
      %v4079 = vunpack.c.l.b16 %v3775
      %v4080 = vunpack.c.l.b16 %v3776
      %v4081 = vunpack.c.l.b16 %v3777
      %v4082 = vunpack.c.l.b16 %v3778
      %v4083 = vunpack.c.l.b16 %v3779
      %v4084 = vunpack.c.l.b16 %v3780
      %v4085 = vunpack.c.l.b16 %v3781
      %v4086 = vunpack.c.l.b16 %v3782
      %v4087 = vunpack.c.l.b16 %v3783
      %v4088 = vunpack.c.l.b16 %v3784
      %v4089 = vunpack.c.l.b16 %v3785
      %v4090 = vpack.c.b16 %v4074, %v4074
      %v4091 = vpack.c.b16 %v4075, %v4075
      %v4092 = vpack.c.b16 %v4076, %v4076
      %v4093 = vpack.c.b16 %v4077, %v4077
      %v4094 = vpack.c.b16 %v4078, %v4078
      %v4095 = vpack.c.b16 %v4079, %v4079
      %v4096 = vpack.c.b16 %v4080, %v4080
      %v4097 = vpack.c.b16 %v4081, %v4081
      %v4098 = vpack.c.b16 %v4082, %v4082
      %v4099 = vpack.c.b16 %v4083, %v4083
      %v4100 = vpack.c.b16 %v4084, %v4084
      %v4101 = vpack.c.b16 %v4085, %v4085
      %v4102 = vpack.c.b16 %v4086, %v4086
      %v4103 = vpack.c.b16 %v4087, %v4087
      %v4104 = vpack.c.b16 %v4088, %v4088
      %v4105 = vpack.c.b16 %v4089, %v4089
      %vm4106 = vcmask 1042432
      %v4107 = vrot.slane %v3914, 5
      %v4108 = vrot.slane %v4090, 5
      %v4109 = vsel %vm4106, %v4107, %v4108
      %v4110 = vrot.slane %v3915, 5
      %v4111 = vrot.slane %v4091, 5
      %v4112 = vsel %vm4106, %v4110, %v4111
      %v4113 = vrot.slane %v3916, 5
      %v4114 = vrot.slane %v4092, 5
      %v4115 = vsel %vm4106, %v4113, %v4114
      %v4116 = vrot.slane %v3917, 5
      %v4117 = vrot.slane %v4093, 5
      %v4118 = vsel %vm4106, %v4116, %v4117
      %v4119 = vrot.slane %v3918, 5
      %v4120 = vrot.slane %v4094, 5
      %v4121 = vsel %vm4106, %v4119, %v4120
      %v4122 = vrot.slane %v3919, 5
      %v4123 = vrot.slane %v4095, 5
      %v4124 = vsel %vm4106, %v4122, %v4123
      %v4125 = vrot.slane %v3920, 5
      %v4126 = vrot.slane %v4096, 5
      %v4127 = vsel %vm4106, %v4125, %v4126
      %v4128 = vrot.slane %v3921, 5
      %v4129 = vrot.slane %v4097, 5
      %v4130 = vsel %vm4106, %v4128, %v4129
      %v4131 = vrot.slane %v3922, 5
      %v4132 = vrot.slane %v4098, 5
      %v4133 = vsel %vm4106, %v4131, %v4132
      %v4134 = vrot.slane %v3923, 5
      %v4135 = vrot.slane %v4099, 5
      %v4136 = vsel %vm4106, %v4134, %v4135
      %v4137 = vrot.slane %v3924, 5
      %v4138 = vrot.slane %v4100, 5
      %v4139 = vsel %vm4106, %v4137, %v4138
      %v4140 = vrot.slane %v3925, 5
      %v4141 = vrot.slane %v4101, 5
      %v4142 = vsel %vm4106, %v4140, %v4141
      %v4143 = vrot.slane %v3926, 5
      %v4144 = vrot.slane %v4102, 5
      %v4145 = vsel %vm4106, %v4143, %v4144
      %v4146 = vrot.slane %v3927, 5
      %v4147 = vrot.slane %v4103, 5
      %v4148 = vsel %vm4106, %v4146, %v4147
      %v4149 = vrot.slane %v3928, 5
      %v4150 = vrot.slane %v4104, 5
      %v4151 = vsel %vm4106, %v4149, %v4150
      %v4152 = vrot.slane %v3929, 5
      %v4153 = vrot.slane %v4105, 5
      %v4154 = vsel %vm4106, %v4152, %v4153
      %vm4155 = vsmask.f32 4352
      %v4157 = vshrl.u32 %v3882, 16
      %v4159 = vrot.slane %v4157, 3
      %v4160 = vshll.u32 %v3882, 16
      %v4162 = vrot.slane %v4160, 4
      %v4163 = vor.u32 %v4159, %v4162
      %v4165 = vshrl.u32 %v3883, 16
      %v4167 = vrot.slane %v4165, 3
      %v4168 = vshll.u32 %v3883, 16
      %v4170 = vrot.slane %v4168, 4
      %v4171 = vor.u32 %v4167, %v4170
      %v4172 = vsel %vm4155, %v4163, %v4171
      %v4174 = vshrl.u32 %v3937, 16
      %v4176 = vrot.slane %v4174, 3
      %v4177 = vshll.u32 %v3937, 16
      %v4179 = vrot.slane %v4177, 4
      %v4180 = vor.u32 %v4176, %v4179
      %v4181 = vsel %vm4155, %v4180, %v4180
      %v4183 = vshrl.u32 %v4107, 16
      %v4185 = vrot.slane %v4183, 3
      %v4186 = vshll.u32 %v4107, 16
      %v4188 = vrot.slane %v4186, 4
      %v4189 = vor.u32 %v4185, %v4188
      %v4191 = vshrl.u32 %v4109, 16
      %v4193 = vrot.slane %v4191, 3
      %v4194 = vshll.u32 %v4109, 16
      %v4196 = vrot.slane %v4194, 4
      %v4197 = vor.u32 %v4193, %v4196
      %v4198 = vsel %vm4155, %v4189, %v4197
      %v4200 = vshrl.u32 %v3884, 16
      %v4202 = vrot.slane %v4200, 3
      %v4203 = vshll.u32 %v3884, 16
      %v4205 = vrot.slane %v4203, 4
      %v4206 = vor.u32 %v4202, %v4205
      %v4208 = vshrl.u32 %v3885, 16
      %v4210 = vrot.slane %v4208, 3
      %v4211 = vshll.u32 %v3885, 16
      %v4213 = vrot.slane %v4211, 4
      %v4214 = vor.u32 %v4210, %v4213
      %v4215 = vsel %vm4155, %v4206, %v4214
      %v4217 = vshrl.u32 %v3945, 16
      %v4219 = vrot.slane %v4217, 3
      %v4220 = vshll.u32 %v3945, 16
      %v4222 = vrot.slane %v4220, 4
      %v4223 = vor.u32 %v4219, %v4222
      %v4224 = vsel %vm4155, %v4223, %v4223
      %v4226 = vshrl.u32 %v4110, 16
      %v4228 = vrot.slane %v4226, 3
      %v4229 = vshll.u32 %v4110, 16
      %v4231 = vrot.slane %v4229, 4
      %v4232 = vor.u32 %v4228, %v4231
      %v4234 = vshrl.u32 %v4112, 16
      %v4236 = vrot.slane %v4234, 3
      %v4237 = vshll.u32 %v4112, 16
      %v4239 = vrot.slane %v4237, 4
      %v4240 = vor.u32 %v4236, %v4239
      %v4241 = vsel %vm4155, %v4232, %v4240
      %v4243 = vshrl.u32 %v3886, 16
      %v4245 = vrot.slane %v4243, 3
      %v4246 = vshll.u32 %v3886, 16
      %v4248 = vrot.slane %v4246, 4
      %v4249 = vor.u32 %v4245, %v4248
      %v4251 = vshrl.u32 %v3887, 16
      %v4253 = vrot.slane %v4251, 3
      %v4254 = vshll.u32 %v3887, 16
      %v4256 = vrot.slane %v4254, 4
      %v4257 = vor.u32 %v4253, %v4256
      %v4258 = vsel %vm4155, %v4249, %v4257
      %v4260 = vshrl.u32 %v3953, 16
      %v4262 = vrot.slane %v4260, 3
      %v4263 = vshll.u32 %v3953, 16
      %v4265 = vrot.slane %v4263, 4
      %v4266 = vor.u32 %v4262, %v4265
      %v4267 = vsel %vm4155, %v4266, %v4266
      %v4269 = vshrl.u32 %v4113, 16
      %v4271 = vrot.slane %v4269, 3
      %v4272 = vshll.u32 %v4113, 16
      %v4274 = vrot.slane %v4272, 4
      %v4275 = vor.u32 %v4271, %v4274
      %v4277 = vshrl.u32 %v4115, 16
      %v4279 = vrot.slane %v4277, 3
      %v4280 = vshll.u32 %v4115, 16
      %v4282 = vrot.slane %v4280, 4
      %v4283 = vor.u32 %v4279, %v4282
      %v4284 = vsel %vm4155, %v4275, %v4283
      %v4286 = vshrl.u32 %v3888, 16
      %v4288 = vrot.slane %v4286, 3
      %v4289 = vshll.u32 %v3888, 16
      %v4291 = vrot.slane %v4289, 4
      %v4292 = vor.u32 %v4288, %v4291
      %v4294 = vshrl.u32 %v3889, 16
      %v4296 = vrot.slane %v4294, 3
      %v4297 = vshll.u32 %v3889, 16
      %v4299 = vrot.slane %v4297, 4
      %v4300 = vor.u32 %v4296, %v4299
      %v4301 = vsel %vm4155, %v4292, %v4300
      %v4303 = vshrl.u32 %v3961, 16
      %v4305 = vrot.slane %v4303, 3
      %v4306 = vshll.u32 %v3961, 16
      %v4308 = vrot.slane %v4306, 4
      %v4309 = vor.u32 %v4305, %v4308
      %v4310 = vsel %vm4155, %v4309, %v4309
      %v4312 = vshrl.u32 %v4116, 16
      %v4314 = vrot.slane %v4312, 3
      %v4315 = vshll.u32 %v4116, 16
      %v4317 = vrot.slane %v4315, 4
      %v4318 = vor.u32 %v4314, %v4317
      %v4320 = vshrl.u32 %v4118, 16
      %v4322 = vrot.slane %v4320, 3
      %v4323 = vshll.u32 %v4118, 16
      %v4325 = vrot.slane %v4323, 4
      %v4326 = vor.u32 %v4322, %v4325
      %v4327 = vsel %vm4155, %v4318, %v4326
      %v4329 = vshrl.u32 %v3890, 16
      %v4331 = vrot.slane %v4329, 3
      %v4332 = vshll.u32 %v3890, 16
      %v4334 = vrot.slane %v4332, 4
      %v4335 = vor.u32 %v4331, %v4334
      %v4337 = vshrl.u32 %v3891, 16
      %v4339 = vrot.slane %v4337, 3
      %v4340 = vshll.u32 %v3891, 16
      %v4342 = vrot.slane %v4340, 4
      %v4343 = vor.u32 %v4339, %v4342
      %v4344 = vsel %vm4155, %v4335, %v4343
      %v4346 = vshrl.u32 %v3969, 16
      %v4348 = vrot.slane %v4346, 3
      %v4349 = vshll.u32 %v3969, 16
      %v4351 = vrot.slane %v4349, 4
      %v4352 = vor.u32 %v4348, %v4351
      %v4353 = vsel %vm4155, %v4352, %v4352
      %v4355 = vshrl.u32 %v4119, 16
      %v4357 = vrot.slane %v4355, 3
      %v4358 = vshll.u32 %v4119, 16
      %v4360 = vrot.slane %v4358, 4
      %v4361 = vor.u32 %v4357, %v4360
      %v4363 = vshrl.u32 %v4121, 16
      %v4365 = vrot.slane %v4363, 3
      %v4366 = vshll.u32 %v4121, 16
      %v4368 = vrot.slane %v4366, 4
      %v4369 = vor.u32 %v4365, %v4368
      %v4370 = vsel %vm4155, %v4361, %v4369
      %v4372 = vshrl.u32 %v3892, 16
      %v4374 = vrot.slane %v4372, 3
      %v4375 = vshll.u32 %v3892, 16
      %v4377 = vrot.slane %v4375, 4
      %v4378 = vor.u32 %v4374, %v4377
      %v4380 = vshrl.u32 %v3893, 16
      %v4382 = vrot.slane %v4380, 3
      %v4383 = vshll.u32 %v3893, 16
      %v4385 = vrot.slane %v4383, 4
      %v4386 = vor.u32 %v4382, %v4385
      %v4387 = vsel %vm4155, %v4378, %v4386
      %v4389 = vshrl.u32 %v3977, 16
      %v4391 = vrot.slane %v4389, 3
      %v4392 = vshll.u32 %v3977, 16
      %v4394 = vrot.slane %v4392, 4
      %v4395 = vor.u32 %v4391, %v4394
      %v4396 = vsel %vm4155, %v4395, %v4395
      %v4398 = vshrl.u32 %v4122, 16
      %v4400 = vrot.slane %v4398, 3
      %v4401 = vshll.u32 %v4122, 16
      %v4403 = vrot.slane %v4401, 4
      %v4404 = vor.u32 %v4400, %v4403
      %v4406 = vshrl.u32 %v4124, 16
      %v4408 = vrot.slane %v4406, 3
      %v4409 = vshll.u32 %v4124, 16
      %v4411 = vrot.slane %v4409, 4
      %v4412 = vor.u32 %v4408, %v4411
      %v4413 = vsel %vm4155, %v4404, %v4412
      %v4415 = vshrl.u32 %v3894, 16
      %v4417 = vrot.slane %v4415, 3
      %v4418 = vshll.u32 %v3894, 16
      %v4420 = vrot.slane %v4418, 4
      %v4421 = vor.u32 %v4417, %v4420
      %v4423 = vshrl.u32 %v3895, 16
      %v4425 = vrot.slane %v4423, 3
      %v4426 = vshll.u32 %v3895, 16
      %v4428 = vrot.slane %v4426, 4
      %v4429 = vor.u32 %v4425, %v4428
      %v4430 = vsel %vm4155, %v4421, %v4429
      %v4432 = vshrl.u32 %v3985, 16
      %v4434 = vrot.slane %v4432, 3
      %v4435 = vshll.u32 %v3985, 16
      %v4437 = vrot.slane %v4435, 4
      %v4438 = vor.u32 %v4434, %v4437
      %v4439 = vsel %vm4155, %v4438, %v4438
      %v4441 = vshrl.u32 %v4125, 16
      %v4443 = vrot.slane %v4441, 3
      %v4444 = vshll.u32 %v4125, 16
      %v4446 = vrot.slane %v4444, 4
      %v4447 = vor.u32 %v4443, %v4446
      %v4449 = vshrl.u32 %v4127, 16
      %v4451 = vrot.slane %v4449, 3
      %v4452 = vshll.u32 %v4127, 16
      %v4454 = vrot.slane %v4452, 4
      %v4455 = vor.u32 %v4451, %v4454
      %v4456 = vsel %vm4155, %v4447, %v4455
      %v4458 = vshrl.u32 %v3896, 16
      %v4460 = vrot.slane %v4458, 3
      %v4461 = vshll.u32 %v3896, 16
      %v4463 = vrot.slane %v4461, 4
      %v4464 = vor.u32 %v4460, %v4463
      %v4466 = vshrl.u32 %v3897, 16
      %v4468 = vrot.slane %v4466, 3
      %v4469 = vshll.u32 %v3897, 16
      %v4471 = vrot.slane %v4469, 4
      %v4472 = vor.u32 %v4468, %v4471
      %v4473 = vsel %vm4155, %v4464, %v4472
      %v4475 = vshrl.u32 %v3993, 16
      %v4477 = vrot.slane %v4475, 3
      %v4478 = vshll.u32 %v3993, 16
      %v4480 = vrot.slane %v4478, 4
      %v4481 = vor.u32 %v4477, %v4480
      %v4482 = vsel %vm4155, %v4481, %v4481
      %v4484 = vshrl.u32 %v4128, 16
      %v4486 = vrot.slane %v4484, 3
      %v4487 = vshll.u32 %v4128, 16
      %v4489 = vrot.slane %v4487, 4
      %v4490 = vor.u32 %v4486, %v4489
      %v4492 = vshrl.u32 %v4130, 16
      %v4494 = vrot.slane %v4492, 3
      %v4495 = vshll.u32 %v4130, 16
      %v4497 = vrot.slane %v4495, 4
      %v4498 = vor.u32 %v4494, %v4497
      %v4499 = vsel %vm4155, %v4490, %v4498
      %v4501 = vshrl.u32 %v3898, 16
      %v4503 = vrot.slane %v4501, 3
      %v4504 = vshll.u32 %v3898, 16
      %v4506 = vrot.slane %v4504, 4
      %v4507 = vor.u32 %v4503, %v4506
      %v4509 = vshrl.u32 %v3899, 16
      %v4511 = vrot.slane %v4509, 3
      %v4512 = vshll.u32 %v3899, 16
      %v4514 = vrot.slane %v4512, 4
      %v4515 = vor.u32 %v4511, %v4514
      %v4516 = vsel %vm4155, %v4507, %v4515
      %v4518 = vshrl.u32 %v4001, 16
      %v4520 = vrot.slane %v4518, 3
      %v4521 = vshll.u32 %v4001, 16
      %v4523 = vrot.slane %v4521, 4
      %v4524 = vor.u32 %v4520, %v4523
      %v4525 = vsel %vm4155, %v4524, %v4524
      %v4527 = vshrl.u32 %v4131, 16
      %v4529 = vrot.slane %v4527, 3
      %v4530 = vshll.u32 %v4131, 16
      %v4532 = vrot.slane %v4530, 4
      %v4533 = vor.u32 %v4529, %v4532
      %v4535 = vshrl.u32 %v4133, 16
      %v4537 = vrot.slane %v4535, 3
      %v4538 = vshll.u32 %v4133, 16
      %v4540 = vrot.slane %v4538, 4
      %v4541 = vor.u32 %v4537, %v4540
      %v4542 = vsel %vm4155, %v4533, %v4541
      %v4544 = vshrl.u32 %v3900, 16
      %v4546 = vrot.slane %v4544, 3
      %v4547 = vshll.u32 %v3900, 16
      %v4549 = vrot.slane %v4547, 4
      %v4550 = vor.u32 %v4546, %v4549
      %v4552 = vshrl.u32 %v3901, 16
      %v4554 = vrot.slane %v4552, 3
      %v4555 = vshll.u32 %v3901, 16
      %v4557 = vrot.slane %v4555, 4
      %v4558 = vor.u32 %v4554, %v4557
      %v4559 = vsel %vm4155, %v4550, %v4558
      %v4561 = vshrl.u32 %v4009, 16
      %v4563 = vrot.slane %v4561, 3
      %v4564 = vshll.u32 %v4009, 16
      %v4566 = vrot.slane %v4564, 4
      %v4567 = vor.u32 %v4563, %v4566
      %v4568 = vsel %vm4155, %v4567, %v4567
      %v4570 = vshrl.u32 %v4134, 16
      %v4572 = vrot.slane %v4570, 3
      %v4573 = vshll.u32 %v4134, 16
      %v4575 = vrot.slane %v4573, 4
      %v4576 = vor.u32 %v4572, %v4575
      %v4578 = vshrl.u32 %v4136, 16
      %v4580 = vrot.slane %v4578, 3
      %v4581 = vshll.u32 %v4136, 16
      %v4583 = vrot.slane %v4581, 4
      %v4584 = vor.u32 %v4580, %v4583
      %v4585 = vsel %vm4155, %v4576, %v4584
      %v4587 = vshrl.u32 %v3902, 16
      %v4589 = vrot.slane %v4587, 3
      %v4590 = vshll.u32 %v3902, 16
      %v4592 = vrot.slane %v4590, 4
      %v4593 = vor.u32 %v4589, %v4592
      %v4595 = vshrl.u32 %v3903, 16
      %v4597 = vrot.slane %v4595, 3
      %v4598 = vshll.u32 %v3903, 16
      %v4600 = vrot.slane %v4598, 4
      %v4601 = vor.u32 %v4597, %v4600
      %v4602 = vsel %vm4155, %v4593, %v4601
      %v4604 = vshrl.u32 %v4017, 16
      %v4606 = vrot.slane %v4604, 3
      %v4607 = vshll.u32 %v4017, 16
      %v4609 = vrot.slane %v4607, 4
      %v4610 = vor.u32 %v4606, %v4609
      %v4611 = vsel %vm4155, %v4610, %v4610
      %v4613 = vshrl.u32 %v4137, 16
      %v4615 = vrot.slane %v4613, 3
      %v4616 = vshll.u32 %v4137, 16
      %v4618 = vrot.slane %v4616, 4
      %v4619 = vor.u32 %v4615, %v4618
      %v4621 = vshrl.u32 %v4139, 16
      %v4623 = vrot.slane %v4621, 3
      %v4624 = vshll.u32 %v4139, 16
      %v4626 = vrot.slane %v4624, 4
      %v4627 = vor.u32 %v4623, %v4626
      %v4628 = vsel %vm4155, %v4619, %v4627
      %v4630 = vshrl.u32 %v3904, 16
      %v4632 = vrot.slane %v4630, 3
      %v4633 = vshll.u32 %v3904, 16
      %v4635 = vrot.slane %v4633, 4
      %v4636 = vor.u32 %v4632, %v4635
      %v4638 = vshrl.u32 %v3905, 16
      %v4640 = vrot.slane %v4638, 3
      %v4641 = vshll.u32 %v3905, 16
      %v4643 = vrot.slane %v4641, 4
      %v4644 = vor.u32 %v4640, %v4643
      %v4645 = vsel %vm4155, %v4636, %v4644
      %v4647 = vshrl.u32 %v4025, 16
      %v4649 = vrot.slane %v4647, 3
      %v4650 = vshll.u32 %v4025, 16
      %v4652 = vrot.slane %v4650, 4
      %v4653 = vor.u32 %v4649, %v4652
      %v4654 = vsel %vm4155, %v4653, %v4653
      %v4656 = vshrl.u32 %v4140, 16
      %v4658 = vrot.slane %v4656, 3
      %v4659 = vshll.u32 %v4140, 16
      %v4661 = vrot.slane %v4659, 4
      %v4662 = vor.u32 %v4658, %v4661
      %v4664 = vshrl.u32 %v4142, 16
      %v4666 = vrot.slane %v4664, 3
      %v4667 = vshll.u32 %v4142, 16
      %v4669 = vrot.slane %v4667, 4
      %v4670 = vor.u32 %v4666, %v4669
      %v4671 = vsel %vm4155, %v4662, %v4670
      %v4673 = vshrl.u32 %v3906, 16
      %v4675 = vrot.slane %v4673, 3
      %v4676 = vshll.u32 %v3906, 16
      %v4678 = vrot.slane %v4676, 4
      %v4679 = vor.u32 %v4675, %v4678
      %v4681 = vshrl.u32 %v3907, 16
      %v4683 = vrot.slane %v4681, 3
      %v4684 = vshll.u32 %v3907, 16
      %v4686 = vrot.slane %v4684, 4
      %v4687 = vor.u32 %v4683, %v4686
      %v4688 = vsel %vm4155, %v4679, %v4687
      %v4690 = vshrl.u32 %v4033, 16
      %v4692 = vrot.slane %v4690, 3
      %v4693 = vshll.u32 %v4033, 16
      %v4695 = vrot.slane %v4693, 4
      %v4696 = vor.u32 %v4692, %v4695
      %v4697 = vsel %vm4155, %v4696, %v4696
      %v4699 = vshrl.u32 %v4143, 16
      %v4701 = vrot.slane %v4699, 3
      %v4702 = vshll.u32 %v4143, 16
      %v4704 = vrot.slane %v4702, 4
      %v4705 = vor.u32 %v4701, %v4704
      %v4707 = vshrl.u32 %v4145, 16
      %v4709 = vrot.slane %v4707, 3
      %v4710 = vshll.u32 %v4145, 16
      %v4712 = vrot.slane %v4710, 4
      %v4713 = vor.u32 %v4709, %v4712
      %v4714 = vsel %vm4155, %v4705, %v4713
      %v4716 = vshrl.u32 %v3908, 16
      %v4718 = vrot.slane %v4716, 3
      %v4719 = vshll.u32 %v3908, 16
      %v4721 = vrot.slane %v4719, 4
      %v4722 = vor.u32 %v4718, %v4721
      %v4724 = vshrl.u32 %v3909, 16
      %v4726 = vrot.slane %v4724, 3
      %v4727 = vshll.u32 %v3909, 16
      %v4729 = vrot.slane %v4727, 4
      %v4730 = vor.u32 %v4726, %v4729
      %v4731 = vsel %vm4155, %v4722, %v4730
      %v4733 = vshrl.u32 %v4041, 16
      %v4735 = vrot.slane %v4733, 3
      %v4736 = vshll.u32 %v4041, 16
      %v4738 = vrot.slane %v4736, 4
      %v4739 = vor.u32 %v4735, %v4738
      %v4740 = vsel %vm4155, %v4739, %v4739
      %v4742 = vshrl.u32 %v4146, 16
      %v4744 = vrot.slane %v4742, 3
      %v4745 = vshll.u32 %v4146, 16
      %v4747 = vrot.slane %v4745, 4
      %v4748 = vor.u32 %v4744, %v4747
      %v4750 = vshrl.u32 %v4148, 16
      %v4752 = vrot.slane %v4750, 3
      %v4753 = vshll.u32 %v4148, 16
      %v4755 = vrot.slane %v4753, 4
      %v4756 = vor.u32 %v4752, %v4755
      %v4757 = vsel %vm4155, %v4748, %v4756
      %v4759 = vshrl.u32 %v3910, 16
      %v4761 = vrot.slane %v4759, 3
      %v4762 = vshll.u32 %v3910, 16
      %v4764 = vrot.slane %v4762, 4
      %v4765 = vor.u32 %v4761, %v4764
      %v4767 = vshrl.u32 %v3911, 16
      %v4769 = vrot.slane %v4767, 3
      %v4770 = vshll.u32 %v3911, 16
      %v4772 = vrot.slane %v4770, 4
      %v4773 = vor.u32 %v4769, %v4772
      %v4774 = vsel %vm4155, %v4765, %v4773
      %v4776 = vshrl.u32 %v4049, 16
      %v4778 = vrot.slane %v4776, 3
      %v4779 = vshll.u32 %v4049, 16
      %v4781 = vrot.slane %v4779, 4
      %v4782 = vor.u32 %v4778, %v4781
      %v4783 = vsel %vm4155, %v4782, %v4782
      %v4785 = vshrl.u32 %v4149, 16
      %v4787 = vrot.slane %v4785, 3
      %v4788 = vshll.u32 %v4149, 16
      %v4790 = vrot.slane %v4788, 4
      %v4791 = vor.u32 %v4787, %v4790
      %v4793 = vshrl.u32 %v4151, 16
      %v4795 = vrot.slane %v4793, 3
      %v4796 = vshll.u32 %v4151, 16
      %v4798 = vrot.slane %v4796, 4
      %v4799 = vor.u32 %v4795, %v4798
      %v4800 = vsel %vm4155, %v4791, %v4799
      %v4802 = vshrl.u32 %v3912, 16
      %v4804 = vrot.slane %v4802, 3
      %v4805 = vshll.u32 %v3912, 16
      %v4807 = vrot.slane %v4805, 4
      %v4808 = vor.u32 %v4804, %v4807
      %v4810 = vshrl.u32 %v3913, 16
      %v4812 = vrot.slane %v4810, 3
      %v4813 = vshll.u32 %v3913, 16
      %v4815 = vrot.slane %v4813, 4
      %v4816 = vor.u32 %v4812, %v4815
      %v4817 = vsel %vm4155, %v4808, %v4816
      %v4819 = vshrl.u32 %v4057, 16
      %v4821 = vrot.slane %v4819, 3
      %v4822 = vshll.u32 %v4057, 16
      %v4824 = vrot.slane %v4822, 4
      %v4825 = vor.u32 %v4821, %v4824
      %v4826 = vsel %vm4155, %v4825, %v4825
      %v4828 = vshrl.u32 %v4152, 16
      %v4830 = vrot.slane %v4828, 3
      %v4831 = vshll.u32 %v4152, 16
      %v4833 = vrot.slane %v4831, 4
      %v4834 = vor.u32 %v4830, %v4833
      %v4836 = vshrl.u32 %v4154, 16
      %v4838 = vrot.slane %v4836, 3
      %v4839 = vshll.u32 %v4154, 16
      %v4841 = vrot.slane %v4839, 4
      %v4842 = vor.u32 %v4838, %v4841
      %v4843 = vsel %vm4155, %v4834, %v4842
      %v4892 = vld [vmem:[%s3] sm:$0xf]
      %v4893 = vld [vmem:[%s3 + $0x4] sm:$0xf]
      %v4894 = vld [vmem:[%s3 + $0x8] sm:$0xf]
      %v4895 = vld [vmem:[%s3 + $0xc] sm:$0xf]
      %v4896 = vld [vmem:[%s3 + $0x10] sm:$0xf]
      %v4897 = vld [vmem:[%s3 + $0x14] sm:$0xf]
      %v4898 = vld [vmem:[%s3 + $0x18] sm:$0xf]
      %v4899 = vld [vmem:[%s3 + $0x1c] sm:$0xf]
      %v4900 = vld [vmem:[%s3 + $0x20] sm:$0xf]
      %v4901 = vld [vmem:[%s3 + $0x24] sm:$0xf]
      %v4902 = vld [vmem:[%s3 + $0x28] sm:$0xf]
      %v4903 = vld [vmem:[%s3 + $0x2c] sm:$0xf]
      %v4904 = vld [vmem:[%s3 + $0x30] sm:$0xf]
      %v4905 = vld [vmem:[%s3 + $0x34] sm:$0xf]
      %v4906 = vld [vmem:[%s3 + $0x38] sm:$0xf]
      %v4907 = vld [vmem:[%s3 + $0x3c] sm:$0xf]
      %v4908 = vld [vmem:[%s3 + $0x40] sm:$0xf]
      %v4909 = vld [vmem:[%s3 + $0x44] sm:$0xf]
      %v4910 = vld [vmem:[%s3 + $0x48] sm:$0xf]
      %v4911 = vld [vmem:[%s3 + $0x4c] sm:$0xf]
      %v4912 = vld [vmem:[%s3 + $0x50] sm:$0xf]
      %v4913 = vld [vmem:[%s3 + $0x54] sm:$0xf]
      %v4914 = vld [vmem:[%s3 + $0x58] sm:$0xf]
      %v4915 = vld [vmem:[%s3 + $0x5c] sm:$0xf]
      %v4916 = vld [vmem:[%s3 + $0x60] sm:$0xf]
      %v4917 = vld [vmem:[%s3 + $0x64] sm:$0xf]
      %v4918 = vld [vmem:[%s3 + $0x68] sm:$0xf]
      %v4919 = vld [vmem:[%s3 + $0x6c] sm:$0xf]
      %v4920 = vld [vmem:[%s3 + $0x70] sm:$0xf]
      %v4921 = vld [vmem:[%s3 + $0x74] sm:$0xf]
      %v4922 = vld [vmem:[%s3 + $0x78] sm:$0xf]
      %v4923 = vld [vmem:[%s3 + $0x7c] sm:$0xf]
      %v4924 = vld [vmem:[%s3 + $0x80] sm:$0xf]
      %v4925 = vld [vmem:[%s3 + $0x84] sm:$0xf]
      %v4926 = vld [vmem:[%s3 + $0x88] sm:$0xf]
      %v4927 = vld [vmem:[%s3 + $0x8c] sm:$0xf]
      %v4928 = vld [vmem:[%s3 + $0x90] sm:$0xf]
      %v4929 = vld [vmem:[%s3 + $0x94] sm:$0xf]
      %v4930 = vld [vmem:[%s3 + $0x98] sm:$0xf]
      %v4931 = vld [vmem:[%s3 + $0x9c] sm:$0xf]
      %v4932 = vld [vmem:[%s3 + $0xa0] sm:$0xf]
      %v4933 = vld [vmem:[%s3 + $0xa4] sm:$0xf]
      %v4934 = vld [vmem:[%s3 + $0xa8] sm:$0xf]
      %v4935 = vld [vmem:[%s3 + $0xac] sm:$0xf]
      %v4936 = vld [vmem:[%s3 + $0xb0] sm:$0xf]
      %v4937 = vld [vmem:[%s3 + $0xb4] sm:$0xf]
      %v4938 = vld [vmem:[%s3 + $0xb8] sm:$0xf]
      %v4939 = vld [vmem:[%s3 + $0xbc] sm:$0xf]
      %v4988 = vunpack.c.l.b16 %v4892
      %v4989 = vunpack.c.l.b16 %v4893
      %v4990 = vunpack.c.l.b16 %v4894
      %v4991 = vunpack.c.l.b16 %v4895
      %v4992 = vunpack.c.l.b16 %v4896
      %v4993 = vunpack.c.l.b16 %v4897
      %v4994 = vunpack.c.l.b16 %v4898
      %v4995 = vunpack.c.l.b16 %v4899
      %v4996 = vunpack.c.l.b16 %v4900
      %v4997 = vunpack.c.l.b16 %v4901
      %v4998 = vunpack.c.l.b16 %v4902
      %v4999 = vunpack.c.l.b16 %v4903
      %v5000 = vunpack.c.l.b16 %v4904
      %v5001 = vunpack.c.l.b16 %v4905
      %v5002 = vunpack.c.l.b16 %v4906
      %v5003 = vunpack.c.l.b16 %v4907
      %v5004 = vunpack.c.l.b16 %v4908
      %v5005 = vunpack.c.l.b16 %v4909
      %v5006 = vunpack.c.l.b16 %v4910
      %v5007 = vunpack.c.l.b16 %v4911
      %v5008 = vunpack.c.l.b16 %v4912
      %v5009 = vunpack.c.l.b16 %v4913
      %v5010 = vunpack.c.l.b16 %v4914
      %v5011 = vunpack.c.l.b16 %v4915
      %v5012 = vunpack.c.l.b16 %v4916
      %v5013 = vunpack.c.l.b16 %v4917
      %v5014 = vunpack.c.l.b16 %v4918
      %v5015 = vunpack.c.l.b16 %v4919
      %v5016 = vunpack.c.l.b16 %v4920
      %v5017 = vunpack.c.l.b16 %v4921
      %v5018 = vunpack.c.l.b16 %v4922
      %v5019 = vunpack.c.l.b16 %v4923
      %v5020 = vunpack.c.l.b16 %v4924
      %v5021 = vunpack.c.l.b16 %v4925
      %v5022 = vunpack.c.l.b16 %v4926
      %v5023 = vunpack.c.l.b16 %v4927
      %v5024 = vunpack.c.l.b16 %v4928
      %v5025 = vunpack.c.l.b16 %v4929
      %v5026 = vunpack.c.l.b16 %v4930
      %v5027 = vunpack.c.l.b16 %v4931
      %v5028 = vunpack.c.l.b16 %v4932
      %v5029 = vunpack.c.l.b16 %v4933
      %v5030 = vunpack.c.l.b16 %v4934
      %v5031 = vunpack.c.l.b16 %v4935
      %v5032 = vunpack.c.l.b16 %v4936
      %v5033 = vunpack.c.l.b16 %v4937
      %v5034 = vunpack.c.l.b16 %v4938
      %v5035 = vunpack.c.l.b16 %v4939
      %v5036 = vpack.c.b16 %v4989, %v4988
      %v5037 = vpack.c.b16 %v4991, %v4990
      %v5038 = vpack.c.b16 %v4993, %v4992
      %v5039 = vpack.c.b16 %v4995, %v4994
      %v5040 = vpack.c.b16 %v4997, %v4996
      %v5041 = vpack.c.b16 %v4999, %v4998
      %v5042 = vpack.c.b16 %v5001, %v5000
      %v5043 = vpack.c.b16 %v5003, %v5002
      %v5044 = vpack.c.b16 %v5005, %v5004
      %v5045 = vpack.c.b16 %v5007, %v5006
      %v5046 = vpack.c.b16 %v5009, %v5008
      %v5047 = vpack.c.b16 %v5011, %v5010
      %v5048 = vpack.c.b16 %v5013, %v5012
      %v5049 = vpack.c.b16 %v5015, %v5014
      %v5050 = vpack.c.b16 %v5017, %v5016
      %v5051 = vpack.c.b16 %v5019, %v5018
      %v5052 = vpack.c.b16 %v5021, %v5020
      %v5053 = vpack.c.b16 %v5023, %v5022
      %v5054 = vpack.c.b16 %v5025, %v5024
      %v5055 = vpack.c.b16 %v5027, %v5026
      %v5056 = vpack.c.b16 %v5029, %v5028
      %v5057 = vpack.c.b16 %v5031, %v5030
      %v5058 = vpack.c.b16 %v5033, %v5032
      %v5059 = vpack.c.b16 %v5035, %v5034
      %5084 = vmatprep.subr.bf16.mxu0 0
      %5085 = vmatpush1.bf16.msra.mxu0 %v5043
      %5086 = vmatprep.subr.bf16.mxu0 0
      %5087 = vmatpush1.bf16.msra.mxu0 %v5042
      %5088 = vmatprep.subr.bf16.mxu0 0
      %5089 = vmatpush1.bf16.msra.mxu0 %v5041
      %5090 = vmatprep.subr.bf16.mxu0 0
      %5091 = vmatpush1.bf16.msra.mxu0 %v5040
      %5092 = vmatprep.subr.bf16.mxu0 0
      %5093 = vmatpush1.bf16.msra.mxu0 %v5039
      %5094 = vmatprep.subr.bf16.mxu0 0
      %5095 = vmatpush1.bf16.msra.mxu0 %v5038
      %5096 = vmatprep.subr.bf16.mxu0 0
      %5097 = vmatpush1.bf16.msra.mxu0 %v5037
      %5098 = vmatprep.subr.bf16.mxu0 0
      %5099 = vmatpush1.bf16.msra.mxu0 %v5036
      %5100 = vmatprep.subr.bf16.mxu0 0
      %5101 = vmatpush2.bf16.msra.mxu0 %v5051
      %5102 = vmatprep.subr.bf16.mxu0 0
      %5103 = vmatpush2.bf16.msra.mxu0 %v5050
      %5104 = vmatprep.subr.bf16.mxu0 0
      %5105 = vmatpush2.bf16.msra.mxu0 %v5049
      %5106 = vmatprep.subr.bf16.mxu0 0
      %5107 = vmatpush2.bf16.msra.mxu0 %v5048
      %5108 = vmatprep.subr.bf16.mxu0 0
      %5109 = vmatpush2.bf16.msra.mxu0 %v5047
      %5110 = vmatprep.subr.bf16.mxu0 0
      %5111 = vmatpush2.bf16.msra.mxu0 %v5046
      %5112 = vmatprep.subr.bf16.mxu0 0
      %5113 = vmatpush2.bf16.msra.mxu0 %v5045
      %5114 = vmatprep.subr.bf16.mxu0 0
      %5115 = vmatpush2.bf16.msra.mxu0 %v5044
      %5116 = vmatprep.mubr.bf16.mxu0 %v4181
      %5117 = vmatmul.mubr.bf16.gmra.mxu0 %v4172
      %v5118 = vpop.f32.mrf.mxu0
      %v5119 = vadd.f32 0.0, %v5118
      %v5120 = vpop.f32.mrf.mxu0
      %v5121 = vpop.f32.mrf.mxu0
      %v5122 = vadd.f32 0.0, %v5121
      %v5123 = vpop.f32.mrf.mxu0
      %5124 = vmatprep.mubr.bf16.mxu0 %v4224
      %5125 = vmatmul.mubr.bf16.gmra.mxu0 %v4215
      %v5126 = vpop.f32.mrf.mxu0
      %v5127 = vadd.f32 0.0, %v5126
      %v5128 = vpop.f32.mrf.mxu0
      %v5129 = vpop.f32.mrf.mxu0
      %v5130 = vadd.f32 0.0, %v5129
      %v5131 = vpop.f32.mrf.mxu0
      %5132 = vmatprep.mubr.bf16.mxu0 %v4267
      %5133 = vmatmul.mubr.bf16.gmra.mxu0 %v4258
      %v5134 = vpop.f32.mrf.mxu0
      %v5135 = vadd.f32 0.0, %v5134
      %v5136 = vpop.f32.mrf.mxu0
      %v5137 = vpop.f32.mrf.mxu0
      %v5138 = vadd.f32 0.0, %v5137
      %v5139 = vpop.f32.mrf.mxu0
      %5140 = vmatprep.mubr.bf16.mxu0 %v4310
      %5141 = vmatmul.mubr.bf16.gmra.mxu0 %v4301
      %v5142 = vpop.f32.mrf.mxu0
      %v5143 = vadd.f32 0.0, %v5142
      %v5144 = vpop.f32.mrf.mxu0
      %v5145 = vpop.f32.mrf.mxu0
      %v5146 = vadd.f32 0.0, %v5145
      %v5147 = vpop.f32.mrf.mxu0
      %5148 = vmatprep.mubr.bf16.mxu0 %v4353
      %5149 = vmatmul.mubr.bf16.gmra.mxu0 %v4344
      %v5150 = vpop.f32.mrf.mxu0
      %v5151 = vadd.f32 0.0, %v5150
      %v5152 = vpop.f32.mrf.mxu0
      %v5153 = vpop.f32.mrf.mxu0
      %v5154 = vadd.f32 0.0, %v5153
      %v5155 = vpop.f32.mrf.mxu0
      %5156 = vmatprep.mubr.bf16.mxu0 %v4396
      %5157 = vmatmul.mubr.bf16.gmra.mxu0 %v4387
      %v5158 = vpop.f32.mrf.mxu0
      %v5159 = vadd.f32 0.0, %v5158
      %v5160 = vpop.f32.mrf.mxu0
      %v5161 = vpop.f32.mrf.mxu0
      %v5162 = vadd.f32 0.0, %v5161
      %v5163 = vpop.f32.mrf.mxu0
      %5164 = vmatprep.mubr.bf16.mxu0 %v4439
      %5165 = vmatmul.mubr.bf16.gmra.mxu0 %v4430
      %v5166 = vpop.f32.mrf.mxu0
      %v5167 = vadd.f32 0.0, %v5166
      %v5168 = vpop.f32.mrf.mxu0
      %v5169 = vpop.f32.mrf.mxu0
      %v5170 = vadd.f32 0.0, %v5169
      %v5171 = vpop.f32.mrf.mxu0
      %5172 = vmatprep.mubr.bf16.mxu0 %v4482
      %5173 = vmatmul.mubr.bf16.gmra.mxu0 %v4473
      %v5174 = vpop.f32.mrf.mxu0
      %v5175 = vadd.f32 0.0, %v5174
      %v5176 = vpop.f32.mrf.mxu0
      %v5177 = vpop.f32.mrf.mxu0
      %v5178 = vadd.f32 0.0, %v5177
      %v5179 = vpop.f32.mrf.mxu0
      %5180 = vmatprep.mubr.bf16.mxu0 %v4525
      %5181 = vmatmul.mubr.bf16.gmra.mxu0 %v4516
      %v5182 = vpop.f32.mrf.mxu0
      %v5183 = vadd.f32 0.0, %v5182
      %v5184 = vpop.f32.mrf.mxu0
      %v5185 = vpop.f32.mrf.mxu0
      %v5186 = vadd.f32 0.0, %v5185
      %v5187 = vpop.f32.mrf.mxu0
      %5188 = vmatprep.mubr.bf16.mxu0 %v4568
      %5189 = vmatmul.mubr.bf16.gmra.mxu0 %v4559
      %v5190 = vpop.f32.mrf.mxu0
      %v5191 = vadd.f32 0.0, %v5190
      %v5192 = vpop.f32.mrf.mxu0
      %v5193 = vpop.f32.mrf.mxu0
      %v5194 = vadd.f32 0.0, %v5193
      %v5195 = vpop.f32.mrf.mxu0
      %5196 = vmatprep.mubr.bf16.mxu0 %v4611
      %5197 = vmatmul.mubr.bf16.gmra.mxu0 %v4602
      %v5198 = vpop.f32.mrf.mxu0
      %v5199 = vadd.f32 0.0, %v5198
      %v5200 = vpop.f32.mrf.mxu0
      %v5201 = vpop.f32.mrf.mxu0
      %v5202 = vadd.f32 0.0, %v5201
      %v5203 = vpop.f32.mrf.mxu0
      %5204 = vmatprep.mubr.bf16.mxu0 %v4654
      %5205 = vmatmul.mubr.bf16.gmra.mxu0 %v4645
      %v5206 = vpop.f32.mrf.mxu0
      %v5207 = vadd.f32 0.0, %v5206
      %v5208 = vpop.f32.mrf.mxu0
      %v5209 = vpop.f32.mrf.mxu0
      %v5210 = vadd.f32 0.0, %v5209
      %v5211 = vpop.f32.mrf.mxu0
      %5212 = vmatprep.mubr.bf16.mxu0 %v4697
      %5213 = vmatmul.mubr.bf16.gmra.mxu0 %v4688
      %v5214 = vpop.f32.mrf.mxu0
      %v5215 = vadd.f32 0.0, %v5214
      %v5216 = vpop.f32.mrf.mxu0
      %v5217 = vpop.f32.mrf.mxu0
      %v5218 = vadd.f32 0.0, %v5217
      %v5219 = vpop.f32.mrf.mxu0
      %5220 = vmatprep.mubr.bf16.mxu0 %v4740
      %5221 = vmatmul.mubr.bf16.gmra.mxu0 %v4731
      %v5222 = vpop.f32.mrf.mxu0
      %v5223 = vadd.f32 0.0, %v5222
      %v5224 = vpop.f32.mrf.mxu0
      %v5225 = vpop.f32.mrf.mxu0
      %v5226 = vadd.f32 0.0, %v5225
      %v5227 = vpop.f32.mrf.mxu0
      %5228 = vmatprep.mubr.bf16.mxu0 %v4783
      %5229 = vmatmul.mubr.bf16.gmra.mxu0 %v4774
      %v5230 = vpop.f32.mrf.mxu0
      %v5231 = vadd.f32 0.0, %v5230
      %v5232 = vpop.f32.mrf.mxu0
      %v5233 = vpop.f32.mrf.mxu0
      %v5234 = vadd.f32 0.0, %v5233
      %v5235 = vpop.f32.mrf.mxu0
      %5236 = vmatprep.mubr.bf16.mxu0 %v4826
      %5237 = vmatmul.mubr.bf16.gmra.mxu0 %v4817
      %v5238 = vpop.f32.mrf.mxu0
      %v5239 = vadd.f32 0.0, %v5238
      %v5240 = vpop.f32.mrf.mxu0
      %v5241 = vpop.f32.mrf.mxu0
      %v5242 = vadd.f32 0.0, %v5241
      %v5243 = vpop.f32.mrf.mxu0
      %5244 = vdwg.mxu0
      %5245 = vmatprep.subr.bf16.mxu0 0
      %5246 = vmatpush1.bf16.msra.mxu0 %v5059
      %5247 = vmatprep.subr.bf16.mxu0 0
      %5248 = vmatpush1.bf16.msra.mxu0 %v5058
      %5249 = vmatprep.subr.bf16.mxu0 0
      %5250 = vmatpush1.bf16.msra.mxu0 %v5057
      %5251 = vmatprep.subr.bf16.mxu0 0
      %5252 = vmatpush1.bf16.msra.mxu0 %v5056
      %5253 = vmatprep.subr.bf16.mxu0 0
      %5254 = vmatpush1.bf16.msra.mxu0 %v5055
      %5255 = vmatprep.subr.bf16.mxu0 0
      %5256 = vmatpush1.bf16.msra.mxu0 %v5054
      %5257 = vmatprep.subr.bf16.mxu0 0
      %5258 = vmatpush1.bf16.msra.mxu0 %v5053
      %5259 = vmatprep.subr.bf16.mxu0 0
      %5260 = vmatpush1.bf16.msra.mxu0 %v5052
      %5261 = vmatprep.subr.bf16.mxu0 0
      %5262 = vmatpush2.bf16.msra.mxu0 0
      %5263 = vmatprep.subr.bf16.mxu0 0
      %5264 = vmatpush2.bf16.msra.mxu0 0
      %5265 = vmatprep.subr.bf16.mxu0 0
      %5266 = vmatpush2.bf16.msra.mxu0 0
      %5267 = vmatprep.subr.bf16.mxu0 0
      %5268 = vmatpush2.bf16.msra.mxu0 0
      %5269 = vmatprep.subr.bf16.mxu0 0
      %5270 = vmatpush2.bf16.msra.mxu0 0
      %5271 = vmatprep.subr.bf16.mxu0 0
      %5272 = vmatpush2.bf16.msra.mxu0 0
      %5273 = vmatprep.subr.bf16.mxu0 0
      %5274 = vmatpush2.bf16.msra.mxu0 0
      %5275 = vmatprep.subr.bf16.mxu0 0
      %5276 = vmatpush2.bf16.msra.mxu0 0
      %5277 = vmatprep.mubr.bf16.mxu0 0
      %5278 = vmatmul.mubr.bf16.gmra.mxu0 %v4198
      %v5279 = vpop.f32.mrf.mxu0
      %v5280 = vadd.f32 %v5119, %v5279
      %v5281 = vpop.f32.mrf.mxu0
      %v5282 = vpop.f32.mrf.mxu0
      %v5283 = vadd.f32 %v5122, %v5282
      %v5284 = vpop.f32.mrf.mxu0
      %5285 = vmatprep.mubr.bf16.mxu0 0
      %5286 = vmatmul.mubr.bf16.gmra.mxu0 %v4241
      %v5287 = vpop.f32.mrf.mxu0
      %v5288 = vadd.f32 %v5127, %v5287
      %v5289 = vpop.f32.mrf.mxu0
      %v5290 = vpop.f32.mrf.mxu0
      %v5291 = vadd.f32 %v5130, %v5290
      %v5292 = vpop.f32.mrf.mxu0
      %5293 = vmatprep.mubr.bf16.mxu0 0
      %5294 = vmatmul.mubr.bf16.gmra.mxu0 %v4284
      %v5295 = vpop.f32.mrf.mxu0
      %v5296 = vadd.f32 %v5135, %v5295
      %v5297 = vpop.f32.mrf.mxu0
      %v5298 = vpop.f32.mrf.mxu0
      %v5299 = vadd.f32 %v5138, %v5298
      %v5300 = vpop.f32.mrf.mxu0
      %5301 = vmatprep.mubr.bf16.mxu0 0
      %5302 = vmatmul.mubr.bf16.gmra.mxu0 %v4327
      %v5303 = vpop.f32.mrf.mxu0
      %v5304 = vadd.f32 %v5143, %v5303
      %v5305 = vpop.f32.mrf.mxu0
      %v5306 = vpop.f32.mrf.mxu0
      %v5307 = vadd.f32 %v5146, %v5306
      %v5308 = vpop.f32.mrf.mxu0
      %5309 = vmatprep.mubr.bf16.mxu0 0
      %5310 = vmatmul.mubr.bf16.gmra.mxu0 %v4370
      %v5311 = vpop.f32.mrf.mxu0
      %v5312 = vadd.f32 %v5151, %v5311
      %v5313 = vpop.f32.mrf.mxu0
      %v5314 = vpop.f32.mrf.mxu0
      %v5315 = vadd.f32 %v5154, %v5314
      %v5316 = vpop.f32.mrf.mxu0
      %5317 = vmatprep.mubr.bf16.mxu0 0
      %5318 = vmatmul.mubr.bf16.gmra.mxu0 %v4413
      %v5319 = vpop.f32.mrf.mxu0
      %v5320 = vadd.f32 %v5159, %v5319
      %v5321 = vpop.f32.mrf.mxu0
      %v5322 = vpop.f32.mrf.mxu0
      %v5323 = vadd.f32 %v5162, %v5322
      %v5324 = vpop.f32.mrf.mxu0
      %5325 = vmatprep.mubr.bf16.mxu0 0
      %5326 = vmatmul.mubr.bf16.gmra.mxu0 %v4456
      %v5327 = vpop.f32.mrf.mxu0
      %v5328 = vadd.f32 %v5167, %v5327
      %v5329 = vpop.f32.mrf.mxu0
      %v5330 = vpop.f32.mrf.mxu0
      %v5331 = vadd.f32 %v5170, %v5330
      %v5332 = vpop.f32.mrf.mxu0
      %5333 = vmatprep.mubr.bf16.mxu0 0
      %5334 = vmatmul.mubr.bf16.gmra.mxu0 %v4499
      %v5335 = vpop.f32.mrf.mxu0
      %v5336 = vadd.f32 %v5175, %v5335
      %v5337 = vpop.f32.mrf.mxu0
      %v5338 = vpop.f32.mrf.mxu0
      %v5339 = vadd.f32 %v5178, %v5338
      %v5340 = vpop.f32.mrf.mxu0
      %5341 = vmatprep.mubr.bf16.mxu0 0
      %5342 = vmatmul.mubr.bf16.gmra.mxu0 %v4542
      %v5343 = vpop.f32.mrf.mxu0
      %v5344 = vadd.f32 %v5183, %v5343
      %v5345 = vpop.f32.mrf.mxu0
      %v5346 = vpop.f32.mrf.mxu0
      %v5347 = vadd.f32 %v5186, %v5346
      %v5348 = vpop.f32.mrf.mxu0
      %5349 = vmatprep.mubr.bf16.mxu0 0
      %5350 = vmatmul.mubr.bf16.gmra.mxu0 %v4585
      %v5351 = vpop.f32.mrf.mxu0
      %v5352 = vadd.f32 %v5191, %v5351
      %v5353 = vpop.f32.mrf.mxu0
      %v5354 = vpop.f32.mrf.mxu0
      %v5355 = vadd.f32 %v5194, %v5354
      %v5356 = vpop.f32.mrf.mxu0
      %5357 = vmatprep.mubr.bf16.mxu0 0
      %5358 = vmatmul.mubr.bf16.gmra.mxu0 %v4628
      %v5359 = vpop.f32.mrf.mxu0
      %v5360 = vadd.f32 %v5199, %v5359
      %v5361 = vpop.f32.mrf.mxu0
      %v5362 = vpop.f32.mrf.mxu0
      %v5363 = vadd.f32 %v5202, %v5362
      %v5364 = vpop.f32.mrf.mxu0
      %5365 = vmatprep.mubr.bf16.mxu0 0
      %5366 = vmatmul.mubr.bf16.gmra.mxu0 %v4671
      %v5367 = vpop.f32.mrf.mxu0
      %v5368 = vadd.f32 %v5207, %v5367
      %v5369 = vpop.f32.mrf.mxu0
      %v5370 = vpop.f32.mrf.mxu0
      %v5371 = vadd.f32 %v5210, %v5370
      %v5372 = vpop.f32.mrf.mxu0
      %5373 = vmatprep.mubr.bf16.mxu0 0
      %5374 = vmatmul.mubr.bf16.gmra.mxu0 %v4714
      %v5375 = vpop.f32.mrf.mxu0
      %v5376 = vadd.f32 %v5215, %v5375
      %v5377 = vpop.f32.mrf.mxu0
      %v5378 = vpop.f32.mrf.mxu0
      %v5379 = vadd.f32 %v5218, %v5378
      %v5380 = vpop.f32.mrf.mxu0
      %5381 = vmatprep.mubr.bf16.mxu0 0
      %5382 = vmatmul.mubr.bf16.gmra.mxu0 %v4757
      %v5383 = vpop.f32.mrf.mxu0
      %v5384 = vadd.f32 %v5223, %v5383
      %v5385 = vpop.f32.mrf.mxu0
      %v5386 = vpop.f32.mrf.mxu0
      %v5387 = vadd.f32 %v5226, %v5386
      %v5388 = vpop.f32.mrf.mxu0
      %5389 = vmatprep.mubr.bf16.mxu0 0
      %5390 = vmatmul.mubr.bf16.gmra.mxu0 %v4800
      %v5391 = vpop.f32.mrf.mxu0
      %v5392 = vadd.f32 %v5231, %v5391
      %v5393 = vpop.f32.mrf.mxu0
      %v5394 = vpop.f32.mrf.mxu0
      %v5395 = vadd.f32 %v5234, %v5394
      %v5396 = vpop.f32.mrf.mxu0
      %5397 = vmatprep.mubr.bf16.mxu0 0
      %5398 = vmatmul.mubr.bf16.gmra.mxu0 %v4843
      %v5399 = vpop.f32.mrf.mxu0
      %v5400 = vadd.f32 %v5239, %v5399
      %v5401 = vpop.f32.mrf.mxu0
      %v5402 = vpop.f32.mrf.mxu0
      %v5403 = vadd.f32 %v5242, %v5402
      %v5404 = vpop.f32.mrf.mxu0
      %5405 = vdwg.mxu0
      %5406 = vst [vmem:[#allocation3] sm:$0xff] %v5280
      %5407 = vst [vmem:[#allocation3 + $0x8] sm:$0xff] %v5283
      %5408 = vst [vmem:[#allocation3 + $0x10] sm:$0xff] %v5288
      %5409 = vst [vmem:[#allocation3 + $0x18] sm:$0xff] %v5291
      %5410 = vst [vmem:[#allocation3 + $0x20] sm:$0xff] %v5296
      %5411 = vst [vmem:[#allocation3 + $0x28] sm:$0xff] %v5299
      %5412 = vst [vmem:[#allocation3 + $0x30] sm:$0xff] %v5304
      %5413 = vst [vmem:[#allocation3 + $0x38] sm:$0xff] %v5307
      %5414 = vst [vmem:[#allocation3 + $0x40] sm:$0xff] %v5312
      %5415 = vst [vmem:[#allocation3 + $0x48] sm:$0xff] %v5315
      %5416 = vst [vmem:[#allocation3 + $0x50] sm:$0xff] %v5320
      %5417 = vst [vmem:[#allocation3 + $0x58] sm:$0xff] %v5323
      %5418 = vst [vmem:[#allocation3 + $0x60] sm:$0xff] %v5328
      %5419 = vst [vmem:[#allocation3 + $0x68] sm:$0xff] %v5331
      %5420 = vst [vmem:[#allocation3 + $0x70] sm:$0xff] %v5336
      %5421 = vst [vmem:[#allocation3 + $0x78] sm:$0xff] %v5339
      %5422 = vst [vmem:[#allocation3 + $0x80] sm:$0xff] %v5344
      %5423 = vst [vmem:[#allocation3 + $0x88] sm:$0xff] %v5347
      %5424 = vst [vmem:[#allocation3 + $0x90] sm:$0xff] %v5352
      %5425 = vst [vmem:[#allocation3 + $0x98] sm:$0xff] %v5355
      %5426 = vst [vmem:[#allocation3 + $0xa0] sm:$0xff] %v5360
      %5427 = vst [vmem:[#allocation3 + $0xa8] sm:$0xff] %v5363
      %5428 = vst [vmem:[#allocation3 + $0xb0] sm:$0xff] %v5368
      %5429 = vst [vmem:[#allocation3 + $0xb8] sm:$0xff] %v5371
      %5430 = vst [vmem:[#allocation3 + $0xc0] sm:$0xff] %v5376
      %5431 = vst [vmem:[#allocation3 + $0xc8] sm:$0xff] %v5379
      %5432 = vst [vmem:[#allocation3 + $0xd0] sm:$0xff] %v5384
      %5433 = vst [vmem:[#allocation3 + $0xd8] sm:$0xff] %v5387
      %5434 = vst [vmem:[#allocation3 + $0xe0] sm:$0xff] %v5392
      %5435 = vst [vmem:[#allocation3 + $0xe8] sm:$0xff] %v5395
      %5436 = vst [vmem:[#allocation3 + $0xf0] sm:$0xff] %v5400
      %5437 = vst [vmem:[#allocation3 + $0xf8] sm:$0xff] %v5403
      %v5438 = vld [vmem:[%s3545] sm:$0x8]
      %v5439 = vld [vmem:[%s3545 + $0x4] sm:$0xf]
      %v5440 = vld [vmem:[%s3545 + $0x8] sm:$0xf]
      %v5441 = vld [vmem:[%s3545 + $0x10] sm:$0x8]
      %v5442 = vld [vmem:[%s3545 + $0x14] sm:$0xf]
      %v5443 = vld [vmem:[%s3545 + $0x18] sm:$0xf]
      %v5444 = vld [vmem:[%s3545 + $0x20] sm:$0x8]
      %v5445 = vld [vmem:[%s3545 + $0x24] sm:$0xf]
      %v5446 = vld [vmem:[%s3545 + $0x28] sm:$0xf]
      %v5447 = vld [vmem:[%s3545 + $0x30] sm:$0x8]
      %v5448 = vld [vmem:[%s3545 + $0x34] sm:$0xf]
      %v5449 = vld [vmem:[%s3545 + $0x38] sm:$0xf]
      %v5450 = vld [vmem:[%s3545 + $0x40] sm:$0x8]
      %v5451 = vld [vmem:[%s3545 + $0x44] sm:$0xf]
      %v5452 = vld [vmem:[%s3545 + $0x48] sm:$0xf]
      %v5453 = vld [vmem:[%s3545 + $0x50] sm:$0x8]
      %v5454 = vld [vmem:[%s3545 + $0x54] sm:$0xf]
      %v5455 = vld [vmem:[%s3545 + $0x58] sm:$0xf]
      %v5456 = vld [vmem:[%s3545 + $0x60] sm:$0x8]
      %v5457 = vld [vmem:[%s3545 + $0x64] sm:$0xf]
      %v5458 = vld [vmem:[%s3545 + $0x68] sm:$0xf]
      %v5459 = vld [vmem:[%s3545 + $0x70] sm:$0x8]
      %v5460 = vld [vmem:[%s3545 + $0x74] sm:$0xf]
      %v5461 = vld [vmem:[%s3545 + $0x78] sm:$0xf]
      %v5462 = vld [vmem:[%s3545 + $0x80] sm:$0x8]
      %v5463 = vld [vmem:[%s3545 + $0x84] sm:$0xf]
      %v5464 = vld [vmem:[%s3545 + $0x88] sm:$0xf]
      %v5465 = vld [vmem:[%s3545 + $0x90] sm:$0x8]
      %v5466 = vld [vmem:[%s3545 + $0x94] sm:$0xf]
      %v5467 = vld [vmem:[%s3545 + $0x98] sm:$0xf]
      %v5468 = vld [vmem:[%s3545 + $0xa0] sm:$0x8]
      %v5469 = vld [vmem:[%s3545 + $0xa4] sm:$0xf]
      %v5470 = vld [vmem:[%s3545 + $0xa8] sm:$0xf]
      %v5471 = vld [vmem:[%s3545 + $0xb0] sm:$0x8]
      %v5472 = vld [vmem:[%s3545 + $0xb4] sm:$0xf]
      %v5473 = vld [vmem:[%s3545 + $0xb8] sm:$0xf]
      %v5474 = vld [vmem:[%s3545 + $0xc0] sm:$0x8]
      %v5475 = vld [vmem:[%s3545 + $0xc4] sm:$0xf]
      %v5476 = vld [vmem:[%s3545 + $0xc8] sm:$0xf]
      %v5477 = vld [vmem:[%s3545 + $0xd0] sm:$0x8]
      %v5478 = vld [vmem:[%s3545 + $0xd4] sm:$0xf]
      %v5479 = vld [vmem:[%s3545 + $0xd8] sm:$0xf]
      %v5480 = vld [vmem:[%s3545 + $0xe0] sm:$0x8]
      %v5481 = vld [vmem:[%s3545 + $0xe4] sm:$0xf]
      %v5482 = vld [vmem:[%s3545 + $0xe8] sm:$0xf]
      %v5483 = vld [vmem:[%s3545 + $0xf0] sm:$0x8]
      %v5484 = vld [vmem:[%s3545 + $0xf4] sm:$0xf]
      %v5485 = vld [vmem:[%s3545 + $0xf8] sm:$0xf]
      %v5486 = vld [vmem:[%s3545 + $0xc] sm:$0x1]
      %v5487 = vld [vmem:[%s3545 + $0x1c] sm:$0x1]
      %v5488 = vld [vmem:[%s3545 + $0x2c] sm:$0x1]
      %v5489 = vld [vmem:[%s3545 + $0x3c] sm:$0x1]
      %v5490 = vld [vmem:[%s3545 + $0x4c] sm:$0x1]
      %v5491 = vld [vmem:[%s3545 + $0x5c] sm:$0x1]
      %v5492 = vld [vmem:[%s3545 + $0x6c] sm:$0x1]
      %v5493 = vld [vmem:[%s3545 + $0x7c] sm:$0x1]
      %v5494 = vld [vmem:[%s3545 + $0x8c] sm:$0x1]
      %v5495 = vld [vmem:[%s3545 + $0x9c] sm:$0x1]
      %v5496 = vld [vmem:[%s3545 + $0xac] sm:$0x1]
      %v5497 = vld [vmem:[%s3545 + $0xbc] sm:$0x1]
      %v5498 = vld [vmem:[%s3545 + $0xcc] sm:$0x1]
      %v5499 = vld [vmem:[%s3545 + $0xdc] sm:$0x1]
      %v5500 = vld [vmem:[%s3545 + $0xec] sm:$0x1]
      %v5501 = vld [vmem:[%s3545 + $0xfc] sm:$0x1]
      %v5550 = vunpack.c.l.b16 %v5438
      %v5551 = vunpack.c.l.b16 %v5439
      %v5552 = vunpack.c.l.b16 %v5440
      %v5553 = vunpack.c.l.b16 %v5441
      %v5554 = vunpack.c.l.b16 %v5442
      %v5555 = vunpack.c.l.b16 %v5443
      %v5556 = vunpack.c.l.b16 %v5444
      %v5557 = vunpack.c.l.b16 %v5445
      %v5558 = vunpack.c.l.b16 %v5446
      %v5559 = vunpack.c.l.b16 %v5447
      %v5560 = vunpack.c.l.b16 %v5448
      %v5561 = vunpack.c.l.b16 %v5449
      %v5562 = vunpack.c.l.b16 %v5450
      %v5563 = vunpack.c.l.b16 %v5451
      %v5564 = vunpack.c.l.b16 %v5452
      %v5565 = vunpack.c.l.b16 %v5453
      %v5566 = vunpack.c.l.b16 %v5454
      %v5567 = vunpack.c.l.b16 %v5455
      %v5568 = vunpack.c.l.b16 %v5456
      %v5569 = vunpack.c.l.b16 %v5457
      %v5570 = vunpack.c.l.b16 %v5458
      %v5571 = vunpack.c.l.b16 %v5459
      %v5572 = vunpack.c.l.b16 %v5460
      %v5573 = vunpack.c.l.b16 %v5461
      %v5574 = vunpack.c.l.b16 %v5462
      %v5575 = vunpack.c.l.b16 %v5463
      %v5576 = vunpack.c.l.b16 %v5464
      %v5577 = vunpack.c.l.b16 %v5465
      %v5578 = vunpack.c.l.b16 %v5466
      %v5579 = vunpack.c.l.b16 %v5467
      %v5580 = vunpack.c.l.b16 %v5468
      %v5581 = vunpack.c.l.b16 %v5469
      %v5582 = vunpack.c.l.b16 %v5470
      %v5583 = vunpack.c.l.b16 %v5471
      %v5584 = vunpack.c.l.b16 %v5472
      %v5585 = vunpack.c.l.b16 %v5473
      %v5586 = vunpack.c.l.b16 %v5474
      %v5587 = vunpack.c.l.b16 %v5475
      %v5588 = vunpack.c.l.b16 %v5476
      %v5589 = vunpack.c.l.b16 %v5477
      %v5590 = vunpack.c.l.b16 %v5478
      %v5591 = vunpack.c.l.b16 %v5479
      %v5592 = vunpack.c.l.b16 %v5480
      %v5593 = vunpack.c.l.b16 %v5481
      %v5594 = vunpack.c.l.b16 %v5482
      %v5595 = vunpack.c.l.b16 %v5483
      %v5596 = vunpack.c.l.b16 %v5484
      %v5597 = vunpack.c.l.b16 %v5485
      %v5598 = vpack.c.b16 %v5551, %v5550
      %v5599 = vpack.c.b16 %v5552, %v5552
      %v5600 = vpack.c.b16 %v5554, %v5553
      %v5601 = vpack.c.b16 %v5555, %v5555
      %v5602 = vpack.c.b16 %v5557, %v5556
      %v5603 = vpack.c.b16 %v5558, %v5558
      %v5604 = vpack.c.b16 %v5560, %v5559
      %v5605 = vpack.c.b16 %v5561, %v5561
      %v5606 = vpack.c.b16 %v5563, %v5562
      %v5607 = vpack.c.b16 %v5564, %v5564
      %v5608 = vpack.c.b16 %v5566, %v5565
      %v5609 = vpack.c.b16 %v5567, %v5567
      %v5610 = vpack.c.b16 %v5569, %v5568
      %v5611 = vpack.c.b16 %v5570, %v5570
      %v5612 = vpack.c.b16 %v5572, %v5571
      %v5613 = vpack.c.b16 %v5573, %v5573
      %v5614 = vpack.c.b16 %v5575, %v5574
      %v5615 = vpack.c.b16 %v5576, %v5576
      %v5616 = vpack.c.b16 %v5578, %v5577
      %v5617 = vpack.c.b16 %v5579, %v5579
      %v5618 = vpack.c.b16 %v5581, %v5580
      %v5619 = vpack.c.b16 %v5582, %v5582
      %v5620 = vpack.c.b16 %v5584, %v5583
      %v5621 = vpack.c.b16 %v5585, %v5585
      %v5622 = vpack.c.b16 %v5587, %v5586
      %v5623 = vpack.c.b16 %v5588, %v5588
      %v5624 = vpack.c.b16 %v5590, %v5589
      %v5625 = vpack.c.b16 %v5591, %v5591
      %v5626 = vpack.c.b16 %v5593, %v5592
      %v5627 = vpack.c.b16 %v5594, %v5594
      %v5628 = vpack.c.b16 %v5596, %v5595
      %v5629 = vpack.c.b16 %v5597, %v5597
      %v5630 = vpack.c.b16 %v5552, %v5551
      %v5631 = vpack.c.b16 %v5555, %v5554
      %v5632 = vpack.c.b16 %v5558, %v5557
      %v5633 = vpack.c.b16 %v5561, %v5560
      %v5634 = vpack.c.b16 %v5564, %v5563
      %v5635 = vpack.c.b16 %v5567, %v5566
      %v5636 = vpack.c.b16 %v5570, %v5569
      %v5637 = vpack.c.b16 %v5573, %v5572
      %v5638 = vpack.c.b16 %v5576, %v5575
      %v5639 = vpack.c.b16 %v5579, %v5578
      %v5640 = vpack.c.b16 %v5582, %v5581
      %v5641 = vpack.c.b16 %v5585, %v5584
      %v5642 = vpack.c.b16 %v5588, %v5587
      %v5643 = vpack.c.b16 %v5591, %v5590
      %v5644 = vpack.c.b16 %v5594, %v5593
      %v5645 = vpack.c.b16 %v5597, %v5596
      %v5647 = vshrl.u32 %v5630, 16
      %v5649 = vrot.slane %v5647, 4
      %v5650 = vshll.u32 %v5630, 16
      %v5652 = vrot.slane %v5650, 5
      %v5653 = vor.u32 %v5649, %v5652
      %v5655 = vshrl.u32 %v5631, 16
      %v5657 = vrot.slane %v5655, 4
      %v5658 = vshll.u32 %v5631, 16
      %v5660 = vrot.slane %v5658, 5
      %v5661 = vor.u32 %v5657, %v5660
      %v5663 = vshrl.u32 %v5632, 16
      %v5665 = vrot.slane %v5663, 4
      %v5666 = vshll.u32 %v5632, 16
      %v5668 = vrot.slane %v5666, 5
      %v5669 = vor.u32 %v5665, %v5668
      %v5671 = vshrl.u32 %v5633, 16
      %v5673 = vrot.slane %v5671, 4
      %v5674 = vshll.u32 %v5633, 16
      %v5676 = vrot.slane %v5674, 5
      %v5677 = vor.u32 %v5673, %v5676
      %v5679 = vshrl.u32 %v5634, 16
      %v5681 = vrot.slane %v5679, 4
      %v5682 = vshll.u32 %v5634, 16
      %v5684 = vrot.slane %v5682, 5
      %v5685 = vor.u32 %v5681, %v5684
      %v5687 = vshrl.u32 %v5635, 16
      %v5689 = vrot.slane %v5687, 4
      %v5690 = vshll.u32 %v5635, 16
      %v5692 = vrot.slane %v5690, 5
      %v5693 = vor.u32 %v5689, %v5692
      %v5695 = vshrl.u32 %v5636, 16
      %v5697 = vrot.slane %v5695, 4
      %v5698 = vshll.u32 %v5636, 16
      %v5700 = vrot.slane %v5698, 5
      %v5701 = vor.u32 %v5697, %v5700
      %v5703 = vshrl.u32 %v5637, 16
      %v5705 = vrot.slane %v5703, 4
      %v5706 = vshll.u32 %v5637, 16
      %v5708 = vrot.slane %v5706, 5
      %v5709 = vor.u32 %v5705, %v5708
      %v5711 = vshrl.u32 %v5638, 16
      %v5713 = vrot.slane %v5711, 4
      %v5714 = vshll.u32 %v5638, 16
      %v5716 = vrot.slane %v5714, 5
      %v5717 = vor.u32 %v5713, %v5716
      %v5719 = vshrl.u32 %v5639, 16
      %v5721 = vrot.slane %v5719, 4
      %v5722 = vshll.u32 %v5639, 16
      %v5724 = vrot.slane %v5722, 5
      %v5725 = vor.u32 %v5721, %v5724
      %v5727 = vshrl.u32 %v5640, 16
      %v5729 = vrot.slane %v5727, 4
      %v5730 = vshll.u32 %v5640, 16
      %v5732 = vrot.slane %v5730, 5
      %v5733 = vor.u32 %v5729, %v5732
      %v5735 = vshrl.u32 %v5641, 16
      %v5737 = vrot.slane %v5735, 4
      %v5738 = vshll.u32 %v5641, 16
      %v5740 = vrot.slane %v5738, 5
      %v5741 = vor.u32 %v5737, %v5740
      %v5743 = vshrl.u32 %v5642, 16
      %v5745 = vrot.slane %v5743, 4
      %v5746 = vshll.u32 %v5642, 16
      %v5748 = vrot.slane %v5746, 5
      %v5749 = vor.u32 %v5745, %v5748
      %v5751 = vshrl.u32 %v5643, 16
      %v5753 = vrot.slane %v5751, 4
      %v5754 = vshll.u32 %v5643, 16
      %v5756 = vrot.slane %v5754, 5
      %v5757 = vor.u32 %v5753, %v5756
      %v5759 = vshrl.u32 %v5644, 16
      %v5761 = vrot.slane %v5759, 4
      %v5762 = vshll.u32 %v5644, 16
      %v5764 = vrot.slane %v5762, 5
      %v5765 = vor.u32 %v5761, %v5764
      %v5767 = vshrl.u32 %v5645, 16
      %v5769 = vrot.slane %v5767, 4
      %v5770 = vshll.u32 %v5645, 16
      %v5772 = vrot.slane %v5770, 5
      %v5773 = vor.u32 %v5769, %v5772
      %v5790 = vunpack.c.l.b16 %v5486
      %v5791 = vunpack.c.l.b16 %v5487
      %v5792 = vunpack.c.l.b16 %v5488
      %v5793 = vunpack.c.l.b16 %v5489
      %v5794 = vunpack.c.l.b16 %v5490
      %v5795 = vunpack.c.l.b16 %v5491
      %v5796 = vunpack.c.l.b16 %v5492
      %v5797 = vunpack.c.l.b16 %v5493
      %v5798 = vunpack.c.l.b16 %v5494
      %v5799 = vunpack.c.l.b16 %v5495
      %v5800 = vunpack.c.l.b16 %v5496
      %v5801 = vunpack.c.l.b16 %v5497
      %v5802 = vunpack.c.l.b16 %v5498
      %v5803 = vunpack.c.l.b16 %v5499
      %v5804 = vunpack.c.l.b16 %v5500
      %v5805 = vunpack.c.l.b16 %v5501
      %v5806 = vpack.c.b16 %v5790, %v5790
      %v5807 = vpack.c.b16 %v5791, %v5791
      %v5808 = vpack.c.b16 %v5792, %v5792
      %v5809 = vpack.c.b16 %v5793, %v5793
      %v5810 = vpack.c.b16 %v5794, %v5794
      %v5811 = vpack.c.b16 %v5795, %v5795
      %v5812 = vpack.c.b16 %v5796, %v5796
      %v5813 = vpack.c.b16 %v5797, %v5797
      %v5814 = vpack.c.b16 %v5798, %v5798
      %v5815 = vpack.c.b16 %v5799, %v5799
      %v5816 = vpack.c.b16 %v5800, %v5800
      %v5817 = vpack.c.b16 %v5801, %v5801
      %v5818 = vpack.c.b16 %v5802, %v5802
      %v5819 = vpack.c.b16 %v5803, %v5803
      %v5820 = vpack.c.b16 %v5804, %v5804
      %v5821 = vpack.c.b16 %v5805, %v5805
      %v5822 = vrot.slane %v5630, 5
      %v5823 = vrot.slane %v5806, 5
      %v5824 = vsel %vm4106, %v5822, %v5823
      %v5825 = vrot.slane %v5631, 5
      %v5826 = vrot.slane %v5807, 5
      %v5827 = vsel %vm4106, %v5825, %v5826
      %v5828 = vrot.slane %v5632, 5
      %v5829 = vrot.slane %v5808, 5
      %v5830 = vsel %vm4106, %v5828, %v5829
      %v5831 = vrot.slane %v5633, 5
      %v5832 = vrot.slane %v5809, 5
      %v5833 = vsel %vm4106, %v5831, %v5832
      %v5834 = vrot.slane %v5634, 5
      %v5835 = vrot.slane %v5810, 5
      %v5836 = vsel %vm4106, %v5834, %v5835
      %v5837 = vrot.slane %v5635, 5
      %v5838 = vrot.slane %v5811, 5
      %v5839 = vsel %vm4106, %v5837, %v5838
      %v5840 = vrot.slane %v5636, 5
      %v5841 = vrot.slane %v5812, 5
      %v5842 = vsel %vm4106, %v5840, %v5841
      %v5843 = vrot.slane %v5637, 5
      %v5844 = vrot.slane %v5813, 5
      %v5845 = vsel %vm4106, %v5843, %v5844
      %v5846 = vrot.slane %v5638, 5
      %v5847 = vrot.slane %v5814, 5
      %v5848 = vsel %vm4106, %v5846, %v5847
      %v5849 = vrot.slane %v5639, 5
      %v5850 = vrot.slane %v5815, 5
      %v5851 = vsel %vm4106, %v5849, %v5850
      %v5852 = vrot.slane %v5640, 5
      %v5853 = vrot.slane %v5816, 5
      %v5854 = vsel %vm4106, %v5852, %v5853
      %v5855 = vrot.slane %v5641, 5
      %v5856 = vrot.slane %v5817, 5
      %v5857 = vsel %vm4106, %v5855, %v5856
      %v5858 = vrot.slane %v5642, 5
      %v5859 = vrot.slane %v5818, 5
      %v5860 = vsel %vm4106, %v5858, %v5859
      %v5861 = vrot.slane %v5643, 5
      %v5862 = vrot.slane %v5819, 5
      %v5863 = vsel %vm4106, %v5861, %v5862
      %v5864 = vrot.slane %v5644, 5
      %v5865 = vrot.slane %v5820, 5
      %v5866 = vsel %vm4106, %v5864, %v5865
      %v5867 = vrot.slane %v5645, 5
      %v5868 = vrot.slane %v5821, 5
      %v5869 = vsel %vm4106, %v5867, %v5868
      %v5871 = vshrl.u32 %v5598, 16
      %v5873 = vrot.slane %v5871, 3
      %v5874 = vshll.u32 %v5598, 16
      %v5876 = vrot.slane %v5874, 4
      %v5877 = vor.u32 %v5873, %v5876
      %v5879 = vshrl.u32 %v5599, 16
      %v5881 = vrot.slane %v5879, 3
      %v5882 = vshll.u32 %v5599, 16
      %v5884 = vrot.slane %v5882, 4
      %v5885 = vor.u32 %v5881, %v5884
      %v5886 = vsel %vm4155, %v5877, %v5885
      %v5888 = vshrl.u32 %v5653, 16
      %v5890 = vrot.slane %v5888, 3
      %v5891 = vshll.u32 %v5653, 16
      %v5893 = vrot.slane %v5891, 4
      %v5894 = vor.u32 %v5890, %v5893
      %v5895 = vsel %vm4155, %v5894, %v5894
      %v5897 = vshrl.u32 %v5822, 16
      %v5899 = vrot.slane %v5897, 3
      %v5900 = vshll.u32 %v5822, 16
      %v5902 = vrot.slane %v5900, 4
      %v5903 = vor.u32 %v5899, %v5902
      %v5905 = vshrl.u32 %v5824, 16
      %v5907 = vrot.slane %v5905, 3
      %v5908 = vshll.u32 %v5824, 16
      %v5910 = vrot.slane %v5908, 4
      %v5911 = vor.u32 %v5907, %v5910
      %v5912 = vsel %vm4155, %v5903, %v5911
      %v5914 = vshrl.u32 %v5600, 16
      %v5916 = vrot.slane %v5914, 3
      %v5917 = vshll.u32 %v5600, 16
      %v5919 = vrot.slane %v5917, 4
      %v5920 = vor.u32 %v5916, %v5919
      %v5922 = vshrl.u32 %v5601, 16
      %v5924 = vrot.slane %v5922, 3
      %v5925 = vshll.u32 %v5601, 16
      %v5927 = vrot.slane %v5925, 4
      %v5928 = vor.u32 %v5924, %v5927
      %v5929 = vsel %vm4155, %v5920, %v5928
      %v5931 = vshrl.u32 %v5661, 16
      %v5933 = vrot.slane %v5931, 3
      %v5934 = vshll.u32 %v5661, 16
      %v5936 = vrot.slane %v5934, 4
      %v5937 = vor.u32 %v5933, %v5936
      %v5938 = vsel %vm4155, %v5937, %v5937
      %v5940 = vshrl.u32 %v5825, 16
      %v5942 = vrot.slane %v5940, 3
      %v5943 = vshll.u32 %v5825, 16
      %v5945 = vrot.slane %v5943, 4
      %v5946 = vor.u32 %v5942, %v5945
      %v5948 = vshrl.u32 %v5827, 16
      %v5950 = vrot.slane %v5948, 3
      %v5951 = vshll.u32 %v5827, 16
      %v5953 = vrot.slane %v5951, 4
      %v5954 = vor.u32 %v5950, %v5953
      %v5955 = vsel %vm4155, %v5946, %v5954
      %v5957 = vshrl.u32 %v5602, 16
      %v5959 = vrot.slane %v5957, 3
      %v5960 = vshll.u32 %v5602, 16
      %v5962 = vrot.slane %v5960, 4
      %v5963 = vor.u32 %v5959, %v5962
      %v5965 = vshrl.u32 %v5603, 16
      %v5967 = vrot.slane %v5965, 3
      %v5968 = vshll.u32 %v5603, 16
      %v5970 = vrot.slane %v5968, 4
      %v5971 = vor.u32 %v5967, %v5970
      %v5972 = vsel %vm4155, %v5963, %v5971
      %v5974 = vshrl.u32 %v5669, 16
      %v5976 = vrot.slane %v5974, 3
      %v5977 = vshll.u32 %v5669, 16
      %v5979 = vrot.slane %v5977, 4
      %v5980 = vor.u32 %v5976, %v5979
      %v5981 = vsel %vm4155, %v5980, %v5980
      %v5983 = vshrl.u32 %v5828, 16
      %v5985 = vrot.slane %v5983, 3
      %v5986 = vshll.u32 %v5828, 16
      %v5988 = vrot.slane %v5986, 4
      %v5989 = vor.u32 %v5985, %v5988
      %v5991 = vshrl.u32 %v5830, 16
      %v5993 = vrot.slane %v5991, 3
      %v5994 = vshll.u32 %v5830, 16
      %v5996 = vrot.slane %v5994, 4
      %v5997 = vor.u32 %v5993, %v5996
      %v5998 = vsel %vm4155, %v5989, %v5997
      %v6000 = vshrl.u32 %v5604, 16
      %v6002 = vrot.slane %v6000, 3
      %v6003 = vshll.u32 %v5604, 16
      %v6005 = vrot.slane %v6003, 4
      %v6006 = vor.u32 %v6002, %v6005
      %v6008 = vshrl.u32 %v5605, 16
      %v6010 = vrot.slane %v6008, 3
      %v6011 = vshll.u32 %v5605, 16
      %v6013 = vrot.slane %v6011, 4
      %v6014 = vor.u32 %v6010, %v6013
      %v6015 = vsel %vm4155, %v6006, %v6014
      %v6017 = vshrl.u32 %v5677, 16
      %v6019 = vrot.slane %v6017, 3
      %v6020 = vshll.u32 %v5677, 16
      %v6022 = vrot.slane %v6020, 4
      %v6023 = vor.u32 %v6019, %v6022
      %v6024 = vsel %vm4155, %v6023, %v6023
      %v6026 = vshrl.u32 %v5831, 16
      %v6028 = vrot.slane %v6026, 3
      %v6029 = vshll.u32 %v5831, 16
      %v6031 = vrot.slane %v6029, 4
      %v6032 = vor.u32 %v6028, %v6031
      %v6034 = vshrl.u32 %v5833, 16
      %v6036 = vrot.slane %v6034, 3
      %v6037 = vshll.u32 %v5833, 16
      %v6039 = vrot.slane %v6037, 4
      %v6040 = vor.u32 %v6036, %v6039
      %v6041 = vsel %vm4155, %v6032, %v6040
      %v6043 = vshrl.u32 %v5606, 16
      %v6045 = vrot.slane %v6043, 3
      %v6046 = vshll.u32 %v5606, 16
      %v6048 = vrot.slane %v6046, 4
      %v6049 = vor.u32 %v6045, %v6048
      %v6051 = vshrl.u32 %v5607, 16
      %v6053 = vrot.slane %v6051, 3
      %v6054 = vshll.u32 %v5607, 16
      %v6056 = vrot.slane %v6054, 4
      %v6057 = vor.u32 %v6053, %v6056
      %v6058 = vsel %vm4155, %v6049, %v6057
      %v6060 = vshrl.u32 %v5685, 16
      %v6062 = vrot.slane %v6060, 3
      %v6063 = vshll.u32 %v5685, 16
      %v6065 = vrot.slane %v6063, 4
      %v6066 = vor.u32 %v6062, %v6065
      %v6067 = vsel %vm4155, %v6066, %v6066
      %v6069 = vshrl.u32 %v5834, 16
      %v6071 = vrot.slane %v6069, 3
      %v6072 = vshll.u32 %v5834, 16
      %v6074 = vrot.slane %v6072, 4
      %v6075 = vor.u32 %v6071, %v6074
      %v6077 = vshrl.u32 %v5836, 16
      %v6079 = vrot.slane %v6077, 3
      %v6080 = vshll.u32 %v5836, 16
      %v6082 = vrot.slane %v6080, 4
      %v6083 = vor.u32 %v6079, %v6082
      %v6084 = vsel %vm4155, %v6075, %v6083
      %v6086 = vshrl.u32 %v5608, 16
      %v6088 = vrot.slane %v6086, 3
      %v6089 = vshll.u32 %v5608, 16
      %v6091 = vrot.slane %v6089, 4
      %v6092 = vor.u32 %v6088, %v6091
      %v6094 = vshrl.u32 %v5609, 16
      %v6096 = vrot.slane %v6094, 3
      %v6097 = vshll.u32 %v5609, 16
      %v6099 = vrot.slane %v6097, 4
      %v6100 = vor.u32 %v6096, %v6099
      %v6101 = vsel %vm4155, %v6092, %v6100
      %v6103 = vshrl.u32 %v5693, 16
      %v6105 = vrot.slane %v6103, 3
      %v6106 = vshll.u32 %v5693, 16
      %v6108 = vrot.slane %v6106, 4
      %v6109 = vor.u32 %v6105, %v6108
      %v6110 = vsel %vm4155, %v6109, %v6109
      %v6112 = vshrl.u32 %v5837, 16
      %v6114 = vrot.slane %v6112, 3
      %v6115 = vshll.u32 %v5837, 16
      %v6117 = vrot.slane %v6115, 4
      %v6118 = vor.u32 %v6114, %v6117
      %v6120 = vshrl.u32 %v5839, 16
      %v6122 = vrot.slane %v6120, 3
      %v6123 = vshll.u32 %v5839, 16
      %v6125 = vrot.slane %v6123, 4
      %v6126 = vor.u32 %v6122, %v6125
      %v6127 = vsel %vm4155, %v6118, %v6126
      %v6129 = vshrl.u32 %v5610, 16
      %v6131 = vrot.slane %v6129, 3
      %v6132 = vshll.u32 %v5610, 16
      %v6134 = vrot.slane %v6132, 4
      %v6135 = vor.u32 %v6131, %v6134
      %v6137 = vshrl.u32 %v5611, 16
      %v6139 = vrot.slane %v6137, 3
      %v6140 = vshll.u32 %v5611, 16
      %v6142 = vrot.slane %v6140, 4
      %v6143 = vor.u32 %v6139, %v6142
      %v6144 = vsel %vm4155, %v6135, %v6143
      %v6146 = vshrl.u32 %v5701, 16
      %v6148 = vrot.slane %v6146, 3
      %v6149 = vshll.u32 %v5701, 16
      %v6151 = vrot.slane %v6149, 4
      %v6152 = vor.u32 %v6148, %v6151
      %v6153 = vsel %vm4155, %v6152, %v6152
      %v6155 = vshrl.u32 %v5840, 16
      %v6157 = vrot.slane %v6155, 3
      %v6158 = vshll.u32 %v5840, 16
      %v6160 = vrot.slane %v6158, 4
      %v6161 = vor.u32 %v6157, %v6160
      %v6163 = vshrl.u32 %v5842, 16
      %v6165 = vrot.slane %v6163, 3
      %v6166 = vshll.u32 %v5842, 16
      %v6168 = vrot.slane %v6166, 4
      %v6169 = vor.u32 %v6165, %v6168
      %v6170 = vsel %vm4155, %v6161, %v6169
      %v6172 = vshrl.u32 %v5612, 16
      %v6174 = vrot.slane %v6172, 3
      %v6175 = vshll.u32 %v5612, 16
      %v6177 = vrot.slane %v6175, 4
      %v6178 = vor.u32 %v6174, %v6177
      %v6180 = vshrl.u32 %v5613, 16
      %v6182 = vrot.slane %v6180, 3
      %v6183 = vshll.u32 %v5613, 16
      %v6185 = vrot.slane %v6183, 4
      %v6186 = vor.u32 %v6182, %v6185
      %v6187 = vsel %vm4155, %v6178, %v6186
      %v6189 = vshrl.u32 %v5709, 16
      %v6191 = vrot.slane %v6189, 3
      %v6192 = vshll.u32 %v5709, 16
      %v6194 = vrot.slane %v6192, 4
      %v6195 = vor.u32 %v6191, %v6194
      %v6196 = vsel %vm4155, %v6195, %v6195
      %v6198 = vshrl.u32 %v5843, 16
      %v6200 = vrot.slane %v6198, 3
      %v6201 = vshll.u32 %v5843, 16
      %v6203 = vrot.slane %v6201, 4
      %v6204 = vor.u32 %v6200, %v6203
      %v6206 = vshrl.u32 %v5845, 16
      %v6208 = vrot.slane %v6206, 3
      %v6209 = vshll.u32 %v5845, 16
      %v6211 = vrot.slane %v6209, 4
      %v6212 = vor.u32 %v6208, %v6211
      %v6213 = vsel %vm4155, %v6204, %v6212
      %v6215 = vshrl.u32 %v5614, 16
      %v6217 = vrot.slane %v6215, 3
      %v6218 = vshll.u32 %v5614, 16
      %v6220 = vrot.slane %v6218, 4
      %v6221 = vor.u32 %v6217, %v6220
      %v6223 = vshrl.u32 %v5615, 16
      %v6225 = vrot.slane %v6223, 3
      %v6226 = vshll.u32 %v5615, 16
      %v6228 = vrot.slane %v6226, 4
      %v6229 = vor.u32 %v6225, %v6228
      %v6230 = vsel %vm4155, %v6221, %v6229
      %v6232 = vshrl.u32 %v5717, 16
      %v6234 = vrot.slane %v6232, 3
      %v6235 = vshll.u32 %v5717, 16
      %v6237 = vrot.slane %v6235, 4
      %v6238 = vor.u32 %v6234, %v6237
      %v6239 = vsel %vm4155, %v6238, %v6238
      %v6241 = vshrl.u32 %v5846, 16
      %v6243 = vrot.slane %v6241, 3
      %v6244 = vshll.u32 %v5846, 16
      %v6246 = vrot.slane %v6244, 4
      %v6247 = vor.u32 %v6243, %v6246
      %v6249 = vshrl.u32 %v5848, 16
      %v6251 = vrot.slane %v6249, 3
      %v6252 = vshll.u32 %v5848, 16
      %v6254 = vrot.slane %v6252, 4
      %v6255 = vor.u32 %v6251, %v6254
      %v6256 = vsel %vm4155, %v6247, %v6255
      %v6258 = vshrl.u32 %v5616, 16
      %v6260 = vrot.slane %v6258, 3
      %v6261 = vshll.u32 %v5616, 16
      %v6263 = vrot.slane %v6261, 4
      %v6264 = vor.u32 %v6260, %v6263
      %v6266 = vshrl.u32 %v5617, 16
      %v6268 = vrot.slane %v6266, 3
      %v6269 = vshll.u32 %v5617, 16
      %v6271 = vrot.slane %v6269, 4
      %v6272 = vor.u32 %v6268, %v6271
      %v6273 = vsel %vm4155, %v6264, %v6272
      %v6275 = vshrl.u32 %v5725, 16
      %v6277 = vrot.slane %v6275, 3
      %v6278 = vshll.u32 %v5725, 16
      %v6280 = vrot.slane %v6278, 4
      %v6281 = vor.u32 %v6277, %v6280
      %v6282 = vsel %vm4155, %v6281, %v6281
      %v6284 = vshrl.u32 %v5849, 16
      %v6286 = vrot.slane %v6284, 3
      %v6287 = vshll.u32 %v5849, 16
      %v6289 = vrot.slane %v6287, 4
      %v6290 = vor.u32 %v6286, %v6289
      %v6292 = vshrl.u32 %v5851, 16
      %v6294 = vrot.slane %v6292, 3
      %v6295 = vshll.u32 %v5851, 16
      %v6297 = vrot.slane %v6295, 4
      %v6298 = vor.u32 %v6294, %v6297
      %v6299 = vsel %vm4155, %v6290, %v6298
      %v6301 = vshrl.u32 %v5618, 16
      %v6303 = vrot.slane %v6301, 3
      %v6304 = vshll.u32 %v5618, 16
      %v6306 = vrot.slane %v6304, 4
      %v6307 = vor.u32 %v6303, %v6306
      %v6309 = vshrl.u32 %v5619, 16
      %v6311 = vrot.slane %v6309, 3
      %v6312 = vshll.u32 %v5619, 16
      %v6314 = vrot.slane %v6312, 4
      %v6315 = vor.u32 %v6311, %v6314
      %v6316 = vsel %vm4155, %v6307, %v6315
      %v6318 = vshrl.u32 %v5733, 16
      %v6320 = vrot.slane %v6318, 3
      %v6321 = vshll.u32 %v5733, 16
      %v6323 = vrot.slane %v6321, 4
      %v6324 = vor.u32 %v6320, %v6323
      %v6325 = vsel %vm4155, %v6324, %v6324
      %v6327 = vshrl.u32 %v5852, 16
      %v6329 = vrot.slane %v6327, 3
      %v6330 = vshll.u32 %v5852, 16
      %v6332 = vrot.slane %v6330, 4
      %v6333 = vor.u32 %v6329, %v6332
      %v6335 = vshrl.u32 %v5854, 16
      %v6337 = vrot.slane %v6335, 3
      %v6338 = vshll.u32 %v5854, 16
      %v6340 = vrot.slane %v6338, 4
      %v6341 = vor.u32 %v6337, %v6340
      %v6342 = vsel %vm4155, %v6333, %v6341
      %v6344 = vshrl.u32 %v5620, 16
      %v6346 = vrot.slane %v6344, 3
      %v6347 = vshll.u32 %v5620, 16
      %v6349 = vrot.slane %v6347, 4
      %v6350 = vor.u32 %v6346, %v6349
      %v6352 = vshrl.u32 %v5621, 16
      %v6354 = vrot.slane %v6352, 3
      %v6355 = vshll.u32 %v5621, 16
      %v6357 = vrot.slane %v6355, 4
      %v6358 = vor.u32 %v6354, %v6357
      %v6359 = vsel %vm4155, %v6350, %v6358
      %v6361 = vshrl.u32 %v5741, 16
      %v6363 = vrot.slane %v6361, 3
      %v6364 = vshll.u32 %v5741, 16
      %v6366 = vrot.slane %v6364, 4
      %v6367 = vor.u32 %v6363, %v6366
      %v6368 = vsel %vm4155, %v6367, %v6367
      %v6370 = vshrl.u32 %v5855, 16
      %v6372 = vrot.slane %v6370, 3
      %v6373 = vshll.u32 %v5855, 16
      %v6375 = vrot.slane %v6373, 4
      %v6376 = vor.u32 %v6372, %v6375
      %v6378 = vshrl.u32 %v5857, 16
      %v6380 = vrot.slane %v6378, 3
      %v6381 = vshll.u32 %v5857, 16
      %v6383 = vrot.slane %v6381, 4
      %v6384 = vor.u32 %v6380, %v6383
      %v6385 = vsel %vm4155, %v6376, %v6384
      %v6387 = vshrl.u32 %v5622, 16
      %v6389 = vrot.slane %v6387, 3
      %v6390 = vshll.u32 %v5622, 16
      %v6392 = vrot.slane %v6390, 4
      %v6393 = vor.u32 %v6389, %v6392
      %v6395 = vshrl.u32 %v5623, 16
      %v6397 = vrot.slane %v6395, 3
      %v6398 = vshll.u32 %v5623, 16
      %v6400 = vrot.slane %v6398, 4
      %v6401 = vor.u32 %v6397, %v6400
      %v6402 = vsel %vm4155, %v6393, %v6401
      %v6404 = vshrl.u32 %v5749, 16
      %v6406 = vrot.slane %v6404, 3
      %v6407 = vshll.u32 %v5749, 16
      %v6409 = vrot.slane %v6407, 4
      %v6410 = vor.u32 %v6406, %v6409
      %v6411 = vsel %vm4155, %v6410, %v6410
      %v6413 = vshrl.u32 %v5858, 16
      %v6415 = vrot.slane %v6413, 3
      %v6416 = vshll.u32 %v5858, 16
      %v6418 = vrot.slane %v6416, 4
      %v6419 = vor.u32 %v6415, %v6418
      %v6421 = vshrl.u32 %v5860, 16
      %v6423 = vrot.slane %v6421, 3
      %v6424 = vshll.u32 %v5860, 16
      %v6426 = vrot.slane %v6424, 4
      %v6427 = vor.u32 %v6423, %v6426
      %v6428 = vsel %vm4155, %v6419, %v6427
      %v6430 = vshrl.u32 %v5624, 16
      %v6432 = vrot.slane %v6430, 3
      %v6433 = vshll.u32 %v5624, 16
      %v6435 = vrot.slane %v6433, 4
      %v6436 = vor.u32 %v6432, %v6435
      %v6438 = vshrl.u32 %v5625, 16
      %v6440 = vrot.slane %v6438, 3
      %v6441 = vshll.u32 %v5625, 16
      %v6443 = vrot.slane %v6441, 4
      %v6444 = vor.u32 %v6440, %v6443
      %v6445 = vsel %vm4155, %v6436, %v6444
      %v6447 = vshrl.u32 %v5757, 16
      %v6449 = vrot.slane %v6447, 3
      %v6450 = vshll.u32 %v5757, 16
      %v6452 = vrot.slane %v6450, 4
      %v6453 = vor.u32 %v6449, %v6452
      %v6454 = vsel %vm4155, %v6453, %v6453
      %v6456 = vshrl.u32 %v5861, 16
      %v6458 = vrot.slane %v6456, 3
      %v6459 = vshll.u32 %v5861, 16
      %v6461 = vrot.slane %v6459, 4
      %v6462 = vor.u32 %v6458, %v6461
      %v6464 = vshrl.u32 %v5863, 16
      %v6466 = vrot.slane %v6464, 3
      %v6467 = vshll.u32 %v5863, 16
      %v6469 = vrot.slane %v6467, 4
      %v6470 = vor.u32 %v6466, %v6469
      %v6471 = vsel %vm4155, %v6462, %v6470
      %v6473 = vshrl.u32 %v5626, 16
      %v6475 = vrot.slane %v6473, 3
      %v6476 = vshll.u32 %v5626, 16
      %v6478 = vrot.slane %v6476, 4
      %v6479 = vor.u32 %v6475, %v6478
      %v6481 = vshrl.u32 %v5627, 16
      %v6483 = vrot.slane %v6481, 3
      %v6484 = vshll.u32 %v5627, 16
      %v6486 = vrot.slane %v6484, 4
      %v6487 = vor.u32 %v6483, %v6486
      %v6488 = vsel %vm4155, %v6479, %v6487
      %v6490 = vshrl.u32 %v5765, 16
      %v6492 = vrot.slane %v6490, 3
      %v6493 = vshll.u32 %v5765, 16
      %v6495 = vrot.slane %v6493, 4
      %v6496 = vor.u32 %v6492, %v6495
      %v6497 = vsel %vm4155, %v6496, %v6496
      %v6499 = vshrl.u32 %v5864, 16
      %v6501 = vrot.slane %v6499, 3
      %v6502 = vshll.u32 %v5864, 16
      %v6504 = vrot.slane %v6502, 4
      %v6505 = vor.u32 %v6501, %v6504
      %v6507 = vshrl.u32 %v5866, 16
      %v6509 = vrot.slane %v6507, 3
      %v6510 = vshll.u32 %v5866, 16
      %v6512 = vrot.slane %v6510, 4
      %v6513 = vor.u32 %v6509, %v6512
      %v6514 = vsel %vm4155, %v6505, %v6513
      %v6516 = vshrl.u32 %v5628, 16
      %v6518 = vrot.slane %v6516, 3
      %v6519 = vshll.u32 %v5628, 16
      %v6521 = vrot.slane %v6519, 4
      %v6522 = vor.u32 %v6518, %v6521
      %v6524 = vshrl.u32 %v5629, 16
      %v6526 = vrot.slane %v6524, 3
      %v6527 = vshll.u32 %v5629, 16
      %v6529 = vrot.slane %v6527, 4
      %v6530 = vor.u32 %v6526, %v6529
      %v6531 = vsel %vm4155, %v6522, %v6530
      %v6533 = vshrl.u32 %v5773, 16
      %v6535 = vrot.slane %v6533, 3
      %v6536 = vshll.u32 %v5773, 16
      %v6538 = vrot.slane %v6536, 4
      %v6539 = vor.u32 %v6535, %v6538
      %v6540 = vsel %vm4155, %v6539, %v6539
      %v6542 = vshrl.u32 %v5867, 16
      %v6544 = vrot.slane %v6542, 3
      %v6545 = vshll.u32 %v5867, 16
      %v6547 = vrot.slane %v6545, 4
      %v6548 = vor.u32 %v6544, %v6547
      %v6550 = vshrl.u32 %v5869, 16
      %v6552 = vrot.slane %v6550, 3
      %v6553 = vshll.u32 %v5869, 16
      %v6555 = vrot.slane %v6553, 4
      %v6556 = vor.u32 %v6552, %v6555
      %v6557 = vsel %vm4155, %v6548, %v6556
      %s6606 = scalar_lea.vmem %s3, 192
      %v6607 = vld [vmem:[%s6606] sm:$0xf]
      %v6608 = vld [vmem:[%s6606 + $0x4] sm:$0xf]
      %v6609 = vld [vmem:[%s6606 + $0x8] sm:$0xf]
      %v6610 = vld [vmem:[%s6606 + $0xc] sm:$0xf]
      %v6611 = vld [vmem:[%s6606 + $0x10] sm:$0xf]
      %v6612 = vld [vmem:[%s6606 + $0x14] sm:$0xf]
      %v6613 = vld [vmem:[%s6606 + $0x18] sm:$0xf]
      %v6614 = vld [vmem:[%s6606 + $0x1c] sm:$0xf]
      %v6615 = vld [vmem:[%s6606 + $0x20] sm:$0xf]
      %v6616 = vld [vmem:[%s6606 + $0x24] sm:$0xf]
      %v6617 = vld [vmem:[%s6606 + $0x28] sm:$0xf]
      %v6618 = vld [vmem:[%s6606 + $0x2c] sm:$0xf]
      %v6619 = vld [vmem:[%s6606 + $0x30] sm:$0xf]
      %v6620 = vld [vmem:[%s6606 + $0x34] sm:$0xf]
      %v6621 = vld [vmem:[%s6606 + $0x38] sm:$0xf]
      %v6622 = vld [vmem:[%s6606 + $0x3c] sm:$0xf]
      %v6623 = vld [vmem:[%s6606 + $0x40] sm:$0xf]
      %v6624 = vld [vmem:[%s6606 + $0x44] sm:$0xf]
      %v6625 = vld [vmem:[%s6606 + $0x48] sm:$0xf]
      %v6626 = vld [vmem:[%s6606 + $0x4c] sm:$0xf]
      %v6627 = vld [vmem:[%s6606 + $0x50] sm:$0xf]
      %v6628 = vld [vmem:[%s6606 + $0x54] sm:$0xf]
      %v6629 = vld [vmem:[%s6606 + $0x58] sm:$0xf]
      %v6630 = vld [vmem:[%s6606 + $0x5c] sm:$0xf]
      %v6631 = vld [vmem:[%s6606 + $0x60] sm:$0xf]
      %v6632 = vld [vmem:[%s6606 + $0x64] sm:$0xf]
      %v6633 = vld [vmem:[%s6606 + $0x68] sm:$0xf]
      %v6634 = vld [vmem:[%s6606 + $0x6c] sm:$0xf]
      %v6635 = vld [vmem:[%s6606 + $0x70] sm:$0xf]
      %v6636 = vld [vmem:[%s6606 + $0x74] sm:$0xf]
      %v6637 = vld [vmem:[%s6606 + $0x78] sm:$0xf]
      %v6638 = vld [vmem:[%s6606 + $0x7c] sm:$0xf]
      %v6639 = vld [vmem:[%s6606 + $0x80] sm:$0xf]
      %v6640 = vld [vmem:[%s6606 + $0x84] sm:$0xf]
      %v6641 = vld [vmem:[%s6606 + $0x88] sm:$0xf]
      %v6642 = vld [vmem:[%s6606 + $0x8c] sm:$0xf]
      %v6643 = vld [vmem:[%s6606 + $0x90] sm:$0xf]
      %v6644 = vld [vmem:[%s6606 + $0x94] sm:$0xf]
      %v6645 = vld [vmem:[%s6606 + $0x98] sm:$0xf]
      %v6646 = vld [vmem:[%s6606 + $0x9c] sm:$0xf]
      %v6647 = vld [vmem:[%s6606 + $0xa0] sm:$0xf]
      %v6648 = vld [vmem:[%s6606 + $0xa4] sm:$0xf]
      %v6649 = vld [vmem:[%s6606 + $0xa8] sm:$0xf]
      %v6650 = vld [vmem:[%s6606 + $0xac] sm:$0xf]
      %v6651 = vld [vmem:[%s6606 + $0xb0] sm:$0xf]
      %v6652 = vld [vmem:[%s6606 + $0xb4] sm:$0xf]
      %v6653 = vld [vmem:[%s6606 + $0xb8] sm:$0xf]
      %v6654 = vld [vmem:[%s6606 + $0xbc] sm:$0xf]
      %v6703 = vunpack.c.l.b16 %v6607
      %v6704 = vunpack.c.l.b16 %v6608
      %v6705 = vunpack.c.l.b16 %v6609
      %v6706 = vunpack.c.l.b16 %v6610
      %v6707 = vunpack.c.l.b16 %v6611
      %v6708 = vunpack.c.l.b16 %v6612
      %v6709 = vunpack.c.l.b16 %v6613
      %v6710 = vunpack.c.l.b16 %v6614
      %v6711 = vunpack.c.l.b16 %v6615
      %v6712 = vunpack.c.l.b16 %v6616
      %v6713 = vunpack.c.l.b16 %v6617
      %v6714 = vunpack.c.l.b16 %v6618
      %v6715 = vunpack.c.l.b16 %v6619
      %v6716 = vunpack.c.l.b16 %v6620
      %v6717 = vunpack.c.l.b16 %v6621
      %v6718 = vunpack.c.l.b16 %v6622
      %v6719 = vunpack.c.l.b16 %v6623
      %v6720 = vunpack.c.l.b16 %v6624
      %v6721 = vunpack.c.l.b16 %v6625
      %v6722 = vunpack.c.l.b16 %v6626
      %v6723 = vunpack.c.l.b16 %v6627
      %v6724 = vunpack.c.l.b16 %v6628
      %v6725 = vunpack.c.l.b16 %v6629
      %v6726 = vunpack.c.l.b16 %v6630
      %v6727 = vunpack.c.l.b16 %v6631
      %v6728 = vunpack.c.l.b16 %v6632
      %v6729 = vunpack.c.l.b16 %v6633
      %v6730 = vunpack.c.l.b16 %v6634
      %v6731 = vunpack.c.l.b16 %v6635
      %v6732 = vunpack.c.l.b16 %v6636
      %v6733 = vunpack.c.l.b16 %v6637
      %v6734 = vunpack.c.l.b16 %v6638
      %v6735 = vunpack.c.l.b16 %v6639
      %v6736 = vunpack.c.l.b16 %v6640
      %v6737 = vunpack.c.l.b16 %v6641
      %v6738 = vunpack.c.l.b16 %v6642
      %v6739 = vunpack.c.l.b16 %v6643
      %v6740 = vunpack.c.l.b16 %v6644
      %v6741 = vunpack.c.l.b16 %v6645
      %v6742 = vunpack.c.l.b16 %v6646
      %v6743 = vunpack.c.l.b16 %v6647
      %v6744 = vunpack.c.l.b16 %v6648
      %v6745 = vunpack.c.l.b16 %v6649
      %v6746 = vunpack.c.l.b16 %v6650
      %v6747 = vunpack.c.l.b16 %v6651
      %v6748 = vunpack.c.l.b16 %v6652
      %v6749 = vunpack.c.l.b16 %v6653
      %v6750 = vunpack.c.l.b16 %v6654
      %v6751 = vpack.c.b16 %v6704, %v6703
      %v6752 = vpack.c.b16 %v6706, %v6705
      %v6753 = vpack.c.b16 %v6708, %v6707
      %v6754 = vpack.c.b16 %v6710, %v6709
      %v6755 = vpack.c.b16 %v6712, %v6711
      %v6756 = vpack.c.b16 %v6714, %v6713
      %v6757 = vpack.c.b16 %v6716, %v6715
      %v6758 = vpack.c.b16 %v6718, %v6717
      %v6759 = vpack.c.b16 %v6720, %v6719
      %v6760 = vpack.c.b16 %v6722, %v6721
      %v6761 = vpack.c.b16 %v6724, %v6723
      %v6762 = vpack.c.b16 %v6726, %v6725
      %v6763 = vpack.c.b16 %v6728, %v6727
      %v6764 = vpack.c.b16 %v6730, %v6729
      %v6765 = vpack.c.b16 %v6732, %v6731
      %v6766 = vpack.c.b16 %v6734, %v6733
      %v6767 = vpack.c.b16 %v6736, %v6735
      %v6768 = vpack.c.b16 %v6738, %v6737
      %v6769 = vpack.c.b16 %v6740, %v6739
      %v6770 = vpack.c.b16 %v6742, %v6741
      %v6771 = vpack.c.b16 %v6744, %v6743
      %v6772 = vpack.c.b16 %v6746, %v6745
      %v6773 = vpack.c.b16 %v6748, %v6747
      %v6774 = vpack.c.b16 %v6750, %v6749
      %6799 = vmatprep.subr.bf16.mxu0 0
      %6800 = vmatpush1.bf16.msra.mxu0 %v6758
      %6801 = vmatprep.subr.bf16.mxu0 0
      %6802 = vmatpush1.bf16.msra.mxu0 %v6757
      %6803 = vmatprep.subr.bf16.mxu0 0
      %6804 = vmatpush1.bf16.msra.mxu0 %v6756
      %6805 = vmatprep.subr.bf16.mxu0 0
      %6806 = vmatpush1.bf16.msra.mxu0 %v6755
      %6807 = vmatprep.subr.bf16.mxu0 0
      %6808 = vmatpush1.bf16.msra.mxu0 %v6754
      %6809 = vmatprep.subr.bf16.mxu0 0
      %6810 = vmatpush1.bf16.msra.mxu0 %v6753
      %6811 = vmatprep.subr.bf16.mxu0 0
      %6812 = vmatpush1.bf16.msra.mxu0 %v6752
      %6813 = vmatprep.subr.bf16.mxu0 0
      %6814 = vmatpush1.bf16.msra.mxu0 %v6751
      %6815 = vmatprep.subr.bf16.mxu0 0
      %6816 = vmatpush2.bf16.msra.mxu0 %v6766
      %6817 = vmatprep.subr.bf16.mxu0 0
      %6818 = vmatpush2.bf16.msra.mxu0 %v6765
      %6819 = vmatprep.subr.bf16.mxu0 0
      %6820 = vmatpush2.bf16.msra.mxu0 %v6764
      %6821 = vmatprep.subr.bf16.mxu0 0
      %6822 = vmatpush2.bf16.msra.mxu0 %v6763
      %6823 = vmatprep.subr.bf16.mxu0 0
      %6824 = vmatpush2.bf16.msra.mxu0 %v6762
      %6825 = vmatprep.subr.bf16.mxu0 0
      %6826 = vmatpush2.bf16.msra.mxu0 %v6761
      %6827 = vmatprep.subr.bf16.mxu0 0
      %6828 = vmatpush2.bf16.msra.mxu0 %v6760
      %6829 = vmatprep.subr.bf16.mxu0 0
      %6830 = vmatpush2.bf16.msra.mxu0 %v6759
      %6831 = vmatprep.mubr.bf16.mxu0 %v5895
      %6832 = vmatmul.mubr.bf16.gmra.mxu0 %v5886
      %v6833 = vpop.f32.mrf.mxu0
      %v6834 = vadd.f32 0.0, %v6833
      %v6835 = vpop.f32.mrf.mxu0
      %v6836 = vpop.f32.mrf.mxu0
      %v6837 = vadd.f32 0.0, %v6836
      %v6838 = vpop.f32.mrf.mxu0
      %6839 = vmatprep.mubr.bf16.mxu0 %v5938
      %6840 = vmatmul.mubr.bf16.gmra.mxu0 %v5929
      %v6841 = vpop.f32.mrf.mxu0
      %v6842 = vadd.f32 0.0, %v6841
      %v6843 = vpop.f32.mrf.mxu0
      %v6844 = vpop.f32.mrf.mxu0
      %v6845 = vadd.f32 0.0, %v6844
      %v6846 = vpop.f32.mrf.mxu0
      %6847 = vmatprep.mubr.bf16.mxu0 %v5981
      %6848 = vmatmul.mubr.bf16.gmra.mxu0 %v5972
      %v6849 = vpop.f32.mrf.mxu0
      %v6850 = vadd.f32 0.0, %v6849
      %v6851 = vpop.f32.mrf.mxu0
      %v6852 = vpop.f32.mrf.mxu0
      %v6853 = vadd.f32 0.0, %v6852
      %v6854 = vpop.f32.mrf.mxu0
      %6855 = vmatprep.mubr.bf16.mxu0 %v6024
      %6856 = vmatmul.mubr.bf16.gmra.mxu0 %v6015
      %v6857 = vpop.f32.mrf.mxu0
      %v6858 = vadd.f32 0.0, %v6857
      %v6859 = vpop.f32.mrf.mxu0
      %v6860 = vpop.f32.mrf.mxu0
      %v6861 = vadd.f32 0.0, %v6860
      %v6862 = vpop.f32.mrf.mxu0
      %6863 = vmatprep.mubr.bf16.mxu0 %v6067
      %6864 = vmatmul.mubr.bf16.gmra.mxu0 %v6058
      %v6865 = vpop.f32.mrf.mxu0
      %v6866 = vadd.f32 0.0, %v6865
      %v6867 = vpop.f32.mrf.mxu0
      %v6868 = vpop.f32.mrf.mxu0
      %v6869 = vadd.f32 0.0, %v6868
      %v6870 = vpop.f32.mrf.mxu0
      %6871 = vmatprep.mubr.bf16.mxu0 %v6110
      %6872 = vmatmul.mubr.bf16.gmra.mxu0 %v6101
      %v6873 = vpop.f32.mrf.mxu0
      %v6874 = vadd.f32 0.0, %v6873
      %v6875 = vpop.f32.mrf.mxu0
      %v6876 = vpop.f32.mrf.mxu0
      %v6877 = vadd.f32 0.0, %v6876
      %v6878 = vpop.f32.mrf.mxu0
      %6879 = vmatprep.mubr.bf16.mxu0 %v6153
      %6880 = vmatmul.mubr.bf16.gmra.mxu0 %v6144
      %v6881 = vpop.f32.mrf.mxu0
      %v6882 = vadd.f32 0.0, %v6881
      %v6883 = vpop.f32.mrf.mxu0
      %v6884 = vpop.f32.mrf.mxu0
      %v6885 = vadd.f32 0.0, %v6884
      %v6886 = vpop.f32.mrf.mxu0
      %6887 = vmatprep.mubr.bf16.mxu0 %v6196
      %6888 = vmatmul.mubr.bf16.gmra.mxu0 %v6187
      %v6889 = vpop.f32.mrf.mxu0
      %v6890 = vadd.f32 0.0, %v6889
      %v6891 = vpop.f32.mrf.mxu0
      %v6892 = vpop.f32.mrf.mxu0
      %v6893 = vadd.f32 0.0, %v6892
      %v6894 = vpop.f32.mrf.mxu0
      %6895 = vmatprep.mubr.bf16.mxu0 %v6239
      %6896 = vmatmul.mubr.bf16.gmra.mxu0 %v6230
      %v6897 = vpop.f32.mrf.mxu0
      %v6898 = vadd.f32 0.0, %v6897
      %v6899 = vpop.f32.mrf.mxu0
      %v6900 = vpop.f32.mrf.mxu0
      %v6901 = vadd.f32 0.0, %v6900
      %v6902 = vpop.f32.mrf.mxu0
      %6903 = vmatprep.mubr.bf16.mxu0 %v6282
      %6904 = vmatmul.mubr.bf16.gmra.mxu0 %v6273
      %v6905 = vpop.f32.mrf.mxu0
      %v6906 = vadd.f32 0.0, %v6905
      %v6907 = vpop.f32.mrf.mxu0
      %v6908 = vpop.f32.mrf.mxu0
      %v6909 = vadd.f32 0.0, %v6908
      %v6910 = vpop.f32.mrf.mxu0
      %6911 = vmatprep.mubr.bf16.mxu0 %v6325
      %6912 = vmatmul.mubr.bf16.gmra.mxu0 %v6316
      %v6913 = vpop.f32.mrf.mxu0
      %v6914 = vadd.f32 0.0, %v6913
      %v6915 = vpop.f32.mrf.mxu0
      %v6916 = vpop.f32.mrf.mxu0
      %v6917 = vadd.f32 0.0, %v6916
      %v6918 = vpop.f32.mrf.mxu0
      %6919 = vmatprep.mubr.bf16.mxu0 %v6368
      %6920 = vmatmul.mubr.bf16.gmra.mxu0 %v6359
      %v6921 = vpop.f32.mrf.mxu0
      %v6922 = vadd.f32 0.0, %v6921
      %v6923 = vpop.f32.mrf.mxu0
      %v6924 = vpop.f32.mrf.mxu0
      %v6925 = vadd.f32 0.0, %v6924
      %v6926 = vpop.f32.mrf.mxu0
      %6927 = vmatprep.mubr.bf16.mxu0 %v6411
      %6928 = vmatmul.mubr.bf16.gmra.mxu0 %v6402
      %v6929 = vpop.f32.mrf.mxu0
      %v6930 = vadd.f32 0.0, %v6929
      %v6931 = vpop.f32.mrf.mxu0
      %v6932 = vpop.f32.mrf.mxu0
      %v6933 = vadd.f32 0.0, %v6932
      %v6934 = vpop.f32.mrf.mxu0
      %6935 = vmatprep.mubr.bf16.mxu0 %v6454
      %6936 = vmatmul.mubr.bf16.gmra.mxu0 %v6445
      %v6937 = vpop.f32.mrf.mxu0
      %v6938 = vadd.f32 0.0, %v6937
      %v6939 = vpop.f32.mrf.mxu0
      %v6940 = vpop.f32.mrf.mxu0
      %v6941 = vadd.f32 0.0, %v6940
      %v6942 = vpop.f32.mrf.mxu0
      %6943 = vmatprep.mubr.bf16.mxu0 %v6497
      %6944 = vmatmul.mubr.bf16.gmra.mxu0 %v6488
      %v6945 = vpop.f32.mrf.mxu0
      %v6946 = vadd.f32 0.0, %v6945
      %v6947 = vpop.f32.mrf.mxu0
      %v6948 = vpop.f32.mrf.mxu0
      %v6949 = vadd.f32 0.0, %v6948
      %v6950 = vpop.f32.mrf.mxu0
      %6951 = vmatprep.mubr.bf16.mxu0 %v6540
      %6952 = vmatmul.mubr.bf16.gmra.mxu0 %v6531
      %v6953 = vpop.f32.mrf.mxu0
      %v6954 = vadd.f32 0.0, %v6953
      %v6955 = vpop.f32.mrf.mxu0
      %v6956 = vpop.f32.mrf.mxu0
      %v6957 = vadd.f32 0.0, %v6956
      %v6958 = vpop.f32.mrf.mxu0
      %6959 = vdwg.mxu0
      %6960 = vmatprep.subr.bf16.mxu0 0
      %6961 = vmatpush1.bf16.msra.mxu0 %v6774
      %6962 = vmatprep.subr.bf16.mxu0 0
      %6963 = vmatpush1.bf16.msra.mxu0 %v6773
      %6964 = vmatprep.subr.bf16.mxu0 0
      %6965 = vmatpush1.bf16.msra.mxu0 %v6772
      %6966 = vmatprep.subr.bf16.mxu0 0
      %6967 = vmatpush1.bf16.msra.mxu0 %v6771
      %6968 = vmatprep.subr.bf16.mxu0 0
      %6969 = vmatpush1.bf16.msra.mxu0 %v6770
      %6970 = vmatprep.subr.bf16.mxu0 0
      %6971 = vmatpush1.bf16.msra.mxu0 %v6769
      %6972 = vmatprep.subr.bf16.mxu0 0
      %6973 = vmatpush1.bf16.msra.mxu0 %v6768
      %6974 = vmatprep.subr.bf16.mxu0 0
      %6975 = vmatpush1.bf16.msra.mxu0 %v6767
      %6976 = vmatprep.subr.bf16.mxu0 0
      %6977 = vmatpush2.bf16.msra.mxu0 0
      %6978 = vmatprep.subr.bf16.mxu0 0
      %6979 = vmatpush2.bf16.msra.mxu0 0
      %6980 = vmatprep.subr.bf16.mxu0 0
      %6981 = vmatpush2.bf16.msra.mxu0 0
      %6982 = vmatprep.subr.bf16.mxu0 0
      %6983 = vmatpush2.bf16.msra.mxu0 0
      %6984 = vmatprep.subr.bf16.mxu0 0
      %6985 = vmatpush2.bf16.msra.mxu0 0
      %6986 = vmatprep.subr.bf16.mxu0 0
      %6987 = vmatpush2.bf16.msra.mxu0 0
      %6988 = vmatprep.subr.bf16.mxu0 0
      %6989 = vmatpush2.bf16.msra.mxu0 0
      %6990 = vmatprep.subr.bf16.mxu0 0
      %6991 = vmatpush2.bf16.msra.mxu0 0
      %6992 = vmatprep.mubr.bf16.mxu0 0
      %6993 = vmatmul.mubr.bf16.gmra.mxu0 %v5912
      %v6994 = vpop.f32.mrf.mxu0
      %v6995 = vadd.f32 %v6834, %v6994
      %v6996 = vpop.f32.mrf.mxu0
      %v6997 = vpop.f32.mrf.mxu0
      %v6998 = vadd.f32 %v6837, %v6997
      %v6999 = vpop.f32.mrf.mxu0
      %7000 = vmatprep.mubr.bf16.mxu0 0
      %7001 = vmatmul.mubr.bf16.gmra.mxu0 %v5955
      %v7002 = vpop.f32.mrf.mxu0
      %v7003 = vadd.f32 %v6842, %v7002
      %v7004 = vpop.f32.mrf.mxu0
      %v7005 = vpop.f32.mrf.mxu0
      %v7006 = vadd.f32 %v6845, %v7005
      %v7007 = vpop.f32.mrf.mxu0
      %7008 = vmatprep.mubr.bf16.mxu0 0
      %7009 = vmatmul.mubr.bf16.gmra.mxu0 %v5998
      %v7010 = vpop.f32.mrf.mxu0
      %v7011 = vadd.f32 %v6850, %v7010
      %v7012 = vpop.f32.mrf.mxu0
      %v7013 = vpop.f32.mrf.mxu0
      %v7014 = vadd.f32 %v6853, %v7013
      %v7015 = vpop.f32.mrf.mxu0
      %7016 = vmatprep.mubr.bf16.mxu0 0
      %7017 = vmatmul.mubr.bf16.gmra.mxu0 %v6041
      %v7018 = vpop.f32.mrf.mxu0
      %v7019 = vadd.f32 %v6858, %v7018
      %v7020 = vpop.f32.mrf.mxu0
      %v7021 = vpop.f32.mrf.mxu0
      %v7022 = vadd.f32 %v6861, %v7021
      %v7023 = vpop.f32.mrf.mxu0
      %7024 = vmatprep.mubr.bf16.mxu0 0
      %7025 = vmatmul.mubr.bf16.gmra.mxu0 %v6084
      %v7026 = vpop.f32.mrf.mxu0
      %v7027 = vadd.f32 %v6866, %v7026
      %v7028 = vpop.f32.mrf.mxu0
      %v7029 = vpop.f32.mrf.mxu0
      %v7030 = vadd.f32 %v6869, %v7029
      %v7031 = vpop.f32.mrf.mxu0
      %7032 = vmatprep.mubr.bf16.mxu0 0
      %7033 = vmatmul.mubr.bf16.gmra.mxu0 %v6127
      %v7034 = vpop.f32.mrf.mxu0
      %v7035 = vadd.f32 %v6874, %v7034
      %v7036 = vpop.f32.mrf.mxu0
      %v7037 = vpop.f32.mrf.mxu0
      %v7038 = vadd.f32 %v6877, %v7037
      %v7039 = vpop.f32.mrf.mxu0
      %7040 = vmatprep.mubr.bf16.mxu0 0
      %7041 = vmatmul.mubr.bf16.gmra.mxu0 %v6170
      %v7042 = vpop.f32.mrf.mxu0
      %v7043 = vadd.f32 %v6882, %v7042
      %v7044 = vpop.f32.mrf.mxu0
      %v7045 = vpop.f32.mrf.mxu0
      %v7046 = vadd.f32 %v6885, %v7045
      %v7047 = vpop.f32.mrf.mxu0
      %7048 = vmatprep.mubr.bf16.mxu0 0
      %7049 = vmatmul.mubr.bf16.gmra.mxu0 %v6213
      %v7050 = vpop.f32.mrf.mxu0
      %v7051 = vadd.f32 %v6890, %v7050
      %v7052 = vpop.f32.mrf.mxu0
      %v7053 = vpop.f32.mrf.mxu0
      %v7054 = vadd.f32 %v6893, %v7053
      %v7055 = vpop.f32.mrf.mxu0
      %7056 = vmatprep.mubr.bf16.mxu0 0
      %7057 = vmatmul.mubr.bf16.gmra.mxu0 %v6256
      %v7058 = vpop.f32.mrf.mxu0
      %v7059 = vadd.f32 %v6898, %v7058
      %v7060 = vpop.f32.mrf.mxu0
      %v7061 = vpop.f32.mrf.mxu0
      %v7062 = vadd.f32 %v6901, %v7061
      %v7063 = vpop.f32.mrf.mxu0
      %7064 = vmatprep.mubr.bf16.mxu0 0
      %7065 = vmatmul.mubr.bf16.gmra.mxu0 %v6299
      %v7066 = vpop.f32.mrf.mxu0
      %v7067 = vadd.f32 %v6906, %v7066
      %v7068 = vpop.f32.mrf.mxu0
      %v7069 = vpop.f32.mrf.mxu0
      %v7070 = vadd.f32 %v6909, %v7069
      %v7071 = vpop.f32.mrf.mxu0
      %7072 = vmatprep.mubr.bf16.mxu0 0
      %7073 = vmatmul.mubr.bf16.gmra.mxu0 %v6342
      %v7074 = vpop.f32.mrf.mxu0
      %v7075 = vadd.f32 %v6914, %v7074
      %v7076 = vpop.f32.mrf.mxu0
      %v7077 = vpop.f32.mrf.mxu0
      %v7078 = vadd.f32 %v6917, %v7077
      %v7079 = vpop.f32.mrf.mxu0
      %7080 = vmatprep.mubr.bf16.mxu0 0
      %7081 = vmatmul.mubr.bf16.gmra.mxu0 %v6385
      %v7082 = vpop.f32.mrf.mxu0
      %v7083 = vadd.f32 %v6922, %v7082
      %v7084 = vpop.f32.mrf.mxu0
      %v7085 = vpop.f32.mrf.mxu0
      %v7086 = vadd.f32 %v6925, %v7085
      %v7087 = vpop.f32.mrf.mxu0
      %7088 = vmatprep.mubr.bf16.mxu0 0
      %7089 = vmatmul.mubr.bf16.gmra.mxu0 %v6428
      %v7090 = vpop.f32.mrf.mxu0
      %v7091 = vadd.f32 %v6930, %v7090
      %v7092 = vpop.f32.mrf.mxu0
      %v7093 = vpop.f32.mrf.mxu0
      %v7094 = vadd.f32 %v6933, %v7093
      %v7095 = vpop.f32.mrf.mxu0
      %7096 = vmatprep.mubr.bf16.mxu0 0
      %7097 = vmatmul.mubr.bf16.gmra.mxu0 %v6471
      %v7098 = vpop.f32.mrf.mxu0
      %v7099 = vadd.f32 %v6938, %v7098
      %v7100 = vpop.f32.mrf.mxu0
      %v7101 = vpop.f32.mrf.mxu0
      %v7102 = vadd.f32 %v6941, %v7101
      %v7103 = vpop.f32.mrf.mxu0
      %7104 = vmatprep.mubr.bf16.mxu0 0
      %7105 = vmatmul.mubr.bf16.gmra.mxu0 %v6514
      %v7106 = vpop.f32.mrf.mxu0
      %v7107 = vadd.f32 %v6946, %v7106
      %v7108 = vpop.f32.mrf.mxu0
      %v7109 = vpop.f32.mrf.mxu0
      %v7110 = vadd.f32 %v6949, %v7109
      %v7111 = vpop.f32.mrf.mxu0
      %7112 = vmatprep.mubr.bf16.mxu0 0
      %7113 = vmatmul.mubr.bf16.gmra.mxu0 %v6557
      %v7114 = vpop.f32.mrf.mxu0
      %v7115 = vadd.f32 %v6954, %v7114
      %v7116 = vpop.f32.mrf.mxu0
      %v7117 = vpop.f32.mrf.mxu0
      %v7118 = vadd.f32 %v6957, %v7117
      %v7119 = vpop.f32.mrf.mxu0
      %7120 = vdwg.mxu0
      %v7121 = vld [vmem:[#allocation3] sm:$0xff]
      %v7122 = vld [vmem:[#allocation3 + $0x8] sm:$0xff]
      %v7123 = vld [vmem:[#allocation3 + $0x10] sm:$0xff]
      %v7124 = vld [vmem:[#allocation3 + $0x18] sm:$0xff]
      %v7125 = vld [vmem:[#allocation3 + $0x20] sm:$0xff]
      %v7126 = vld [vmem:[#allocation3 + $0x28] sm:$0xff]
      %v7127 = vld [vmem:[#allocation3 + $0x30] sm:$0xff]
      %v7128 = vld [vmem:[#allocation3 + $0x38] sm:$0xff]
      %v7129 = vld [vmem:[#allocation3 + $0x40] sm:$0xff]
      %v7130 = vld [vmem:[#allocation3 + $0x48] sm:$0xff]
      %v7131 = vld [vmem:[#allocation3 + $0x50] sm:$0xff]
      %v7132 = vld [vmem:[#allocation3 + $0x58] sm:$0xff]
      %v7133 = vld [vmem:[#allocation3 + $0x60] sm:$0xff]
      %v7134 = vld [vmem:[#allocation3 + $0x68] sm:$0xff]
      %v7135 = vld [vmem:[#allocation3 + $0x70] sm:$0xff]
      %v7136 = vld [vmem:[#allocation3 + $0x78] sm:$0xff]
      %v7137 = vld [vmem:[#allocation3 + $0x80] sm:$0xff]
      %v7138 = vld [vmem:[#allocation3 + $0x88] sm:$0xff]
      %v7139 = vld [vmem:[#allocation3 + $0x90] sm:$0xff]
      %v7140 = vld [vmem:[#allocation3 + $0x98] sm:$0xff]
      %v7141 = vld [vmem:[#allocation3 + $0xa0] sm:$0xff]
      %v7142 = vld [vmem:[#allocation3 + $0xa8] sm:$0xff]
      %v7143 = vld [vmem:[#allocation3 + $0xb0] sm:$0xff]
      %v7144 = vld [vmem:[#allocation3 + $0xb8] sm:$0xff]
      %v7145 = vld [vmem:[#allocation3 + $0xc0] sm:$0xff]
      %v7146 = vld [vmem:[#allocation3 + $0xc8] sm:$0xff]
      %v7147 = vld [vmem:[#allocation3 + $0xd0] sm:$0xff]
      %v7148 = vld [vmem:[#allocation3 + $0xd8] sm:$0xff]
      %v7149 = vld [vmem:[#allocation3 + $0xe0] sm:$0xff]
      %v7150 = vld [vmem:[#allocation3 + $0xe8] sm:$0xff]
      %v7151 = vld [vmem:[#allocation3 + $0xf0] sm:$0xff]
      %v7152 = vld [vmem:[#allocation3 + $0xf8] sm:$0xff]
      %v7153 = vadd.f32 %v7121, %v6995
      %v7154 = vadd.f32 %v7122, %v6998
      %v7155 = vadd.f32 %v7123, %v7003
      %v7156 = vadd.f32 %v7124, %v7006
      %v7157 = vadd.f32 %v7125, %v7011
      %v7158 = vadd.f32 %v7126, %v7014
      %v7159 = vadd.f32 %v7127, %v7019
      %v7160 = vadd.f32 %v7128, %v7022
      %v7161 = vadd.f32 %v7129, %v7027
      %v7162 = vadd.f32 %v7130, %v7030
      %v7163 = vadd.f32 %v7131, %v7035
      %v7164 = vadd.f32 %v7132, %v7038
      %v7165 = vadd.f32 %v7133, %v7043
      %v7166 = vadd.f32 %v7134, %v7046
      %v7167 = vadd.f32 %v7135, %v7051
      %v7168 = vadd.f32 %v7136, %v7054
      %v7169 = vadd.f32 %v7137, %v7059
      %v7170 = vadd.f32 %v7138, %v7062
      %v7171 = vadd.f32 %v7139, %v7067
      %v7172 = vadd.f32 %v7140, %v7070
      %v7173 = vadd.f32 %v7141, %v7075
      %v7174 = vadd.f32 %v7142, %v7078
      %v7175 = vadd.f32 %v7143, %v7083
      %v7176 = vadd.f32 %v7144, %v7086
      %v7177 = vadd.f32 %v7145, %v7091
      %v7178 = vadd.f32 %v7146, %v7094
      %v7179 = vadd.f32 %v7147, %v7099
      %v7180 = vadd.f32 %v7148, %v7102
      %v7181 = vadd.f32 %v7149, %v7107
      %v7182 = vadd.f32 %v7150, %v7110
      %v7183 = vadd.f32 %v7151, %v7115
      %v7184 = vadd.f32 %v7152, %v7118
      %7185 = vst [vmem:[#allocation3] sm:$0xff] %v7153
      %7186 = vst [vmem:[#allocation3 + $0x8] sm:$0xff] %v7154
      %7187 = vst [vmem:[#allocation3 + $0x10] sm:$0xff] %v7155
      %7188 = vst [vmem:[#allocation3 + $0x18] sm:$0xff] %v7156
      %7189 = vst [vmem:[#allocation3 + $0x20] sm:$0xff] %v7157
      %7190 = vst [vmem:[#allocation3 + $0x28] sm:$0xff] %v7158
      %7191 = vst [vmem:[#allocation3 + $0x30] sm:$0xff] %v7159
      %7192 = vst [vmem:[#allocation3 + $0x38] sm:$0xff] %v7160
      %7193 = vst [vmem:[#allocation3 + $0x40] sm:$0xff] %v7161
      %7194 = vst [vmem:[#allocation3 + $0x48] sm:$0xff] %v7162
      %7195 = vst [vmem:[#allocation3 + $0x50] sm:$0xff] %v7163
      %7196 = vst [vmem:[#allocation3 + $0x58] sm:$0xff] %v7164
      %7197 = vst [vmem:[#allocation3 + $0x60] sm:$0xff] %v7165
      %7198 = vst [vmem:[#allocation3 + $0x68] sm:$0xff] %v7166
      %7199 = vst [vmem:[#allocation3 + $0x70] sm:$0xff] %v7167
      %7200 = vst [vmem:[#allocation3 + $0x78] sm:$0xff] %v7168
      %7201 = vst [vmem:[#allocation3 + $0x80] sm:$0xff] %v7169
      %7202 = vst [vmem:[#allocation3 + $0x88] sm:$0xff] %v7170
      %7203 = vst [vmem:[#allocation3 + $0x90] sm:$0xff] %v7171
      %7204 = vst [vmem:[#allocation3 + $0x98] sm:$0xff] %v7172
      %7205 = vst [vmem:[#allocation3 + $0xa0] sm:$0xff] %v7173
      %7206 = vst [vmem:[#allocation3 + $0xa8] sm:$0xff] %v7174
      %7207 = vst [vmem:[#allocation3 + $0xb0] sm:$0xff] %v7175
      %7208 = vst [vmem:[#allocation3 + $0xb8] sm:$0xff] %v7176
      %7209 = vst [vmem:[#allocation3 + $0xc0] sm:$0xff] %v7177
      %7210 = vst [vmem:[#allocation3 + $0xc8] sm:$0xff] %v7178
      %7211 = vst [vmem:[#allocation3 + $0xd0] sm:$0xff] %v7179
      %7212 = vst [vmem:[#allocation3 + $0xd8] sm:$0xff] %v7180
      %7213 = vst [vmem:[#allocation3 + $0xe0] sm:$0xff] %v7181
      %7214 = vst [vmem:[#allocation3 + $0xe8] sm:$0xff] %v7182
      %7215 = vst [vmem:[#allocation3 + $0xf0] sm:$0xff] %v7183
      %7216 = vst [vmem:[#allocation3 + $0xf8] sm:$0xff] %v7184
      %s7217 = scalar_lea.vmem [#allocation2], 32
      %v7218 = vld [vmem:[%s7217] sm:$0x8]
      %v7219 = vld [vmem:[%s7217 + $0x4] sm:$0xf]
      %v7220 = vld [vmem:[%s7217 + $0x8] sm:$0xf]
      %v7221 = vld [vmem:[%s7217 + $0x10] sm:$0x8]
      %v7222 = vld [vmem:[%s7217 + $0x14] sm:$0xf]
      %v7223 = vld [vmem:[%s7217 + $0x18] sm:$0xf]
      %v7224 = vld [vmem:[%s7217 + $0x20] sm:$0x8]
      %v7225 = vld [vmem:[%s7217 + $0x24] sm:$0xf]
      %v7226 = vld [vmem:[%s7217 + $0x28] sm:$0xf]
      %v7227 = vld [vmem:[%s7217 + $0x30] sm:$0x8]
      %v7228 = vld [vmem:[%s7217 + $0x34] sm:$0xf]
      %v7229 = vld [vmem:[%s7217 + $0x38] sm:$0xf]
      %v7230 = vld [vmem:[%s7217 + $0x40] sm:$0x8]
      %v7231 = vld [vmem:[%s7217 + $0x44] sm:$0xf]
      %v7232 = vld [vmem:[%s7217 + $0x48] sm:$0xf]
      %v7233 = vld [vmem:[%s7217 + $0x50] sm:$0x8]
      %v7234 = vld [vmem:[%s7217 + $0x54] sm:$0xf]
      %v7235 = vld [vmem:[%s7217 + $0x58] sm:$0xf]
      %v7236 = vld [vmem:[%s7217 + $0x60] sm:$0x8]
      %v7237 = vld [vmem:[%s7217 + $0x64] sm:$0xf]
      %v7238 = vld [vmem:[%s7217 + $0x68] sm:$0xf]
      %v7239 = vld [vmem:[%s7217 + $0x70] sm:$0x8]
      %v7240 = vld [vmem:[%s7217 + $0x74] sm:$0xf]
      %v7241 = vld [vmem:[%s7217 + $0x78] sm:$0xf]
      %v7242 = vld [vmem:[%s7217 + $0x80] sm:$0x8]
      %v7243 = vld [vmem:[%s7217 + $0x84] sm:$0xf]
      %v7244 = vld [vmem:[%s7217 + $0x88] sm:$0xf]
      %v7245 = vld [vmem:[%s7217 + $0x90] sm:$0x8]
      %v7246 = vld [vmem:[%s7217 + $0x94] sm:$0xf]
      %v7247 = vld [vmem:[%s7217 + $0x98] sm:$0xf]
      %v7248 = vld [vmem:[%s7217 + $0xa0] sm:$0x8]
      %v7249 = vld [vmem:[%s7217 + $0xa4] sm:$0xf]
      %v7250 = vld [vmem:[%s7217 + $0xa8] sm:$0xf]
      %v7251 = vld [vmem:[%s7217 + $0xb0] sm:$0x8]
      %v7252 = vld [vmem:[%s7217 + $0xb4] sm:$0xf]
      %v7253 = vld [vmem:[%s7217 + $0xb8] sm:$0xf]
      %v7254 = vld [vmem:[%s7217 + $0xc0] sm:$0x8]
      %v7255 = vld [vmem:[%s7217 + $0xc4] sm:$0xf]
      %v7256 = vld [vmem:[%s7217 + $0xc8] sm:$0xf]
      %v7257 = vld [vmem:[%s7217 + $0xd0] sm:$0x8]
      %v7258 = vld [vmem:[%s7217 + $0xd4] sm:$0xf]
      %v7259 = vld [vmem:[%s7217 + $0xd8] sm:$0xf]
      %v7260 = vld [vmem:[%s7217 + $0xe0] sm:$0x8]
      %v7261 = vld [vmem:[%s7217 + $0xe4] sm:$0xf]
      %v7262 = vld [vmem:[%s7217 + $0xe8] sm:$0xf]
      %v7263 = vld [vmem:[%s7217 + $0xf0] sm:$0x8]
      %v7264 = vld [vmem:[%s7217 + $0xf4] sm:$0xf]
      %v7265 = vld [vmem:[%s7217 + $0xf8] sm:$0xf]
      %v7266 = vld [vmem:[%s7217 + $0xc] sm:$0x1]
      %v7267 = vld [vmem:[%s7217 + $0x1c] sm:$0x1]
      %v7268 = vld [vmem:[%s7217 + $0x2c] sm:$0x1]
      %v7269 = vld [vmem:[%s7217 + $0x3c] sm:$0x1]
      %v7270 = vld [vmem:[%s7217 + $0x4c] sm:$0x1]
      %v7271 = vld [vmem:[%s7217 + $0x5c] sm:$0x1]
      %v7272 = vld [vmem:[%s7217 + $0x6c] sm:$0x1]
      %v7273 = vld [vmem:[%s7217 + $0x7c] sm:$0x1]
      %v7274 = vld [vmem:[%s7217 + $0x8c] sm:$0x1]
      %v7275 = vld [vmem:[%s7217 + $0x9c] sm:$0x1]
      %v7276 = vld [vmem:[%s7217 + $0xac] sm:$0x1]
      %v7277 = vld [vmem:[%s7217 + $0xbc] sm:$0x1]
      %v7278 = vld [vmem:[%s7217 + $0xcc] sm:$0x1]
      %v7279 = vld [vmem:[%s7217 + $0xdc] sm:$0x1]
      %v7280 = vld [vmem:[%s7217 + $0xec] sm:$0x1]
      %v7281 = vld [vmem:[%s7217 + $0xfc] sm:$0x1]
      %v7330 = vunpack.c.l.b16 %v7218
      %v7331 = vunpack.c.l.b16 %v7219
      %v7332 = vunpack.c.l.b16 %v7220
      %v7333 = vunpack.c.l.b16 %v7221
      %v7334 = vunpack.c.l.b16 %v7222
      %v7335 = vunpack.c.l.b16 %v7223
      %v7336 = vunpack.c.l.b16 %v7224
      %v7337 = vunpack.c.l.b16 %v7225
      %v7338 = vunpack.c.l.b16 %v7226
      %v7339 = vunpack.c.l.b16 %v7227
      %v7340 = vunpack.c.l.b16 %v7228
      %v7341 = vunpack.c.l.b16 %v7229
      %v7342 = vunpack.c.l.b16 %v7230
      %v7343 = vunpack.c.l.b16 %v7231
      %v7344 = vunpack.c.l.b16 %v7232
      %v7345 = vunpack.c.l.b16 %v7233
      %v7346 = vunpack.c.l.b16 %v7234
      %v7347 = vunpack.c.l.b16 %v7235
      %v7348 = vunpack.c.l.b16 %v7236
      %v7349 = vunpack.c.l.b16 %v7237
      %v7350 = vunpack.c.l.b16 %v7238
      %v7351 = vunpack.c.l.b16 %v7239
      %v7352 = vunpack.c.l.b16 %v7240
      %v7353 = vunpack.c.l.b16 %v7241
      %v7354 = vunpack.c.l.b16 %v7242
      %v7355 = vunpack.c.l.b16 %v7243
      %v7356 = vunpack.c.l.b16 %v7244
      %v7357 = vunpack.c.l.b16 %v7245
      %v7358 = vunpack.c.l.b16 %v7246
      %v7359 = vunpack.c.l.b16 %v7247
      %v7360 = vunpack.c.l.b16 %v7248
      %v7361 = vunpack.c.l.b16 %v7249
      %v7362 = vunpack.c.l.b16 %v7250
      %v7363 = vunpack.c.l.b16 %v7251
      %v7364 = vunpack.c.l.b16 %v7252
      %v7365 = vunpack.c.l.b16 %v7253
      %v7366 = vunpack.c.l.b16 %v7254
      %v7367 = vunpack.c.l.b16 %v7255
      %v7368 = vunpack.c.l.b16 %v7256
      %v7369 = vunpack.c.l.b16 %v7257
      %v7370 = vunpack.c.l.b16 %v7258
      %v7371 = vunpack.c.l.b16 %v7259
      %v7372 = vunpack.c.l.b16 %v7260
      %v7373 = vunpack.c.l.b16 %v7261
      %v7374 = vunpack.c.l.b16 %v7262
      %v7375 = vunpack.c.l.b16 %v7263
      %v7376 = vunpack.c.l.b16 %v7264
      %v7377 = vunpack.c.l.b16 %v7265
      %v7378 = vpack.c.b16 %v7331, %v7330
      %v7379 = vpack.c.b16 %v7332, %v7332
      %v7380 = vpack.c.b16 %v7334, %v7333
      %v7381 = vpack.c.b16 %v7335, %v7335
      %v7382 = vpack.c.b16 %v7337, %v7336
      %v7383 = vpack.c.b16 %v7338, %v7338
      %v7384 = vpack.c.b16 %v7340, %v7339
      %v7385 = vpack.c.b16 %v7341, %v7341
      %v7386 = vpack.c.b16 %v7343, %v7342
      %v7387 = vpack.c.b16 %v7344, %v7344
      %v7388 = vpack.c.b16 %v7346, %v7345
      %v7389 = vpack.c.b16 %v7347, %v7347
      %v7390 = vpack.c.b16 %v7349, %v7348
      %v7391 = vpack.c.b16 %v7350, %v7350
      %v7392 = vpack.c.b16 %v7352, %v7351
      %v7393 = vpack.c.b16 %v7353, %v7353
      %v7394 = vpack.c.b16 %v7355, %v7354
      %v7395 = vpack.c.b16 %v7356, %v7356
      %v7396 = vpack.c.b16 %v7358, %v7357
      %v7397 = vpack.c.b16 %v7359, %v7359
      %v7398 = vpack.c.b16 %v7361, %v7360
      %v7399 = vpack.c.b16 %v7362, %v7362
      %v7400 = vpack.c.b16 %v7364, %v7363
      %v7401 = vpack.c.b16 %v7365, %v7365
      %v7402 = vpack.c.b16 %v7367, %v7366
      %v7403 = vpack.c.b16 %v7368, %v7368
      %v7404 = vpack.c.b16 %v7370, %v7369
      %v7405 = vpack.c.b16 %v7371, %v7371
      %v7406 = vpack.c.b16 %v7373, %v7372
      %v7407 = vpack.c.b16 %v7374, %v7374
      %v7408 = vpack.c.b16 %v7376, %v7375
      %v7409 = vpack.c.b16 %v7377, %v7377
      %v7410 = vpack.c.b16 %v7332, %v7331
      %v7411 = vpack.c.b16 %v7335, %v7334
      %v7412 = vpack.c.b16 %v7338, %v7337
      %v7413 = vpack.c.b16 %v7341, %v7340
      %v7414 = vpack.c.b16 %v7344, %v7343
      %v7415 = vpack.c.b16 %v7347, %v7346
      %v7416 = vpack.c.b16 %v7350, %v7349
      %v7417 = vpack.c.b16 %v7353, %v7352
      %v7418 = vpack.c.b16 %v7356, %v7355
      %v7419 = vpack.c.b16 %v7359, %v7358
      %v7420 = vpack.c.b16 %v7362, %v7361
      %v7421 = vpack.c.b16 %v7365, %v7364
      %v7422 = vpack.c.b16 %v7368, %v7367
      %v7423 = vpack.c.b16 %v7371, %v7370
      %v7424 = vpack.c.b16 %v7374, %v7373
      %v7425 = vpack.c.b16 %v7377, %v7376
      %v7427 = vshrl.u32 %v7410, 16
      %v7429 = vrot.slane %v7427, 4
      %v7430 = vshll.u32 %v7410, 16
      %v7432 = vrot.slane %v7430, 5
      %v7433 = vor.u32 %v7429, %v7432
      %v7435 = vshrl.u32 %v7411, 16
      %v7437 = vrot.slane %v7435, 4
      %v7438 = vshll.u32 %v7411, 16
      %v7440 = vrot.slane %v7438, 5
      %v7441 = vor.u32 %v7437, %v7440
      %v7443 = vshrl.u32 %v7412, 16
      %v7445 = vrot.slane %v7443, 4
      %v7446 = vshll.u32 %v7412, 16
      %v7448 = vrot.slane %v7446, 5
      %v7449 = vor.u32 %v7445, %v7448
      %v7451 = vshrl.u32 %v7413, 16
      %v7453 = vrot.slane %v7451, 4
      %v7454 = vshll.u32 %v7413, 16
      %v7456 = vrot.slane %v7454, 5
      %v7457 = vor.u32 %v7453, %v7456
      %v7459 = vshrl.u32 %v7414, 16
      %v7461 = vrot.slane %v7459, 4
      %v7462 = vshll.u32 %v7414, 16
      %v7464 = vrot.slane %v7462, 5
      %v7465 = vor.u32 %v7461, %v7464
      %v7467 = vshrl.u32 %v7415, 16
      %v7469 = vrot.slane %v7467, 4
      %v7470 = vshll.u32 %v7415, 16
      %v7472 = vrot.slane %v7470, 5
      %v7473 = vor.u32 %v7469, %v7472
      %v7475 = vshrl.u32 %v7416, 16
      %v7477 = vrot.slane %v7475, 4
      %v7478 = vshll.u32 %v7416, 16
      %v7480 = vrot.slane %v7478, 5
      %v7481 = vor.u32 %v7477, %v7480
      %v7483 = vshrl.u32 %v7417, 16
      %v7485 = vrot.slane %v7483, 4
      %v7486 = vshll.u32 %v7417, 16
      %v7488 = vrot.slane %v7486, 5
      %v7489 = vor.u32 %v7485, %v7488
      %v7491 = vshrl.u32 %v7418, 16
      %v7493 = vrot.slane %v7491, 4
      %v7494 = vshll.u32 %v7418, 16
      %v7496 = vrot.slane %v7494, 5
      %v7497 = vor.u32 %v7493, %v7496
      %v7499 = vshrl.u32 %v7419, 16
      %v7501 = vrot.slane %v7499, 4
      %v7502 = vshll.u32 %v7419, 16
      %v7504 = vrot.slane %v7502, 5
      %v7505 = vor.u32 %v7501, %v7504
      %v7507 = vshrl.u32 %v7420, 16
      %v7509 = vrot.slane %v7507, 4
      %v7510 = vshll.u32 %v7420, 16
      %v7512 = vrot.slane %v7510, 5
      %v7513 = vor.u32 %v7509, %v7512
      %v7515 = vshrl.u32 %v7421, 16
      %v7517 = vrot.slane %v7515, 4
      %v7518 = vshll.u32 %v7421, 16
      %v7520 = vrot.slane %v7518, 5
      %v7521 = vor.u32 %v7517, %v7520
      %v7523 = vshrl.u32 %v7422, 16
      %v7525 = vrot.slane %v7523, 4
      %v7526 = vshll.u32 %v7422, 16
      %v7528 = vrot.slane %v7526, 5
      %v7529 = vor.u32 %v7525, %v7528
      %v7531 = vshrl.u32 %v7423, 16
      %v7533 = vrot.slane %v7531, 4
      %v7534 = vshll.u32 %v7423, 16
      %v7536 = vrot.slane %v7534, 5
      %v7537 = vor.u32 %v7533, %v7536
      %v7539 = vshrl.u32 %v7424, 16
      %v7541 = vrot.slane %v7539, 4
      %v7542 = vshll.u32 %v7424, 16
      %v7544 = vrot.slane %v7542, 5
      %v7545 = vor.u32 %v7541, %v7544
      %v7547 = vshrl.u32 %v7425, 16
      %v7549 = vrot.slane %v7547, 4
      %v7550 = vshll.u32 %v7425, 16
      %v7552 = vrot.slane %v7550, 5
      %v7553 = vor.u32 %v7549, %v7552
      %v7570 = vunpack.c.l.b16 %v7266
      %v7571 = vunpack.c.l.b16 %v7267
      %v7572 = vunpack.c.l.b16 %v7268
      %v7573 = vunpack.c.l.b16 %v7269
      %v7574 = vunpack.c.l.b16 %v7270
      %v7575 = vunpack.c.l.b16 %v7271
      %v7576 = vunpack.c.l.b16 %v7272
      %v7577 = vunpack.c.l.b16 %v7273
      %v7578 = vunpack.c.l.b16 %v7274
      %v7579 = vunpack.c.l.b16 %v7275
      %v7580 = vunpack.c.l.b16 %v7276
      %v7581 = vunpack.c.l.b16 %v7277
      %v7582 = vunpack.c.l.b16 %v7278
      %v7583 = vunpack.c.l.b16 %v7279
      %v7584 = vunpack.c.l.b16 %v7280
      %v7585 = vunpack.c.l.b16 %v7281
      %v7586 = vpack.c.b16 %v7570, %v7570
      %v7587 = vpack.c.b16 %v7571, %v7571
      %v7588 = vpack.c.b16 %v7572, %v7572
      %v7589 = vpack.c.b16 %v7573, %v7573
      %v7590 = vpack.c.b16 %v7574, %v7574
      %v7591 = vpack.c.b16 %v7575, %v7575
      %v7592 = vpack.c.b16 %v7576, %v7576
      %v7593 = vpack.c.b16 %v7577, %v7577
      %v7594 = vpack.c.b16 %v7578, %v7578
      %v7595 = vpack.c.b16 %v7579, %v7579
      %v7596 = vpack.c.b16 %v7580, %v7580
      %v7597 = vpack.c.b16 %v7581, %v7581
      %v7598 = vpack.c.b16 %v7582, %v7582
      %v7599 = vpack.c.b16 %v7583, %v7583
      %v7600 = vpack.c.b16 %v7584, %v7584
      %v7601 = vpack.c.b16 %v7585, %v7585
      %v7602 = vrot.slane %v7410, 5
      %v7603 = vrot.slane %v7586, 5
      %v7604 = vsel %vm4106, %v7602, %v7603
      %v7605 = vrot.slane %v7411, 5
      %v7606 = vrot.slane %v7587, 5
      %v7607 = vsel %vm4106, %v7605, %v7606
      %v7608 = vrot.slane %v7412, 5
      %v7609 = vrot.slane %v7588, 5
      %v7610 = vsel %vm4106, %v7608, %v7609
      %v7611 = vrot.slane %v7413, 5
      %v7612 = vrot.slane %v7589, 5
      %v7613 = vsel %vm4106, %v7611, %v7612
      %v7614 = vrot.slane %v7414, 5
      %v7615 = vrot.slane %v7590, 5
      %v7616 = vsel %vm4106, %v7614, %v7615
      %v7617 = vrot.slane %v7415, 5
      %v7618 = vrot.slane %v7591, 5
      %v7619 = vsel %vm4106, %v7617, %v7618
      %v7620 = vrot.slane %v7416, 5
      %v7621 = vrot.slane %v7592, 5
      %v7622 = vsel %vm4106, %v7620, %v7621
      %v7623 = vrot.slane %v7417, 5
      %v7624 = vrot.slane %v7593, 5
      %v7625 = vsel %vm4106, %v7623, %v7624
      %v7626 = vrot.slane %v7418, 5
      %v7627 = vrot.slane %v7594, 5
      %v7628 = vsel %vm4106, %v7626, %v7627
      %v7629 = vrot.slane %v7419, 5
      %v7630 = vrot.slane %v7595, 5
      %v7631 = vsel %vm4106, %v7629, %v7630
      %v7632 = vrot.slane %v7420, 5
      %v7633 = vrot.slane %v7596, 5
      %v7634 = vsel %vm4106, %v7632, %v7633
      %v7635 = vrot.slane %v7421, 5
      %v7636 = vrot.slane %v7597, 5
      %v7637 = vsel %vm4106, %v7635, %v7636
      %v7638 = vrot.slane %v7422, 5
      %v7639 = vrot.slane %v7598, 5
      %v7640 = vsel %vm4106, %v7638, %v7639
      %v7641 = vrot.slane %v7423, 5
      %v7642 = vrot.slane %v7599, 5
      %v7643 = vsel %vm4106, %v7641, %v7642
      %v7644 = vrot.slane %v7424, 5
      %v7645 = vrot.slane %v7600, 5
      %v7646 = vsel %vm4106, %v7644, %v7645
      %v7647 = vrot.slane %v7425, 5
      %v7648 = vrot.slane %v7601, 5
      %v7649 = vsel %vm4106, %v7647, %v7648
      %v7651 = vshrl.u32 %v7378, 16
      %v7653 = vrot.slane %v7651, 3
      %v7654 = vshll.u32 %v7378, 16
      %v7656 = vrot.slane %v7654, 4
      %v7657 = vor.u32 %v7653, %v7656
      %v7659 = vshrl.u32 %v7379, 16
      %v7661 = vrot.slane %v7659, 3
      %v7662 = vshll.u32 %v7379, 16
      %v7664 = vrot.slane %v7662, 4
      %v7665 = vor.u32 %v7661, %v7664
      %v7666 = vsel %vm4155, %v7657, %v7665
      %v7668 = vshrl.u32 %v7433, 16
      %v7670 = vrot.slane %v7668, 3
      %v7671 = vshll.u32 %v7433, 16
      %v7673 = vrot.slane %v7671, 4
      %v7674 = vor.u32 %v7670, %v7673
      %v7675 = vsel %vm4155, %v7674, %v7674
      %v7677 = vshrl.u32 %v7602, 16
      %v7679 = vrot.slane %v7677, 3
      %v7680 = vshll.u32 %v7602, 16
      %v7682 = vrot.slane %v7680, 4
      %v7683 = vor.u32 %v7679, %v7682
      %v7685 = vshrl.u32 %v7604, 16
      %v7687 = vrot.slane %v7685, 3
      %v7688 = vshll.u32 %v7604, 16
      %v7690 = vrot.slane %v7688, 4
      %v7691 = vor.u32 %v7687, %v7690
      %v7692 = vsel %vm4155, %v7683, %v7691
      %v7694 = vshrl.u32 %v7380, 16
      %v7696 = vrot.slane %v7694, 3
      %v7697 = vshll.u32 %v7380, 16
      %v7699 = vrot.slane %v7697, 4
      %v7700 = vor.u32 %v7696, %v7699
      %v7702 = vshrl.u32 %v7381, 16
      %v7704 = vrot.slane %v7702, 3
      %v7705 = vshll.u32 %v7381, 16
      %v7707 = vrot.slane %v7705, 4
      %v7708 = vor.u32 %v7704, %v7707
      %v7709 = vsel %vm4155, %v7700, %v7708
      %v7711 = vshrl.u32 %v7441, 16
      %v7713 = vrot.slane %v7711, 3
      %v7714 = vshll.u32 %v7441, 16
      %v7716 = vrot.slane %v7714, 4
      %v7717 = vor.u32 %v7713, %v7716
      %v7718 = vsel %vm4155, %v7717, %v7717
      %v7720 = vshrl.u32 %v7605, 16
      %v7722 = vrot.slane %v7720, 3
      %v7723 = vshll.u32 %v7605, 16
      %v7725 = vrot.slane %v7723, 4
      %v7726 = vor.u32 %v7722, %v7725
      %v7728 = vshrl.u32 %v7607, 16
      %v7730 = vrot.slane %v7728, 3
      %v7731 = vshll.u32 %v7607, 16
      %v7733 = vrot.slane %v7731, 4
      %v7734 = vor.u32 %v7730, %v7733
      %v7735 = vsel %vm4155, %v7726, %v7734
      %v7737 = vshrl.u32 %v7382, 16
      %v7739 = vrot.slane %v7737, 3
      %v7740 = vshll.u32 %v7382, 16
      %v7742 = vrot.slane %v7740, 4
      %v7743 = vor.u32 %v7739, %v7742
      %v7745 = vshrl.u32 %v7383, 16
      %v7747 = vrot.slane %v7745, 3
      %v7748 = vshll.u32 %v7383, 16
      %v7750 = vrot.slane %v7748, 4
      %v7751 = vor.u32 %v7747, %v7750
      %v7752 = vsel %vm4155, %v7743, %v7751
      %v7754 = vshrl.u32 %v7449, 16
      %v7756 = vrot.slane %v7754, 3
      %v7757 = vshll.u32 %v7449, 16
      %v7759 = vrot.slane %v7757, 4
      %v7760 = vor.u32 %v7756, %v7759
      %v7761 = vsel %vm4155, %v7760, %v7760
      %v7763 = vshrl.u32 %v7608, 16
      %v7765 = vrot.slane %v7763, 3
      %v7766 = vshll.u32 %v7608, 16
      %v7768 = vrot.slane %v7766, 4
      %v7769 = vor.u32 %v7765, %v7768
      %v7771 = vshrl.u32 %v7610, 16
      %v7773 = vrot.slane %v7771, 3
      %v7774 = vshll.u32 %v7610, 16
      %v7776 = vrot.slane %v7774, 4
      %v7777 = vor.u32 %v7773, %v7776
      %v7778 = vsel %vm4155, %v7769, %v7777
      %v7780 = vshrl.u32 %v7384, 16
      %v7782 = vrot.slane %v7780, 3
      %v7783 = vshll.u32 %v7384, 16
      %v7785 = vrot.slane %v7783, 4
      %v7786 = vor.u32 %v7782, %v7785
      %v7788 = vshrl.u32 %v7385, 16
      %v7790 = vrot.slane %v7788, 3
      %v7791 = vshll.u32 %v7385, 16
      %v7793 = vrot.slane %v7791, 4
      %v7794 = vor.u32 %v7790, %v7793
      %v7795 = vsel %vm4155, %v7786, %v7794
      %v7797 = vshrl.u32 %v7457, 16
      %v7799 = vrot.slane %v7797, 3
      %v7800 = vshll.u32 %v7457, 16
      %v7802 = vrot.slane %v7800, 4
      %v7803 = vor.u32 %v7799, %v7802
      %v7804 = vsel %vm4155, %v7803, %v7803
      %v7806 = vshrl.u32 %v7611, 16
      %v7808 = vrot.slane %v7806, 3
      %v7809 = vshll.u32 %v7611, 16
      %v7811 = vrot.slane %v7809, 4
      %v7812 = vor.u32 %v7808, %v7811
      %v7814 = vshrl.u32 %v7613, 16
      %v7816 = vrot.slane %v7814, 3
      %v7817 = vshll.u32 %v7613, 16
      %v7819 = vrot.slane %v7817, 4
      %v7820 = vor.u32 %v7816, %v7819
      %v7821 = vsel %vm4155, %v7812, %v7820
      %v7823 = vshrl.u32 %v7386, 16
      %v7825 = vrot.slane %v7823, 3
      %v7826 = vshll.u32 %v7386, 16
      %v7828 = vrot.slane %v7826, 4
      %v7829 = vor.u32 %v7825, %v7828
      %v7831 = vshrl.u32 %v7387, 16
      %v7833 = vrot.slane %v7831, 3
      %v7834 = vshll.u32 %v7387, 16
      %v7836 = vrot.slane %v7834, 4
      %v7837 = vor.u32 %v7833, %v7836
      %v7838 = vsel %vm4155, %v7829, %v7837
      %v7840 = vshrl.u32 %v7465, 16
      %v7842 = vrot.slane %v7840, 3
      %v7843 = vshll.u32 %v7465, 16
      %v7845 = vrot.slane %v7843, 4
      %v7846 = vor.u32 %v7842, %v7845
      %v7847 = vsel %vm4155, %v7846, %v7846
      %v7849 = vshrl.u32 %v7614, 16
      %v7851 = vrot.slane %v7849, 3
      %v7852 = vshll.u32 %v7614, 16
      %v7854 = vrot.slane %v7852, 4
      %v7855 = vor.u32 %v7851, %v7854
      %v7857 = vshrl.u32 %v7616, 16
      %v7859 = vrot.slane %v7857, 3
      %v7860 = vshll.u32 %v7616, 16
      %v7862 = vrot.slane %v7860, 4
      %v7863 = vor.u32 %v7859, %v7862
      %v7864 = vsel %vm4155, %v7855, %v7863
      %v7866 = vshrl.u32 %v7388, 16
      %v7868 = vrot.slane %v7866, 3
      %v7869 = vshll.u32 %v7388, 16
      %v7871 = vrot.slane %v7869, 4
      %v7872 = vor.u32 %v7868, %v7871
      %v7874 = vshrl.u32 %v7389, 16
      %v7876 = vrot.slane %v7874, 3
      %v7877 = vshll.u32 %v7389, 16
      %v7879 = vrot.slane %v7877, 4
      %v7880 = vor.u32 %v7876, %v7879
      %v7881 = vsel %vm4155, %v7872, %v7880
      %v7883 = vshrl.u32 %v7473, 16
      %v7885 = vrot.slane %v7883, 3
      %v7886 = vshll.u32 %v7473, 16
      %v7888 = vrot.slane %v7886, 4
      %v7889 = vor.u32 %v7885, %v7888
      %v7890 = vsel %vm4155, %v7889, %v7889
      %v7892 = vshrl.u32 %v7617, 16
      %v7894 = vrot.slane %v7892, 3
      %v7895 = vshll.u32 %v7617, 16
      %v7897 = vrot.slane %v7895, 4
      %v7898 = vor.u32 %v7894, %v7897
      %v7900 = vshrl.u32 %v7619, 16
      %v7902 = vrot.slane %v7900, 3
      %v7903 = vshll.u32 %v7619, 16
      %v7905 = vrot.slane %v7903, 4
      %v7906 = vor.u32 %v7902, %v7905
      %v7907 = vsel %vm4155, %v7898, %v7906
      %v7909 = vshrl.u32 %v7390, 16
      %v7911 = vrot.slane %v7909, 3
      %v7912 = vshll.u32 %v7390, 16
      %v7914 = vrot.slane %v7912, 4
      %v7915 = vor.u32 %v7911, %v7914
      %v7917 = vshrl.u32 %v7391, 16
      %v7919 = vrot.slane %v7917, 3
      %v7920 = vshll.u32 %v7391, 16
      %v7922 = vrot.slane %v7920, 4
      %v7923 = vor.u32 %v7919, %v7922
      %v7924 = vsel %vm4155, %v7915, %v7923
      %v7926 = vshrl.u32 %v7481, 16
      %v7928 = vrot.slane %v7926, 3
      %v7929 = vshll.u32 %v7481, 16
      %v7931 = vrot.slane %v7929, 4
      %v7932 = vor.u32 %v7928, %v7931
      %v7933 = vsel %vm4155, %v7932, %v7932
      %v7935 = vshrl.u32 %v7620, 16
      %v7937 = vrot.slane %v7935, 3
      %v7938 = vshll.u32 %v7620, 16
      %v7940 = vrot.slane %v7938, 4
      %v7941 = vor.u32 %v7937, %v7940
      %v7943 = vshrl.u32 %v7622, 16
      %v7945 = vrot.slane %v7943, 3
      %v7946 = vshll.u32 %v7622, 16
      %v7948 = vrot.slane %v7946, 4
      %v7949 = vor.u32 %v7945, %v7948
      %v7950 = vsel %vm4155, %v7941, %v7949
      %v7952 = vshrl.u32 %v7392, 16
      %v7954 = vrot.slane %v7952, 3
      %v7955 = vshll.u32 %v7392, 16
      %v7957 = vrot.slane %v7955, 4
      %v7958 = vor.u32 %v7954, %v7957
      %v7960 = vshrl.u32 %v7393, 16
      %v7962 = vrot.slane %v7960, 3
      %v7963 = vshll.u32 %v7393, 16
      %v7965 = vrot.slane %v7963, 4
      %v7966 = vor.u32 %v7962, %v7965
      %v7967 = vsel %vm4155, %v7958, %v7966
      %v7969 = vshrl.u32 %v7489, 16
      %v7971 = vrot.slane %v7969, 3
      %v7972 = vshll.u32 %v7489, 16
      %v7974 = vrot.slane %v7972, 4
      %v7975 = vor.u32 %v7971, %v7974
      %v7976 = vsel %vm4155, %v7975, %v7975
      %v7978 = vshrl.u32 %v7623, 16
      %v7980 = vrot.slane %v7978, 3
      %v7981 = vshll.u32 %v7623, 16
      %v7983 = vrot.slane %v7981, 4
      %v7984 = vor.u32 %v7980, %v7983
      %v7986 = vshrl.u32 %v7625, 16
      %v7988 = vrot.slane %v7986, 3
      %v7989 = vshll.u32 %v7625, 16
      %v7991 = vrot.slane %v7989, 4
      %v7992 = vor.u32 %v7988, %v7991
      %v7993 = vsel %vm4155, %v7984, %v7992
      %v7995 = vshrl.u32 %v7394, 16
      %v7997 = vrot.slane %v7995, 3
      %v7998 = vshll.u32 %v7394, 16
      %v8000 = vrot.slane %v7998, 4
      %v8001 = vor.u32 %v7997, %v8000
      %v8003 = vshrl.u32 %v7395, 16
      %v8005 = vrot.slane %v8003, 3
      %v8006 = vshll.u32 %v7395, 16
      %v8008 = vrot.slane %v8006, 4
      %v8009 = vor.u32 %v8005, %v8008
      %v8010 = vsel %vm4155, %v8001, %v8009
      %v8012 = vshrl.u32 %v7497, 16
      %v8014 = vrot.slane %v8012, 3
      %v8015 = vshll.u32 %v7497, 16
      %v8017 = vrot.slane %v8015, 4
      %v8018 = vor.u32 %v8014, %v8017
      %v8019 = vsel %vm4155, %v8018, %v8018
      %v8021 = vshrl.u32 %v7626, 16
      %v8023 = vrot.slane %v8021, 3
      %v8024 = vshll.u32 %v7626, 16
      %v8026 = vrot.slane %v8024, 4
      %v8027 = vor.u32 %v8023, %v8026
      %v8029 = vshrl.u32 %v7628, 16
      %v8031 = vrot.slane %v8029, 3
      %v8032 = vshll.u32 %v7628, 16
      %v8034 = vrot.slane %v8032, 4
      %v8035 = vor.u32 %v8031, %v8034
      %v8036 = vsel %vm4155, %v8027, %v8035
      %v8038 = vshrl.u32 %v7396, 16
      %v8040 = vrot.slane %v8038, 3
      %v8041 = vshll.u32 %v7396, 16
      %v8043 = vrot.slane %v8041, 4
      %v8044 = vor.u32 %v8040, %v8043
      %v8046 = vshrl.u32 %v7397, 16
      %v8048 = vrot.slane %v8046, 3
      %v8049 = vshll.u32 %v7397, 16
      %v8051 = vrot.slane %v8049, 4
      %v8052 = vor.u32 %v8048, %v8051
      %v8053 = vsel %vm4155, %v8044, %v8052
      %v8055 = vshrl.u32 %v7505, 16
      %v8057 = vrot.slane %v8055, 3
      %v8058 = vshll.u32 %v7505, 16
      %v8060 = vrot.slane %v8058, 4
      %v8061 = vor.u32 %v8057, %v8060
      %v8062 = vsel %vm4155, %v8061, %v8061
      %v8064 = vshrl.u32 %v7629, 16
      %v8066 = vrot.slane %v8064, 3
      %v8067 = vshll.u32 %v7629, 16
      %v8069 = vrot.slane %v8067, 4
      %v8070 = vor.u32 %v8066, %v8069
      %v8072 = vshrl.u32 %v7631, 16
      %v8074 = vrot.slane %v8072, 3
      %v8075 = vshll.u32 %v7631, 16
      %v8077 = vrot.slane %v8075, 4
      %v8078 = vor.u32 %v8074, %v8077
      %v8079 = vsel %vm4155, %v8070, %v8078
      %v8081 = vshrl.u32 %v7398, 16
      %v8083 = vrot.slane %v8081, 3
      %v8084 = vshll.u32 %v7398, 16
      %v8086 = vrot.slane %v8084, 4
      %v8087 = vor.u32 %v8083, %v8086
      %v8089 = vshrl.u32 %v7399, 16
      %v8091 = vrot.slane %v8089, 3
      %v8092 = vshll.u32 %v7399, 16
      %v8094 = vrot.slane %v8092, 4
      %v8095 = vor.u32 %v8091, %v8094
      %v8096 = vsel %vm4155, %v8087, %v8095
      %v8098 = vshrl.u32 %v7513, 16
      %v8100 = vrot.slane %v8098, 3
      %v8101 = vshll.u32 %v7513, 16
      %v8103 = vrot.slane %v8101, 4
      %v8104 = vor.u32 %v8100, %v8103
      %v8105 = vsel %vm4155, %v8104, %v8104
      %v8107 = vshrl.u32 %v7632, 16
      %v8109 = vrot.slane %v8107, 3
      %v8110 = vshll.u32 %v7632, 16
      %v8112 = vrot.slane %v8110, 4
      %v8113 = vor.u32 %v8109, %v8112
      %v8115 = vshrl.u32 %v7634, 16
      %v8117 = vrot.slane %v8115, 3
      %v8118 = vshll.u32 %v7634, 16
      %v8120 = vrot.slane %v8118, 4
      %v8121 = vor.u32 %v8117, %v8120
      %v8122 = vsel %vm4155, %v8113, %v8121
      %v8124 = vshrl.u32 %v7400, 16
      %v8126 = vrot.slane %v8124, 3
      %v8127 = vshll.u32 %v7400, 16
      %v8129 = vrot.slane %v8127, 4
      %v8130 = vor.u32 %v8126, %v8129
      %v8132 = vshrl.u32 %v7401, 16
      %v8134 = vrot.slane %v8132, 3
      %v8135 = vshll.u32 %v7401, 16
      %v8137 = vrot.slane %v8135, 4
      %v8138 = vor.u32 %v8134, %v8137
      %v8139 = vsel %vm4155, %v8130, %v8138
      %v8141 = vshrl.u32 %v7521, 16
      %v8143 = vrot.slane %v8141, 3
      %v8144 = vshll.u32 %v7521, 16
      %v8146 = vrot.slane %v8144, 4
      %v8147 = vor.u32 %v8143, %v8146
      %v8148 = vsel %vm4155, %v8147, %v8147
      %v8150 = vshrl.u32 %v7635, 16
      %v8152 = vrot.slane %v8150, 3
      %v8153 = vshll.u32 %v7635, 16
      %v8155 = vrot.slane %v8153, 4
      %v8156 = vor.u32 %v8152, %v8155
      %v8158 = vshrl.u32 %v7637, 16
      %v8160 = vrot.slane %v8158, 3
      %v8161 = vshll.u32 %v7637, 16
      %v8163 = vrot.slane %v8161, 4
      %v8164 = vor.u32 %v8160, %v8163
      %v8165 = vsel %vm4155, %v8156, %v8164
      %v8167 = vshrl.u32 %v7402, 16
      %v8169 = vrot.slane %v8167, 3
      %v8170 = vshll.u32 %v7402, 16
      %v8172 = vrot.slane %v8170, 4
      %v8173 = vor.u32 %v8169, %v8172
      %v8175 = vshrl.u32 %v7403, 16
      %v8177 = vrot.slane %v8175, 3
      %v8178 = vshll.u32 %v7403, 16
      %v8180 = vrot.slane %v8178, 4
      %v8181 = vor.u32 %v8177, %v8180
      %v8182 = vsel %vm4155, %v8173, %v8181
      %v8184 = vshrl.u32 %v7529, 16
      %v8186 = vrot.slane %v8184, 3
      %v8187 = vshll.u32 %v7529, 16
      %v8189 = vrot.slane %v8187, 4
      %v8190 = vor.u32 %v8186, %v8189
      %v8191 = vsel %vm4155, %v8190, %v8190
      %v8193 = vshrl.u32 %v7638, 16
      %v8195 = vrot.slane %v8193, 3
      %v8196 = vshll.u32 %v7638, 16
      %v8198 = vrot.slane %v8196, 4
      %v8199 = vor.u32 %v8195, %v8198
      %v8201 = vshrl.u32 %v7640, 16
      %v8203 = vrot.slane %v8201, 3
      %v8204 = vshll.u32 %v7640, 16
      %v8206 = vrot.slane %v8204, 4
      %v8207 = vor.u32 %v8203, %v8206
      %v8208 = vsel %vm4155, %v8199, %v8207
      %v8210 = vshrl.u32 %v7404, 16
      %v8212 = vrot.slane %v8210, 3
      %v8213 = vshll.u32 %v7404, 16
      %v8215 = vrot.slane %v8213, 4
      %v8216 = vor.u32 %v8212, %v8215
      %v8218 = vshrl.u32 %v7405, 16
      %v8220 = vrot.slane %v8218, 3
      %v8221 = vshll.u32 %v7405, 16
      %v8223 = vrot.slane %v8221, 4
      %v8224 = vor.u32 %v8220, %v8223
      %v8225 = vsel %vm4155, %v8216, %v8224
      %v8227 = vshrl.u32 %v7537, 16
      %v8229 = vrot.slane %v8227, 3
      %v8230 = vshll.u32 %v7537, 16
      %v8232 = vrot.slane %v8230, 4
      %v8233 = vor.u32 %v8229, %v8232
      %v8234 = vsel %vm4155, %v8233, %v8233
      %v8236 = vshrl.u32 %v7641, 16
      %v8238 = vrot.slane %v8236, 3
      %v8239 = vshll.u32 %v7641, 16
      %v8241 = vrot.slane %v8239, 4
      %v8242 = vor.u32 %v8238, %v8241
      %v8244 = vshrl.u32 %v7643, 16
      %v8246 = vrot.slane %v8244, 3
      %v8247 = vshll.u32 %v7643, 16
      %v8249 = vrot.slane %v8247, 4
      %v8250 = vor.u32 %v8246, %v8249
      %v8251 = vsel %vm4155, %v8242, %v8250
      %v8253 = vshrl.u32 %v7406, 16
      %v8255 = vrot.slane %v8253, 3
      %v8256 = vshll.u32 %v7406, 16
      %v8258 = vrot.slane %v8256, 4
      %v8259 = vor.u32 %v8255, %v8258
      %v8261 = vshrl.u32 %v7407, 16
      %v8263 = vrot.slane %v8261, 3
      %v8264 = vshll.u32 %v7407, 16
      %v8266 = vrot.slane %v8264, 4
      %v8267 = vor.u32 %v8263, %v8266
      %v8268 = vsel %vm4155, %v8259, %v8267
      %v8270 = vshrl.u32 %v7545, 16
      %v8272 = vrot.slane %v8270, 3
      %v8273 = vshll.u32 %v7545, 16
      %v8275 = vrot.slane %v8273, 4
      %v8276 = vor.u32 %v8272, %v8275
      %v8277 = vsel %vm4155, %v8276, %v8276
      %v8279 = vshrl.u32 %v7644, 16
      %v8281 = vrot.slane %v8279, 3
      %v8282 = vshll.u32 %v7644, 16
      %v8284 = vrot.slane %v8282, 4
      %v8285 = vor.u32 %v8281, %v8284
      %v8287 = vshrl.u32 %v7646, 16
      %v8289 = vrot.slane %v8287, 3
      %v8290 = vshll.u32 %v7646, 16
      %v8292 = vrot.slane %v8290, 4
      %v8293 = vor.u32 %v8289, %v8292
      %v8294 = vsel %vm4155, %v8285, %v8293
      %v8296 = vshrl.u32 %v7408, 16
      %v8298 = vrot.slane %v8296, 3
      %v8299 = vshll.u32 %v7408, 16
      %v8301 = vrot.slane %v8299, 4
      %v8302 = vor.u32 %v8298, %v8301
      %v8304 = vshrl.u32 %v7409, 16
      %v8306 = vrot.slane %v8304, 3
      %v8307 = vshll.u32 %v7409, 16
      %v8309 = vrot.slane %v8307, 4
      %v8310 = vor.u32 %v8306, %v8309
      %v8311 = vsel %vm4155, %v8302, %v8310
      %v8313 = vshrl.u32 %v7553, 16
      %v8315 = vrot.slane %v8313, 3
      %v8316 = vshll.u32 %v7553, 16
      %v8318 = vrot.slane %v8316, 4
      %v8319 = vor.u32 %v8315, %v8318
      %v8320 = vsel %vm4155, %v8319, %v8319
      %v8322 = vshrl.u32 %v7647, 16
      %v8324 = vrot.slane %v8322, 3
      %v8325 = vshll.u32 %v7647, 16
      %v8327 = vrot.slane %v8325, 4
      %v8328 = vor.u32 %v8324, %v8327
      %v8330 = vshrl.u32 %v7649, 16
      %v8332 = vrot.slane %v8330, 3
      %v8333 = vshll.u32 %v7649, 16
      %v8335 = vrot.slane %v8333, 4
      %v8336 = vor.u32 %v8332, %v8335
      %v8337 = vsel %vm4155, %v8328, %v8336
      %s8386 = scalar_lea.vmem %s3, 384
      %v8387 = vld [vmem:[%s8386] sm:$0xf]
      %v8388 = vld [vmem:[%s8386 + $0x4] sm:$0xf]
      %v8389 = vld [vmem:[%s8386 + $0x8] sm:$0xf]
      %v8390 = vld [vmem:[%s8386 + $0xc] sm:$0xf]
      %v8391 = vld [vmem:[%s8386 + $0x10] sm:$0xf]
      %v8392 = vld [vmem:[%s8386 + $0x14] sm:$0xf]
      %v8393 = vld [vmem:[%s8386 + $0x18] sm:$0xf]
      %v8394 = vld [vmem:[%s8386 + $0x1c] sm:$0xf]
      %v8395 = vld [vmem:[%s8386 + $0x20] sm:$0xf]
      %v8396 = vld [vmem:[%s8386 + $0x24] sm:$0xf]
      %v8397 = vld [vmem:[%s8386 + $0x28] sm:$0xf]
      %v8398 = vld [vmem:[%s8386 + $0x2c] sm:$0xf]
      %v8399 = vld [vmem:[%s8386 + $0x30] sm:$0xf]
      %v8400 = vld [vmem:[%s8386 + $0x34] sm:$0xf]
      %v8401 = vld [vmem:[%s8386 + $0x38] sm:$0xf]
      %v8402 = vld [vmem:[%s8386 + $0x3c] sm:$0xf]
      %v8403 = vld [vmem:[%s8386 + $0x40] sm:$0xf]
      %v8404 = vld [vmem:[%s8386 + $0x44] sm:$0xf]
      %v8405 = vld [vmem:[%s8386 + $0x48] sm:$0xf]
      %v8406 = vld [vmem:[%s8386 + $0x4c] sm:$0xf]
      %v8407 = vld [vmem:[%s8386 + $0x50] sm:$0xf]
      %v8408 = vld [vmem:[%s8386 + $0x54] sm:$0xf]
      %v8409 = vld [vmem:[%s8386 + $0x58] sm:$0xf]
      %v8410 = vld [vmem:[%s8386 + $0x5c] sm:$0xf]
      %v8411 = vld [vmem:[%s8386 + $0x60] sm:$0xf]
      %v8412 = vld [vmem:[%s8386 + $0x64] sm:$0xf]
      %v8413 = vld [vmem:[%s8386 + $0x68] sm:$0xf]
      %v8414 = vld [vmem:[%s8386 + $0x6c] sm:$0xf]
      %v8415 = vld [vmem:[%s8386 + $0x70] sm:$0xf]
      %v8416 = vld [vmem:[%s8386 + $0x74] sm:$0xf]
      %v8417 = vld [vmem:[%s8386 + $0x78] sm:$0xf]
      %v8418 = vld [vmem:[%s8386 + $0x7c] sm:$0xf]
      %v8419 = vld [vmem:[%s8386 + $0x80] sm:$0xf]
      %v8420 = vld [vmem:[%s8386 + $0x84] sm:$0xf]
      %v8421 = vld [vmem:[%s8386 + $0x88] sm:$0xf]
      %v8422 = vld [vmem:[%s8386 + $0x8c] sm:$0xf]
      %v8423 = vld [vmem:[%s8386 + $0x90] sm:$0xf]
      %v8424 = vld [vmem:[%s8386 + $0x94] sm:$0xf]
      %v8425 = vld [vmem:[%s8386 + $0x98] sm:$0xf]
      %v8426 = vld [vmem:[%s8386 + $0x9c] sm:$0xf]
      %v8427 = vld [vmem:[%s8386 + $0xa0] sm:$0xf]
      %v8428 = vld [vmem:[%s8386 + $0xa4] sm:$0xf]
      %v8429 = vld [vmem:[%s8386 + $0xa8] sm:$0xf]
      %v8430 = vld [vmem:[%s8386 + $0xac] sm:$0xf]
      %v8431 = vld [vmem:[%s8386 + $0xb0] sm:$0xf]
      %v8432 = vld [vmem:[%s8386 + $0xb4] sm:$0xf]
      %v8433 = vld [vmem:[%s8386 + $0xb8] sm:$0xf]
      %v8434 = vld [vmem:[%s8386 + $0xbc] sm:$0xf]
      %v8483 = vunpack.c.l.b16 %v8387
      %v8484 = vunpack.c.l.b16 %v8388
      %v8485 = vunpack.c.l.b16 %v8389
      %v8486 = vunpack.c.l.b16 %v8390
      %v8487 = vunpack.c.l.b16 %v8391
      %v8488 = vunpack.c.l.b16 %v8392
      %v8489 = vunpack.c.l.b16 %v8393
      %v8490 = vunpack.c.l.b16 %v8394
      %v8491 = vunpack.c.l.b16 %v8395
      %v8492 = vunpack.c.l.b16 %v8396
      %v8493 = vunpack.c.l.b16 %v8397
      %v8494 = vunpack.c.l.b16 %v8398
      %v8495 = vunpack.c.l.b16 %v8399
      %v8496 = vunpack.c.l.b16 %v8400
      %v8497 = vunpack.c.l.b16 %v8401
      %v8498 = vunpack.c.l.b16 %v8402
      %v8499 = vunpack.c.l.b16 %v8403
      %v8500 = vunpack.c.l.b16 %v8404
      %v8501 = vunpack.c.l.b16 %v8405
      %v8502 = vunpack.c.l.b16 %v8406
      %v8503 = vunpack.c.l.b16 %v8407
      %v8504 = vunpack.c.l.b16 %v8408
      %v8505 = vunpack.c.l.b16 %v8409
      %v8506 = vunpack.c.l.b16 %v8410
      %v8507 = vunpack.c.l.b16 %v8411
      %v8508 = vunpack.c.l.b16 %v8412
      %v8509 = vunpack.c.l.b16 %v8413
      %v8510 = vunpack.c.l.b16 %v8414
      %v8511 = vunpack.c.l.b16 %v8415
      %v8512 = vunpack.c.l.b16 %v8416
      %v8513 = vunpack.c.l.b16 %v8417
      %v8514 = vunpack.c.l.b16 %v8418
      %v8515 = vunpack.c.l.b16 %v8419
      %v8516 = vunpack.c.l.b16 %v8420
      %v8517 = vunpack.c.l.b16 %v8421
      %v8518 = vunpack.c.l.b16 %v8422
      %v8519 = vunpack.c.l.b16 %v8423
      %v8520 = vunpack.c.l.b16 %v8424
      %v8521 = vunpack.c.l.b16 %v8425
      %v8522 = vunpack.c.l.b16 %v8426
      %v8523 = vunpack.c.l.b16 %v8427
      %v8524 = vunpack.c.l.b16 %v8428
      %v8525 = vunpack.c.l.b16 %v8429
      %v8526 = vunpack.c.l.b16 %v8430
      %v8527 = vunpack.c.l.b16 %v8431
      %v8528 = vunpack.c.l.b16 %v8432
      %v8529 = vunpack.c.l.b16 %v8433
      %v8530 = vunpack.c.l.b16 %v8434
      %v8531 = vpack.c.b16 %v8484, %v8483
      %v8532 = vpack.c.b16 %v8486, %v8485
      %v8533 = vpack.c.b16 %v8488, %v8487
      %v8534 = vpack.c.b16 %v8490, %v8489
      %v8535 = vpack.c.b16 %v8492, %v8491
      %v8536 = vpack.c.b16 %v8494, %v8493
      %v8537 = vpack.c.b16 %v8496, %v8495
      %v8538 = vpack.c.b16 %v8498, %v8497
      %v8539 = vpack.c.b16 %v8500, %v8499
      %v8540 = vpack.c.b16 %v8502, %v8501
      %v8541 = vpack.c.b16 %v8504, %v8503
      %v8542 = vpack.c.b16 %v8506, %v8505
      %v8543 = vpack.c.b16 %v8508, %v8507
      %v8544 = vpack.c.b16 %v8510, %v8509
      %v8545 = vpack.c.b16 %v8512, %v8511
      %v8546 = vpack.c.b16 %v8514, %v8513
      %v8547 = vpack.c.b16 %v8516, %v8515
      %v8548 = vpack.c.b16 %v8518, %v8517
      %v8549 = vpack.c.b16 %v8520, %v8519
      %v8550 = vpack.c.b16 %v8522, %v8521
      %v8551 = vpack.c.b16 %v8524, %v8523
      %v8552 = vpack.c.b16 %v8526, %v8525
      %v8553 = vpack.c.b16 %v8528, %v8527
      %v8554 = vpack.c.b16 %v8530, %v8529
      %8579 = vmatprep.subr.bf16.mxu0 0
      %8580 = vmatpush1.bf16.msra.mxu0 %v8538
      %8581 = vmatprep.subr.bf16.mxu0 0
      %8582 = vmatpush1.bf16.msra.mxu0 %v8537
      %8583 = vmatprep.subr.bf16.mxu0 0
      %8584 = vmatpush1.bf16.msra.mxu0 %v8536
      %8585 = vmatprep.subr.bf16.mxu0 0
      %8586 = vmatpush1.bf16.msra.mxu0 %v8535
      %8587 = vmatprep.subr.bf16.mxu0 0
      %8588 = vmatpush1.bf16.msra.mxu0 %v8534
      %8589 = vmatprep.subr.bf16.mxu0 0
      %8590 = vmatpush1.bf16.msra.mxu0 %v8533
      %8591 = vmatprep.subr.bf16.mxu0 0
      %8592 = vmatpush1.bf16.msra.mxu0 %v8532
      %8593 = vmatprep.subr.bf16.mxu0 0
      %8594 = vmatpush1.bf16.msra.mxu0 %v8531
      %8595 = vmatprep.subr.bf16.mxu0 0
      %8596 = vmatpush2.bf16.msra.mxu0 %v8546
      %8597 = vmatprep.subr.bf16.mxu0 0
      %8598 = vmatpush2.bf16.msra.mxu0 %v8545
      %8599 = vmatprep.subr.bf16.mxu0 0
      %8600 = vmatpush2.bf16.msra.mxu0 %v8544
      %8601 = vmatprep.subr.bf16.mxu0 0
      %8602 = vmatpush2.bf16.msra.mxu0 %v8543
      %8603 = vmatprep.subr.bf16.mxu0 0
      %8604 = vmatpush2.bf16.msra.mxu0 %v8542
      %8605 = vmatprep.subr.bf16.mxu0 0
      %8606 = vmatpush2.bf16.msra.mxu0 %v8541
      %8607 = vmatprep.subr.bf16.mxu0 0
      %8608 = vmatpush2.bf16.msra.mxu0 %v8540
      %8609 = vmatprep.subr.bf16.mxu0 0
      %8610 = vmatpush2.bf16.msra.mxu0 %v8539
      %8611 = vmatprep.mubr.bf16.mxu0 %v7675
      %8612 = vmatmul.mubr.bf16.gmra.mxu0 %v7666
      %v8613 = vpop.f32.mrf.mxu0
      %v8614 = vadd.f32 0.0, %v8613
      %v8615 = vpop.f32.mrf.mxu0
      %v8616 = vpop.f32.mrf.mxu0
      %v8617 = vadd.f32 0.0, %v8616
      %v8618 = vpop.f32.mrf.mxu0
      %8619 = vmatprep.mubr.bf16.mxu0 %v7718
      %8620 = vmatmul.mubr.bf16.gmra.mxu0 %v7709
      %v8621 = vpop.f32.mrf.mxu0
      %v8622 = vadd.f32 0.0, %v8621
      %v8623 = vpop.f32.mrf.mxu0
      %v8624 = vpop.f32.mrf.mxu0
      %v8625 = vadd.f32 0.0, %v8624
      %v8626 = vpop.f32.mrf.mxu0
      %8627 = vmatprep.mubr.bf16.mxu0 %v7761
      %8628 = vmatmul.mubr.bf16.gmra.mxu0 %v7752
      %v8629 = vpop.f32.mrf.mxu0
      %v8630 = vadd.f32 0.0, %v8629
      %v8631 = vpop.f32.mrf.mxu0
      %v8632 = vpop.f32.mrf.mxu0
      %v8633 = vadd.f32 0.0, %v8632
      %v8634 = vpop.f32.mrf.mxu0
      %8635 = vmatprep.mubr.bf16.mxu0 %v7804
      %8636 = vmatmul.mubr.bf16.gmra.mxu0 %v7795
      %v8637 = vpop.f32.mrf.mxu0
      %v8638 = vadd.f32 0.0, %v8637
      %v8639 = vpop.f32.mrf.mxu0
      %v8640 = vpop.f32.mrf.mxu0
      %v8641 = vadd.f32 0.0, %v8640
      %v8642 = vpop.f32.mrf.mxu0
      %8643 = vmatprep.mubr.bf16.mxu0 %v7847
      %8644 = vmatmul.mubr.bf16.gmra.mxu0 %v7838
      %v8645 = vpop.f32.mrf.mxu0
      %v8646 = vadd.f32 0.0, %v8645
      %v8647 = vpop.f32.mrf.mxu0
      %v8648 = vpop.f32.mrf.mxu0
      %v8649 = vadd.f32 0.0, %v8648
      %v8650 = vpop.f32.mrf.mxu0
      %8651 = vmatprep.mubr.bf16.mxu0 %v7890
      %8652 = vmatmul.mubr.bf16.gmra.mxu0 %v7881
      %v8653 = vpop.f32.mrf.mxu0
      %v8654 = vadd.f32 0.0, %v8653
      %v8655 = vpop.f32.mrf.mxu0
      %v8656 = vpop.f32.mrf.mxu0
      %v8657 = vadd.f32 0.0, %v8656
      %v8658 = vpop.f32.mrf.mxu0
      %8659 = vmatprep.mubr.bf16.mxu0 %v7933
      %8660 = vmatmul.mubr.bf16.gmra.mxu0 %v7924
      %v8661 = vpop.f32.mrf.mxu0
      %v8662 = vadd.f32 0.0, %v8661
      %v8663 = vpop.f32.mrf.mxu0
      %v8664 = vpop.f32.mrf.mxu0
      %v8665 = vadd.f32 0.0, %v8664
      %v8666 = vpop.f32.mrf.mxu0
      %8667 = vmatprep.mubr.bf16.mxu0 %v7976
      %8668 = vmatmul.mubr.bf16.gmra.mxu0 %v7967
      %v8669 = vpop.f32.mrf.mxu0
      %v8670 = vadd.f32 0.0, %v8669
      %v8671 = vpop.f32.mrf.mxu0
      %v8672 = vpop.f32.mrf.mxu0
      %v8673 = vadd.f32 0.0, %v8672
      %v8674 = vpop.f32.mrf.mxu0
      %8675 = vmatprep.mubr.bf16.mxu0 %v8019
      %8676 = vmatmul.mubr.bf16.gmra.mxu0 %v8010
      %v8677 = vpop.f32.mrf.mxu0
      %v8678 = vadd.f32 0.0, %v8677
      %v8679 = vpop.f32.mrf.mxu0
      %v8680 = vpop.f32.mrf.mxu0
      %v8681 = vadd.f32 0.0, %v8680
      %v8682 = vpop.f32.mrf.mxu0
      %8683 = vmatprep.mubr.bf16.mxu0 %v8062
      %8684 = vmatmul.mubr.bf16.gmra.mxu0 %v8053
      %v8685 = vpop.f32.mrf.mxu0
      %v8686 = vadd.f32 0.0, %v8685
      %v8687 = vpop.f32.mrf.mxu0
      %v8688 = vpop.f32.mrf.mxu0
      %v8689 = vadd.f32 0.0, %v8688
      %v8690 = vpop.f32.mrf.mxu0
      %8691 = vmatprep.mubr.bf16.mxu0 %v8105
      %8692 = vmatmul.mubr.bf16.gmra.mxu0 %v8096
      %v8693 = vpop.f32.mrf.mxu0
      %v8694 = vadd.f32 0.0, %v8693
      %v8695 = vpop.f32.mrf.mxu0
      %v8696 = vpop.f32.mrf.mxu0
      %v8697 = vadd.f32 0.0, %v8696
      %v8698 = vpop.f32.mrf.mxu0
      %8699 = vmatprep.mubr.bf16.mxu0 %v8148
      %8700 = vmatmul.mubr.bf16.gmra.mxu0 %v8139
      %v8701 = vpop.f32.mrf.mxu0
      %v8702 = vadd.f32 0.0, %v8701
      %v8703 = vpop.f32.mrf.mxu0
      %v8704 = vpop.f32.mrf.mxu0
      %v8705 = vadd.f32 0.0, %v8704
      %v8706 = vpop.f32.mrf.mxu0
      %8707 = vmatprep.mubr.bf16.mxu0 %v8191
      %8708 = vmatmul.mubr.bf16.gmra.mxu0 %v8182
      %v8709 = vpop.f32.mrf.mxu0
      %v8710 = vadd.f32 0.0, %v8709
      %v8711 = vpop.f32.mrf.mxu0
      %v8712 = vpop.f32.mrf.mxu0
      %v8713 = vadd.f32 0.0, %v8712
      %v8714 = vpop.f32.mrf.mxu0
      %8715 = vmatprep.mubr.bf16.mxu0 %v8234
      %8716 = vmatmul.mubr.bf16.gmra.mxu0 %v8225
      %v8717 = vpop.f32.mrf.mxu0
      %v8718 = vadd.f32 0.0, %v8717
      %v8719 = vpop.f32.mrf.mxu0
      %v8720 = vpop.f32.mrf.mxu0
      %v8721 = vadd.f32 0.0, %v8720
      %v8722 = vpop.f32.mrf.mxu0
      %8723 = vmatprep.mubr.bf16.mxu0 %v8277
      %8724 = vmatmul.mubr.bf16.gmra.mxu0 %v8268
      %v8725 = vpop.f32.mrf.mxu0
      %v8726 = vadd.f32 0.0, %v8725
      %v8727 = vpop.f32.mrf.mxu0
      %v8728 = vpop.f32.mrf.mxu0
      %v8729 = vadd.f32 0.0, %v8728
      %v8730 = vpop.f32.mrf.mxu0
      %8731 = vmatprep.mubr.bf16.mxu0 %v8320
      %8732 = vmatmul.mubr.bf16.gmra.mxu0 %v8311
      %v8733 = vpop.f32.mrf.mxu0
      %v8734 = vadd.f32 0.0, %v8733
      %v8735 = vpop.f32.mrf.mxu0
      %v8736 = vpop.f32.mrf.mxu0
      %v8737 = vadd.f32 0.0, %v8736
      %v8738 = vpop.f32.mrf.mxu0
      %8739 = vdwg.mxu0
      %8740 = vmatprep.subr.bf16.mxu0 0
      %8741 = vmatpush1.bf16.msra.mxu0 %v8554
      %8742 = vmatprep.subr.bf16.mxu0 0
      %8743 = vmatpush1.bf16.msra.mxu0 %v8553
      %8744 = vmatprep.subr.bf16.mxu0 0
      %8745 = vmatpush1.bf16.msra.mxu0 %v8552
      %8746 = vmatprep.subr.bf16.mxu0 0
      %8747 = vmatpush1.bf16.msra.mxu0 %v8551
      %8748 = vmatprep.subr.bf16.mxu0 0
      %8749 = vmatpush1.bf16.msra.mxu0 %v8550
      %8750 = vmatprep.subr.bf16.mxu0 0
      %8751 = vmatpush1.bf16.msra.mxu0 %v8549
      %8752 = vmatprep.subr.bf16.mxu0 0
      %8753 = vmatpush1.bf16.msra.mxu0 %v8548
      %8754 = vmatprep.subr.bf16.mxu0 0
      %8755 = vmatpush1.bf16.msra.mxu0 %v8547
      %8756 = vmatprep.subr.bf16.mxu0 0
      %8757 = vmatpush2.bf16.msra.mxu0 0
      %8758 = vmatprep.subr.bf16.mxu0 0
      %8759 = vmatpush2.bf16.msra.mxu0 0
      %8760 = vmatprep.subr.bf16.mxu0 0
      %8761 = vmatpush2.bf16.msra.mxu0 0
      %8762 = vmatprep.subr.bf16.mxu0 0
      %8763 = vmatpush2.bf16.msra.mxu0 0
      %8764 = vmatprep.subr.bf16.mxu0 0
      %8765 = vmatpush2.bf16.msra.mxu0 0
      %8766 = vmatprep.subr.bf16.mxu0 0
      %8767 = vmatpush2.bf16.msra.mxu0 0
      %8768 = vmatprep.subr.bf16.mxu0 0
      %8769 = vmatpush2.bf16.msra.mxu0 0
      %8770 = vmatprep.subr.bf16.mxu0 0
      %8771 = vmatpush2.bf16.msra.mxu0 0
      %8772 = vmatprep.mubr.bf16.mxu0 0
      %8773 = vmatmul.mubr.bf16.gmra.mxu0 %v7692
      %v8774 = vpop.f32.mrf.mxu0
      %v8775 = vadd.f32 %v8614, %v8774
      %v8776 = vpop.f32.mrf.mxu0
      %v8777 = vpop.f32.mrf.mxu0
      %v8778 = vadd.f32 %v8617, %v8777
      %v8779 = vpop.f32.mrf.mxu0
      %8780 = vmatprep.mubr.bf16.mxu0 0
      %8781 = vmatmul.mubr.bf16.gmra.mxu0 %v7735
      %v8782 = vpop.f32.mrf.mxu0
      %v8783 = vadd.f32 %v8622, %v8782
      %v8784 = vpop.f32.mrf.mxu0
      %v8785 = vpop.f32.mrf.mxu0
      %v8786 = vadd.f32 %v8625, %v8785
      %v8787 = vpop.f32.mrf.mxu0
      %8788 = vmatprep.mubr.bf16.mxu0 0
      %8789 = vmatmul.mubr.bf16.gmra.mxu0 %v7778
      %v8790 = vpop.f32.mrf.mxu0
      %v8791 = vadd.f32 %v8630, %v8790
      %v8792 = vpop.f32.mrf.mxu0
      %v8793 = vpop.f32.mrf.mxu0
      %v8794 = vadd.f32 %v8633, %v8793
      %v8795 = vpop.f32.mrf.mxu0
      %8796 = vmatprep.mubr.bf16.mxu0 0
      %8797 = vmatmul.mubr.bf16.gmra.mxu0 %v7821
      %v8798 = vpop.f32.mrf.mxu0
      %v8799 = vadd.f32 %v8638, %v8798
      %v8800 = vpop.f32.mrf.mxu0
      %v8801 = vpop.f32.mrf.mxu0
      %v8802 = vadd.f32 %v8641, %v8801
      %v8803 = vpop.f32.mrf.mxu0
      %8804 = vmatprep.mubr.bf16.mxu0 0
      %8805 = vmatmul.mubr.bf16.gmra.mxu0 %v7864
      %v8806 = vpop.f32.mrf.mxu0
      %v8807 = vadd.f32 %v8646, %v8806
      %v8808 = vpop.f32.mrf.mxu0
      %v8809 = vpop.f32.mrf.mxu0
      %v8810 = vadd.f32 %v8649, %v8809
      %v8811 = vpop.f32.mrf.mxu0
      %8812 = vmatprep.mubr.bf16.mxu0 0
      %8813 = vmatmul.mubr.bf16.gmra.mxu0 %v7907
      %v8814 = vpop.f32.mrf.mxu0
      %v8815 = vadd.f32 %v8654, %v8814
      %v8816 = vpop.f32.mrf.mxu0
      %v8817 = vpop.f32.mrf.mxu0
      %v8818 = vadd.f32 %v8657, %v8817
      %v8819 = vpop.f32.mrf.mxu0
      %8820 = vmatprep.mubr.bf16.mxu0 0
      %8821 = vmatmul.mubr.bf16.gmra.mxu0 %v7950
      %v8822 = vpop.f32.mrf.mxu0
      %v8823 = vadd.f32 %v8662, %v8822
      %v8824 = vpop.f32.mrf.mxu0
      %v8825 = vpop.f32.mrf.mxu0
      %v8826 = vadd.f32 %v8665, %v8825
      %v8827 = vpop.f32.mrf.mxu0
      %8828 = vmatprep.mubr.bf16.mxu0 0
      %8829 = vmatmul.mubr.bf16.gmra.mxu0 %v7993
      %v8830 = vpop.f32.mrf.mxu0
      %v8831 = vadd.f32 %v8670, %v8830
      %v8832 = vpop.f32.mrf.mxu0
      %v8833 = vpop.f32.mrf.mxu0
      %v8834 = vadd.f32 %v8673, %v8833
      %v8835 = vpop.f32.mrf.mxu0
      %8836 = vmatprep.mubr.bf16.mxu0 0
      %8837 = vmatmul.mubr.bf16.gmra.mxu0 %v8036
      %v8838 = vpop.f32.mrf.mxu0
      %v8839 = vadd.f32 %v8678, %v8838
      %v8840 = vpop.f32.mrf.mxu0
      %v8841 = vpop.f32.mrf.mxu0
      %v8842 = vadd.f32 %v8681, %v8841
      %v8843 = vpop.f32.mrf.mxu0
      %8844 = vmatprep.mubr.bf16.mxu0 0
      %8845 = vmatmul.mubr.bf16.gmra.mxu0 %v8079
      %v8846 = vpop.f32.mrf.mxu0
      %v8847 = vadd.f32 %v8686, %v8846
      %v8848 = vpop.f32.mrf.mxu0
      %v8849 = vpop.f32.mrf.mxu0
      %v8850 = vadd.f32 %v8689, %v8849
      %v8851 = vpop.f32.mrf.mxu0
      %8852 = vmatprep.mubr.bf16.mxu0 0
      %8853 = vmatmul.mubr.bf16.gmra.mxu0 %v8122
      %v8854 = vpop.f32.mrf.mxu0
      %v8855 = vadd.f32 %v8694, %v8854
      %v8856 = vpop.f32.mrf.mxu0
      %v8857 = vpop.f32.mrf.mxu0
      %v8858 = vadd.f32 %v8697, %v8857
      %v8859 = vpop.f32.mrf.mxu0
      %8860 = vmatprep.mubr.bf16.mxu0 0
      %8861 = vmatmul.mubr.bf16.gmra.mxu0 %v8165
      %v8862 = vpop.f32.mrf.mxu0
      %v8863 = vadd.f32 %v8702, %v8862
      %v8864 = vpop.f32.mrf.mxu0
      %v8865 = vpop.f32.mrf.mxu0
      %v8866 = vadd.f32 %v8705, %v8865
      %v8867 = vpop.f32.mrf.mxu0
      %8868 = vmatprep.mubr.bf16.mxu0 0
      %8869 = vmatmul.mubr.bf16.gmra.mxu0 %v8208
      %v8870 = vpop.f32.mrf.mxu0
      %v8871 = vadd.f32 %v8710, %v8870
      %v8872 = vpop.f32.mrf.mxu0
      %v8873 = vpop.f32.mrf.mxu0
      %v8874 = vadd.f32 %v8713, %v8873
      %v8875 = vpop.f32.mrf.mxu0
      %8876 = vmatprep.mubr.bf16.mxu0 0
      %8877 = vmatmul.mubr.bf16.gmra.mxu0 %v8251
      %v8878 = vpop.f32.mrf.mxu0
      %v8879 = vadd.f32 %v8718, %v8878
      %v8880 = vpop.f32.mrf.mxu0
      %v8881 = vpop.f32.mrf.mxu0
      %v8882 = vadd.f32 %v8721, %v8881
      %v8883 = vpop.f32.mrf.mxu0
      %8884 = vmatprep.mubr.bf16.mxu0 0
      %8885 = vmatmul.mubr.bf16.gmra.mxu0 %v8294
      %v8886 = vpop.f32.mrf.mxu0
      %v8887 = vadd.f32 %v8726, %v8886
      %v8888 = vpop.f32.mrf.mxu0
      %v8889 = vpop.f32.mrf.mxu0
      %v8890 = vadd.f32 %v8729, %v8889
      %v8891 = vpop.f32.mrf.mxu0
      %8892 = vmatprep.mubr.bf16.mxu0 0
      %8893 = vmatmul.mubr.bf16.gmra.mxu0 %v8337
      %v8894 = vpop.f32.mrf.mxu0
      %v8895 = vadd.f32 %v8734, %v8894
      %v8896 = vpop.f32.mrf.mxu0
      %v8897 = vpop.f32.mrf.mxu0
      %v8898 = vadd.f32 %v8737, %v8897
      %v8899 = vpop.f32.mrf.mxu0
      %8900 = vdwg.mxu0
      %v8901 = vld [vmem:[#allocation3] sm:$0xff]
      %v8902 = vld [vmem:[#allocation3 + $0x8] sm:$0xff]
      %v8903 = vld [vmem:[#allocation3 + $0x10] sm:$0xff]
      %v8904 = vld [vmem:[#allocation3 + $0x18] sm:$0xff]
      %v8905 = vld [vmem:[#allocation3 + $0x20] sm:$0xff]
      %v8906 = vld [vmem:[#allocation3 + $0x28] sm:$0xff]
      %v8907 = vld [vmem:[#allocation3 + $0x30] sm:$0xff]
      %v8908 = vld [vmem:[#allocation3 + $0x38] sm:$0xff]
      %v8909 = vld [vmem:[#allocation3 + $0x40] sm:$0xff]
      %v8910 = vld [vmem:[#allocation3 + $0x48] sm:$0xff]
      %v8911 = vld [vmem:[#allocation3 + $0x50] sm:$0xff]
      %v8912 = vld [vmem:[#allocation3 + $0x58] sm:$0xff]
      %v8913 = vld [vmem:[#allocation3 + $0x60] sm:$0xff]
      %v8914 = vld [vmem:[#allocation3 + $0x68] sm:$0xff]
      %v8915 = vld [vmem:[#allocation3 + $0x70] sm:$0xff]
      %v8916 = vld [vmem:[#allocation3 + $0x78] sm:$0xff]
      %v8917 = vld [vmem:[#allocation3 + $0x80] sm:$0xff]
      %v8918 = vld [vmem:[#allocation3 + $0x88] sm:$0xff]
      %v8919 = vld [vmem:[#allocation3 + $0x90] sm:$0xff]
      %v8920 = vld [vmem:[#allocation3 + $0x98] sm:$0xff]
      %v8921 = vld [vmem:[#allocation3 + $0xa0] sm:$0xff]
      %v8922 = vld [vmem:[#allocation3 + $0xa8] sm:$0xff]
      %v8923 = vld [vmem:[#allocation3 + $0xb0] sm:$0xff]
      %v8924 = vld [vmem:[#allocation3 + $0xb8] sm:$0xff]
      %v8925 = vld [vmem:[#allocation3 + $0xc0] sm:$0xff]
      %v8926 = vld [vmem:[#allocation3 + $0xc8] sm:$0xff]
      %v8927 = vld [vmem:[#allocation3 + $0xd0] sm:$0xff]
      %v8928 = vld [vmem:[#allocation3 + $0xd8] sm:$0xff]
      %v8929 = vld [vmem:[#allocation3 + $0xe0] sm:$0xff]
      %v8930 = vld [vmem:[#allocation3 + $0xe8] sm:$0xff]
      %v8931 = vld [vmem:[#allocation3 + $0xf0] sm:$0xff]
      %v8932 = vld [vmem:[#allocation3 + $0xf8] sm:$0xff]
      %v8933 = vadd.f32 %v8901, %v8775
      %v8934 = vadd.f32 %v8902, %v8778
      %v8935 = vadd.f32 %v8903, %v8783
      %v8936 = vadd.f32 %v8904, %v8786
      %v8937 = vadd.f32 %v8905, %v8791
      %v8938 = vadd.f32 %v8906, %v8794
      %v8939 = vadd.f32 %v8907, %v8799
      %v8940 = vadd.f32 %v8908, %v8802
      %v8941 = vadd.f32 %v8909, %v8807
      %v8942 = vadd.f32 %v8910, %v8810
      %v8943 = vadd.f32 %v8911, %v8815
      %v8944 = vadd.f32 %v8912, %v8818
      %v8945 = vadd.f32 %v8913, %v8823
      %v8946 = vadd.f32 %v8914, %v8826
      %v8947 = vadd.f32 %v8915, %v8831
      %v8948 = vadd.f32 %v8916, %v8834
      %v8949 = vadd.f32 %v8917, %v8839
      %v8950 = vadd.f32 %v8918, %v8842
      %v8951 = vadd.f32 %v8919, %v8847
      %v8952 = vadd.f32 %v8920, %v8850
      %v8953 = vadd.f32 %v8921, %v8855
      %v8954 = vadd.f32 %v8922, %v8858
      %v8955 = vadd.f32 %v8923, %v8863
      %v8956 = vadd.f32 %v8924, %v8866
      %v8957 = vadd.f32 %v8925, %v8871
      %v8958 = vadd.f32 %v8926, %v8874
      %v8959 = vadd.f32 %v8927, %v8879
      %v8960 = vadd.f32 %v8928, %v8882
      %v8961 = vadd.f32 %v8929, %v8887
      %v8962 = vadd.f32 %v8930, %v8890
      %v8963 = vadd.f32 %v8931, %v8895
      %v8964 = vadd.f32 %v8932, %v8898
      %8965 = vst [vmem:[#allocation3] sm:$0xff] %v8933
      %8966 = vst [vmem:[#allocation3 + $0x8] sm:$0xff] %v8934
      %8967 = vst [vmem:[#allocation3 + $0x10] sm:$0xff] %v8935
      %8968 = vst [vmem:[#allocation3 + $0x18] sm:$0xff] %v8936
      %8969 = vst [vmem:[#allocation3 + $0x20] sm:$0xff] %v8937
      %8970 = vst [vmem:[#allocation3 + $0x28] sm:$0xff] %v8938
      %8971 = vst [vmem:[#allocation3 + $0x30] sm:$0xff] %v8939
      %8972 = vst [vmem:[#allocation3 + $0x38] sm:$0xff] %v8940
      %8973 = vst [vmem:[#allocation3 + $0x40] sm:$0xff] %v8941
      %8974 = vst [vmem:[#allocation3 + $0x48] sm:$0xff] %v8942
      %8975 = vst [vmem:[#allocation3 + $0x50] sm:$0xff] %v8943
      %8976 = vst [vmem:[#allocation3 + $0x58] sm:$0xff] %v8944
      %8977 = vst [vmem:[#allocation3 + $0x60] sm:$0xff] %v8945
      %8978 = vst [vmem:[#allocation3 + $0x68] sm:$0xff] %v8946
      %8979 = vst [vmem:[#allocation3 + $0x70] sm:$0xff] %v8947
      %8980 = vst [vmem:[#allocation3 + $0x78] sm:$0xff] %v8948
      %8981 = vst [vmem:[#allocation3 + $0x80] sm:$0xff] %v8949
      %8982 = vst [vmem:[#allocation3 + $0x88] sm:$0xff] %v8950
      %8983 = vst [vmem:[#allocation3 + $0x90] sm:$0xff] %v8951
      %8984 = vst [vmem:[#allocation3 + $0x98] sm:$0xff] %v8952
      %8985 = vst [vmem:[#allocation3 + $0xa0] sm:$0xff] %v8953
      %8986 = vst [vmem:[#allocation3 + $0xa8] sm:$0xff] %v8954
      %8987 = vst [vmem:[#allocation3 + $0xb0] sm:$0xff] %v8955
      %8988 = vst [vmem:[#allocation3 + $0xb8] sm:$0xff] %v8956
      %8989 = vst [vmem:[#allocation3 + $0xc0] sm:$0xff] %v8957
      %8990 = vst [vmem:[#allocation3 + $0xc8] sm:$0xff] %v8958
      %8991 = vst [vmem:[#allocation3 + $0xd0] sm:$0xff] %v8959
      %8992 = vst [vmem:[#allocation3 + $0xd8] sm:$0xff] %v8960
      %8993 = vst [vmem:[#allocation3 + $0xe0] sm:$0xff] %v8961
      %8994 = vst [vmem:[#allocation3 + $0xe8] sm:$0xff] %v8962
      %8995 = vst [vmem:[#allocation3 + $0xf0] sm:$0xff] %v8963
      %8996 = vst [vmem:[#allocation3 + $0xf8] sm:$0xff] %v8964
      %vm8997 = vsmask.f32 3328
      %vm8998 = vsmask.f32 7440
      %vm8999 = vmor %vm8997, %vm8998
      %v9001 = vshrl.u32 %v1266, 16
      %v9003 = vrot.slane %v9001, 4
      %v9004 = vshll.u32 %v1266, 16
      %v9006 = vrot.slane %v9004, 5
      %v9007 = vor.u32 %v9003, %v9006
      %v9008 = vrot.slane %v9007, 4
      %v9010 = vshll.u32 %v1267, 16
      %v9012 = vrot.slane %v9010, 5
      %v9013 = vsel %vm8999, %v9008, %v9012
      %v9014 = vshrl.u32 %v1267, 16
      %v9016 = vrot.slane %v9014, 4
      %v9017 = vor.u32 %v9016, %v9012
      %v9018 = vrot.slane %v9017, 4
      %v9020 = vshll.u32 %v1268, 16
      %v9022 = vrot.slane %v9020, 5
      %v9023 = vsel %vm8999, %v9018, %v9022
      %v9025 = vshrl.u32 %v1269, 16
      %v9027 = vrot.slane %v9025, 4
      %v9028 = vshll.u32 %v1269, 16
      %v9030 = vrot.slane %v9028, 5
      %v9031 = vor.u32 %v9027, %v9030
      %v9032 = vrot.slane %v9031, 4
      %v9034 = vshll.u32 %v1270, 16
      %v9036 = vrot.slane %v9034, 5
      %v9037 = vsel %vm8999, %v9032, %v9036
      %v9038 = vshrl.u32 %v1270, 16
      %v9040 = vrot.slane %v9038, 4
      %v9041 = vor.u32 %v9040, %v9036
      %v9042 = vrot.slane %v9041, 4
      %v9044 = vshll.u32 %v1271, 16
      %v9046 = vrot.slane %v9044, 5
      %v9047 = vsel %vm8999, %v9042, %v9046
      %v9049 = vshrl.u32 %v1272, 16
      %v9051 = vrot.slane %v9049, 4
      %v9052 = vshll.u32 %v1272, 16
      %v9054 = vrot.slane %v9052, 5
      %v9055 = vor.u32 %v9051, %v9054
      %v9056 = vrot.slane %v9055, 4
      %v9058 = vshll.u32 %v1273, 16
      %v9060 = vrot.slane %v9058, 5
      %v9061 = vsel %vm8999, %v9056, %v9060
      %v9062 = vshrl.u32 %v1273, 16
      %v9064 = vrot.slane %v9062, 4
      %v9065 = vor.u32 %v9064, %v9060
      %v9066 = vrot.slane %v9065, 4
      %v9068 = vshll.u32 %v1274, 16
      %v9070 = vrot.slane %v9068, 5
      %v9071 = vsel %vm8999, %v9066, %v9070
      %v9073 = vshrl.u32 %v1275, 16
      %v9075 = vrot.slane %v9073, 4
      %v9076 = vshll.u32 %v1275, 16
      %v9078 = vrot.slane %v9076, 5
      %v9079 = vor.u32 %v9075, %v9078
      %v9080 = vrot.slane %v9079, 4
      %v9082 = vshll.u32 %v1276, 16
      %v9084 = vrot.slane %v9082, 5
      %v9085 = vsel %vm8999, %v9080, %v9084
      %v9086 = vshrl.u32 %v1276, 16
      %v9088 = vrot.slane %v9086, 4
      %v9089 = vor.u32 %v9088, %v9084
      %v9090 = vrot.slane %v9089, 4
      %v9092 = vshll.u32 %v1277, 16
      %v9094 = vrot.slane %v9092, 5
      %v9095 = vsel %vm8999, %v9090, %v9094
      %v9097 = vshrl.u32 %v1278, 16
      %v9099 = vrot.slane %v9097, 4
      %v9100 = vshll.u32 %v1278, 16
      %v9102 = vrot.slane %v9100, 5
      %v9103 = vor.u32 %v9099, %v9102
      %v9104 = vrot.slane %v9103, 4
      %v9106 = vshll.u32 %v1279, 16
      %v9108 = vrot.slane %v9106, 5
      %v9109 = vsel %vm8999, %v9104, %v9108
      %v9110 = vshrl.u32 %v1279, 16
      %v9112 = vrot.slane %v9110, 4
      %v9113 = vor.u32 %v9112, %v9108
      %v9114 = vrot.slane %v9113, 4
      %v9116 = vshll.u32 %v1280, 16
      %v9118 = vrot.slane %v9116, 5
      %v9119 = vsel %vm8999, %v9114, %v9118
      %v9121 = vshrl.u32 %v1281, 16
      %v9123 = vrot.slane %v9121, 4
      %v9124 = vshll.u32 %v1281, 16
      %v9126 = vrot.slane %v9124, 5
      %v9127 = vor.u32 %v9123, %v9126
      %v9128 = vrot.slane %v9127, 4
      %v9130 = vshll.u32 %v1282, 16
      %v9132 = vrot.slane %v9130, 5
      %v9133 = vsel %vm8999, %v9128, %v9132
      %v9134 = vshrl.u32 %v1282, 16
      %v9136 = vrot.slane %v9134, 4
      %v9137 = vor.u32 %v9136, %v9132
      %v9138 = vrot.slane %v9137, 4
      %v9140 = vshll.u32 %v1283, 16
      %v9142 = vrot.slane %v9140, 5
      %v9143 = vsel %vm8999, %v9138, %v9142
      %v9145 = vshrl.u32 %v1284, 16
      %v9147 = vrot.slane %v9145, 4
      %v9148 = vshll.u32 %v1284, 16
      %v9150 = vrot.slane %v9148, 5
      %v9151 = vor.u32 %v9147, %v9150
      %v9152 = vrot.slane %v9151, 4
      %v9154 = vshll.u32 %v1285, 16
      %v9156 = vrot.slane %v9154, 5
      %v9157 = vsel %vm8999, %v9152, %v9156
      %v9158 = vshrl.u32 %v1285, 16
      %v9160 = vrot.slane %v9158, 4
      %v9161 = vor.u32 %v9160, %v9156
      %v9162 = vrot.slane %v9161, 4
      %v9164 = vshll.u32 %v1286, 16
      %v9166 = vrot.slane %v9164, 5
      %v9167 = vsel %vm8999, %v9162, %v9166
      %v9169 = vshrl.u32 %v1287, 16
      %v9171 = vrot.slane %v9169, 4
      %v9172 = vshll.u32 %v1287, 16
      %v9174 = vrot.slane %v9172, 5
      %v9175 = vor.u32 %v9171, %v9174
      %v9176 = vrot.slane %v9175, 4
      %v9178 = vshll.u32 %v1288, 16
      %v9180 = vrot.slane %v9178, 5
      %v9181 = vsel %vm8999, %v9176, %v9180
      %v9182 = vshrl.u32 %v1288, 16
      %v9184 = vrot.slane %v9182, 4
      %v9185 = vor.u32 %v9184, %v9180
      %v9186 = vrot.slane %v9185, 4
      %v9188 = vshll.u32 %v1289, 16
      %v9190 = vrot.slane %v9188, 5
      %v9191 = vsel %vm8999, %v9186, %v9190
      %v9193 = vshrl.u32 %v1290, 16
      %v9195 = vrot.slane %v9193, 4
      %v9196 = vshll.u32 %v1290, 16
      %v9198 = vrot.slane %v9196, 5
      %v9199 = vor.u32 %v9195, %v9198
      %v9200 = vrot.slane %v9199, 4
      %v9202 = vshll.u32 %v1291, 16
      %v9204 = vrot.slane %v9202, 5
      %v9205 = vsel %vm8999, %v9200, %v9204
      %v9206 = vshrl.u32 %v1291, 16
      %v9208 = vrot.slane %v9206, 4
      %v9209 = vor.u32 %v9208, %v9204
      %v9210 = vrot.slane %v9209, 4
      %v9212 = vshll.u32 %v1292, 16
      %v9214 = vrot.slane %v9212, 5
      %v9215 = vsel %vm8999, %v9210, %v9214
      %v9217 = vshrl.u32 %v1293, 16
      %v9219 = vrot.slane %v9217, 4
      %v9220 = vshll.u32 %v1293, 16
      %v9222 = vrot.slane %v9220, 5
      %v9223 = vor.u32 %v9219, %v9222
      %v9224 = vrot.slane %v9223, 4
      %v9226 = vshll.u32 %v1294, 16
      %v9228 = vrot.slane %v9226, 5
      %v9229 = vsel %vm8999, %v9224, %v9228
      %v9230 = vshrl.u32 %v1294, 16
      %v9232 = vrot.slane %v9230, 4
      %v9233 = vor.u32 %v9232, %v9228
      %v9234 = vrot.slane %v9233, 4
      %v9236 = vshll.u32 %v1295, 16
      %v9238 = vrot.slane %v9236, 5
      %v9239 = vsel %vm8999, %v9234, %v9238
      %v9241 = vshrl.u32 %v1296, 16
      %v9243 = vrot.slane %v9241, 4
      %v9244 = vshll.u32 %v1296, 16
      %v9246 = vrot.slane %v9244, 5
      %v9247 = vor.u32 %v9243, %v9246
      %v9248 = vrot.slane %v9247, 4
      %v9250 = vshll.u32 %v1297, 16
      %v9252 = vrot.slane %v9250, 5
      %v9253 = vsel %vm8999, %v9248, %v9252
      %v9254 = vshrl.u32 %v1297, 16
      %v9256 = vrot.slane %v9254, 4
      %v9257 = vor.u32 %v9256, %v9252
      %v9258 = vrot.slane %v9257, 4
      %v9260 = vshll.u32 %v1298, 16
      %v9262 = vrot.slane %v9260, 5
      %v9263 = vsel %vm8999, %v9258, %v9262
      %v9265 = vshrl.u32 %v1299, 16
      %v9267 = vrot.slane %v9265, 4
      %v9268 = vshll.u32 %v1299, 16
      %v9270 = vrot.slane %v9268, 5
      %v9271 = vor.u32 %v9267, %v9270
      %v9272 = vrot.slane %v9271, 4
      %v9274 = vshll.u32 %v1300, 16
      %v9276 = vrot.slane %v9274, 5
      %v9277 = vsel %vm8999, %v9272, %v9276
      %v9278 = vshrl.u32 %v1300, 16
      %v9280 = vrot.slane %v9278, 4
      %v9281 = vor.u32 %v9280, %v9276
      %v9282 = vrot.slane %v9281, 4
      %v9284 = vshll.u32 %v1301, 16
      %v9286 = vrot.slane %v9284, 5
      %v9287 = vsel %vm8999, %v9282, %v9286
      %v9289 = vshrl.u32 %v1302, 16
      %v9291 = vrot.slane %v9289, 4
      %v9292 = vshll.u32 %v1302, 16
      %v9294 = vrot.slane %v9292, 5
      %v9295 = vor.u32 %v9291, %v9294
      %v9296 = vrot.slane %v9295, 4
      %v9298 = vshll.u32 %v1303, 16
      %v9300 = vrot.slane %v9298, 5
      %v9301 = vsel %vm8999, %v9296, %v9300
      %v9302 = vshrl.u32 %v1303, 16
      %v9304 = vrot.slane %v9302, 4
      %v9305 = vor.u32 %v9304, %v9300
      %v9306 = vrot.slane %v9305, 4
      %v9308 = vshll.u32 %v1304, 16
      %v9310 = vrot.slane %v9308, 5
      %v9311 = vsel %vm8999, %v9306, %v9310
      %v9313 = vshrl.u32 %v1305, 16
      %v9315 = vrot.slane %v9313, 4
      %v9316 = vshll.u32 %v1305, 16
      %v9318 = vrot.slane %v9316, 5
      %v9319 = vor.u32 %v9315, %v9318
      %v9320 = vrot.slane %v9319, 4
      %v9322 = vshll.u32 %v1306, 16
      %v9324 = vrot.slane %v9322, 5
      %v9325 = vsel %vm8999, %v9320, %v9324
      %v9326 = vshrl.u32 %v1306, 16
      %v9328 = vrot.slane %v9326, 4
      %v9329 = vor.u32 %v9328, %v9324
      %v9330 = vrot.slane %v9329, 4
      %v9332 = vshll.u32 %v1307, 16
      %v9334 = vrot.slane %v9332, 5
      %v9335 = vsel %vm8999, %v9330, %v9334
      %v9337 = vshrl.u32 %v1308, 16
      %v9339 = vrot.slane %v9337, 4
      %v9340 = vshll.u32 %v1308, 16
      %v9342 = vrot.slane %v9340, 5
      %v9343 = vor.u32 %v9339, %v9342
      %v9344 = vrot.slane %v9343, 4
      %v9346 = vshll.u32 %v1309, 16
      %v9348 = vrot.slane %v9346, 5
      %v9349 = vsel %vm8999, %v9344, %v9348
      %v9350 = vshrl.u32 %v1309, 16
      %v9352 = vrot.slane %v9350, 4
      %v9353 = vor.u32 %v9352, %v9348
      %v9354 = vrot.slane %v9353, 4
      %v9356 = vshll.u32 %v1310, 16
      %v9358 = vrot.slane %v9356, 5
      %v9359 = vsel %vm8999, %v9354, %v9358
      %v9361 = vshrl.u32 %v1311, 16
      %v9363 = vrot.slane %v9361, 4
      %v9364 = vshll.u32 %v1311, 16
      %v9366 = vrot.slane %v9364, 5
      %v9367 = vor.u32 %v9363, %v9366
      %v9368 = vrot.slane %v9367, 4
      %v9370 = vshll.u32 %v1312, 16
      %v9372 = vrot.slane %v9370, 5
      %v9373 = vsel %vm8999, %v9368, %v9372
      %v9374 = vshrl.u32 %v1312, 16
      %v9376 = vrot.slane %v9374, 4
      %v9377 = vor.u32 %v9376, %v9372
      %v9378 = vrot.slane %v9377, 4
      %v9380 = vshll.u32 %v1313, 16
      %v9382 = vrot.slane %v9380, 5
      %v9383 = vsel %vm8999, %v9378, %v9382
      %v9384 = vld [vmem:[%s4] sm:$0xf]
      %v9385 = vld [vmem:[%s4 + $0x4] sm:$0xf]
      %v9386 = vld [vmem:[%s4 + $0x8] sm:$0xf]
      %v9387 = vld [vmem:[%s4 + $0xc] sm:$0xf]
      %v9388 = vld [vmem:[%s4 + $0x10] sm:$0xf]
      %v9389 = vld [vmem:[%s4 + $0x14] sm:$0xf]
      %v9390 = vld [vmem:[%s4 + $0x18] sm:$0xf]
      %v9391 = vld [vmem:[%s4 + $0x1c] sm:$0xf]
      %v9392 = vld [vmem:[%s4 + $0x20] sm:$0xf]
      %v9393 = vld [vmem:[%s4 + $0x24] sm:$0xf]
      %v9394 = vld [vmem:[%s4 + $0x28] sm:$0xf]
      %v9395 = vld [vmem:[%s4 + $0x2c] sm:$0xf]
      %v9396 = vld [vmem:[%s4 + $0x30] sm:$0xf]
      %v9397 = vld [vmem:[%s4 + $0x34] sm:$0xf]
      %v9398 = vld [vmem:[%s4 + $0x38] sm:$0xf]
      %v9399 = vld [vmem:[%s4 + $0x3c] sm:$0xf]
      %v9400 = vunpack.c.l.b16 %v9013
      %v9401 = vunpack.c.l.b16 %v9023
      %v9402 = vunpack.c.l.b16 %v9037
      %v9403 = vunpack.c.l.b16 %v9047
      %v9404 = vunpack.c.l.b16 %v9061
      %v9405 = vunpack.c.l.b16 %v9071
      %v9406 = vunpack.c.l.b16 %v9085
      %v9407 = vunpack.c.l.b16 %v9095
      %v9408 = vunpack.c.l.b16 %v9109
      %v9409 = vunpack.c.l.b16 %v9119
      %v9410 = vunpack.c.l.b16 %v9133
      %v9411 = vunpack.c.l.b16 %v9143
      %v9412 = vunpack.c.l.b16 %v9157
      %v9413 = vunpack.c.l.b16 %v9167
      %v9414 = vunpack.c.l.b16 %v9181
      %v9415 = vunpack.c.l.b16 %v9191
      %v9416 = vunpack.c.l.b16 %v9205
      %v9417 = vunpack.c.l.b16 %v9215
      %v9418 = vunpack.c.l.b16 %v9229
      %v9419 = vunpack.c.l.b16 %v9239
      %v9420 = vunpack.c.l.b16 %v9253
      %v9421 = vunpack.c.l.b16 %v9263
      %v9422 = vunpack.c.l.b16 %v9277
      %v9423 = vunpack.c.l.b16 %v9287
      %v9424 = vunpack.c.l.b16 %v9301
      %v9425 = vunpack.c.l.b16 %v9311
      %v9426 = vunpack.c.l.b16 %v9325
      %v9427 = vunpack.c.l.b16 %v9335
      %v9428 = vunpack.c.l.b16 %v9349
      %v9429 = vunpack.c.l.b16 %v9359
      %v9430 = vunpack.c.l.b16 %v9373
      %v9431 = vunpack.c.l.b16 %v9383
      %v9432 = vpack.c.b16 %v9401, %v9400
      %v9433 = vpack.c.b16 %v9403, %v9402
      %v9434 = vpack.c.b16 %v9405, %v9404
      %v9435 = vpack.c.b16 %v9407, %v9406
      %v9436 = vpack.c.b16 %v9409, %v9408
      %v9437 = vpack.c.b16 %v9411, %v9410
      %v9438 = vpack.c.b16 %v9413, %v9412
      %v9439 = vpack.c.b16 %v9415, %v9414
      %v9440 = vpack.c.b16 %v9417, %v9416
      %v9441 = vpack.c.b16 %v9419, %v9418
      %v9442 = vpack.c.b16 %v9421, %v9420
      %v9443 = vpack.c.b16 %v9423, %v9422
      %v9444 = vpack.c.b16 %v9425, %v9424
      %v9445 = vpack.c.b16 %v9427, %v9426
      %v9446 = vpack.c.b16 %v9429, %v9428
      %v9447 = vpack.c.b16 %v9431, %v9430
      %v9480 = vunpack.c.l.b16 %v9384
      %v9481 = vunpack.c.l.b16 %v9385
      %v9482 = vunpack.c.l.b16 %v9386
      %v9483 = vunpack.c.l.b16 %v9387
      %v9484 = vunpack.c.l.b16 %v9388
      %v9485 = vunpack.c.l.b16 %v9389
      %v9486 = vunpack.c.l.b16 %v9390
      %v9487 = vunpack.c.l.b16 %v9391
      %v9488 = vunpack.c.l.b16 %v9392
      %v9489 = vunpack.c.l.b16 %v9393
      %v9490 = vunpack.c.l.b16 %v9394
      %v9491 = vunpack.c.l.b16 %v9395
      %v9492 = vunpack.c.l.b16 %v9396
      %v9493 = vunpack.c.l.b16 %v9397
      %v9494 = vunpack.c.l.b16 %v9398
      %v9495 = vunpack.c.l.b16 %v9399
      %v9496 = vpack.c.b16 %v9481, %v9480
      %v9497 = vpack.c.b16 %v9483, %v9482
      %v9498 = vpack.c.b16 %v9485, %v9484
      %v9499 = vpack.c.b16 %v9487, %v9486
      %v9500 = vpack.c.b16 %v9489, %v9488
      %v9501 = vpack.c.b16 %v9491, %v9490
      %v9502 = vpack.c.b16 %v9493, %v9492
      %v9503 = vpack.c.b16 %v9495, %v9494
      %9512 = vmatprep.subr.bf16.mxu0 0
      %9513 = vmatpush1.bf16.msra.mxu0 %v9503
      %9514 = vmatprep.subr.bf16.mxu0 0
      %9515 = vmatpush1.bf16.msra.mxu0 %v9502
      %9516 = vmatprep.subr.bf16.mxu0 0
      %9517 = vmatpush1.bf16.msra.mxu0 %v9501
      %9518 = vmatprep.subr.bf16.mxu0 0
      %9519 = vmatpush1.bf16.msra.mxu0 %v9500
      %9520 = vmatprep.subr.bf16.mxu0 0
      %9521 = vmatpush1.bf16.msra.mxu0 %v9499
      %9522 = vmatprep.subr.bf16.mxu0 0
      %9523 = vmatpush1.bf16.msra.mxu0 %v9498
      %9524 = vmatprep.subr.bf16.mxu0 0
      %9525 = vmatpush1.bf16.msra.mxu0 %v9497
      %9526 = vmatprep.subr.bf16.mxu0 0
      %9527 = vmatpush1.bf16.msra.mxu0 %v9496
      %9528 = vmatprep.subr.bf16.mxu0 0
      %9529 = vmatpush2.bf16.msra.mxu0 0
      %9530 = vmatprep.subr.bf16.mxu0 0
      %9531 = vmatpush2.bf16.msra.mxu0 0
      %9532 = vmatprep.subr.bf16.mxu0 0
      %9533 = vmatpush2.bf16.msra.mxu0 0
      %9534 = vmatprep.subr.bf16.mxu0 0
      %9535 = vmatpush2.bf16.msra.mxu0 0
      %9536 = vmatprep.subr.bf16.mxu0 0
      %9537 = vmatpush2.bf16.msra.mxu0 0
      %9538 = vmatprep.subr.bf16.mxu0 0
      %9539 = vmatpush2.bf16.msra.mxu0 0
      %9540 = vmatprep.subr.bf16.mxu0 0
      %9541 = vmatpush2.bf16.msra.mxu0 0
      %9542 = vmatprep.subr.bf16.mxu0 0
      %9543 = vmatpush2.bf16.msra.mxu0 0
      %9544 = vmatprep.mubr.bf16.mxu0 0
      %9545 = vmatmul.mubr.bf16.gmra.mxu0 %v9432
      %v9546 = vpop.f32.mrf.mxu0
      %v9547 = vadd.f32 0.0, %v9546
      %v9548 = vpop.f32.mrf.mxu0
      %v9549 = vpop.f32.mrf.mxu0
      %v9550 = vadd.f32 0.0, %v9549
      %v9551 = vpop.f32.mrf.mxu0
      %9552 = vmatprep.mubr.bf16.mxu0 0
      %9553 = vmatmul.mubr.bf16.gmra.mxu0 %v9433
      %v9554 = vpop.f32.mrf.mxu0
      %v9555 = vadd.f32 0.0, %v9554
      %v9556 = vpop.f32.mrf.mxu0
      %v9557 = vpop.f32.mrf.mxu0
      %v9558 = vadd.f32 0.0, %v9557
      %v9559 = vpop.f32.mrf.mxu0
      %9560 = vmatprep.mubr.bf16.mxu0 0
      %9561 = vmatmul.mubr.bf16.gmra.mxu0 %v9434
      %v9562 = vpop.f32.mrf.mxu0
      %v9563 = vadd.f32 0.0, %v9562
      %v9564 = vpop.f32.mrf.mxu0
      %v9565 = vpop.f32.mrf.mxu0
      %v9566 = vadd.f32 0.0, %v9565
      %v9567 = vpop.f32.mrf.mxu0
      %9568 = vmatprep.mubr.bf16.mxu0 0
      %9569 = vmatmul.mubr.bf16.gmra.mxu0 %v9435
      %v9570 = vpop.f32.mrf.mxu0
      %v9571 = vadd.f32 0.0, %v9570
      %v9572 = vpop.f32.mrf.mxu0
      %v9573 = vpop.f32.mrf.mxu0
      %v9574 = vadd.f32 0.0, %v9573
      %v9575 = vpop.f32.mrf.mxu0
      %9576 = vmatprep.mubr.bf16.mxu0 0
      %9577 = vmatmul.mubr.bf16.gmra.mxu0 %v9436
      %v9578 = vpop.f32.mrf.mxu0
      %v9579 = vadd.f32 0.0, %v9578
      %v9580 = vpop.f32.mrf.mxu0
      %v9581 = vpop.f32.mrf.mxu0
      %v9582 = vadd.f32 0.0, %v9581
      %v9583 = vpop.f32.mrf.mxu0
      %9584 = vmatprep.mubr.bf16.mxu0 0
      %9585 = vmatmul.mubr.bf16.gmra.mxu0 %v9437
      %v9586 = vpop.f32.mrf.mxu0
      %v9587 = vadd.f32 0.0, %v9586
      %v9588 = vpop.f32.mrf.mxu0
      %v9589 = vpop.f32.mrf.mxu0
      %v9590 = vadd.f32 0.0, %v9589
      %v9591 = vpop.f32.mrf.mxu0
      %9592 = vmatprep.mubr.bf16.mxu0 0
      %9593 = vmatmul.mubr.bf16.gmra.mxu0 %v9438
      %v9594 = vpop.f32.mrf.mxu0
      %v9595 = vadd.f32 0.0, %v9594
      %v9596 = vpop.f32.mrf.mxu0
      %v9597 = vpop.f32.mrf.mxu0
      %v9598 = vadd.f32 0.0, %v9597
      %v9599 = vpop.f32.mrf.mxu0
      %9600 = vmatprep.mubr.bf16.mxu0 0
      %9601 = vmatmul.mubr.bf16.gmra.mxu0 %v9439
      %v9602 = vpop.f32.mrf.mxu0
      %v9603 = vadd.f32 0.0, %v9602
      %v9604 = vpop.f32.mrf.mxu0
      %v9605 = vpop.f32.mrf.mxu0
      %v9606 = vadd.f32 0.0, %v9605
      %v9607 = vpop.f32.mrf.mxu0
      %9608 = vmatprep.mubr.bf16.mxu0 0
      %9609 = vmatmul.mubr.bf16.gmra.mxu0 %v9440
      %v9610 = vpop.f32.mrf.mxu0
      %v9611 = vadd.f32 0.0, %v9610
      %v9612 = vpop.f32.mrf.mxu0
      %v9613 = vpop.f32.mrf.mxu0
      %v9614 = vadd.f32 0.0, %v9613
      %v9615 = vpop.f32.mrf.mxu0
      %9616 = vmatprep.mubr.bf16.mxu0 0
      %9617 = vmatmul.mubr.bf16.gmra.mxu0 %v9441
      %v9618 = vpop.f32.mrf.mxu0
      %v9619 = vadd.f32 0.0, %v9618
      %v9620 = vpop.f32.mrf.mxu0
      %v9621 = vpop.f32.mrf.mxu0
      %v9622 = vadd.f32 0.0, %v9621
      %v9623 = vpop.f32.mrf.mxu0
      %9624 = vmatprep.mubr.bf16.mxu0 0
      %9625 = vmatmul.mubr.bf16.gmra.mxu0 %v9442
      %v9626 = vpop.f32.mrf.mxu0
      %v9627 = vadd.f32 0.0, %v9626
      %v9628 = vpop.f32.mrf.mxu0
      %v9629 = vpop.f32.mrf.mxu0
      %v9630 = vadd.f32 0.0, %v9629
      %v9631 = vpop.f32.mrf.mxu0
      %9632 = vmatprep.mubr.bf16.mxu0 0
      %9633 = vmatmul.mubr.bf16.gmra.mxu0 %v9443
      %v9634 = vpop.f32.mrf.mxu0
      %v9635 = vadd.f32 0.0, %v9634
      %v9636 = vpop.f32.mrf.mxu0
      %v9637 = vpop.f32.mrf.mxu0
      %v9638 = vadd.f32 0.0, %v9637
      %v9639 = vpop.f32.mrf.mxu0
      %9640 = vmatprep.mubr.bf16.mxu0 0
      %9641 = vmatmul.mubr.bf16.gmra.mxu0 %v9444
      %v9642 = vpop.f32.mrf.mxu0
      %v9643 = vadd.f32 0.0, %v9642
      %v9644 = vpop.f32.mrf.mxu0
      %v9645 = vpop.f32.mrf.mxu0
      %v9646 = vadd.f32 0.0, %v9645
      %v9647 = vpop.f32.mrf.mxu0
      %9648 = vmatprep.mubr.bf16.mxu0 0
      %9649 = vmatmul.mubr.bf16.gmra.mxu0 %v9445
      %v9650 = vpop.f32.mrf.mxu0
      %v9651 = vadd.f32 0.0, %v9650
      %v9652 = vpop.f32.mrf.mxu0
      %v9653 = vpop.f32.mrf.mxu0
      %v9654 = vadd.f32 0.0, %v9653
      %v9655 = vpop.f32.mrf.mxu0
      %9656 = vmatprep.mubr.bf16.mxu0 0
      %9657 = vmatmul.mubr.bf16.gmra.mxu0 %v9446
      %v9658 = vpop.f32.mrf.mxu0
      %v9659 = vadd.f32 0.0, %v9658
      %v9660 = vpop.f32.mrf.mxu0
      %v9661 = vpop.f32.mrf.mxu0
      %v9662 = vadd.f32 0.0, %v9661
      %v9663 = vpop.f32.mrf.mxu0
      %9664 = vmatprep.mubr.bf16.mxu0 0
      %9665 = vmatmul.mubr.bf16.gmra.mxu0 %v9447
      %v9666 = vpop.f32.mrf.mxu0
      %v9667 = vadd.f32 0.0, %v9666
      %v9668 = vpop.f32.mrf.mxu0
      %v9669 = vpop.f32.mrf.mxu0
      %v9670 = vadd.f32 0.0, %v9669
      %v9671 = vpop.f32.mrf.mxu0
      %9672 = vdwg.mxu0
      %v9673 = vld [vmem:[#allocation3] sm:$0xff]
      %v9674 = vld [vmem:[#allocation3 + $0x8] sm:$0xff]
      %v9675 = vld [vmem:[#allocation3 + $0x10] sm:$0xff]
      %v9676 = vld [vmem:[#allocation3 + $0x18] sm:$0xff]
      %v9677 = vld [vmem:[#allocation3 + $0x20] sm:$0xff]
      %v9678 = vld [vmem:[#allocation3 + $0x28] sm:$0xff]
      %v9679 = vld [vmem:[#allocation3 + $0x30] sm:$0xff]
      %v9680 = vld [vmem:[#allocation3 + $0x38] sm:$0xff]
      %v9681 = vld [vmem:[#allocation3 + $0x40] sm:$0xff]
      %v9682 = vld [vmem:[#allocation3 + $0x48] sm:$0xff]
      %v9683 = vld [vmem:[#allocation3 + $0x50] sm:$0xff]
      %v9684 = vld [vmem:[#allocation3 + $0x58] sm:$0xff]
      %v9685 = vld [vmem:[#allocation3 + $0x60] sm:$0xff]
      %v9686 = vld [vmem:[#allocation3 + $0x68] sm:$0xff]
      %v9687 = vld [vmem:[#allocation3 + $0x70] sm:$0xff]
      %v9688 = vld [vmem:[#allocation3 + $0x78] sm:$0xff]
      %v9689 = vld [vmem:[#allocation3 + $0x80] sm:$0xff]
      %v9690 = vld [vmem:[#allocation3 + $0x88] sm:$0xff]
      %v9691 = vld [vmem:[#allocation3 + $0x90] sm:$0xff]
      %v9692 = vld [vmem:[#allocation3 + $0x98] sm:$0xff]
      %v9693 = vld [vmem:[#allocation3 + $0xa0] sm:$0xff]
      %v9694 = vld [vmem:[#allocation3 + $0xa8] sm:$0xff]
      %v9695 = vld [vmem:[#allocation3 + $0xb0] sm:$0xff]
      %v9696 = vld [vmem:[#allocation3 + $0xb8] sm:$0xff]
      %v9697 = vld [vmem:[#allocation3 + $0xc0] sm:$0xff]
      %v9698 = vld [vmem:[#allocation3 + $0xc8] sm:$0xff]
      %v9699 = vld [vmem:[#allocation3 + $0xd0] sm:$0xff]
      %v9700 = vld [vmem:[#allocation3 + $0xd8] sm:$0xff]
      %v9701 = vld [vmem:[#allocation3 + $0xe0] sm:$0xff]
      %v9702 = vld [vmem:[#allocation3 + $0xe8] sm:$0xff]
      %v9703 = vld [vmem:[#allocation3 + $0xf0] sm:$0xff]
      %v9704 = vld [vmem:[#allocation3 + $0xf8] sm:$0xff]
      %v9705 = vadd.f32 %v9673, %v9547
      %v9706 = vadd.f32 %v9674, %v9550
      %v9707 = vadd.f32 %v9675, %v9555
      %v9708 = vadd.f32 %v9676, %v9558
      %v9709 = vadd.f32 %v9677, %v9563
      %v9710 = vadd.f32 %v9678, %v9566
      %v9711 = vadd.f32 %v9679, %v9571
      %v9712 = vadd.f32 %v9680, %v9574
      %v9713 = vadd.f32 %v9681, %v9579
      %v9714 = vadd.f32 %v9682, %v9582
      %v9715 = vadd.f32 %v9683, %v9587
      %v9716 = vadd.f32 %v9684, %v9590
      %v9717 = vadd.f32 %v9685, %v9595
      %v9718 = vadd.f32 %v9686, %v9598
      %v9719 = vadd.f32 %v9687, %v9603
      %v9720 = vadd.f32 %v9688, %v9606
      %v9721 = vadd.f32 %v9689, %v9611
      %v9722 = vadd.f32 %v9690, %v9614
      %v9723 = vadd.f32 %v9691, %v9619
      %v9724 = vadd.f32 %v9692, %v9622
      %v9725 = vadd.f32 %v9693, %v9627
      %v9726 = vadd.f32 %v9694, %v9630
      %v9727 = vadd.f32 %v9695, %v9635
      %v9728 = vadd.f32 %v9696, %v9638
      %v9729 = vadd.f32 %v9697, %v9643
      %v9730 = vadd.f32 %v9698, %v9646
      %v9731 = vadd.f32 %v9699, %v9651
      %v9732 = vadd.f32 %v9700, %v9654
      %v9733 = vadd.f32 %v9701, %v9659
      %v9734 = vadd.f32 %v9702, %v9662
      %v9735 = vadd.f32 %v9703, %v9667
      %v9736 = vadd.f32 %v9704, %v9670
      %v9737 = vld [vmem:[%s5] sm:$0x1]
      %v9739 = vlaneseq
      %v9740 = vshrl.u32 %v9739, 7
      %v9741 = vsub.s32 0, %v9740
      %v9742 = vrot.slane %v9737, %v9741
      %v9744 = vadd.f32 %v9705, %v9742
      %v9745 = vadd.f32 %v9706, %v9742
      %v9746 = vadd.f32 %v9707, %v9742
      %v9747 = vadd.f32 %v9708, %v9742
      %v9748 = vadd.f32 %v9709, %v9742
      %v9749 = vadd.f32 %v9710, %v9742
      %v9750 = vadd.f32 %v9711, %v9742
      %v9751 = vadd.f32 %v9712, %v9742
      %v9752 = vadd.f32 %v9713, %v9742
      %v9753 = vadd.f32 %v9714, %v9742
      %v9754 = vadd.f32 %v9715, %v9742
      %v9755 = vadd.f32 %v9716, %v9742
      %v9756 = vadd.f32 %v9717, %v9742
      %v9757 = vadd.f32 %v9718, %v9742
      %v9758 = vadd.f32 %v9719, %v9742
      %v9759 = vadd.f32 %v9720, %v9742
      %v9760 = vadd.f32 %v9721, %v9742
      %v9761 = vadd.f32 %v9722, %v9742
      %v9762 = vadd.f32 %v9723, %v9742
      %v9763 = vadd.f32 %v9724, %v9742
      %v9764 = vadd.f32 %v9725, %v9742
      %v9765 = vadd.f32 %v9726, %v9742
      %v9766 = vadd.f32 %v9727, %v9742
      %v9767 = vadd.f32 %v9728, %v9742
      %v9768 = vadd.f32 %v9729, %v9742
      %v9769 = vadd.f32 %v9730, %v9742
      %v9770 = vadd.f32 %v9731, %v9742
      %v9771 = vadd.f32 %v9732, %v9742
      %v9772 = vadd.f32 %v9733, %v9742
      %v9773 = vadd.f32 %v9734, %v9742
      %v9774 = vadd.f32 %v9735, %v9742
      %v9775 = vadd.f32 %v9736, %v9742
      %v9776 = vmax.f32 %v9744, 0.0
      %v9777 = vmax.f32 %v9745, 0.0
      %v9778 = vmax.f32 %v9746, 0.0
      %v9779 = vmax.f32 %v9747, 0.0
      %v9780 = vmax.f32 %v9748, 0.0
      %v9781 = vmax.f32 %v9749, 0.0
      %v9782 = vmax.f32 %v9750, 0.0
      %v9783 = vmax.f32 %v9751, 0.0
      %v9784 = vmax.f32 %v9752, 0.0
      %v9785 = vmax.f32 %v9753, 0.0
      %v9786 = vmax.f32 %v9754, 0.0
      %v9787 = vmax.f32 %v9755, 0.0
      %v9788 = vmax.f32 %v9756, 0.0
      %v9789 = vmax.f32 %v9757, 0.0
      %v9790 = vmax.f32 %v9758, 0.0
      %v9791 = vmax.f32 %v9759, 0.0
      %v9792 = vmax.f32 %v9760, 0.0
      %v9793 = vmax.f32 %v9761, 0.0
      %v9794 = vmax.f32 %v9762, 0.0
      %v9795 = vmax.f32 %v9763, 0.0
      %v9796 = vmax.f32 %v9764, 0.0
      %v9797 = vmax.f32 %v9765, 0.0
      %v9798 = vmax.f32 %v9766, 0.0
      %v9799 = vmax.f32 %v9767, 0.0
      %v9800 = vmax.f32 %v9768, 0.0
      %v9801 = vmax.f32 %v9769, 0.0
      %v9802 = vmax.f32 %v9770, 0.0
      %v9803 = vmax.f32 %v9771, 0.0
      %v9804 = vmax.f32 %v9772, 0.0
      %v9805 = vmax.f32 %v9773, 0.0
      %v9806 = vmax.f32 %v9774, 0.0
      %v9807 = vmax.f32 %v9775, 0.0
      %9808 = vst [vmem:[%s251] sm:$0xff] %v9776
      %9809 = vst [vmem:[%s251 + $0x8] sm:$0xff] %v9777
      %9810 = vst [vmem:[%s251 + $0x10] sm:$0xff] %v9778
      %9811 = vst [vmem:[%s251 + $0x18] sm:$0xff] %v9779
      %9812 = vst [vmem:[%s251 + $0x20] sm:$0xff] %v9780
      %9813 = vst [vmem:[%s251 + $0x28] sm:$0xff] %v9781
      %9814 = vst [vmem:[%s251 + $0x30] sm:$0xff] %v9782
      %9815 = vst [vmem:[%s251 + $0x38] sm:$0xff] %v9783
      %9816 = vst [vmem:[%s251 + $0x40] sm:$0xff] %v9784
      %9817 = vst [vmem:[%s251 + $0x48] sm:$0xff] %v9785
      %9818 = vst [vmem:[%s251 + $0x50] sm:$0xff] %v9786
      %9819 = vst [vmem:[%s251 + $0x58] sm:$0xff] %v9787
      %9820 = vst [vmem:[%s251 + $0x60] sm:$0xff] %v9788
      %9821 = vst [vmem:[%s251 + $0x68] sm:$0xff] %v9789
      %9822 = vst [vmem:[%s251 + $0x70] sm:$0xff] %v9790
      %9823 = vst [vmem:[%s251 + $0x78] sm:$0xff] %v9791
      %9824 = vst [vmem:[%s251 + $0x80] sm:$0xff] %v9792
      %9825 = vst [vmem:[%s251 + $0x88] sm:$0xff] %v9793
      %9826 = vst [vmem:[%s251 + $0x90] sm:$0xff] %v9794
      %9827 = vst [vmem:[%s251 + $0x98] sm:$0xff] %v9795
      %9828 = vst [vmem:[%s251 + $0xa0] sm:$0xff] %v9796
      %9829 = vst [vmem:[%s251 + $0xa8] sm:$0xff] %v9797
      %9830 = vst [vmem:[%s251 + $0xb0] sm:$0xff] %v9798
      %9831 = vst [vmem:[%s251 + $0xb8] sm:$0xff] %v9799
      %9832 = vst [vmem:[%s251 + $0xc0] sm:$0xff] %v9800
      %9833 = vst [vmem:[%s251 + $0xc8] sm:$0xff] %v9801
      %9834 = vst [vmem:[%s251 + $0xd0] sm:$0xff] %v9802
      %9835 = vst [vmem:[%s251 + $0xd8] sm:$0xff] %v9803
      %9836 = vst [vmem:[%s251 + $0xe0] sm:$0xff] %v9804
      %9837 = vst [vmem:[%s251 + $0xe8] sm:$0xff] %v9805
      %9838 = vst [vmem:[%s251 + $0xf0] sm:$0xff] %v9806
      %9839 = vst [vmem:[%s251 + $0xf8] sm:$0xff] %v9807
      %p9840 = scmp.lt.s32.totalorder %s17, 1
      %s9841 = scalar_select %p9840, %s17, 1
      %s9842 = smul.addr %s9841, 32
      %s9843 = smul.addr %s9842, 8
      %s9844 = scalar_lea.vmem %s6, %s9843
      // Predicated region
      $region45: #{residual_block_forward.1} parent=43 // pred_check
        %p9845 = pneg %p166
      $region46: #{residual_block_forward.1} parent=43 // pred_check_branch
        %9847 = sbr.rel (%p9845) target = $region48
      $region47: #{residual_block_forward.1} parent=43 // pred_region
        _
      $region48: #{residual_block_forward.1} parent=43 // pred_fallthru
        _
    $region44: #{residual_block_forward.1} parent=5 // pred_fallthru
      _
    %p9848 = scmp.le.s32.totalorder 2, %s12
    // Predicated region
    $region49: #{residual_block_forward.1} parent=5 // pred_check
      %p9849 = pneg %p9848
    $region50: #{residual_block_forward.1} parent=5 // pred_check_branch
      %9851 = sbr.rel (%p9849) target = $region52
    $region51: #{residual_block_forward.1} parent=5 // pred_region
      %s9852 = ssub.s32 %s12, 2
      // Predicated region
      $region53: #{residual_block_forward.1} parent=51 // pred_check
        %p9853 = pneg %p172
      $region54: #{residual_block_forward.1} parent=51 // pred_check_branch
        %9855 = sbr.rel (%p9853) target = $region56
      $region55: #{residual_block_forward.1} parent=51 // pred_region
        %p9856 = scmp.lt.s32.totalorder %s18, 1
        %s9857 = scalar_select %p9856, %s18, 1
        %s9858 = smul.addr %s9857, 32
        %s9859 = smul.addr %s9858, 8
        %s9860 = scalar_lea.vmem %s6, %s9859
      $region56: #{residual_block_forward.1} parent=51 // pred_fallthru
        _
    $region52: #{residual_block_forward.1} parent=5 // pred_fallthru
      _
  $region6: #{residual_block_forward.1} parent=0 // loop_footer
    %s16 = sadd.s32 1, %s12
  $region7: #{residual_block_forward.1} parent=0 // loop_footer_branch
    %11 = sbr.rel target = $region3
  $region8: #{residual_block_forward.1} parent=0 // loop_exit
    _

</llo_original>
